<compile_context>
chip_gen: v7x
topology: tpu7x:2x2x1
jax: 0.10.0
libtpu: 0.0.40
codegen_flags: <defaults>
</compile_context>

<pallas_src>
import functools
import random

import jax
import jax.numpy as jnp
from jax.experimental import pallas as pl
from jax.experimental.pallas import tpu as pltpu


# -----------------------------------------------------------------------------
# Single fused kernel: conv + mean + encoder GRU + full decode loop.
# -----------------------------------------------------------------------------
def _img2seq_kernel(patches_ref, conv_w_ref, conv_b_ref,
                    enc_w_ih_ref, enc_b_ih_ref, enc_w_hh_ref, enc_b_hh_ref,
                    trg_emb_ref, emb_ref,
                    dec_w_ih_ref, dec_w_hh_ref, dec_b_ih_ref, dec_b_hh_ref,
                    out_w_ref, out_b_ref, tf_ref,
                    out_ref,
                    *, Himg, W, Bp, hid, max_len, Vp):
    # ---- encoder: conv-as-matmul (+bias +ReLU) on the MXU, mean over image rows ----
    acc = jnp.dot(patches_ref[...], conv_w_ref[...],
                  preferred_element_type=jnp.float32)             # (Himg*W*Bp, hid)
    acc = jnp.maximum(acc + conv_b_ref[...], 0.0)
    # rows are ordered (h, w, b): reduce the leading (image-row) axis.
    feat = acc.reshape(Himg, W * Bp, hid).sum(axis=0) * (1.0 / Himg)   # (W*Bp, hid)

    # ---- encoder GRU over T = W steps; input-to-hidden projection hoisted ----
    gi_all = jnp.dot(feat, enc_w_ih_ref[...],
                     preferred_element_type=jnp.float32) + enc_b_ih_ref[...]   # (W*Bp, 3H)
    w_hh = enc_w_hh_ref[...]
    b_hh = enc_b_hh_ref[...]
    h = feat[0:Bp, :]                      # initial hidden = encoder_result[0, :, :]
    for t in range(W):                     # fully unrolled (static, small trip count)
        gi = gi_all[t * Bp:(t + 1) * Bp, :]
        gh = jnp.dot(h, w_hh, preferred_element_type=jnp.float32) + b_hh
        r = jax.nn.sigmoid(gi[:, 0:hid] + gh[:, 0:hid])
        z = jax.nn.sigmoid(gi[:, hid:2 * hid] + gh[:, hid:2 * hid])
        n = jnp.tanh(gi[:, 2 * hid:3 * hid] + r * gh[:, 2 * hid:3 * hid])
        h = (1.0 - z) * n + z * h

    # ---- decoder loop (max_len - 1 steps), fully unrolled ----
    out_ref[0] = jnp.zeros((Bp, Vp), jnp.float32)      # outputs[0] stays zero (as in torch)

    d_w_ih = dec_w_ih_ref[...]
    d_w_hh = dec_w_hh_ref[...]
    d_b_ih = dec_b_ih_ref[...]
    d_b_hh = dec_b_hh_ref[...]
    w_out = out_w_ref[...]
    b_out = out_b_ref[...]                 # padded vocab columns carry a -1e30 bias
    emb_tab = emb_ref[...]
    col = jax.lax.broadcasted_iota(jnp.int32, (Bp, Vp), 1).astype(jnp.float32)

    inp_emb = trg_emb_ref[0]               # input = trg[0, :] (pre-embedded)
    for t in range(1, max_len):
        gi = jnp.dot(inp_emb, d_w_ih, preferred_element_type=jnp.float32) + d_b_ih
        gh = jnp.dot(h, d_w_hh, preferred_element_type=jnp.float32) + d_b_hh
        r = jax.nn.sigmoid(gi[:, 0:hid] + gh[:, 0:hid])
        z = jax.nn.sigmoid(gi[:, hid:2 * hid] + gh[:, hid:2 * hid])
        n = jnp.tanh(gi[:, 2 * hid:3 * hid] + r * gh[:, 2 * hid:3 * hid])
        h = (1.0 - z) * n + z * h

        logits = jnp.dot(h, w_out, preferred_element_type=jnp.float32) + b_out
        out_ref[t] = logits                # lane-dense (Bp, Vp=128k) store

        # next input: teacher forcing (pre-drawn SMEM flag) or greedy argmax
        # (first-max tie-break; padded columns can never win due to -1e30 bias).
        mx = jnp.max(logits, axis=1, keepdims=True)
        top1 = jnp.min(jnp.where(logits == mx, col, float(Vp)), axis=1, keepdims=True)
        argmax_emb = jnp.dot((col == top1).astype(jnp.float32), emb_tab,
                             preferred_element_type=jnp.float32)
        tf = (tf_ref[t] > 0).astype(jnp.float32)
        inp_emb = tf * trg_emb_ref[t] + (1.0 - tf) * argmax_emb


# -----------------------------------------------------------------------------
# Forward pass (jitted): host-side layout prep + ONE pallas_call.
# -----------------------------------------------------------------------------
def _img2seq_forward(params, src, trg, tf_flags):
    B, Cin, Himg, W = src.shape
    hid = params["conv_w"].shape[1]
    emb_dim = params["emb"].shape[1]
    vocab = params["out_w"].shape[1]
    max_len = trg.shape[0]

    Bp = ((B + 7) // 8) * 8                 # sublane-dense batch
    Vp = ((vocab + 127) // 128) * 128       # lane-dense vocab
    Kc = Cin * 9
    Kp = ((Kc + 7) // 8) * 8                # conv matmul K padded to sublane multiple

    # Pad batch; padded rows flow through harmlessly and are sliced off at the end.
    src_p = jnp.pad(src, ((0, Bp - B), (0, 0), (0, 0), (0, 0)))
    trg_p = jnp.pad(trg, ((0, 0), (0, Bp - B)))

    # im2col: rows ordered (h, w, b), columns (cin, 3x3 tap).
    # TODO(synk): form the 9 taps in-kernel from the padded image to cut HBM traffic.
    xp = jnp.pad(src_p, ((0, 0), (0, 0), (1, 1), (1, 1)))
    patches = jnp.stack([xp[:, :, dh:dh + Himg, dw:dw + W]
                         for dh in range(3) for dw in range(3)], axis=2)   # (Bp,Cin,9,H,W)
    patches = patches.transpose(3, 4, 0, 1, 2).reshape(Himg * W * Bp, Kc)
    patches = jnp.pad(patches, ((0, 0), (0, Kp - Kc)))
    conv_w_p = jnp.pad(params["conv_w"], ((0, Kp - Kc), (0, 0)))

    # Pre-embed the teacher tokens (replaces the (max_len, B, Vp) one-hot tensor).
    trg_emb = jnp.take(params["emb"], trg_p, axis=0)                        # (max_len,Bp,emb)

    # Padded decoder tables: emb rows / out cols zero-padded; out bias -1e30 on pads.
    emb_p = jnp.zeros((Vp, emb_dim), jnp.float32).at[:vocab].set(params["emb"])
    out_w_p = jnp.zeros((hid, Vp), jnp.float32).at[:, :vocab].set(params["out_w"])
    out_b_p = jnp.full((1, Vp), -1e30, jnp.float32).at[0, :vocab].set(params["out_b"])

    conv_b = params["conv_b"].reshape(1, hid)
    enc_b_ih = params["enc_b_ih"].reshape(1, 3 * hid)
    enc_b_hh = params["enc_b_hh"].reshape(1, 3 * hid)
    dec_b_ih = params["dec_b_ih"].reshape(1, 3 * hid)
    dec_b_hh = params["dec_b_hh"].reshape(1, 3 * hid)

    kernel = functools.partial(_img2seq_kernel, Himg=Himg, W=W, Bp=Bp, hid=hid,
                               max_len=max_len, Vp=Vp)

    vmem = pl.BlockSpec(memory_space=pltpu.MemorySpace.VMEM)
    smem = pl.BlockSpec(memory_space=pltpu.MemorySpace.SMEM)
    in_specs = [vmem] * 15 + [smem]         # last input (tf_flags) lives in SMEM

    out_p = pl.pallas_call(
        kernel,
        out_shape=jax.ShapeDtypeStruct((max_len, Bp, Vp), jnp.float32),
        in_specs=in_specs,
        out_specs=pl.BlockSpec(memory_space=pltpu.MemorySpace.VMEM),
    )(patches, conv_w_p, conv_b,
      params["enc_w_ih"], enc_b_ih, params["enc_w_hh"], enc_b_hh,
      trg_emb, emb_p,
      params["dec_w_ih"], params["dec_w_hh"], dec_b_ih, dec_b_hh,
      out_w_p, out_b_p, tf_flags)

    # Drop batch / vocab padding (row 0 already zeroed in-kernel, as in PyTorch).
    return out_p[:, :B, :vocab]


img2seq_forward = jax.jit(_img2seq_forward)


def make_tf_flags(max_len, teacher_forcing_rate, seed):
    """Pre-draw the Python-random teacher-forcing coin flips (one random.random() per
    torch step t in 1..max_len-1). Index 0 is unused."""
    random.seed(seed)
    flags = [1]
    for _ in range(1, max_len):
        flags.append(1 if random.random() < teacher_forcing_rate else 0)
    return jnp.asarray(flags, jnp.int32)


# -----------------------------------------------------------------------------
# Deterministic parameter construction
# -----------------------------------------------------------------------------
def make_params(cin, hidden, emb_dim, vocab, key):
    ks = jax.random.split(key, 12)
    s = 0.1
    return {
        # encoder conv: (Cin*3*3, hidden)
        "conv_w": s * jax.random.normal(ks[0], (cin * 9, hidden), jnp.float32),
        "conv_b": s * jax.random.normal(ks[1], (hidden,), jnp.float32),
        # rnn encoder GRU
        "enc_w_ih": s * jax.random.normal(ks[2], (hidden, 3 * hidden), jnp.float32),
        "enc_w_hh": s * jax.random.normal(ks[3], (hidden, 3 * hidden), jnp.float32),
        "enc_b_ih": s * jax.random.normal(ks[4], (3 * hidden,), jnp.float32),
        "enc_b_hh": s * jax.random.normal(ks[5], (3 * hidden,), jnp.float32),
        # decoder: embedding + GRU + output projection
        "emb": s * jax.random.normal(ks[6], (vocab, emb_dim), jnp.float32),
        "dec_w_ih": s * jax.random.normal(ks[7], (emb_dim, 3 * hidden), jnp.float32),
        "dec_w_hh": s * jax.random.normal(ks[8], (hidden, 3 * hidden), jnp.float32),
        "dec_b_ih": s * jax.random.normal(ks[9], (3 * hidden,), jnp.float32),
        "dec_b_hh": s * jax.random.normal(ks[10], (3 * hidden,), jnp.float32),
        "out_w": s * jax.random.normal(ks[11], (hidden, vocab), jnp.float32),
        "out_b": jnp.zeros((vocab,), jnp.float32),
    }


# -----------------------------------------------------------------------------
if __name__ == "__main__":
    # Small shapes consistent with the forward pass.
    B, Cin, H, W = 2, 4, 16, 16     # image: src (B, Cin, H, W)
    hidden = 32                     # rnn_encoder.hidden_size == encoder channels
    emb_dim = 32
    vocab = 16                      # decoder.vocab_size
    max_len = 8                     # trg sequence length (time-major)

    key = jax.random.PRNGKey(0)
    k_src, k_trg, k_par = jax.random.split(key, 3)

    src = jax.random.normal(k_src, (B, Cin, H, W), jnp.float32)
    trg = jax.random.randint(k_trg, (max_len, B), 0, vocab, jnp.int32)
    params = make_params(Cin, hidden, emb_dim, vocab, k_par)

    # TODO(synk): torch's random.random() teacher-forcing coin flips are reproduced by
    # pre-drawing a seeded Python `random` schedule; exact coin-flip parity with any
    # specific torch run is inherently seed-dependent.
    tf_flags = make_tf_flags(max_len, teacher_forcing_rate=0.99, seed=0)

    outputs = img2seq_forward(params, src, trg, tf_flags)
    outputs = jax.block_until_ready(outputs)

    assert outputs.shape == (max_len, B, vocab)
    assert bool(jnp.all(outputs[0] == 0.0))          # outputs[0] untouched, as in PyTorch
    assert bool(jnp.all(jnp.isfinite(outputs)))
    print("KERNEL_OK")
</pallas_src>

<mosaic_0001>
module attributes {stable_mosaic.version = 11 : i64} {
  func.func @_img2seq_kernel(%arg0: memref<2048x40xf32, #tpu.memory_space<vmem>>, %arg1: memref<40x32xf32, #tpu.memory_space<vmem>>, %arg2: memref<1x32xf32, #tpu.memory_space<vmem>>, %arg3: memref<32x96xf32, #tpu.memory_space<vmem>>, %arg4: memref<1x96xf32, #tpu.memory_space<vmem>>, %arg5: memref<32x96xf32, #tpu.memory_space<vmem>>, %arg6: memref<1x96xf32, #tpu.memory_space<vmem>>, %arg7: memref<8x8x32xf32, #tpu.memory_space<vmem>>, %arg8: memref<128x32xf32, #tpu.memory_space<vmem>>, %arg9: memref<32x96xf32, #tpu.memory_space<vmem>>, %arg10: memref<32x96xf32, #tpu.memory_space<vmem>>, %arg11: memref<1x96xf32, #tpu.memory_space<vmem>>, %arg12: memref<1x96xf32, #tpu.memory_space<vmem>>, %arg13: memref<32x128xf32, #tpu.memory_space<vmem>>, %arg14: memref<1x128xf32, #tpu.memory_space<vmem>>, %arg15: memref<8xi32, #tpu.memory_space<smem>>, %arg16: memref<8x8x128xf32, #tpu.memory_space<vmem>>) attributes {dimension_semantics = [], scalar_prefetch = 0 : i64, scratch_operands = 0 : i64, tpu.core_type = #tpu.core_type<tc>} {
    %c0 = arith.constant 0 : index
    %c0_0 = arith.constant 0 : index
    %0 = vector.load %arg0[%c0, %c0_0] : memref<2048x40xf32, #tpu.memory_space<vmem>>, vector<2048x40xf32>
    %c0_1 = arith.constant 0 : index
    %c0_2 = arith.constant 0 : index
    %1 = vector.load %arg1[%c0_1, %c0_2] : memref<40x32xf32, #tpu.memory_space<vmem>>, vector<40x32xf32>
    %cst = arith.constant dense<0.000000e+00> : vector<2048x32xf32>
    %2 = tpu.matmul %0, %1, %cst {dimension_numbers = #tpu.dot_dimension_numbers<[1], [0], [0], [1], [0, 0, 1, 1], [], []>} : vector<2048x40xf32>, vector<40x32xf32>, vector<2048x32xf32> -> vector<2048x32xf32>
    %c0_3 = arith.constant 0 : index
    %c0_4 = arith.constant 0 : index
    %3 = vector.load %arg2[%c0_3, %c0_4] : memref<1x32xf32, #tpu.memory_space<vmem>>, vector<1x32xf32>
    %4 = vector.broadcast %3 : vector<1x32xf32> to vector<2048x32xf32>
    %5 = arith.addf %2, %4 : vector<2048x32xf32>
    %cst_5 = arith.constant 0.000000e+00 : f32
    %6 = vector.broadcast %cst_5 : f32 to vector<2048x32xf32>
    %7 = arith.maximumf %5, %6 : vector<2048x32xf32>
    %8 = vector.shape_cast %7 : vector<2048x32xf32> to vector<16x128x32xf32>
    %cst_6 = arith.constant dense<0.000000e+00> : vector<128x32xf32>
    %9 = vector.multi_reduction <add>, %8, %cst_6 [0] : vector<16x128x32xf32> to vector<128x32xf32>
    %cst_7 = arith.constant 6.250000e-02 : f32
    %10 = vector.broadcast %cst_7 : f32 to vector<128x32xf32>
    %11 = arith.mulf %9, %10 : vector<128x32xf32>
    %c0_8 = arith.constant 0 : index
    %c0_9 = arith.constant 0 : index
    %12 = vector.load %arg3[%c0_8, %c0_9] : memref<32x96xf32, #tpu.memory_space<vmem>>, vector<32x96xf32>
    %cst_10 = arith.constant dense<0.000000e+00> : vector<128x96xf32>
    %13 = tpu.matmul %11, %12, %cst_10 {dimension_numbers = #tpu.dot_dimension_numbers<[1], [0], [0], [1], [0, 0, 1, 1], [], []>} : vector<128x32xf32>, vector<32x96xf32>, vector<128x96xf32> -> vector<128x96xf32>
    %c0_11 = arith.constant 0 : index
    %c0_12 = arith.constant 0 : index
    %14 = vector.load %arg4[%c0_11, %c0_12] : memref<1x96xf32, #tpu.memory_space<vmem>>, vector<1x96xf32>
    %15 = vector.broadcast %14 : vector<1x96xf32> to vector<128x96xf32>
    %16 = arith.addf %13, %15 : vector<128x96xf32>
    %c0_13 = arith.constant 0 : index
    %c0_14 = arith.constant 0 : index
    %17 = vector.load %arg5[%c0_13, %c0_14] : memref<32x96xf32, #tpu.memory_space<vmem>>, vector<32x96xf32>
    %c0_15 = arith.constant 0 : index
    %c0_16 = arith.constant 0 : index
    %18 = vector.load %arg6[%c0_15, %c0_16] : memref<1x96xf32, #tpu.memory_space<vmem>>, vector<1x96xf32>
    %19 = vector.extract_strided_slice %11 {offsets = [0, 0], sizes = [8, 32], strides = [1, 1]} : vector<128x32xf32> to vector<8x32xf32>
    %20 = vector.extract_strided_slice %16 {offsets = [0, 0], sizes = [8, 96], strides = [1, 1]} : vector<128x96xf32> to vector<8x96xf32>
    %cst_17 = arith.constant dense<0.000000e+00> : vector<8x96xf32>
    %21 = tpu.matmul %19, %17, %cst_17 {dimension_numbers = #tpu.dot_dimension_numbers<[1], [0], [0], [1], [0, 0, 1, 1], [], []>} : vector<8x32xf32>, vector<32x96xf32>, vector<8x96xf32> -> vector<8x96xf32>
    %22 = vector.broadcast %18 : vector<1x96xf32> to vector<8x96xf32>
    %23 = arith.addf %21, %22 : vector<8x96xf32>
    %24 = vector.extract_strided_slice %20 {offsets = [0, 0], sizes = [8, 32], strides = [1, 1]} : vector<8x96xf32> to vector<8x32xf32>
    %25 = vector.extract_strided_slice %23 {offsets = [0, 0], sizes = [8, 32], strides = [1, 1]} : vector<8x96xf32> to vector<8x32xf32>
    %26 = arith.addf %24, %25 : vector<8x32xf32>
    %27 = arith.negf %26 : vector<8x32xf32>
    %28 = math.exp %27 : vector<8x32xf32>
    %cst_18 = arith.constant 1.000000e+00 : f32
    %29 = vector.broadcast %cst_18 : f32 to vector<8x32xf32>
    %30 = arith.addf %29, %28 : vector<8x32xf32>
    %31 = arith.divf %29, %30 : vector<8x32xf32>
    %32 = vector.extract_strided_slice %20 {offsets = [0, 32], sizes = [8, 32], strides = [1, 1]} : vector<8x96xf32> to vector<8x32xf32>
    %33 = vector.extract_strided_slice %23 {offsets = [0, 32], sizes = [8, 32], strides = [1, 1]} : vector<8x96xf32> to vector<8x32xf32>
    %34 = arith.addf %32, %33 : vector<8x32xf32>
    %35 = arith.negf %34 : vector<8x32xf32>
    %36 = math.exp %35 : vector<8x32xf32>
    %cst_19 = arith.constant 1.000000e+00 : f32
    %37 = vector.broadcast %cst_19 : f32 to vector<8x32xf32>
    %38 = arith.addf %37, %36 : vector<8x32xf32>
    %39 = arith.divf %37, %38 : vector<8x32xf32>
    %40 = vector.extract_strided_slice %20 {offsets = [0, 64], sizes = [8, 32], strides = [1, 1]} : vector<8x96xf32> to vector<8x32xf32>
    %41 = vector.extract_strided_slice %23 {offsets = [0, 64], sizes = [8, 32], strides = [1, 1]} : vector<8x96xf32> to vector<8x32xf32>
    %42 = arith.mulf %31, %41 : vector<8x32xf32>
    %43 = arith.addf %40, %42 : vector<8x32xf32>
    %44 = math.tanh %43 : vector<8x32xf32>
    %cst_20 = arith.constant 1.000000e+00 : f32
    %45 = vector.broadcast %cst_20 : f32 to vector<8x32xf32>
    %46 = arith.subf %45, %39 : vector<8x32xf32>
    %47 = arith.mulf %46, %44 : vector<8x32xf32>
    %48 = arith.mulf %39, %19 : vector<8x32xf32>
    %49 = arith.addf %47, %48 : vector<8x32xf32>
    %50 = vector.extract_strided_slice %16 {offsets = [8, 0], sizes = [8, 96], strides = [1, 1]} : vector<128x96xf32> to vector<8x96xf32>
    %cst_21 = arith.constant dense<0.000000e+00> : vector<8x96xf32>
    %51 = tpu.matmul %49, %17, %cst_21 {dimension_numbers = #tpu.dot_dimension_numbers<[1], [0], [0], [1], [0, 0, 1, 1], [], []>} : vector<8x32xf32>, vector<32x96xf32>, vector<8x96xf32> -> vector<8x96xf32>
    %52 = vector.broadcast %18 : vector<1x96xf32> to vector<8x96xf32>
    %53 = arith.addf %51, %52 : vector<8x96xf32>
    %54 = vector.extract_strided_slice %50 {offsets = [0, 0], sizes = [8, 32], strides = [1, 1]} : vector<8x96xf32> to vector<8x32xf32>
    %55 = vector.extract_strided_slice %53 {offsets = [0, 0], sizes = [8, 32], strides = [1, 1]} : vector<8x96xf32> to vector<8x32xf32>
    %56 = arith.addf %54, %55 : vector<8x32xf32>
    %57 = arith.negf %56 : vector<8x32xf32>
    %58 = math.exp %57 : vector<8x32xf32>
    %cst_22 = arith.constant 1.000000e+00 : f32
    %59 = vector.broadcast %cst_22 : f32 to vector<8x32xf32>
    %60 = arith.addf %59, %58 : vector<8x32xf32>
    %61 = arith.divf %59, %60 : vector<8x32xf32>
    %62 = vector.extract_strided_slice %50 {offsets = [0, 32], sizes = [8, 32], strides = [1, 1]} : vector<8x96xf32> to vector<8x32xf32>
    %63 = vector.extract_strided_slice %53 {offsets = [0, 32], sizes = [8, 32], strides = [1, 1]} : vector<8x96xf32> to vector<8x32xf32>
    %64 = arith.addf %62, %63 : vector<8x32xf32>
    %65 = arith.negf %64 : vector<8x32xf32>
    %66 = math.exp %65 : vector<8x32xf32>
    %cst_23 = arith.constant 1.000000e+00 : f32
    %67 = vector.broadcast %cst_23 : f32 to vector<8x32xf32>
    %68 = arith.addf %67, %66 : vector<8x32xf32>
    %69 = arith.divf %67, %68 : vector<8x32xf32>
    %70 = vector.extract_strided_slice %50 {offsets = [0, 64], sizes = [8, 32], strides = [1, 1]} : vector<8x96xf32> to vector<8x32xf32>
    %71 = vector.extract_strided_slice %53 {offsets = [0, 64], sizes = [8, 32], strides = [1, 1]} : vector<8x96xf32> to vector<8x32xf32>
    %72 = arith.mulf %61, %71 : vector<8x32xf32>
    %73 = arith.addf %70, %72 : vector<8x32xf32>
    %74 = math.tanh %73 : vector<8x32xf32>
    %cst_24 = arith.constant 1.000000e+00 : f32
    %75 = vector.broadcast %cst_24 : f32 to vector<8x32xf32>
    %76 = arith.subf %75, %69 : vector<8x32xf32>
    %77 = arith.mulf %76, %74 : vector<8x32xf32>
    %78 = arith.mulf %69, %49 : vector<8x32xf32>
    %79 = arith.addf %77, %78 : vector<8x32xf32>
    %80 = vector.extract_strided_slice %16 {offsets = [16, 0], sizes = [8, 96], strides = [1, 1]} : vector<128x96xf32> to vector<8x96xf32>
    %cst_25 = arith.constant dense<0.000000e+00> : vector<8x96xf32>
    %81 = tpu.matmul %79, %17, %cst_25 {dimension_numbers = #tpu.dot_dimension_numbers<[1], [0], [0], [1], [0, 0, 1, 1], [], []>} : vector<8x32xf32>, vector<32x96xf32>, vector<8x96xf32> -> vector<8x96xf32>
    %82 = vector.broadcast %18 : vector<1x96xf32> to vector<8x96xf32>
    %83 = arith.addf %81, %82 : vector<8x96xf32>
    %84 = vector.extract_strided_slice %80 {offsets = [0, 0], sizes = [8, 32], strides = [1, 1]} : vector<8x96xf32> to vector<8x32xf32>
    %85 = vector.extract_strided_slice %83 {offsets = [0, 0], sizes = [8, 32], strides = [1, 1]} : vector<8x96xf32> to vector<8x32xf32>
    %86 = arith.addf %84, %85 : vector<8x32xf32>
    %87 = arith.negf %86 : vector<8x32xf32>
    %88 = math.exp %87 : vector<8x32xf32>
    %cst_26 = arith.constant 1.000000e+00 : f32
    %89 = vector.broadcast %cst_26 : f32 to vector<8x32xf32>
    %90 = arith.addf %89, %88 : vector<8x32xf32>
    %91 = arith.divf %89, %90 : vector<8x32xf32>
    %92 = vector.extract_strided_slice %80 {offsets = [0, 32], sizes = [8, 32], strides = [1, 1]} : vector<8x96xf32> to vector<8x32xf32>
    %93 = vector.extract_strided_slice %83 {offsets = [0, 32], sizes = [8, 32], strides = [1, 1]} : vector<8x96xf32> to vector<8x32xf32>
    %94 = arith.addf %92, %93 : vector<8x32xf32>
    %95 = arith.negf %94 : vector<8x32xf32>
    %96 = math.exp %95 : vector<8x32xf32>
    %cst_27 = arith.constant 1.000000e+00 : f32
    %97 = vector.broadcast %cst_27 : f32 to vector<8x32xf32>
    %98 = arith.addf %97, %96 : vector<8x32xf32>
    %99 = arith.divf %97, %98 : vector<8x32xf32>
    %100 = vector.extract_strided_slice %80 {offsets = [0, 64], sizes = [8, 32], strides = [1, 1]} : vector<8x96xf32> to vector<8x32xf32>
    %101 = vector.extract_strided_slice %83 {offsets = [0, 64], sizes = [8, 32], strides = [1, 1]} : vector<8x96xf32> to vector<8x32xf32>
    %102 = arith.mulf %91, %101 : vector<8x32xf32>
    %103 = arith.addf %100, %102 : vector<8x32xf32>
    %104 = math.tanh %103 : vector<8x32xf32>
    %cst_28 = arith.constant 1.000000e+00 : f32
    %105 = vector.broadcast %cst_28 : f32 to vector<8x32xf32>
    %106 = arith.subf %105, %99 : vector<8x32xf32>
    %107 = arith.mulf %106, %104 : vector<8x32xf32>
    %108 = arith.mulf %99, %79 : vector<8x32xf32>
    %109 = arith.addf %107, %108 : vector<8x32xf32>
    %110 = vector.extract_strided_slice %16 {offsets = [24, 0], sizes = [8, 96], strides = [1, 1]} : vector<128x96xf32> to vector<8x96xf32>
    %cst_29 = arith.constant dense<0.000000e+00> : vector<8x96xf32>
    %111 = tpu.matmul %109, %17, %cst_29 {dimension_numbers = #tpu.dot_dimension_numbers<[1], [0], [0], [1], [0, 0, 1, 1], [], []>} : vector<8x32xf32>, vector<32x96xf32>, vector<8x96xf32> -> vector<8x96xf32>
    %112 = vector.broadcast %18 : vector<1x96xf32> to vector<8x96xf32>
    %113 = arith.addf %111, %112 : vector<8x96xf32>
    %114 = vector.extract_strided_slice %110 {offsets = [0, 0], sizes = [8, 32], strides = [1, 1]} : vector<8x96xf32> to vector<8x32xf32>
    %115 = vector.extract_strided_slice %113 {offsets = [0, 0], sizes = [8, 32], strides = [1, 1]} : vector<8x96xf32> to vector<8x32xf32>
    %116 = arith.addf %114, %115 : vector<8x32xf32>
    %117 = arith.negf %116 : vector<8x32xf32>
    %118 = math.exp %117 : vector<8x32xf32>
    %cst_30 = arith.constant 1.000000e+00 : f32
    %119 = vector.broadcast %cst_30 : f32 to vector<8x32xf32>
    %120 = arith.addf %119, %118 : vector<8x32xf32>
    %121 = arith.divf %119, %120 : vector<8x32xf32>
    %122 = vector.extract_strided_slice %110 {offsets = [0, 32], sizes = [8, 32], strides = [1, 1]} : vector<8x96xf32> to vector<8x32xf32>
    %123 = vector.extract_strided_slice %113 {offsets = [0, 32], sizes = [8, 32], strides = [1, 1]} : vector<8x96xf32> to vector<8x32xf32>
    %124 = arith.addf %122, %123 : vector<8x32xf32>
    %125 = arith.negf %124 : vector<8x32xf32>
    %126 = math.exp %125 : vector<8x32xf32>
    %cst_31 = arith.constant 1.000000e+00 : f32
    %127 = vector.broadcast %cst_31 : f32 to vector<8x32xf32>
    %128 = arith.addf %127, %126 : vector<8x32xf32>
    %129 = arith.divf %127, %128 : vector<8x32xf32>
    %130 = vector.extract_strided_slice %110 {offsets = [0, 64], sizes = [8, 32], strides = [1, 1]} : vector<8x96xf32> to vector<8x32xf32>
    %131 = vector.extract_strided_slice %113 {offsets = [0, 64], sizes = [8, 32], strides = [1, 1]} : vector<8x96xf32> to vector<8x32xf32>
    %132 = arith.mulf %121, %131 : vector<8x32xf32>
    %133 = arith.addf %130, %132 : vector<8x32xf32>
    %134 = math.tanh %133 : vector<8x32xf32>
    %cst_32 = arith.constant 1.000000e+00 : f32
    %135 = vector.broadcast %cst_32 : f32 to vector<8x32xf32>
    %136 = arith.subf %135, %129 : vector<8x32xf32>
    %137 = arith.mulf %136, %134 : vector<8x32xf32>
    %138 = arith.mulf %129, %109 : vector<8x32xf32>
    %139 = arith.addf %137, %138 : vector<8x32xf32>
    %140 = vector.extract_strided_slice %16 {offsets = [32, 0], sizes = [8, 96], strides = [1, 1]} : vector<128x96xf32> to vector<8x96xf32>
    %cst_33 = arith.constant dense<0.000000e+00> : vector<8x96xf32>
    %141 = tpu.matmul %139, %17, %cst_33 {dimension_numbers = #tpu.dot_dimension_numbers<[1], [0], [0], [1], [0, 0, 1, 1], [], []>} : vector<8x32xf32>, vector<32x96xf32>, vector<8x96xf32> -> vector<8x96xf32>
    %142 = vector.broadcast %18 : vector<1x96xf32> to vector<8x96xf32>
    %143 = arith.addf %141, %142 : vector<8x96xf32>
    %144 = vector.extract_strided_slice %140 {offsets = [0, 0], sizes = [8, 32], strides = [1, 1]} : vector<8x96xf32> to vector<8x32xf32>
    %145 = vector.extract_strided_slice %143 {offsets = [0, 0], sizes = [8, 32], strides = [1, 1]} : vector<8x96xf32> to vector<8x32xf32>
    %146 = arith.addf %144, %145 : vector<8x32xf32>
    %147 = arith.negf %146 : vector<8x32xf32>
    %148 = math.exp %147 : vector<8x32xf32>
    %cst_34 = arith.constant 1.000000e+00 : f32
    %149 = vector.broadcast %cst_34 : f32 to vector<8x32xf32>
    %150 = arith.addf %149, %148 : vector<8x32xf32>
    %151 = arith.divf %149, %150 : vector<8x32xf32>
    %152 = vector.extract_strided_slice %140 {offsets = [0, 32], sizes = [8, 32], strides = [1, 1]} : vector<8x96xf32> to vector<8x32xf32>
    %153 = vector.extract_strided_slice %143 {offsets = [0, 32], sizes = [8, 32], strides = [1, 1]} : vector<8x96xf32> to vector<8x32xf32>
    %154 = arith.addf %152, %153 : vector<8x32xf32>
    %155 = arith.negf %154 : vector<8x32xf32>
    %156 = math.exp %155 : vector<8x32xf32>
    %cst_35 = arith.constant 1.000000e+00 : f32
    %157 = vector.broadcast %cst_35 : f32 to vector<8x32xf32>
    %158 = arith.addf %157, %156 : vector<8x32xf32>
    %159 = arith.divf %157, %158 : vector<8x32xf32>
    %160 = vector.extract_strided_slice %140 {offsets = [0, 64], sizes = [8, 32], strides = [1, 1]} : vector<8x96xf32> to vector<8x32xf32>
    %161 = vector.extract_strided_slice %143 {offsets = [0, 64], sizes = [8, 32], strides = [1, 1]} : vector<8x96xf32> to vector<8x32xf32>
    %162 = arith.mulf %151, %161 : vector<8x32xf32>
    %163 = arith.addf %160, %162 : vector<8x32xf32>
    %164 = math.tanh %163 : vector<8x32xf32>
    %cst_36 = arith.constant 1.000000e+00 : f32
    %165 = vector.broadcast %cst_36 : f32 to vector<8x32xf32>
    %166 = arith.subf %165, %159 : vector<8x32xf32>
    %167 = arith.mulf %166, %164 : vector<8x32xf32>
    %168 = arith.mulf %159, %139 : vector<8x32xf32>
    %169 = arith.addf %167, %168 : vector<8x32xf32>
    %170 = vector.extract_strided_slice %16 {offsets = [40, 0], sizes = [8, 96], strides = [1, 1]} : vector<128x96xf32> to vector<8x96xf32>
    %cst_37 = arith.constant dense<0.000000e+00> : vector<8x96xf32>
    %171 = tpu.matmul %169, %17, %cst_37 {dimension_numbers = #tpu.dot_dimension_numbers<[1], [0], [0], [1], [0, 0, 1, 1], [], []>} : vector<8x32xf32>, vector<32x96xf32>, vector<8x96xf32> -> vector<8x96xf32>
    %172 = vector.broadcast %18 : vector<1x96xf32> to vector<8x96xf32>
    %173 = arith.addf %171, %172 : vector<8x96xf32>
    %174 = vector.extract_strided_slice %170 {offsets = [0, 0], sizes = [8, 32], strides = [1, 1]} : vector<8x96xf32> to vector<8x32xf32>
    %175 = vector.extract_strided_slice %173 {offsets = [0, 0], sizes = [8, 32], strides = [1, 1]} : vector<8x96xf32> to vector<8x32xf32>
    %176 = arith.addf %174, %175 : vector<8x32xf32>
    %177 = arith.negf %176 : vector<8x32xf32>
    %178 = math.exp %177 : vector<8x32xf32>
    %cst_38 = arith.constant 1.000000e+00 : f32
    %179 = vector.broadcast %cst_38 : f32 to vector<8x32xf32>
    %180 = arith.addf %179, %178 : vector<8x32xf32>
    %181 = arith.divf %179, %180 : vector<8x32xf32>
    %182 = vector.extract_strided_slice %170 {offsets = [0, 32], sizes = [8, 32], strides = [1, 1]} : vector<8x96xf32> to vector<8x32xf32>
    %183 = vector.extract_strided_slice %173 {offsets = [0, 32], sizes = [8, 32], strides = [1, 1]} : vector<8x96xf32> to vector<8x32xf32>
    %184 = arith.addf %182, %183 : vector<8x32xf32>
    %185 = arith.negf %184 : vector<8x32xf32>
    %186 = math.exp %185 : vector<8x32xf32>
    %cst_39 = arith.constant 1.000000e+00 : f32
    %187 = vector.broadcast %cst_39 : f32 to vector<8x32xf32>
    %188 = arith.addf %187, %186 : vector<8x32xf32>
    %189 = arith.divf %187, %188 : vector<8x32xf32>
    %190 = vector.extract_strided_slice %170 {offsets = [0, 64], sizes = [8, 32], strides = [1, 1]} : vector<8x96xf32> to vector<8x32xf32>
    %191 = vector.extract_strided_slice %173 {offsets = [0, 64], sizes = [8, 32], strides = [1, 1]} : vector<8x96xf32> to vector<8x32xf32>
    %192 = arith.mulf %181, %191 : vector<8x32xf32>
    %193 = arith.addf %190, %192 : vector<8x32xf32>
    %194 = math.tanh %193 : vector<8x32xf32>
    %cst_40 = arith.constant 1.000000e+00 : f32
    %195 = vector.broadcast %cst_40 : f32 to vector<8x32xf32>
    %196 = arith.subf %195, %189 : vector<8x32xf32>
    %197 = arith.mulf %196, %194 : vector<8x32xf32>
    %198 = arith.mulf %189, %169 : vector<8x32xf32>
    %199 = arith.addf %197, %198 : vector<8x32xf32>
    %200 = vector.extract_strided_slice %16 {offsets = [48, 0], sizes = [8, 96], strides = [1, 1]} : vector<128x96xf32> to vector<8x96xf32>
    %cst_41 = arith.constant dense<0.000000e+00> : vector<8x96xf32>
    %201 = tpu.matmul %199, %17, %cst_41 {dimension_numbers = #tpu.dot_dimension_numbers<[1], [0], [0], [1], [0, 0, 1, 1], [], []>} : vector<8x32xf32>, vector<32x96xf32>, vector<8x96xf32> -> vector<8x96xf32>
    %202 = vector.broadcast %18 : vector<1x96xf32> to vector<8x96xf32>
    %203 = arith.addf %201, %202 : vector<8x96xf32>
    %204 = vector.extract_strided_slice %200 {offsets = [0, 0], sizes = [8, 32], strides = [1, 1]} : vector<8x96xf32> to vector<8x32xf32>
    %205 = vector.extract_strided_slice %203 {offsets = [0, 0], sizes = [8, 32], strides = [1, 1]} : vector<8x96xf32> to vector<8x32xf32>
    %206 = arith.addf %204, %205 : vector<8x32xf32>
    %207 = arith.negf %206 : vector<8x32xf32>
    %208 = math.exp %207 : vector<8x32xf32>
    %cst_42 = arith.constant 1.000000e+00 : f32
    %209 = vector.broadcast %cst_42 : f32 to vector<8x32xf32>
    %210 = arith.addf %209, %208 : vector<8x32xf32>
    %211 = arith.divf %209, %210 : vector<8x32xf32>
    %212 = vector.extract_strided_slice %200 {offsets = [0, 32], sizes = [8, 32], strides = [1, 1]} : vector<8x96xf32> to vector<8x32xf32>
    %213 = vector.extract_strided_slice %203 {offsets = [0, 32], sizes = [8, 32], strides = [1, 1]} : vector<8x96xf32> to vector<8x32xf32>
    %214 = arith.addf %212, %213 : vector<8x32xf32>
    %215 = arith.negf %214 : vector<8x32xf32>
    %216 = math.exp %215 : vector<8x32xf32>
    %cst_43 = arith.constant 1.000000e+00 : f32
    %217 = vector.broadcast %cst_43 : f32 to vector<8x32xf32>
    %218 = arith.addf %217, %216 : vector<8x32xf32>
    %219 = arith.divf %217, %218 : vector<8x32xf32>
    %220 = vector.extract_strided_slice %200 {offsets = [0, 64], sizes = [8, 32], strides = [1, 1]} : vector<8x96xf32> to vector<8x32xf32>
    %221 = vector.extract_strided_slice %203 {offsets = [0, 64], sizes = [8, 32], strides = [1, 1]} : vector<8x96xf32> to vector<8x32xf32>
    %222 = arith.mulf %211, %221 : vector<8x32xf32>
    %223 = arith.addf %220, %222 : vector<8x32xf32>
    %224 = math.tanh %223 : vector<8x32xf32>
    %cst_44 = arith.constant 1.000000e+00 : f32
    %225 = vector.broadcast %cst_44 : f32 to vector<8x32xf32>
    %226 = arith.subf %225, %219 : vector<8x32xf32>
    %227 = arith.mulf %226, %224 : vector<8x32xf32>
    %228 = arith.mulf %219, %199 : vector<8x32xf32>
    %229 = arith.addf %227, %228 : vector<8x32xf32>
    %230 = vector.extract_strided_slice %16 {offsets = [56, 0], sizes = [8, 96], strides = [1, 1]} : vector<128x96xf32> to vector<8x96xf32>
    %cst_45 = arith.constant dense<0.000000e+00> : vector<8x96xf32>
    %231 = tpu.matmul %229, %17, %cst_45 {dimension_numbers = #tpu.dot_dimension_numbers<[1], [0], [0], [1], [0, 0, 1, 1], [], []>} : vector<8x32xf32>, vector<32x96xf32>, vector<8x96xf32> -> vector<8x96xf32>
    %232 = vector.broadcast %18 : vector<1x96xf32> to vector<8x96xf32>
    %233 = arith.addf %231, %232 : vector<8x96xf32>
    %234 = vector.extract_strided_slice %230 {offsets = [0, 0], sizes = [8, 32], strides = [1, 1]} : vector<8x96xf32> to vector<8x32xf32>
    %235 = vector.extract_strided_slice %233 {offsets = [0, 0], sizes = [8, 32], strides = [1, 1]} : vector<8x96xf32> to vector<8x32xf32>
    %236 = arith.addf %234, %235 : vector<8x32xf32>
    %237 = arith.negf %236 : vector<8x32xf32>
    %238 = math.exp %237 : vector<8x32xf32>
    %cst_46 = arith.constant 1.000000e+00 : f32
    %239 = vector.broadcast %cst_46 : f32 to vector<8x32xf32>
    %240 = arith.addf %239, %238 : vector<8x32xf32>
    %241 = arith.divf %239, %240 : vector<8x32xf32>
    %242 = vector.extract_strided_slice %230 {offsets = [0, 32], sizes = [8, 32], strides = [1, 1]} : vector<8x96xf32> to vector<8x32xf32>
    %243 = vector.extract_strided_slice %233 {offsets = [0, 32], sizes = [8, 32], strides = [1, 1]} : vector<8x96xf32> to vector<8x32xf32>
    %244 = arith.addf %242, %243 : vector<8x32xf32>
    %245 = arith.negf %244 : vector<8x32xf32>
    %246 = math.exp %245 : vector<8x32xf32>
    %cst_47 = arith.constant 1.000000e+00 : f32
    %247 = vector.broadcast %cst_47 : f32 to vector<8x32xf32>
    %248 = arith.addf %247, %246 : vector<8x32xf32>
    %249 = arith.divf %247, %248 : vector<8x32xf32>
    %250 = vector.extract_strided_slice %230 {offsets = [0, 64], sizes = [8, 32], strides = [1, 1]} : vector<8x96xf32> to vector<8x32xf32>
    %251 = vector.extract_strided_slice %233 {offsets = [0, 64], sizes = [8, 32], strides = [1, 1]} : vector<8x96xf32> to vector<8x32xf32>
    %252 = arith.mulf %241, %251 : vector<8x32xf32>
    %253 = arith.addf %250, %252 : vector<8x32xf32>
    %254 = math.tanh %253 : vector<8x32xf32>
    %cst_48 = arith.constant 1.000000e+00 : f32
    %255 = vector.broadcast %cst_48 : f32 to vector<8x32xf32>
    %256 = arith.subf %255, %249 : vector<8x32xf32>
    %257 = arith.mulf %256, %254 : vector<8x32xf32>
    %258 = arith.mulf %249, %229 : vector<8x32xf32>
    %259 = arith.addf %257, %258 : vector<8x32xf32>
    %260 = vector.extract_strided_slice %16 {offsets = [64, 0], sizes = [8, 96], strides = [1, 1]} : vector<128x96xf32> to vector<8x96xf32>
    %cst_49 = arith.constant dense<0.000000e+00> : vector<8x96xf32>
    %261 = tpu.matmul %259, %17, %cst_49 {dimension_numbers = #tpu.dot_dimension_numbers<[1], [0], [0], [1], [0, 0, 1, 1], [], []>} : vector<8x32xf32>, vector<32x96xf32>, vector<8x96xf32> -> vector<8x96xf32>
    %262 = vector.broadcast %18 : vector<1x96xf32> to vector<8x96xf32>
    %263 = arith.addf %261, %262 : vector<8x96xf32>
    %264 = vector.extract_strided_slice %260 {offsets = [0, 0], sizes = [8, 32], strides = [1, 1]} : vector<8x96xf32> to vector<8x32xf32>
    %265 = vector.extract_strided_slice %263 {offsets = [0, 0], sizes = [8, 32], strides = [1, 1]} : vector<8x96xf32> to vector<8x32xf32>
    %266 = arith.addf %264, %265 : vector<8x32xf32>
    %267 = arith.negf %266 : vector<8x32xf32>
    %268 = math.exp %267 : vector<8x32xf32>
    %cst_50 = arith.constant 1.000000e+00 : f32
    %269 = vector.broadcast %cst_50 : f32 to vector<8x32xf32>
    %270 = arith.addf %269, %268 : vector<8x32xf32>
    %271 = arith.divf %269, %270 : vector<8x32xf32>
    %272 = vector.extract_strided_slice %260 {offsets = [0, 32], sizes = [8, 32], strides = [1, 1]} : vector<8x96xf32> to vector<8x32xf32>
    %273 = vector.extract_strided_slice %263 {offsets = [0, 32], sizes = [8, 32], strides = [1, 1]} : vector<8x96xf32> to vector<8x32xf32>
    %274 = arith.addf %272, %273 : vector<8x32xf32>
    %275 = arith.negf %274 : vector<8x32xf32>
    %276 = math.exp %275 : vector<8x32xf32>
    %cst_51 = arith.constant 1.000000e+00 : f32
    %277 = vector.broadcast %cst_51 : f32 to vector<8x32xf32>
    %278 = arith.addf %277, %276 : vector<8x32xf32>
    %279 = arith.divf %277, %278 : vector<8x32xf32>
    %280 = vector.extract_strided_slice %260 {offsets = [0, 64], sizes = [8, 32], strides = [1, 1]} : vector<8x96xf32> to vector<8x32xf32>
    %281 = vector.extract_strided_slice %263 {offsets = [0, 64], sizes = [8, 32], strides = [1, 1]} : vector<8x96xf32> to vector<8x32xf32>
    %282 = arith.mulf %271, %281 : vector<8x32xf32>
    %283 = arith.addf %280, %282 : vector<8x32xf32>
    %284 = math.tanh %283 : vector<8x32xf32>
    %cst_52 = arith.constant 1.000000e+00 : f32
    %285 = vector.broadcast %cst_52 : f32 to vector<8x32xf32>
    %286 = arith.subf %285, %279 : vector<8x32xf32>
    %287 = arith.mulf %286, %284 : vector<8x32xf32>
    %288 = arith.mulf %279, %259 : vector<8x32xf32>
    %289 = arith.addf %287, %288 : vector<8x32xf32>
    %290 = vector.extract_strided_slice %16 {offsets = [72, 0], sizes = [8, 96], strides = [1, 1]} : vector<128x96xf32> to vector<8x96xf32>
    %cst_53 = arith.constant dense<0.000000e+00> : vector<8x96xf32>
    %291 = tpu.matmul %289, %17, %cst_53 {dimension_numbers = #tpu.dot_dimension_numbers<[1], [0], [0], [1], [0, 0, 1, 1], [], []>} : vector<8x32xf32>, vector<32x96xf32>, vector<8x96xf32> -> vector<8x96xf32>
    %292 = vector.broadcast %18 : vector<1x96xf32> to vector<8x96xf32>
    %293 = arith.addf %291, %292 : vector<8x96xf32>
    %294 = vector.extract_strided_slice %290 {offsets = [0, 0], sizes = [8, 32], strides = [1, 1]} : vector<8x96xf32> to vector<8x32xf32>
    %295 = vector.extract_strided_slice %293 {offsets = [0, 0], sizes = [8, 32], strides = [1, 1]} : vector<8x96xf32> to vector<8x32xf32>
    %296 = arith.addf %294, %295 : vector<8x32xf32>
    %297 = arith.negf %296 : vector<8x32xf32>
    %298 = math.exp %297 : vector<8x32xf32>
    %cst_54 = arith.constant 1.000000e+00 : f32
    %299 = vector.broadcast %cst_54 : f32 to vector<8x32xf32>
    %300 = arith.addf %299, %298 : vector<8x32xf32>
    %301 = arith.divf %299, %300 : vector<8x32xf32>
    %302 = vector.extract_strided_slice %290 {offsets = [0, 32], sizes = [8, 32], strides = [1, 1]} : vector<8x96xf32> to vector<8x32xf32>
    %303 = vector.extract_strided_slice %293 {offsets = [0, 32], sizes = [8, 32], strides = [1, 1]} : vector<8x96xf32> to vector<8x32xf32>
    %304 = arith.addf %302, %303 : vector<8x32xf32>
    %305 = arith.negf %304 : vector<8x32xf32>
    %306 = math.exp %305 : vector<8x32xf32>
    %cst_55 = arith.constant 1.000000e+00 : f32
    %307 = vector.broadcast %cst_55 : f32 to vector<8x32xf32>
    %308 = arith.addf %307, %306 : vector<8x32xf32>
    %309 = arith.divf %307, %308 : vector<8x32xf32>
    %310 = vector.extract_strided_slice %290 {offsets = [0, 64], sizes = [8, 32], strides = [1, 1]} : vector<8x96xf32> to vector<8x32xf32>
    %311 = vector.extract_strided_slice %293 {offsets = [0, 64], sizes = [8, 32], strides = [1, 1]} : vector<8x96xf32> to vector<8x32xf32>
    %312 = arith.mulf %301, %311 : vector<8x32xf32>
    %313 = arith.addf %310, %312 : vector<8x32xf32>
    %314 = math.tanh %313 : vector<8x32xf32>
    %cst_56 = arith.constant 1.000000e+00 : f32
    %315 = vector.broadcast %cst_56 : f32 to vector<8x32xf32>
    %316 = arith.subf %315, %309 : vector<8x32xf32>
    %317 = arith.mulf %316, %314 : vector<8x32xf32>
    %318 = arith.mulf %309, %289 : vector<8x32xf32>
    %319 = arith.addf %317, %318 : vector<8x32xf32>
    %320 = vector.extract_strided_slice %16 {offsets = [80, 0], sizes = [8, 96], strides = [1, 1]} : vector<128x96xf32> to vector<8x96xf32>
    %cst_57 = arith.constant dense<0.000000e+00> : vector<8x96xf32>
    %321 = tpu.matmul %319, %17, %cst_57 {dimension_numbers = #tpu.dot_dimension_numbers<[1], [0], [0], [1], [0, 0, 1, 1], [], []>} : vector<8x32xf32>, vector<32x96xf32>, vector<8x96xf32> -> vector<8x96xf32>
    %322 = vector.broadcast %18 : vector<1x96xf32> to vector<8x96xf32>
    %323 = arith.addf %321, %322 : vector<8x96xf32>
    %324 = vector.extract_strided_slice %320 {offsets = [0, 0], sizes = [8, 32], strides = [1, 1]} : vector<8x96xf32> to vector<8x32xf32>
    %325 = vector.extract_strided_slice %323 {offsets = [0, 0], sizes = [8, 32], strides = [1, 1]} : vector<8x96xf32> to vector<8x32xf32>
    %326 = arith.addf %324, %325 : vector<8x32xf32>
    %327 = arith.negf %326 : vector<8x32xf32>
    %328 = math.exp %327 : vector<8x32xf32>
    %cst_58 = arith.constant 1.000000e+00 : f32
    %329 = vector.broadcast %cst_58 : f32 to vector<8x32xf32>
    %330 = arith.addf %329, %328 : vector<8x32xf32>
    %331 = arith.divf %329, %330 : vector<8x32xf32>
    %332 = vector.extract_strided_slice %320 {offsets = [0, 32], sizes = [8, 32], strides = [1, 1]} : vector<8x96xf32> to vector<8x32xf32>
    %333 = vector.extract_strided_slice %323 {offsets = [0, 32], sizes = [8, 32], strides = [1, 1]} : vector<8x96xf32> to vector<8x32xf32>
    %334 = arith.addf %332, %333 : vector<8x32xf32>
    %335 = arith.negf %334 : vector<8x32xf32>
    %336 = math.exp %335 : vector<8x32xf32>
    %cst_59 = arith.constant 1.000000e+00 : f32
    %337 = vector.broadcast %cst_59 : f32 to vector<8x32xf32>
    %338 = arith.addf %337, %336 : vector<8x32xf32>
    %339 = arith.divf %337, %338 : vector<8x32xf32>
    %340 = vector.extract_strided_slice %320 {offsets = [0, 64], sizes = [8, 32], strides = [1, 1]} : vector<8x96xf32> to vector<8x32xf32>
    %341 = vector.extract_strided_slice %323 {offsets = [0, 64], sizes = [8, 32], strides = [1, 1]} : vector<8x96xf32> to vector<8x32xf32>
    %342 = arith.mulf %331, %341 : vector<8x32xf32>
    %343 = arith.addf %340, %342 : vector<8x32xf32>
    %344 = math.tanh %343 : vector<8x32xf32>
    %cst_60 = arith.constant 1.000000e+00 : f32
    %345 = vector.broadcast %cst_60 : f32 to vector<8x32xf32>
    %346 = arith.subf %345, %339 : vector<8x32xf32>
    %347 = arith.mulf %346, %344 : vector<8x32xf32>
    %348 = arith.mulf %339, %319 : vector<8x32xf32>
    %349 = arith.addf %347, %348 : vector<8x32xf32>
    %350 = vector.extract_strided_slice %16 {offsets = [88, 0], sizes = [8, 96], strides = [1, 1]} : vector<128x96xf32> to vector<8x96xf32>
    %cst_61 = arith.constant dense<0.000000e+00> : vector<8x96xf32>
    %351 = tpu.matmul %349, %17, %cst_61 {dimension_numbers = #tpu.dot_dimension_numbers<[1], [0], [0], [1], [0, 0, 1, 1], [], []>} : vector<8x32xf32>, vector<32x96xf32>, vector<8x96xf32> -> vector<8x96xf32>
    %352 = vector.broadcast %18 : vector<1x96xf32> to vector<8x96xf32>
    %353 = arith.addf %351, %352 : vector<8x96xf32>
    %354 = vector.extract_strided_slice %350 {offsets = [0, 0], sizes = [8, 32], strides = [1, 1]} : vector<8x96xf32> to vector<8x32xf32>
    %355 = vector.extract_strided_slice %353 {offsets = [0, 0], sizes = [8, 32], strides = [1, 1]} : vector<8x96xf32> to vector<8x32xf32>
    %356 = arith.addf %354, %355 : vector<8x32xf32>
    %357 = arith.negf %356 : vector<8x32xf32>
    %358 = math.exp %357 : vector<8x32xf32>
    %cst_62 = arith.constant 1.000000e+00 : f32
    %359 = vector.broadcast %cst_62 : f32 to vector<8x32xf32>
    %360 = arith.addf %359, %358 : vector<8x32xf32>
    %361 = arith.divf %359, %360 : vector<8x32xf32>
    %362 = vector.extract_strided_slice %350 {offsets = [0, 32], sizes = [8, 32], strides = [1, 1]} : vector<8x96xf32> to vector<8x32xf32>
    %363 = vector.extract_strided_slice %353 {offsets = [0, 32], sizes = [8, 32], strides = [1, 1]} : vector<8x96xf32> to vector<8x32xf32>
    %364 = arith.addf %362, %363 : vector<8x32xf32>
    %365 = arith.negf %364 : vector<8x32xf32>
    %366 = math.exp %365 : vector<8x32xf32>
    %cst_63 = arith.constant 1.000000e+00 : f32
    %367 = vector.broadcast %cst_63 : f32 to vector<8x32xf32>
    %368 = arith.addf %367, %366 : vector<8x32xf32>
    %369 = arith.divf %367, %368 : vector<8x32xf32>
    %370 = vector.extract_strided_slice %350 {offsets = [0, 64], sizes = [8, 32], strides = [1, 1]} : vector<8x96xf32> to vector<8x32xf32>
    %371 = vector.extract_strided_slice %353 {offsets = [0, 64], sizes = [8, 32], strides = [1, 1]} : vector<8x96xf32> to vector<8x32xf32>
    %372 = arith.mulf %361, %371 : vector<8x32xf32>
    %373 = arith.addf %370, %372 : vector<8x32xf32>
    %374 = math.tanh %373 : vector<8x32xf32>
    %cst_64 = arith.constant 1.000000e+00 : f32
    %375 = vector.broadcast %cst_64 : f32 to vector<8x32xf32>
    %376 = arith.subf %375, %369 : vector<8x32xf32>
    %377 = arith.mulf %376, %374 : vector<8x32xf32>
    %378 = arith.mulf %369, %349 : vector<8x32xf32>
    %379 = arith.addf %377, %378 : vector<8x32xf32>
    %380 = vector.extract_strided_slice %16 {offsets = [96, 0], sizes = [8, 96], strides = [1, 1]} : vector<128x96xf32> to vector<8x96xf32>
    %cst_65 = arith.constant dense<0.000000e+00> : vector<8x96xf32>
    %381 = tpu.matmul %379, %17, %cst_65 {dimension_numbers = #tpu.dot_dimension_numbers<[1], [0], [0], [1], [0, 0, 1, 1], [], []>} : vector<8x32xf32>, vector<32x96xf32>, vector<8x96xf32> -> vector<8x96xf32>
    %382 = vector.broadcast %18 : vector<1x96xf32> to vector<8x96xf32>
    %383 = arith.addf %381, %382 : vector<8x96xf32>
    %384 = vector.extract_strided_slice %380 {offsets = [0, 0], sizes = [8, 32], strides = [1, 1]} : vector<8x96xf32> to vector<8x32xf32>
    %385 = vector.extract_strided_slice %383 {offsets = [0, 0], sizes = [8, 32], strides = [1, 1]} : vector<8x96xf32> to vector<8x32xf32>
    %386 = arith.addf %384, %385 : vector<8x32xf32>
    %387 = arith.negf %386 : vector<8x32xf32>
    %388 = math.exp %387 : vector<8x32xf32>
    %cst_66 = arith.constant 1.000000e+00 : f32
    %389 = vector.broadcast %cst_66 : f32 to vector<8x32xf32>
    %390 = arith.addf %389, %388 : vector<8x32xf32>
    %391 = arith.divf %389, %390 : vector<8x32xf32>
    %392 = vector.extract_strided_slice %380 {offsets = [0, 32], sizes = [8, 32], strides = [1, 1]} : vector<8x96xf32> to vector<8x32xf32>
    %393 = vector.extract_strided_slice %383 {offsets = [0, 32], sizes = [8, 32], strides = [1, 1]} : vector<8x96xf32> to vector<8x32xf32>
    %394 = arith.addf %392, %393 : vector<8x32xf32>
    %395 = arith.negf %394 : vector<8x32xf32>
    %396 = math.exp %395 : vector<8x32xf32>
    %cst_67 = arith.constant 1.000000e+00 : f32
    %397 = vector.broadcast %cst_67 : f32 to vector<8x32xf32>
    %398 = arith.addf %397, %396 : vector<8x32xf32>
    %399 = arith.divf %397, %398 : vector<8x32xf32>
    %400 = vector.extract_strided_slice %380 {offsets = [0, 64], sizes = [8, 32], strides = [1, 1]} : vector<8x96xf32> to vector<8x32xf32>
    %401 = vector.extract_strided_slice %383 {offsets = [0, 64], sizes = [8, 32], strides = [1, 1]} : vector<8x96xf32> to vector<8x32xf32>
    %402 = arith.mulf %391, %401 : vector<8x32xf32>
    %403 = arith.addf %400, %402 : vector<8x32xf32>
    %404 = math.tanh %403 : vector<8x32xf32>
    %cst_68 = arith.constant 1.000000e+00 : f32
    %405 = vector.broadcast %cst_68 : f32 to vector<8x32xf32>
    %406 = arith.subf %405, %399 : vector<8x32xf32>
    %407 = arith.mulf %406, %404 : vector<8x32xf32>
    %408 = arith.mulf %399, %379 : vector<8x32xf32>
    %409 = arith.addf %407, %408 : vector<8x32xf32>
    %410 = vector.extract_strided_slice %16 {offsets = [104, 0], sizes = [8, 96], strides = [1, 1]} : vector<128x96xf32> to vector<8x96xf32>
    %cst_69 = arith.constant dense<0.000000e+00> : vector<8x96xf32>
    %411 = tpu.matmul %409, %17, %cst_69 {dimension_numbers = #tpu.dot_dimension_numbers<[1], [0], [0], [1], [0, 0, 1, 1], [], []>} : vector<8x32xf32>, vector<32x96xf32>, vector<8x96xf32> -> vector<8x96xf32>
    %412 = vector.broadcast %18 : vector<1x96xf32> to vector<8x96xf32>
    %413 = arith.addf %411, %412 : vector<8x96xf32>
    %414 = vector.extract_strided_slice %410 {offsets = [0, 0], sizes = [8, 32], strides = [1, 1]} : vector<8x96xf32> to vector<8x32xf32>
    %415 = vector.extract_strided_slice %413 {offsets = [0, 0], sizes = [8, 32], strides = [1, 1]} : vector<8x96xf32> to vector<8x32xf32>
    %416 = arith.addf %414, %415 : vector<8x32xf32>
    %417 = arith.negf %416 : vector<8x32xf32>
    %418 = math.exp %417 : vector<8x32xf32>
    %cst_70 = arith.constant 1.000000e+00 : f32
    %419 = vector.broadcast %cst_70 : f32 to vector<8x32xf32>
    %420 = arith.addf %419, %418 : vector<8x32xf32>
    %421 = arith.divf %419, %420 : vector<8x32xf32>
    %422 = vector.extract_strided_slice %410 {offsets = [0, 32], sizes = [8, 32], strides = [1, 1]} : vector<8x96xf32> to vector<8x32xf32>
    %423 = vector.extract_strided_slice %413 {offsets = [0, 32], sizes = [8, 32], strides = [1, 1]} : vector<8x96xf32> to vector<8x32xf32>
    %424 = arith.addf %422, %423 : vector<8x32xf32>
    %425 = arith.negf %424 : vector<8x32xf32>
    %426 = math.exp %425 : vector<8x32xf32>
    %cst_71 = arith.constant 1.000000e+00 : f32
    %427 = vector.broadcast %cst_71 : f32 to vector<8x32xf32>
    %428 = arith.addf %427, %426 : vector<8x32xf32>
    %429 = arith.divf %427, %428 : vector<8x32xf32>
    %430 = vector.extract_strided_slice %410 {offsets = [0, 64], sizes = [8, 32], strides = [1, 1]} : vector<8x96xf32> to vector<8x32xf32>
    %431 = vector.extract_strided_slice %413 {offsets = [0, 64], sizes = [8, 32], strides = [1, 1]} : vector<8x96xf32> to vector<8x32xf32>
    %432 = arith.mulf %421, %431 : vector<8x32xf32>
    %433 = arith.addf %430, %432 : vector<8x32xf32>
    %434 = math.tanh %433 : vector<8x32xf32>
    %cst_72 = arith.constant 1.000000e+00 : f32
    %435 = vector.broadcast %cst_72 : f32 to vector<8x32xf32>
    %436 = arith.subf %435, %429 : vector<8x32xf32>
    %437 = arith.mulf %436, %434 : vector<8x32xf32>
    %438 = arith.mulf %429, %409 : vector<8x32xf32>
    %439 = arith.addf %437, %438 : vector<8x32xf32>
    %440 = vector.extract_strided_slice %16 {offsets = [112, 0], sizes = [8, 96], strides = [1, 1]} : vector<128x96xf32> to vector<8x96xf32>
    %cst_73 = arith.constant dense<0.000000e+00> : vector<8x96xf32>
    %441 = tpu.matmul %439, %17, %cst_73 {dimension_numbers = #tpu.dot_dimension_numbers<[1], [0], [0], [1], [0, 0, 1, 1], [], []>} : vector<8x32xf32>, vector<32x96xf32>, vector<8x96xf32> -> vector<8x96xf32>
    %442 = vector.broadcast %18 : vector<1x96xf32> to vector<8x96xf32>
    %443 = arith.addf %441, %442 : vector<8x96xf32>
    %444 = vector.extract_strided_slice %440 {offsets = [0, 0], sizes = [8, 32], strides = [1, 1]} : vector<8x96xf32> to vector<8x32xf32>
    %445 = vector.extract_strided_slice %443 {offsets = [0, 0], sizes = [8, 32], strides = [1, 1]} : vector<8x96xf32> to vector<8x32xf32>
    %446 = arith.addf %444, %445 : vector<8x32xf32>
    %447 = arith.negf %446 : vector<8x32xf32>
    %448 = math.exp %447 : vector<8x32xf32>
    %cst_74 = arith.constant 1.000000e+00 : f32
    %449 = vector.broadcast %cst_74 : f32 to vector<8x32xf32>
    %450 = arith.addf %449, %448 : vector<8x32xf32>
    %451 = arith.divf %449, %450 : vector<8x32xf32>
    %452 = vector.extract_strided_slice %440 {offsets = [0, 32], sizes = [8, 32], strides = [1, 1]} : vector<8x96xf32> to vector<8x32xf32>
    %453 = vector.extract_strided_slice %443 {offsets = [0, 32], sizes = [8, 32], strides = [1, 1]} : vector<8x96xf32> to vector<8x32xf32>
    %454 = arith.addf %452, %453 : vector<8x32xf32>
    %455 = arith.negf %454 : vector<8x32xf32>
    %456 = math.exp %455 : vector<8x32xf32>
    %cst_75 = arith.constant 1.000000e+00 : f32
    %457 = vector.broadcast %cst_75 : f32 to vector<8x32xf32>
    %458 = arith.addf %457, %456 : vector<8x32xf32>
    %459 = arith.divf %457, %458 : vector<8x32xf32>
    %460 = vector.extract_strided_slice %440 {offsets = [0, 64], sizes = [8, 32], strides = [1, 1]} : vector<8x96xf32> to vector<8x32xf32>
    %461 = vector.extract_strided_slice %443 {offsets = [0, 64], sizes = [8, 32], strides = [1, 1]} : vector<8x96xf32> to vector<8x32xf32>
    %462 = arith.mulf %451, %461 : vector<8x32xf32>
    %463 = arith.addf %460, %462 : vector<8x32xf32>
    %464 = math.tanh %463 : vector<8x32xf32>
    %cst_76 = arith.constant 1.000000e+00 : f32
    %465 = vector.broadcast %cst_76 : f32 to vector<8x32xf32>
    %466 = arith.subf %465, %459 : vector<8x32xf32>
    %467 = arith.mulf %466, %464 : vector<8x32xf32>
    %468 = arith.mulf %459, %439 : vector<8x32xf32>
    %469 = arith.addf %467, %468 : vector<8x32xf32>
    %470 = vector.extract_strided_slice %16 {offsets = [120, 0], sizes = [8, 96], strides = [1, 1]} : vector<128x96xf32> to vector<8x96xf32>
    %cst_77 = arith.constant dense<0.000000e+00> : vector<8x96xf32>
    %471 = tpu.matmul %469, %17, %cst_77 {dimension_numbers = #tpu.dot_dimension_numbers<[1], [0], [0], [1], [0, 0, 1, 1], [], []>} : vector<8x32xf32>, vector<32x96xf32>, vector<8x96xf32> -> vector<8x96xf32>
    %472 = vector.broadcast %18 : vector<1x96xf32> to vector<8x96xf32>
    %473 = arith.addf %471, %472 : vector<8x96xf32>
    %474 = vector.extract_strided_slice %470 {offsets = [0, 0], sizes = [8, 32], strides = [1, 1]} : vector<8x96xf32> to vector<8x32xf32>
    %475 = vector.extract_strided_slice %473 {offsets = [0, 0], sizes = [8, 32], strides = [1, 1]} : vector<8x96xf32> to vector<8x32xf32>
    %476 = arith.addf %474, %475 : vector<8x32xf32>
    %477 = arith.negf %476 : vector<8x32xf32>
    %478 = math.exp %477 : vector<8x32xf32>
    %cst_78 = arith.constant 1.000000e+00 : f32
    %479 = vector.broadcast %cst_78 : f32 to vector<8x32xf32>
    %480 = arith.addf %479, %478 : vector<8x32xf32>
    %481 = arith.divf %479, %480 : vector<8x32xf32>
    %482 = vector.extract_strided_slice %470 {offsets = [0, 32], sizes = [8, 32], strides = [1, 1]} : vector<8x96xf32> to vector<8x32xf32>
    %483 = vector.extract_strided_slice %473 {offsets = [0, 32], sizes = [8, 32], strides = [1, 1]} : vector<8x96xf32> to vector<8x32xf32>
    %484 = arith.addf %482, %483 : vector<8x32xf32>
    %485 = arith.negf %484 : vector<8x32xf32>
    %486 = math.exp %485 : vector<8x32xf32>
    %cst_79 = arith.constant 1.000000e+00 : f32
    %487 = vector.broadcast %cst_79 : f32 to vector<8x32xf32>
    %488 = arith.addf %487, %486 : vector<8x32xf32>
    %489 = arith.divf %487, %488 : vector<8x32xf32>
    %490 = vector.extract_strided_slice %470 {offsets = [0, 64], sizes = [8, 32], strides = [1, 1]} : vector<8x96xf32> to vector<8x32xf32>
    %491 = vector.extract_strided_slice %473 {offsets = [0, 64], sizes = [8, 32], strides = [1, 1]} : vector<8x96xf32> to vector<8x32xf32>
    %492 = arith.mulf %481, %491 : vector<8x32xf32>
    %493 = arith.addf %490, %492 : vector<8x32xf32>
    %494 = math.tanh %493 : vector<8x32xf32>
    %cst_80 = arith.constant 1.000000e+00 : f32
    %495 = vector.broadcast %cst_80 : f32 to vector<8x32xf32>
    %496 = arith.subf %495, %489 : vector<8x32xf32>
    %497 = arith.mulf %496, %494 : vector<8x32xf32>
    %498 = arith.mulf %489, %469 : vector<8x32xf32>
    %499 = arith.addf %497, %498 : vector<8x32xf32>
    %cst_81 = arith.constant 0.000000e+00 : f32
    %500 = vector.broadcast %cst_81 : f32 to vector<8x128xf32>
    %c0_82 = arith.constant 0 : index
    %c0_83 = arith.constant 0 : index
    %c0_84 = arith.constant 0 : index
    %501 = vector.load %arg16[%c0_82, %c0_83, %c0_84] : memref<8x8x128xf32, #tpu.memory_space<vmem>>, vector<1x8x128xf32>
    %502 = vector.shape_cast %501 : vector<1x8x128xf32> to vector<8x128xf32>
    %503 = vector.shape_cast %500 : vector<8x128xf32> to vector<1x8x128xf32>
    tpu.vector_store %arg16[%c0_82, %c0_83, %c0_84], %503 {strides = array<i32>} : memref<8x8x128xf32, #tpu.memory_space<vmem>>, vector<1x8x128xf32>,
    %c0_85 = arith.constant 0 : index
    %c0_86 = arith.constant 0 : index
    %504 = vector.load %arg9[%c0_85, %c0_86] : memref<32x96xf32, #tpu.memory_space<vmem>>, vector<32x96xf32>
    %c0_87 = arith.constant 0 : index
    %c0_88 = arith.constant 0 : index
    %505 = vector.load %arg10[%c0_87, %c0_88] : memref<32x96xf32, #tpu.memory_space<vmem>>, vector<32x96xf32>
    %c0_89 = arith.constant 0 : index
    %c0_90 = arith.constant 0 : index
    %506 = vector.load %arg11[%c0_89, %c0_90] : memref<1x96xf32, #tpu.memory_space<vmem>>, vector<1x96xf32>
    %c0_91 = arith.constant 0 : index
    %c0_92 = arith.constant 0 : index
    %507 = vector.load %arg12[%c0_91, %c0_92] : memref<1x96xf32, #tpu.memory_space<vmem>>, vector<1x96xf32>
    %c0_93 = arith.constant 0 : index
    %c0_94 = arith.constant 0 : index
    %508 = vector.load %arg13[%c0_93, %c0_94] : memref<32x128xf32, #tpu.memory_space<vmem>>, vector<32x128xf32>
    %c0_95 = arith.constant 0 : index
    %c0_96 = arith.constant 0 : index
    %509 = vector.load %arg14[%c0_95, %c0_96] : memref<1x128xf32, #tpu.memory_space<vmem>>, vector<1x128xf32>
    %c0_97 = arith.constant 0 : index
    %c0_98 = arith.constant 0 : index
    %510 = vector.load %arg8[%c0_97, %c0_98] : memref<128x32xf32, #tpu.memory_space<vmem>>, vector<128x32xf32>
    %511 = tpu.iota {dimensions = array<i32: 1>} : vector<8x128xi32>
    %512 = arith.sitofp %511 : vector<8x128xi32> to vector<8x128xf32>
    %c0_99 = arith.constant 0 : index
    %c0_100 = arith.constant 0 : index
    %c0_101 = arith.constant 0 : index
    %513 = vector.load %arg7[%c0_99, %c0_100, %c0_101] : memref<8x8x32xf32, #tpu.memory_space<vmem>>, vector<1x8x32xf32>
    %514 = vector.shape_cast %513 : vector<1x8x32xf32> to vector<8x32xf32>
    %cst_102 = arith.constant dense<0.000000e+00> : vector<8x96xf32>
    %515 = tpu.matmul %514, %504, %cst_102 {dimension_numbers = #tpu.dot_dimension_numbers<[1], [0], [0], [1], [0, 0, 1, 1], [], []>} : vector<8x32xf32>, vector<32x96xf32>, vector<8x96xf32> -> vector<8x96xf32>
    %516 = vector.broadcast %506 : vector<1x96xf32> to vector<8x96xf32>
    %517 = arith.addf %515, %516 : vector<8x96xf32>
    %cst_103 = arith.constant dense<0.000000e+00> : vector<8x96xf32>
    %518 = tpu.matmul %499, %505, %cst_103 {dimension_numbers = #tpu.dot_dimension_numbers<[1], [0], [0], [1], [0, 0, 1, 1], [], []>} : vector<8x32xf32>, vector<32x96xf32>, vector<8x96xf32> -> vector<8x96xf32>
    %519 = vector.broadcast %507 : vector<1x96xf32> to vector<8x96xf32>
    %520 = arith.addf %518, %519 : vector<8x96xf32>
    %521 = vector.extract_strided_slice %517 {offsets = [0, 0], sizes = [8, 32], strides = [1, 1]} : vector<8x96xf32> to vector<8x32xf32>
    %522 = vector.extract_strided_slice %520 {offsets = [0, 0], sizes = [8, 32], strides = [1, 1]} : vector<8x96xf32> to vector<8x32xf32>
    %523 = arith.addf %521, %522 : vector<8x32xf32>
    %524 = arith.negf %523 : vector<8x32xf32>
    %525 = math.exp %524 : vector<8x32xf32>
    %cst_104 = arith.constant 1.000000e+00 : f32
    %526 = vector.broadcast %cst_104 : f32 to vector<8x32xf32>
    %527 = arith.addf %526, %525 : vector<8x32xf32>
    %528 = arith.divf %526, %527 : vector<8x32xf32>
    %529 = vector.extract_strided_slice %517 {offsets = [0, 32], sizes = [8, 32], strides = [1, 1]} : vector<8x96xf32> to vector<8x32xf32>
    %530 = vector.extract_strided_slice %520 {offsets = [0, 32], sizes = [8, 32], strides = [1, 1]} : vector<8x96xf32> to vector<8x32xf32>
    %531 = arith.addf %529, %530 : vector<8x32xf32>
    %532 = arith.negf %531 : vector<8x32xf32>
    %533 = math.exp %532 : vector<8x32xf32>
    %cst_105 = arith.constant 1.000000e+00 : f32
    %534 = vector.broadcast %cst_105 : f32 to vector<8x32xf32>
    %535 = arith.addf %534, %533 : vector<8x32xf32>
    %536 = arith.divf %534, %535 : vector<8x32xf32>
    %537 = vector.extract_strided_slice %517 {offsets = [0, 64], sizes = [8, 32], strides = [1, 1]} : vector<8x96xf32> to vector<8x32xf32>
    %538 = vector.extract_strided_slice %520 {offsets = [0, 64], sizes = [8, 32], strides = [1, 1]} : vector<8x96xf32> to vector<8x32xf32>
    %539 = arith.mulf %528, %538 : vector<8x32xf32>
    %540 = arith.addf %537, %539 : vector<8x32xf32>
    %541 = math.tanh %540 : vector<8x32xf32>
    %cst_106 = arith.constant 1.000000e+00 : f32
    %542 = vector.broadcast %cst_106 : f32 to vector<8x32xf32>
    %543 = arith.subf %542, %536 : vector<8x32xf32>
    %544 = arith.mulf %543, %541 : vector<8x32xf32>
    %545 = arith.mulf %536, %499 : vector<8x32xf32>
    %546 = arith.addf %544, %545 : vector<8x32xf32>
    %cst_107 = arith.constant dense<0.000000e+00> : vector<8x128xf32>
    %547 = tpu.matmul %546, %508, %cst_107 {dimension_numbers = #tpu.dot_dimension_numbers<[1], [0], [0], [1], [0, 0, 1, 1], [], []>} : vector<8x32xf32>, vector<32x128xf32>, vector<8x128xf32> -> vector<8x128xf32>
    %548 = vector.broadcast %509 : vector<1x128xf32> to vector<8x128xf32>
    %549 = arith.addf %547, %548 : vector<8x128xf32>
    %c1 = arith.constant 1 : index
    %c0_108 = arith.constant 0 : index
    %c0_109 = arith.constant 0 : index
    %550 = vector.load %arg16[%c1, %c0_108, %c0_109] : memref<8x8x128xf32, #tpu.memory_space<vmem>>, vector<1x8x128xf32>
    %551 = vector.shape_cast %550 : vector<1x8x128xf32> to vector<8x128xf32>
    %552 = vector.shape_cast %549 : vector<8x128xf32> to vector<1x8x128xf32>
    tpu.vector_store %arg16[%c1, %c0_108, %c0_109], %552 {strides = array<i32>} : memref<8x8x128xf32, #tpu.memory_space<vmem>>, vector<1x8x128xf32>,
    %cst_110 = arith.constant dense<0xFF800000> : vector<8xf32>
    %553 = vector.multi_reduction <maximumf>, %549, %cst_110 [1] : vector<8x128xf32> to vector<8xf32>
    %554 = vector.shape_cast %553 : vector<8xf32> to vector<8x1xf32>
    %555 = vector.broadcast %554 : vector<8x1xf32> to vector<8x128xf32>
    %556 = arith.cmpf oeq, %549, %555 : vector<8x128xf32>
    %cst_111 = arith.constant 1.280000e+02 : f32
    %557 = vector.broadcast %cst_111 : f32 to vector<8x128xf32>
    %558 = arith.select %556, %512, %557 : vector<8x128xi1>, vector<8x128xf32>
    %cst_112 = arith.constant dense<0x7F800000> : vector<8xf32>
    %559 = vector.multi_reduction <minimumf>, %558, %cst_112 [1] : vector<8x128xf32> to vector<8xf32>
    %560 = vector.shape_cast %559 : vector<8xf32> to vector<8x1xf32>
    %561 = vector.broadcast %560 : vector<8x1xf32> to vector<8x128xf32>
    %562 = arith.cmpf oeq, %512, %561 : vector<8x128xf32>
    %563 = arith.extui %562 : vector<8x128xi1> to vector<8x128xi32>
    %564 = arith.sitofp %563 : vector<8x128xi32> to vector<8x128xf32>
    %cst_113 = arith.constant dense<0.000000e+00> : vector<8x32xf32>
    %565 = tpu.matmul %564, %510, %cst_113 {dimension_numbers = #tpu.dot_dimension_numbers<[1], [0], [0], [1], [0, 0, 1, 1], [], []>} : vector<8x128xf32>, vector<128x32xf32>, vector<8x32xf32> -> vector<8x32xf32>
    %c1_114 = arith.constant 1 : index
    %566 = memref.load %arg15[%c1_114] : memref<8xi32, #tpu.memory_space<smem>>
    %c0_i32 = arith.constant 0 : i32
    %567 = arith.cmpi sgt, %566, %c0_i32 : i32
    %568 = arith.extui %567 : i1 to i32
    %569 = arith.sitofp %568 : i32 to f32
    %c1_115 = arith.constant 1 : index
    %c0_116 = arith.constant 0 : index
    %c0_117 = arith.constant 0 : index
    %570 = vector.load %arg7[%c1_115, %c0_116, %c0_117] : memref<8x8x32xf32, #tpu.memory_space<vmem>>, vector<1x8x32xf32>
    %571 = vector.shape_cast %570 : vector<1x8x32xf32> to vector<8x32xf32>
    %572 = vector.broadcast %569 : f32 to vector<8x32xf32>
    %573 = arith.mulf %572, %571 : vector<8x32xf32>
    %cst_118 = arith.constant 1.000000e+00 : f32
    %574 = arith.subf %cst_118, %569 : f32
    %575 = vector.broadcast %574 : f32 to vector<8x32xf32>
    %576 = arith.mulf %575, %565 : vector<8x32xf32>
    %577 = arith.addf %573, %576 : vector<8x32xf32>
    %cst_119 = arith.constant dense<0.000000e+00> : vector<8x96xf32>
    %578 = tpu.matmul %577, %504, %cst_119 {dimension_numbers = #tpu.dot_dimension_numbers<[1], [0], [0], [1], [0, 0, 1, 1], [], []>} : vector<8x32xf32>, vector<32x96xf32>, vector<8x96xf32> -> vector<8x96xf32>
    %579 = vector.broadcast %506 : vector<1x96xf32> to vector<8x96xf32>
    %580 = arith.addf %578, %579 : vector<8x96xf32>
    %cst_120 = arith.constant dense<0.000000e+00> : vector<8x96xf32>
    %581 = tpu.matmul %546, %505, %cst_120 {dimension_numbers = #tpu.dot_dimension_numbers<[1], [0], [0], [1], [0, 0, 1, 1], [], []>} : vector<8x32xf32>, vector<32x96xf32>, vector<8x96xf32> -> vector<8x96xf32>
    %582 = vector.broadcast %507 : vector<1x96xf32> to vector<8x96xf32>
    %583 = arith.addf %581, %582 : vector<8x96xf32>
    %584 = vector.extract_strided_slice %580 {offsets = [0, 0], sizes = [8, 32], strides = [1, 1]} : vector<8x96xf32> to vector<8x32xf32>
    %585 = vector.extract_strided_slice %583 {offsets = [0, 0], sizes = [8, 32], strides = [1, 1]} : vector<8x96xf32> to vector<8x32xf32>
    %586 = arith.addf %584, %585 : vector<8x32xf32>
    %587 = arith.negf %586 : vector<8x32xf32>
    %588 = math.exp %587 : vector<8x32xf32>
    %cst_121 = arith.constant 1.000000e+00 : f32
    %589 = vector.broadcast %cst_121 : f32 to vector<8x32xf32>
    %590 = arith.addf %589, %588 : vector<8x32xf32>
    %591 = arith.divf %589, %590 : vector<8x32xf32>
    %592 = vector.extract_strided_slice %580 {offsets = [0, 32], sizes = [8, 32], strides = [1, 1]} : vector<8x96xf32> to vector<8x32xf32>
    %593 = vector.extract_strided_slice %583 {offsets = [0, 32], sizes = [8, 32], strides = [1, 1]} : vector<8x96xf32> to vector<8x32xf32>
    %594 = arith.addf %592, %593 : vector<8x32xf32>
    %595 = arith.negf %594 : vector<8x32xf32>
    %596 = math.exp %595 : vector<8x32xf32>
    %cst_122 = arith.constant 1.000000e+00 : f32
    %597 = vector.broadcast %cst_122 : f32 to vector<8x32xf32>
    %598 = arith.addf %597, %596 : vector<8x32xf32>
    %599 = arith.divf %597, %598 : vector<8x32xf32>
    %600 = vector.extract_strided_slice %580 {offsets = [0, 64], sizes = [8, 32], strides = [1, 1]} : vector<8x96xf32> to vector<8x32xf32>
    %601 = vector.extract_strided_slice %583 {offsets = [0, 64], sizes = [8, 32], strides = [1, 1]} : vector<8x96xf32> to vector<8x32xf32>
    %602 = arith.mulf %591, %601 : vector<8x32xf32>
    %603 = arith.addf %600, %602 : vector<8x32xf32>
    %604 = math.tanh %603 : vector<8x32xf32>
    %cst_123 = arith.constant 1.000000e+00 : f32
    %605 = vector.broadcast %cst_123 : f32 to vector<8x32xf32>
    %606 = arith.subf %605, %599 : vector<8x32xf32>
    %607 = arith.mulf %606, %604 : vector<8x32xf32>
    %608 = arith.mulf %599, %546 : vector<8x32xf32>
    %609 = arith.addf %607, %608 : vector<8x32xf32>
    %cst_124 = arith.constant dense<0.000000e+00> : vector<8x128xf32>
    %610 = tpu.matmul %609, %508, %cst_124 {dimension_numbers = #tpu.dot_dimension_numbers<[1], [0], [0], [1], [0, 0, 1, 1], [], []>} : vector<8x32xf32>, vector<32x128xf32>, vector<8x128xf32> -> vector<8x128xf32>
    %611 = vector.broadcast %509 : vector<1x128xf32> to vector<8x128xf32>
    %612 = arith.addf %610, %611 : vector<8x128xf32>
    %c2 = arith.constant 2 : index
    %c0_125 = arith.constant 0 : index
    %c0_126 = arith.constant 0 : index
    %613 = vector.load %arg16[%c2, %c0_125, %c0_126] : memref<8x8x128xf32, #tpu.memory_space<vmem>>, vector<1x8x128xf32>
    %614 = vector.shape_cast %613 : vector<1x8x128xf32> to vector<8x128xf32>
    %615 = vector.shape_cast %612 : vector<8x128xf32> to vector<1x8x128xf32>
    tpu.vector_store %arg16[%c2, %c0_125, %c0_126], %615 {strides = array<i32>} : memref<8x8x128xf32, #tpu.memory_space<vmem>>, vector<1x8x128xf32>,
    %cst_127 = arith.constant dense<0xFF800000> : vector<8xf32>
    %616 = vector.multi_reduction <maximumf>, %612, %cst_127 [1] : vector<8x128xf32> to vector<8xf32>
    %617 = vector.shape_cast %616 : vector<8xf32> to vector<8x1xf32>
    %618 = vector.broadcast %617 : vector<8x1xf32> to vector<8x128xf32>
    %619 = arith.cmpf oeq, %612, %618 : vector<8x128xf32>
    %cst_128 = arith.constant 1.280000e+02 : f32
    %620 = vector.broadcast %cst_128 : f32 to vector<8x128xf32>
    %621 = arith.select %619, %512, %620 : vector<8x128xi1>, vector<8x128xf32>
    %cst_129 = arith.constant dense<0x7F800000> : vector<8xf32>
    %622 = vector.multi_reduction <minimumf>, %621, %cst_129 [1] : vector<8x128xf32> to vector<8xf32>
    %623 = vector.shape_cast %622 : vector<8xf32> to vector<8x1xf32>
    %624 = vector.broadcast %623 : vector<8x1xf32> to vector<8x128xf32>
    %625 = arith.cmpf oeq, %512, %624 : vector<8x128xf32>
    %626 = arith.extui %625 : vector<8x128xi1> to vector<8x128xi32>
    %627 = arith.sitofp %626 : vector<8x128xi32> to vector<8x128xf32>
    %cst_130 = arith.constant dense<0.000000e+00> : vector<8x32xf32>
    %628 = tpu.matmul %627, %510, %cst_130 {dimension_numbers = #tpu.dot_dimension_numbers<[1], [0], [0], [1], [0, 0, 1, 1], [], []>} : vector<8x128xf32>, vector<128x32xf32>, vector<8x32xf32> -> vector<8x32xf32>
    %c2_131 = arith.constant 2 : index
    %629 = memref.load %arg15[%c2_131] : memref<8xi32, #tpu.memory_space<smem>>
    %c0_i32_132 = arith.constant 0 : i32
    %630 = arith.cmpi sgt, %629, %c0_i32_132 : i32
    %631 = arith.extui %630 : i1 to i32
    %632 = arith.sitofp %631 : i32 to f32
    %c2_133 = arith.constant 2 : index
    %c0_134 = arith.constant 0 : index
    %c0_135 = arith.constant 0 : index
    %633 = vector.load %arg7[%c2_133, %c0_134, %c0_135] : memref<8x8x32xf32, #tpu.memory_space<vmem>>, vector<1x8x32xf32>
    %634 = vector.shape_cast %633 : vector<1x8x32xf32> to vector<8x32xf32>
    %635 = vector.broadcast %632 : f32 to vector<8x32xf32>
    %636 = arith.mulf %635, %634 : vector<8x32xf32>
    %cst_136 = arith.constant 1.000000e+00 : f32
    %637 = arith.subf %cst_136, %632 : f32
    %638 = vector.broadcast %637 : f32 to vector<8x32xf32>
    %639 = arith.mulf %638, %628 : vector<8x32xf32>
    %640 = arith.addf %636, %639 : vector<8x32xf32>
    %cst_137 = arith.constant dense<0.000000e+00> : vector<8x96xf32>
    %641 = tpu.matmul %640, %504, %cst_137 {dimension_numbers = #tpu.dot_dimension_numbers<[1], [0], [0], [1], [0, 0, 1, 1], [], []>} : vector<8x32xf32>, vector<32x96xf32>, vector<8x96xf32> -> vector<8x96xf32>
    %642 = vector.broadcast %506 : vector<1x96xf32> to vector<8x96xf32>
    %643 = arith.addf %641, %642 : vector<8x96xf32>
    %cst_138 = arith.constant dense<0.000000e+00> : vector<8x96xf32>
    %644 = tpu.matmul %609, %505, %cst_138 {dimension_numbers = #tpu.dot_dimension_numbers<[1], [0], [0], [1], [0, 0, 1, 1], [], []>} : vector<8x32xf32>, vector<32x96xf32>, vector<8x96xf32> -> vector<8x96xf32>
    %645 = vector.broadcast %507 : vector<1x96xf32> to vector<8x96xf32>
    %646 = arith.addf %644, %645 : vector<8x96xf32>
    %647 = vector.extract_strided_slice %643 {offsets = [0, 0], sizes = [8, 32], strides = [1, 1]} : vector<8x96xf32> to vector<8x32xf32>
    %648 = vector.extract_strided_slice %646 {offsets = [0, 0], sizes = [8, 32], strides = [1, 1]} : vector<8x96xf32> to vector<8x32xf32>
    %649 = arith.addf %647, %648 : vector<8x32xf32>
    %650 = arith.negf %649 : vector<8x32xf32>
    %651 = math.exp %650 : vector<8x32xf32>
    %cst_139 = arith.constant 1.000000e+00 : f32
    %652 = vector.broadcast %cst_139 : f32 to vector<8x32xf32>
    %653 = arith.addf %652, %651 : vector<8x32xf32>
    %654 = arith.divf %652, %653 : vector<8x32xf32>
    %655 = vector.extract_strided_slice %643 {offsets = [0, 32], sizes = [8, 32], strides = [1, 1]} : vector<8x96xf32> to vector<8x32xf32>
    %656 = vector.extract_strided_slice %646 {offsets = [0, 32], sizes = [8, 32], strides = [1, 1]} : vector<8x96xf32> to vector<8x32xf32>
    %657 = arith.addf %655, %656 : vector<8x32xf32>
    %658 = arith.negf %657 : vector<8x32xf32>
    %659 = math.exp %658 : vector<8x32xf32>
    %cst_140 = arith.constant 1.000000e+00 : f32
    %660 = vector.broadcast %cst_140 : f32 to vector<8x32xf32>
    %661 = arith.addf %660, %659 : vector<8x32xf32>
    %662 = arith.divf %660, %661 : vector<8x32xf32>
    %663 = vector.extract_strided_slice %643 {offsets = [0, 64], sizes = [8, 32], strides = [1, 1]} : vector<8x96xf32> to vector<8x32xf32>
    %664 = vector.extract_strided_slice %646 {offsets = [0, 64], sizes = [8, 32], strides = [1, 1]} : vector<8x96xf32> to vector<8x32xf32>
    %665 = arith.mulf %654, %664 : vector<8x32xf32>
    %666 = arith.addf %663, %665 : vector<8x32xf32>
    %667 = math.tanh %666 : vector<8x32xf32>
    %cst_141 = arith.constant 1.000000e+00 : f32
    %668 = vector.broadcast %cst_141 : f32 to vector<8x32xf32>
    %669 = arith.subf %668, %662 : vector<8x32xf32>
    %670 = arith.mulf %669, %667 : vector<8x32xf32>
    %671 = arith.mulf %662, %609 : vector<8x32xf32>
    %672 = arith.addf %670, %671 : vector<8x32xf32>
    %cst_142 = arith.constant dense<0.000000e+00> : vector<8x128xf32>
    %673 = tpu.matmul %672, %508, %cst_142 {dimension_numbers = #tpu.dot_dimension_numbers<[1], [0], [0], [1], [0, 0, 1, 1], [], []>} : vector<8x32xf32>, vector<32x128xf32>, vector<8x128xf32> -> vector<8x128xf32>
    %674 = vector.broadcast %509 : vector<1x128xf32> to vector<8x128xf32>
    %675 = arith.addf %673, %674 : vector<8x128xf32>
    %c3 = arith.constant 3 : index
    %c0_143 = arith.constant 0 : index
    %c0_144 = arith.constant 0 : index
    %676 = vector.load %arg16[%c3, %c0_143, %c0_144] : memref<8x8x128xf32, #tpu.memory_space<vmem>>, vector<1x8x128xf32>
    %677 = vector.shape_cast %676 : vector<1x8x128xf32> to vector<8x128xf32>
    %678 = vector.shape_cast %675 : vector<8x128xf32> to vector<1x8x128xf32>
    tpu.vector_store %arg16[%c3, %c0_143, %c0_144], %678 {strides = array<i32>} : memref<8x8x128xf32, #tpu.memory_space<vmem>>, vector<1x8x128xf32>,
    %cst_145 = arith.constant dense<0xFF800000> : vector<8xf32>
    %679 = vector.multi_reduction <maximumf>, %675, %cst_145 [1] : vector<8x128xf32> to vector<8xf32>
    %680 = vector.shape_cast %679 : vector<8xf32> to vector<8x1xf32>
    %681 = vector.broadcast %680 : vector<8x1xf32> to vector<8x128xf32>
    %682 = arith.cmpf oeq, %675, %681 : vector<8x128xf32>
    %cst_146 = arith.constant 1.280000e+02 : f32
    %683 = vector.broadcast %cst_146 : f32 to vector<8x128xf32>
    %684 = arith.select %682, %512, %683 : vector<8x128xi1>, vector<8x128xf32>
    %cst_147 = arith.constant dense<0x7F800000> : vector<8xf32>
    %685 = vector.multi_reduction <minimumf>, %684, %cst_147 [1] : vector<8x128xf32> to vector<8xf32>
    %686 = vector.shape_cast %685 : vector<8xf32> to vector<8x1xf32>
    %687 = vector.broadcast %686 : vector<8x1xf32> to vector<8x128xf32>
    %688 = arith.cmpf oeq, %512, %687 : vector<8x128xf32>
    %689 = arith.extui %688 : vector<8x128xi1> to vector<8x128xi32>
    %690 = arith.sitofp %689 : vector<8x128xi32> to vector<8x128xf32>
    %cst_148 = arith.constant dense<0.000000e+00> : vector<8x32xf32>
    %691 = tpu.matmul %690, %510, %cst_148 {dimension_numbers = #tpu.dot_dimension_numbers<[1], [0], [0], [1], [0, 0, 1, 1], [], []>} : vector<8x128xf32>, vector<128x32xf32>, vector<8x32xf32> -> vector<8x32xf32>
    %c3_149 = arith.constant 3 : index
    %692 = memref.load %arg15[%c3_149] : memref<8xi32, #tpu.memory_space<smem>>
    %c0_i32_150 = arith.constant 0 : i32
    %693 = arith.cmpi sgt, %692, %c0_i32_150 : i32
    %694 = arith.extui %693 : i1 to i32
    %695 = arith.sitofp %694 : i32 to f32
    %c3_151 = arith.constant 3 : index
    %c0_152 = arith.constant 0 : index
    %c0_153 = arith.constant 0 : index
    %696 = vector.load %arg7[%c3_151, %c0_152, %c0_153] : memref<8x8x32xf32, #tpu.memory_space<vmem>>, vector<1x8x32xf32>
    %697 = vector.shape_cast %696 : vector<1x8x32xf32> to vector<8x32xf32>
    %698 = vector.broadcast %695 : f32 to vector<8x32xf32>
    %699 = arith.mulf %698, %697 : vector<8x32xf32>
    %cst_154 = arith.constant 1.000000e+00 : f32
    %700 = arith.subf %cst_154, %695 : f32
    %701 = vector.broadcast %700 : f32 to vector<8x32xf32>
    %702 = arith.mulf %701, %691 : vector<8x32xf32>
    %703 = arith.addf %699, %702 : vector<8x32xf32>
    %cst_155 = arith.constant dense<0.000000e+00> : vector<8x96xf32>
    %704 = tpu.matmul %703, %504, %cst_155 {dimension_numbers = #tpu.dot_dimension_numbers<[1], [0], [0], [1], [0, 0, 1, 1], [], []>} : vector<8x32xf32>, vector<32x96xf32>, vector<8x96xf32> -> vector<8x96xf32>
    %705 = vector.broadcast %506 : vector<1x96xf32> to vector<8x96xf32>
    %706 = arith.addf %704, %705 : vector<8x96xf32>
    %cst_156 = arith.constant dense<0.000000e+00> : vector<8x96xf32>
    %707 = tpu.matmul %672, %505, %cst_156 {dimension_numbers = #tpu.dot_dimension_numbers<[1], [0], [0], [1], [0, 0, 1, 1], [], []>} : vector<8x32xf32>, vector<32x96xf32>, vector<8x96xf32> -> vector<8x96xf32>
    %708 = vector.broadcast %507 : vector<1x96xf32> to vector<8x96xf32>
    %709 = arith.addf %707, %708 : vector<8x96xf32>
    %710 = vector.extract_strided_slice %706 {offsets = [0, 0], sizes = [8, 32], strides = [1, 1]} : vector<8x96xf32> to vector<8x32xf32>
    %711 = vector.extract_strided_slice %709 {offsets = [0, 0], sizes = [8, 32], strides = [1, 1]} : vector<8x96xf32> to vector<8x32xf32>
    %712 = arith.addf %710, %711 : vector<8x32xf32>
    %713 = arith.negf %712 : vector<8x32xf32>
    %714 = math.exp %713 : vector<8x32xf32>
    %cst_157 = arith.constant 1.000000e+00 : f32
    %715 = vector.broadcast %cst_157 : f32 to vector<8x32xf32>
    %716 = arith.addf %715, %714 : vector<8x32xf32>
    %717 = arith.divf %715, %716 : vector<8x32xf32>
    %718 = vector.extract_strided_slice %706 {offsets = [0, 32], sizes = [8, 32], strides = [1, 1]} : vector<8x96xf32> to vector<8x32xf32>
    %719 = vector.extract_strided_slice %709 {offsets = [0, 32], sizes = [8, 32], strides = [1, 1]} : vector<8x96xf32> to vector<8x32xf32>
    %720 = arith.addf %718, %719 : vector<8x32xf32>
    %721 = arith.negf %720 : vector<8x32xf32>
    %722 = math.exp %721 : vector<8x32xf32>
    %cst_158 = arith.constant 1.000000e+00 : f32
    %723 = vector.broadcast %cst_158 : f32 to vector<8x32xf32>
    %724 = arith.addf %723, %722 : vector<8x32xf32>
    %725 = arith.divf %723, %724 : vector<8x32xf32>
    %726 = vector.extract_strided_slice %706 {offsets = [0, 64], sizes = [8, 32], strides = [1, 1]} : vector<8x96xf32> to vector<8x32xf32>
    %727 = vector.extract_strided_slice %709 {offsets = [0, 64], sizes = [8, 32], strides = [1, 1]} : vector<8x96xf32> to vector<8x32xf32>
    %728 = arith.mulf %717, %727 : vector<8x32xf32>
    %729 = arith.addf %726, %728 : vector<8x32xf32>
    %730 = math.tanh %729 : vector<8x32xf32>
    %cst_159 = arith.constant 1.000000e+00 : f32
    %731 = vector.broadcast %cst_159 : f32 to vector<8x32xf32>
    %732 = arith.subf %731, %725 : vector<8x32xf32>
    %733 = arith.mulf %732, %730 : vector<8x32xf32>
    %734 = arith.mulf %725, %672 : vector<8x32xf32>
    %735 = arith.addf %733, %734 : vector<8x32xf32>
    %cst_160 = arith.constant dense<0.000000e+00> : vector<8x128xf32>
    %736 = tpu.matmul %735, %508, %cst_160 {dimension_numbers = #tpu.dot_dimension_numbers<[1], [0], [0], [1], [0, 0, 1, 1], [], []>} : vector<8x32xf32>, vector<32x128xf32>, vector<8x128xf32> -> vector<8x128xf32>
    %737 = vector.broadcast %509 : vector<1x128xf32> to vector<8x128xf32>
    %738 = arith.addf %736, %737 : vector<8x128xf32>
    %c4 = arith.constant 4 : index
    %c0_161 = arith.constant 0 : index
    %c0_162 = arith.constant 0 : index
    %739 = vector.load %arg16[%c4, %c0_161, %c0_162] : memref<8x8x128xf32, #tpu.memory_space<vmem>>, vector<1x8x128xf32>
    %740 = vector.shape_cast %739 : vector<1x8x128xf32> to vector<8x128xf32>
    %741 = vector.shape_cast %738 : vector<8x128xf32> to vector<1x8x128xf32>
    tpu.vector_store %arg16[%c4, %c0_161, %c0_162], %741 {strides = array<i32>} : memref<8x8x128xf32, #tpu.memory_space<vmem>>, vector<1x8x128xf32>,
    %cst_163 = arith.constant dense<0xFF800000> : vector<8xf32>
    %742 = vector.multi_reduction <maximumf>, %738, %cst_163 [1] : vector<8x128xf32> to vector<8xf32>
    %743 = vector.shape_cast %742 : vector<8xf32> to vector<8x1xf32>
    %744 = vector.broadcast %743 : vector<8x1xf32> to vector<8x128xf32>
    %745 = arith.cmpf oeq, %738, %744 : vector<8x128xf32>
    %cst_164 = arith.constant 1.280000e+02 : f32
    %746 = vector.broadcast %cst_164 : f32 to vector<8x128xf32>
    %747 = arith.select %745, %512, %746 : vector<8x128xi1>, vector<8x128xf32>
    %cst_165 = arith.constant dense<0x7F800000> : vector<8xf32>
    %748 = vector.multi_reduction <minimumf>, %747, %cst_165 [1] : vector<8x128xf32> to vector<8xf32>
    %749 = vector.shape_cast %748 : vector<8xf32> to vector<8x1xf32>
    %750 = vector.broadcast %749 : vector<8x1xf32> to vector<8x128xf32>
    %751 = arith.cmpf oeq, %512, %750 : vector<8x128xf32>
    %752 = arith.extui %751 : vector<8x128xi1> to vector<8x128xi32>
    %753 = arith.sitofp %752 : vector<8x128xi32> to vector<8x128xf32>
    %cst_166 = arith.constant dense<0.000000e+00> : vector<8x32xf32>
    %754 = tpu.matmul %753, %510, %cst_166 {dimension_numbers = #tpu.dot_dimension_numbers<[1], [0], [0], [1], [0, 0, 1, 1], [], []>} : vector<8x128xf32>, vector<128x32xf32>, vector<8x32xf32> -> vector<8x32xf32>
    %c4_167 = arith.constant 4 : index
    %755 = memref.load %arg15[%c4_167] : memref<8xi32, #tpu.memory_space<smem>>
    %c0_i32_168 = arith.constant 0 : i32
    %756 = arith.cmpi sgt, %755, %c0_i32_168 : i32
    %757 = arith.extui %756 : i1 to i32
    %758 = arith.sitofp %757 : i32 to f32
    %c4_169 = arith.constant 4 : index
    %c0_170 = arith.constant 0 : index
    %c0_171 = arith.constant 0 : index
    %759 = vector.load %arg7[%c4_169, %c0_170, %c0_171] : memref<8x8x32xf32, #tpu.memory_space<vmem>>, vector<1x8x32xf32>
    %760 = vector.shape_cast %759 : vector<1x8x32xf32> to vector<8x32xf32>
    %761 = vector.broadcast %758 : f32 to vector<8x32xf32>
    %762 = arith.mulf %761, %760 : vector<8x32xf32>
    %cst_172 = arith.constant 1.000000e+00 : f32
    %763 = arith.subf %cst_172, %758 : f32
    %764 = vector.broadcast %763 : f32 to vector<8x32xf32>
    %765 = arith.mulf %764, %754 : vector<8x32xf32>
    %766 = arith.addf %762, %765 : vector<8x32xf32>
    %cst_173 = arith.constant dense<0.000000e+00> : vector<8x96xf32>
    %767 = tpu.matmul %766, %504, %cst_173 {dimension_numbers = #tpu.dot_dimension_numbers<[1], [0], [0], [1], [0, 0, 1, 1], [], []>} : vector<8x32xf32>, vector<32x96xf32>, vector<8x96xf32> -> vector<8x96xf32>
    %768 = vector.broadcast %506 : vector<1x96xf32> to vector<8x96xf32>
    %769 = arith.addf %767, %768 : vector<8x96xf32>
    %cst_174 = arith.constant dense<0.000000e+00> : vector<8x96xf32>
    %770 = tpu.matmul %735, %505, %cst_174 {dimension_numbers = #tpu.dot_dimension_numbers<[1], [0], [0], [1], [0, 0, 1, 1], [], []>} : vector<8x32xf32>, vector<32x96xf32>, vector<8x96xf32> -> vector<8x96xf32>
    %771 = vector.broadcast %507 : vector<1x96xf32> to vector<8x96xf32>
    %772 = arith.addf %770, %771 : vector<8x96xf32>
    %773 = vector.extract_strided_slice %769 {offsets = [0, 0], sizes = [8, 32], strides = [1, 1]} : vector<8x96xf32> to vector<8x32xf32>
    %774 = vector.extract_strided_slice %772 {offsets = [0, 0], sizes = [8, 32], strides = [1, 1]} : vector<8x96xf32> to vector<8x32xf32>
    %775 = arith.addf %773, %774 : vector<8x32xf32>
    %776 = arith.negf %775 : vector<8x32xf32>
    %777 = math.exp %776 : vector<8x32xf32>
    %cst_175 = arith.constant 1.000000e+00 : f32
    %778 = vector.broadcast %cst_175 : f32 to vector<8x32xf32>
    %779 = arith.addf %778, %777 : vector<8x32xf32>
    %780 = arith.divf %778, %779 : vector<8x32xf32>
    %781 = vector.extract_strided_slice %769 {offsets = [0, 32], sizes = [8, 32], strides = [1, 1]} : vector<8x96xf32> to vector<8x32xf32>
    %782 = vector.extract_strided_slice %772 {offsets = [0, 32], sizes = [8, 32], strides = [1, 1]} : vector<8x96xf32> to vector<8x32xf32>
    %783 = arith.addf %781, %782 : vector<8x32xf32>
    %784 = arith.negf %783 : vector<8x32xf32>
    %785 = math.exp %784 : vector<8x32xf32>
    %cst_176 = arith.constant 1.000000e+00 : f32
    %786 = vector.broadcast %cst_176 : f32 to vector<8x32xf32>
    %787 = arith.addf %786, %785 : vector<8x32xf32>
    %788 = arith.divf %786, %787 : vector<8x32xf32>
    %789 = vector.extract_strided_slice %769 {offsets = [0, 64], sizes = [8, 32], strides = [1, 1]} : vector<8x96xf32> to vector<8x32xf32>
    %790 = vector.extract_strided_slice %772 {offsets = [0, 64], sizes = [8, 32], strides = [1, 1]} : vector<8x96xf32> to vector<8x32xf32>
    %791 = arith.mulf %780, %790 : vector<8x32xf32>
    %792 = arith.addf %789, %791 : vector<8x32xf32>
    %793 = math.tanh %792 : vector<8x32xf32>
    %cst_177 = arith.constant 1.000000e+00 : f32
    %794 = vector.broadcast %cst_177 : f32 to vector<8x32xf32>
    %795 = arith.subf %794, %788 : vector<8x32xf32>
    %796 = arith.mulf %795, %793 : vector<8x32xf32>
    %797 = arith.mulf %788, %735 : vector<8x32xf32>
    %798 = arith.addf %796, %797 : vector<8x32xf32>
    %cst_178 = arith.constant dense<0.000000e+00> : vector<8x128xf32>
    %799 = tpu.matmul %798, %508, %cst_178 {dimension_numbers = #tpu.dot_dimension_numbers<[1], [0], [0], [1], [0, 0, 1, 1], [], []>} : vector<8x32xf32>, vector<32x128xf32>, vector<8x128xf32> -> vector<8x128xf32>
    %800 = vector.broadcast %509 : vector<1x128xf32> to vector<8x128xf32>
    %801 = arith.addf %799, %800 : vector<8x128xf32>
    %c5 = arith.constant 5 : index
    %c0_179 = arith.constant 0 : index
    %c0_180 = arith.constant 0 : index
    %802 = vector.load %arg16[%c5, %c0_179, %c0_180] : memref<8x8x128xf32, #tpu.memory_space<vmem>>, vector<1x8x128xf32>
    %803 = vector.shape_cast %802 : vector<1x8x128xf32> to vector<8x128xf32>
    %804 = vector.shape_cast %801 : vector<8x128xf32> to vector<1x8x128xf32>
    tpu.vector_store %arg16[%c5, %c0_179, %c0_180], %804 {strides = array<i32>} : memref<8x8x128xf32, #tpu.memory_space<vmem>>, vector<1x8x128xf32>,
    %cst_181 = arith.constant dense<0xFF800000> : vector<8xf32>
    %805 = vector.multi_reduction <maximumf>, %801, %cst_181 [1] : vector<8x128xf32> to vector<8xf32>
    %806 = vector.shape_cast %805 : vector<8xf32> to vector<8x1xf32>
    %807 = vector.broadcast %806 : vector<8x1xf32> to vector<8x128xf32>
    %808 = arith.cmpf oeq, %801, %807 : vector<8x128xf32>
    %cst_182 = arith.constant 1.280000e+02 : f32
    %809 = vector.broadcast %cst_182 : f32 to vector<8x128xf32>
    %810 = arith.select %808, %512, %809 : vector<8x128xi1>, vector<8x128xf32>
    %cst_183 = arith.constant dense<0x7F800000> : vector<8xf32>
    %811 = vector.multi_reduction <minimumf>, %810, %cst_183 [1] : vector<8x128xf32> to vector<8xf32>
    %812 = vector.shape_cast %811 : vector<8xf32> to vector<8x1xf32>
    %813 = vector.broadcast %812 : vector<8x1xf32> to vector<8x128xf32>
    %814 = arith.cmpf oeq, %512, %813 : vector<8x128xf32>
    %815 = arith.extui %814 : vector<8x128xi1> to vector<8x128xi32>
    %816 = arith.sitofp %815 : vector<8x128xi32> to vector<8x128xf32>
    %cst_184 = arith.constant dense<0.000000e+00> : vector<8x32xf32>
    %817 = tpu.matmul %816, %510, %cst_184 {dimension_numbers = #tpu.dot_dimension_numbers<[1], [0], [0], [1], [0, 0, 1, 1], [], []>} : vector<8x128xf32>, vector<128x32xf32>, vector<8x32xf32> -> vector<8x32xf32>
    %c5_185 = arith.constant 5 : index
    %818 = memref.load %arg15[%c5_185] : memref<8xi32, #tpu.memory_space<smem>>
    %c0_i32_186 = arith.constant 0 : i32
    %819 = arith.cmpi sgt, %818, %c0_i32_186 : i32
    %820 = arith.extui %819 : i1 to i32
    %821 = arith.sitofp %820 : i32 to f32
    %c5_187 = arith.constant 5 : index
    %c0_188 = arith.constant 0 : index
    %c0_189 = arith.constant 0 : index
    %822 = vector.load %arg7[%c5_187, %c0_188, %c0_189] : memref<8x8x32xf32, #tpu.memory_space<vmem>>, vector<1x8x32xf32>
    %823 = vector.shape_cast %822 : vector<1x8x32xf32> to vector<8x32xf32>
    %824 = vector.broadcast %821 : f32 to vector<8x32xf32>
    %825 = arith.mulf %824, %823 : vector<8x32xf32>
    %cst_190 = arith.constant 1.000000e+00 : f32
    %826 = arith.subf %cst_190, %821 : f32
    %827 = vector.broadcast %826 : f32 to vector<8x32xf32>
    %828 = arith.mulf %827, %817 : vector<8x32xf32>
    %829 = arith.addf %825, %828 : vector<8x32xf32>
    %cst_191 = arith.constant dense<0.000000e+00> : vector<8x96xf32>
    %830 = tpu.matmul %829, %504, %cst_191 {dimension_numbers = #tpu.dot_dimension_numbers<[1], [0], [0], [1], [0, 0, 1, 1], [], []>} : vector<8x32xf32>, vector<32x96xf32>, vector<8x96xf32> -> vector<8x96xf32>
    %831 = vector.broadcast %506 : vector<1x96xf32> to vector<8x96xf32>
    %832 = arith.addf %830, %831 : vector<8x96xf32>
    %cst_192 = arith.constant dense<0.000000e+00> : vector<8x96xf32>
    %833 = tpu.matmul %798, %505, %cst_192 {dimension_numbers = #tpu.dot_dimension_numbers<[1], [0], [0], [1], [0, 0, 1, 1], [], []>} : vector<8x32xf32>, vector<32x96xf32>, vector<8x96xf32> -> vector<8x96xf32>
    %834 = vector.broadcast %507 : vector<1x96xf32> to vector<8x96xf32>
    %835 = arith.addf %833, %834 : vector<8x96xf32>
    %836 = vector.extract_strided_slice %832 {offsets = [0, 0], sizes = [8, 32], strides = [1, 1]} : vector<8x96xf32> to vector<8x32xf32>
    %837 = vector.extract_strided_slice %835 {offsets = [0, 0], sizes = [8, 32], strides = [1, 1]} : vector<8x96xf32> to vector<8x32xf32>
    %838 = arith.addf %836, %837 : vector<8x32xf32>
    %839 = arith.negf %838 : vector<8x32xf32>
    %840 = math.exp %839 : vector<8x32xf32>
    %cst_193 = arith.constant 1.000000e+00 : f32
    %841 = vector.broadcast %cst_193 : f32 to vector<8x32xf32>
    %842 = arith.addf %841, %840 : vector<8x32xf32>
    %843 = arith.divf %841, %842 : vector<8x32xf32>
    %844 = vector.extract_strided_slice %832 {offsets = [0, 32], sizes = [8, 32], strides = [1, 1]} : vector<8x96xf32> to vector<8x32xf32>
    %845 = vector.extract_strided_slice %835 {offsets = [0, 32], sizes = [8, 32], strides = [1, 1]} : vector<8x96xf32> to vector<8x32xf32>
    %846 = arith.addf %844, %845 : vector<8x32xf32>
    %847 = arith.negf %846 : vector<8x32xf32>
    %848 = math.exp %847 : vector<8x32xf32>
    %cst_194 = arith.constant 1.000000e+00 : f32
    %849 = vector.broadcast %cst_194 : f32 to vector<8x32xf32>
    %850 = arith.addf %849, %848 : vector<8x32xf32>
    %851 = arith.divf %849, %850 : vector<8x32xf32>
    %852 = vector.extract_strided_slice %832 {offsets = [0, 64], sizes = [8, 32], strides = [1, 1]} : vector<8x96xf32> to vector<8x32xf32>
    %853 = vector.extract_strided_slice %835 {offsets = [0, 64], sizes = [8, 32], strides = [1, 1]} : vector<8x96xf32> to vector<8x32xf32>
    %854 = arith.mulf %843, %853 : vector<8x32xf32>
    %855 = arith.addf %852, %854 : vector<8x32xf32>
    %856 = math.tanh %855 : vector<8x32xf32>
    %cst_195 = arith.constant 1.000000e+00 : f32
    %857 = vector.broadcast %cst_195 : f32 to vector<8x32xf32>
    %858 = arith.subf %857, %851 : vector<8x32xf32>
    %859 = arith.mulf %858, %856 : vector<8x32xf32>
    %860 = arith.mulf %851, %798 : vector<8x32xf32>
    %861 = arith.addf %859, %860 : vector<8x32xf32>
    %cst_196 = arith.constant dense<0.000000e+00> : vector<8x128xf32>
    %862 = tpu.matmul %861, %508, %cst_196 {dimension_numbers = #tpu.dot_dimension_numbers<[1], [0], [0], [1], [0, 0, 1, 1], [], []>} : vector<8x32xf32>, vector<32x128xf32>, vector<8x128xf32> -> vector<8x128xf32>
    %863 = vector.broadcast %509 : vector<1x128xf32> to vector<8x128xf32>
    %864 = arith.addf %862, %863 : vector<8x128xf32>
    %c6 = arith.constant 6 : index
    %c0_197 = arith.constant 0 : index
    %c0_198 = arith.constant 0 : index
    %865 = vector.load %arg16[%c6, %c0_197, %c0_198] : memref<8x8x128xf32, #tpu.memory_space<vmem>>, vector<1x8x128xf32>
    %866 = vector.shape_cast %865 : vector<1x8x128xf32> to vector<8x128xf32>
    %867 = vector.shape_cast %864 : vector<8x128xf32> to vector<1x8x128xf32>
    tpu.vector_store %arg16[%c6, %c0_197, %c0_198], %867 {strides = array<i32>} : memref<8x8x128xf32, #tpu.memory_space<vmem>>, vector<1x8x128xf32>,
    %cst_199 = arith.constant dense<0xFF800000> : vector<8xf32>
    %868 = vector.multi_reduction <maximumf>, %864, %cst_199 [1] : vector<8x128xf32> to vector<8xf32>
    %869 = vector.shape_cast %868 : vector<8xf32> to vector<8x1xf32>
    %870 = vector.broadcast %869 : vector<8x1xf32> to vector<8x128xf32>
    %871 = arith.cmpf oeq, %864, %870 : vector<8x128xf32>
    %cst_200 = arith.constant 1.280000e+02 : f32
    %872 = vector.broadcast %cst_200 : f32 to vector<8x128xf32>
    %873 = arith.select %871, %512, %872 : vector<8x128xi1>, vector<8x128xf32>
    %cst_201 = arith.constant dense<0x7F800000> : vector<8xf32>
    %874 = vector.multi_reduction <minimumf>, %873, %cst_201 [1] : vector<8x128xf32> to vector<8xf32>
    %875 = vector.shape_cast %874 : vector<8xf32> to vector<8x1xf32>
    %876 = vector.broadcast %875 : vector<8x1xf32> to vector<8x128xf32>
    %877 = arith.cmpf oeq, %512, %876 : vector<8x128xf32>
    %878 = arith.extui %877 : vector<8x128xi1> to vector<8x128xi32>
    %879 = arith.sitofp %878 : vector<8x128xi32> to vector<8x128xf32>
    %cst_202 = arith.constant dense<0.000000e+00> : vector<8x32xf32>
    %880 = tpu.matmul %879, %510, %cst_202 {dimension_numbers = #tpu.dot_dimension_numbers<[1], [0], [0], [1], [0, 0, 1, 1], [], []>} : vector<8x128xf32>, vector<128x32xf32>, vector<8x32xf32> -> vector<8x32xf32>
    %c6_203 = arith.constant 6 : index
    %881 = memref.load %arg15[%c6_203] : memref<8xi32, #tpu.memory_space<smem>>
    %c0_i32_204 = arith.constant 0 : i32
    %882 = arith.cmpi sgt, %881, %c0_i32_204 : i32
    %883 = arith.extui %882 : i1 to i32
    %884 = arith.sitofp %883 : i32 to f32
    %c6_205 = arith.constant 6 : index
    %c0_206 = arith.constant 0 : index
    %c0_207 = arith.constant 0 : index
    %885 = vector.load %arg7[%c6_205, %c0_206, %c0_207] : memref<8x8x32xf32, #tpu.memory_space<vmem>>, vector<1x8x32xf32>
    %886 = vector.shape_cast %885 : vector<1x8x32xf32> to vector<8x32xf32>
    %887 = vector.broadcast %884 : f32 to vector<8x32xf32>
    %888 = arith.mulf %887, %886 : vector<8x32xf32>
    %cst_208 = arith.constant 1.000000e+00 : f32
    %889 = arith.subf %cst_208, %884 : f32
    %890 = vector.broadcast %889 : f32 to vector<8x32xf32>
    %891 = arith.mulf %890, %880 : vector<8x32xf32>
    %892 = arith.addf %888, %891 : vector<8x32xf32>
    %cst_209 = arith.constant dense<0.000000e+00> : vector<8x96xf32>
    %893 = tpu.matmul %892, %504, %cst_209 {dimension_numbers = #tpu.dot_dimension_numbers<[1], [0], [0], [1], [0, 0, 1, 1], [], []>} : vector<8x32xf32>, vector<32x96xf32>, vector<8x96xf32> -> vector<8x96xf32>
    %894 = vector.broadcast %506 : vector<1x96xf32> to vector<8x96xf32>
    %895 = arith.addf %893, %894 : vector<8x96xf32>
    %cst_210 = arith.constant dense<0.000000e+00> : vector<8x96xf32>
    %896 = tpu.matmul %861, %505, %cst_210 {dimension_numbers = #tpu.dot_dimension_numbers<[1], [0], [0], [1], [0, 0, 1, 1], [], []>} : vector<8x32xf32>, vector<32x96xf32>, vector<8x96xf32> -> vector<8x96xf32>
    %897 = vector.broadcast %507 : vector<1x96xf32> to vector<8x96xf32>
    %898 = arith.addf %896, %897 : vector<8x96xf32>
    %899 = vector.extract_strided_slice %895 {offsets = [0, 0], sizes = [8, 32], strides = [1, 1]} : vector<8x96xf32> to vector<8x32xf32>
    %900 = vector.extract_strided_slice %898 {offsets = [0, 0], sizes = [8, 32], strides = [1, 1]} : vector<8x96xf32> to vector<8x32xf32>
    %901 = arith.addf %899, %900 : vector<8x32xf32>
    %902 = arith.negf %901 : vector<8x32xf32>
    %903 = math.exp %902 : vector<8x32xf32>
    %cst_211 = arith.constant 1.000000e+00 : f32
    %904 = vector.broadcast %cst_211 : f32 to vector<8x32xf32>
    %905 = arith.addf %904, %903 : vector<8x32xf32>
    %906 = arith.divf %904, %905 : vector<8x32xf32>
    %907 = vector.extract_strided_slice %895 {offsets = [0, 32], sizes = [8, 32], strides = [1, 1]} : vector<8x96xf32> to vector<8x32xf32>
    %908 = vector.extract_strided_slice %898 {offsets = [0, 32], sizes = [8, 32], strides = [1, 1]} : vector<8x96xf32> to vector<8x32xf32>
    %909 = arith.addf %907, %908 : vector<8x32xf32>
    %910 = arith.negf %909 : vector<8x32xf32>
    %911 = math.exp %910 : vector<8x32xf32>
    %cst_212 = arith.constant 1.000000e+00 : f32
    %912 = vector.broadcast %cst_212 : f32 to vector<8x32xf32>
    %913 = arith.addf %912, %911 : vector<8x32xf32>
    %914 = arith.divf %912, %913 : vector<8x32xf32>
    %915 = vector.extract_strided_slice %895 {offsets = [0, 64], sizes = [8, 32], strides = [1, 1]} : vector<8x96xf32> to vector<8x32xf32>
    %916 = vector.extract_strided_slice %898 {offsets = [0, 64], sizes = [8, 32], strides = [1, 1]} : vector<8x96xf32> to vector<8x32xf32>
    %917 = arith.mulf %906, %916 : vector<8x32xf32>
    %918 = arith.addf %915, %917 : vector<8x32xf32>
    %919 = math.tanh %918 : vector<8x32xf32>
    %cst_213 = arith.constant 1.000000e+00 : f32
    %920 = vector.broadcast %cst_213 : f32 to vector<8x32xf32>
    %921 = arith.subf %920, %914 : vector<8x32xf32>
    %922 = arith.mulf %921, %919 : vector<8x32xf32>
    %923 = arith.mulf %914, %861 : vector<8x32xf32>
    %924 = arith.addf %922, %923 : vector<8x32xf32>
    %cst_214 = arith.constant dense<0.000000e+00> : vector<8x128xf32>
    %925 = tpu.matmul %924, %508, %cst_214 {dimension_numbers = #tpu.dot_dimension_numbers<[1], [0], [0], [1], [0, 0, 1, 1], [], []>} : vector<8x32xf32>, vector<32x128xf32>, vector<8x128xf32> -> vector<8x128xf32>
    %926 = vector.broadcast %509 : vector<1x128xf32> to vector<8x128xf32>
    %927 = arith.addf %925, %926 : vector<8x128xf32>
    %c7 = arith.constant 7 : index
    %c0_215 = arith.constant 0 : index
    %c0_216 = arith.constant 0 : index
    %928 = vector.load %arg16[%c7, %c0_215, %c0_216] : memref<8x8x128xf32, #tpu.memory_space<vmem>>, vector<1x8x128xf32>
    %929 = vector.shape_cast %928 : vector<1x8x128xf32> to vector<8x128xf32>
    %930 = vector.shape_cast %927 : vector<8x128xf32> to vector<1x8x128xf32>
    tpu.vector_store %arg16[%c7, %c0_215, %c0_216], %930 {strides = array<i32>} : memref<8x8x128xf32, #tpu.memory_space<vmem>>, vector<1x8x128xf32>,
    return
  }
}

</mosaic_0001>

<llo_original>
// kernel: _img2seq_forward.1
$region0: #{_img2seq_forward.1}
  #allocation0 [shape = 'u32[]', space=smem, size = 0x4, offset = 0x4, fixed_abs, tag = 'smem constant byte address 0x4 - core index']
  #allocation1 [shape = 'u32[144,128]{1,0:T(1,128)}', space=vmem, size = 0x12000, scoped, tag = 'internal scratch']
  %s0 = inlined_call_operand.vmem [shape: f32[2048,40], index: 0, kind: input, shape index: {}]
  %s1 = inlined_call_operand.vmem [shape: f32[40,32], index: 1, kind: input, shape index: {}]
  %s2 = inlined_call_operand.vmem [shape: f32[1,32], index: 2, kind: input, shape index: {}]
  %s3 = inlined_call_operand.vmem [shape: f32[32,96], index: 3, kind: input, shape index: {}]
  %s4 = inlined_call_operand.vmem [shape: f32[1,96], index: 4, kind: input, shape index: {}]
  %s5 = inlined_call_operand.vmem [shape: f32[32,96], index: 5, kind: input, shape index: {}]
  %s6 = inlined_call_operand.vmem [shape: f32[1,96], index: 6, kind: input, shape index: {}]
  %s7 = inlined_call_operand.vmem [shape: f32[8,8,32], index: 7, kind: input, shape index: {}]
  %s8 = inlined_call_operand.vmem [shape: f32[128,32], index: 8, kind: input, shape index: {}]
  %s9 = inlined_call_operand.vmem [shape: f32[32,96], index: 9, kind: input, shape index: {}]
  %s10 = inlined_call_operand.vmem [shape: f32[32,96], index: 10, kind: input, shape index: {}]
  %s11 = inlined_call_operand.vmem [shape: f32[1,96], index: 11, kind: input, shape index: {}]
  %s12 = inlined_call_operand.vmem [shape: f32[1,96], index: 12, kind: input, shape index: {}]
  %s13 = inlined_call_operand.vmem [shape: f32[32,128], index: 13, kind: input, shape index: {}]
  %s14 = inlined_call_operand.vmem [shape: f32[1,128], index: 14, kind: input, shape index: {}]
  %s15 = inlined_call_operand.vmem [shape: s32[8], index: 15, kind: input, shape index: {}]
  %s16 = inlined_call_operand.vmem [shape: f32[8,8,128], index: 16, kind: output, shape index: {}]
  %s17 = sld [smem:[#allocation0]]
  $region78: #{_img2seq_forward.1} parent=0
    _
  %s19 = ssub.s32 1, %s17
  %s20 = scalar_select 0, %s19, %s17
  $region1: #{_img2seq_forward.1} parent=0
    #allocation2 [shape = 'u8[512]{0}', space=smem, size = 0x200, scoped, tag = 'input window, operand 15, single buffered']
    #allocation3 [shape = 's32[1]{0}', space=sflag, size = 0x4, scoped, tag = 'scoped memory for _img2seq_forward.1']
    %21 = vsyncpa [#allocation3], 0
    // Predicated region
    $region2: #{_img2seq_forward.1} parent=1 // pred_check
      _
    $region3: #{_img2seq_forward.1} parent=1 // pred_check_branch
      %23 = sbr.rel (0) target = $region5
    $region4: #{_img2seq_forward.1} parent=1 // pred_region
      _
    $region5: #{_img2seq_forward.1} parent=1 // pred_fallthru
      _
    // Predicated region
    $region6: #{_img2seq_forward.1} parent=1 // pred_check
      _
    $region7: #{_img2seq_forward.1} parent=1 // pred_check_branch
      %25 = sbr.rel (0) target = $region9
    $region8: #{_img2seq_forward.1} parent=1 // pred_region
      _
    $region9: #{_img2seq_forward.1} parent=1 // pred_fallthru
      _
    // Predicated region
    $region10: #{_img2seq_forward.1} parent=1 // pred_check
      _
    $region11: #{_img2seq_forward.1} parent=1 // pred_check_branch
      %27 = sbr.rel (0) target = $region13
    $region12: #{_img2seq_forward.1} parent=1 // pred_region
      _
    $region13: #{_img2seq_forward.1} parent=1 // pred_fallthru
      _
    // Predicated region
    $region14: #{_img2seq_forward.1} parent=1 // pred_check
      _
    $region15: #{_img2seq_forward.1} parent=1 // pred_check_branch
      %29 = sbr.rel (0) target = $region17
    $region16: #{_img2seq_forward.1} parent=1 // pred_region
      _
    $region17: #{_img2seq_forward.1} parent=1 // pred_fallthru
      _
    // Predicated region
    $region18: #{_img2seq_forward.1} parent=1 // pred_check
      _
    $region19: #{_img2seq_forward.1} parent=1 // pred_check_branch
      %31 = sbr.rel (0) target = $region21
    $region20: #{_img2seq_forward.1} parent=1 // pred_region
      _
    $region21: #{_img2seq_forward.1} parent=1 // pred_fallthru
      _
    // Predicated region
    $region22: #{_img2seq_forward.1} parent=1 // pred_check
      _
    $region23: #{_img2seq_forward.1} parent=1 // pred_check_branch
      %33 = sbr.rel (0) target = $region25
    $region24: #{_img2seq_forward.1} parent=1 // pred_region
      _
    $region25: #{_img2seq_forward.1} parent=1 // pred_fallthru
      _
    // Predicated region
    $region26: #{_img2seq_forward.1} parent=1 // pred_check
      _
    $region27: #{_img2seq_forward.1} parent=1 // pred_check_branch
      %35 = sbr.rel (0) target = $region29
    $region28: #{_img2seq_forward.1} parent=1 // pred_region
      _
    $region29: #{_img2seq_forward.1} parent=1 // pred_fallthru
      _
    // Predicated region
    $region30: #{_img2seq_forward.1} parent=1 // pred_check
      _
    $region31: #{_img2seq_forward.1} parent=1 // pred_check_branch
      %37 = sbr.rel (0) target = $region33
    $region32: #{_img2seq_forward.1} parent=1 // pred_region
      _
    $region33: #{_img2seq_forward.1} parent=1 // pred_fallthru
      _
    // Predicated region
    $region34: #{_img2seq_forward.1} parent=1 // pred_check
      _
    $region35: #{_img2seq_forward.1} parent=1 // pred_check_branch
      %39 = sbr.rel (0) target = $region37
    $region36: #{_img2seq_forward.1} parent=1 // pred_region
      _
    $region37: #{_img2seq_forward.1} parent=1 // pred_fallthru
      _
    // Predicated region
    $region38: #{_img2seq_forward.1} parent=1 // pred_check
      _
    $region39: #{_img2seq_forward.1} parent=1 // pred_check_branch
      %41 = sbr.rel (0) target = $region41
    $region40: #{_img2seq_forward.1} parent=1 // pred_region
      _
    $region41: #{_img2seq_forward.1} parent=1 // pred_fallthru
      _
    // Predicated region
    $region42: #{_img2seq_forward.1} parent=1 // pred_check
      _
    $region43: #{_img2seq_forward.1} parent=1 // pred_check_branch
      %43 = sbr.rel (0) target = $region45
    $region44: #{_img2seq_forward.1} parent=1 // pred_region
      _
    $region45: #{_img2seq_forward.1} parent=1 // pred_fallthru
      _
    // Predicated region
    $region46: #{_img2seq_forward.1} parent=1 // pred_check
      _
    $region47: #{_img2seq_forward.1} parent=1 // pred_check_branch
      %45 = sbr.rel (0) target = $region49
    $region48: #{_img2seq_forward.1} parent=1 // pred_region
      _
    $region49: #{_img2seq_forward.1} parent=1 // pred_fallthru
      _
    // Predicated region
    $region50: #{_img2seq_forward.1} parent=1 // pred_check
      _
    $region51: #{_img2seq_forward.1} parent=1 // pred_check_branch
      %47 = sbr.rel (0) target = $region53
    $region52: #{_img2seq_forward.1} parent=1 // pred_region
      _
    $region53: #{_img2seq_forward.1} parent=1 // pred_fallthru
      _
    // Predicated region
    $region54: #{_img2seq_forward.1} parent=1 // pred_check
      _
    $region55: #{_img2seq_forward.1} parent=1 // pred_check_branch
      %49 = sbr.rel (0) target = $region57
    $region56: #{_img2seq_forward.1} parent=1 // pred_region
      _
    $region57: #{_img2seq_forward.1} parent=1 // pred_fallthru
      _
    // Predicated region
    $region58: #{_img2seq_forward.1} parent=1 // pred_check
      _
    $region59: #{_img2seq_forward.1} parent=1 // pred_check_branch
      %51 = sbr.rel (0) target = $region61
    $region60: #{_img2seq_forward.1} parent=1 // pred_region
      _
    $region61: #{_img2seq_forward.1} parent=1 // pred_fallthru
      _
    // Predicated region
    $region62: #{_img2seq_forward.1} parent=1 // pred_check
      _
    $region63: #{_img2seq_forward.1} parent=1 // pred_check_branch
      %53 = sbr.rel (0) target = $region65
    $region64: #{_img2seq_forward.1} parent=1 // pred_region
      %s55 = ssub.s32 16, 16
      %56 = vsyncadd [#allocation3], %s55
      %s58 = sshll.u32 %s15, 4
      %s59 = int_to_ptr.vmem [resolvable:$true] %s58
      %61 = dma.vmem_to_smem %s59, 16, [#allocation2], [#allocation3]
    $region65: #{_img2seq_forward.1} parent=1 // pred_fallthru
      _
    // Predicated region
    $region66: #{_img2seq_forward.1} parent=1 // pred_check
      _
    $region67: #{_img2seq_forward.1} parent=1 // pred_check_branch
      %63 = sbr.rel (0) target = $region69
    $region68: #{_img2seq_forward.1} parent=1 // pred_region
      %64 = dma.done [#allocation3], 16
    $region69: #{_img2seq_forward.1} parent=1 // pred_fallthru
      _
    %65 = sfence
    %v66 = vld [vmem:[%s0] sm:$0xff]
    %v67 = vld [vmem:[%s0 + $0x8] sm:$0xff]
    %v68 = vld [vmem:[%s0 + $0x10] sm:$0xff]
    %v69 = vld [vmem:[%s0 + $0x18] sm:$0xff]
    %v70 = vld [vmem:[%s0 + $0x20] sm:$0xff]
    %v71 = vld [vmem:[%s0 + $0x28] sm:$0xff]
    %v72 = vld [vmem:[%s0 + $0x30] sm:$0xff]
    %v73 = vld [vmem:[%s0 + $0x38] sm:$0xff]
    %v74 = vld [vmem:[%s0 + $0x40] sm:$0xff]
    %v75 = vld [vmem:[%s0 + $0x48] sm:$0xff]
    %v76 = vld [vmem:[%s0 + $0x50] sm:$0xff]
    %v77 = vld [vmem:[%s0 + $0x58] sm:$0xff]
    %v78 = vld [vmem:[%s0 + $0x60] sm:$0xff]
    %v79 = vld [vmem:[%s0 + $0x68] sm:$0xff]
    %v80 = vld [vmem:[%s0 + $0x70] sm:$0xff]
    %v81 = vld [vmem:[%s0 + $0x78] sm:$0xff]
    %v82 = vld [vmem:[%s0 + $0x80] sm:$0xff]
    %v83 = vld [vmem:[%s0 + $0x88] sm:$0xff]
    %v84 = vld [vmem:[%s0 + $0x90] sm:$0xff]
    %v85 = vld [vmem:[%s0 + $0x98] sm:$0xff]
    %v86 = vld [vmem:[%s0 + $0xa0] sm:$0xff]
    %v87 = vld [vmem:[%s0 + $0xa8] sm:$0xff]
    %v88 = vld [vmem:[%s0 + $0xb0] sm:$0xff]
    %v89 = vld [vmem:[%s0 + $0xb8] sm:$0xff]
    %v90 = vld [vmem:[%s0 + $0xc0] sm:$0xff]
    %v91 = vld [vmem:[%s0 + $0xc8] sm:$0xff]
    %v92 = vld [vmem:[%s0 + $0xd0] sm:$0xff]
    %v93 = vld [vmem:[%s0 + $0xd8] sm:$0xff]
    %v94 = vld [vmem:[%s0 + $0xe0] sm:$0xff]
    %v95 = vld [vmem:[%s0 + $0xe8] sm:$0xff]
    %v96 = vld [vmem:[%s0 + $0xf0] sm:$0xff]
    %v97 = vld [vmem:[%s0 + $0xf8] sm:$0xff]
    %v98 = vld [vmem:[%s0 + $0x100] sm:$0xff]
    %v99 = vld [vmem:[%s0 + $0x108] sm:$0xff]
    %v100 = vld [vmem:[%s0 + $0x110] sm:$0xff]
    %v101 = vld [vmem:[%s0 + $0x118] sm:$0xff]
    %v102 = vld [vmem:[%s0 + $0x120] sm:$0xff]
    %v103 = vld [vmem:[%s0 + $0x128] sm:$0xff]
    %v104 = vld [vmem:[%s0 + $0x130] sm:$0xff]
    %v105 = vld [vmem:[%s0 + $0x138] sm:$0xff]
    %v106 = vld [vmem:[%s0 + $0x140] sm:$0xff]
    %v107 = vld [vmem:[%s0 + $0x148] sm:$0xff]
    %v108 = vld [vmem:[%s0 + $0x150] sm:$0xff]
    %v109 = vld [vmem:[%s0 + $0x158] sm:$0xff]
    %v110 = vld [vmem:[%s0 + $0x160] sm:$0xff]
    %v111 = vld [vmem:[%s0 + $0x168] sm:$0xff]
    %v112 = vld [vmem:[%s0 + $0x170] sm:$0xff]
    %v113 = vld [vmem:[%s0 + $0x178] sm:$0xff]
    %v114 = vld [vmem:[%s0 + $0x180] sm:$0xff]
    %v115 = vld [vmem:[%s0 + $0x188] sm:$0xff]
    %v116 = vld [vmem:[%s0 + $0x190] sm:$0xff]
    %v117 = vld [vmem:[%s0 + $0x198] sm:$0xff]
    %v118 = vld [vmem:[%s0 + $0x1a0] sm:$0xff]
    %v119 = vld [vmem:[%s0 + $0x1a8] sm:$0xff]
    %v120 = vld [vmem:[%s0 + $0x1b0] sm:$0xff]
    %v121 = vld [vmem:[%s0 + $0x1b8] sm:$0xff]
    %v122 = vld [vmem:[%s0 + $0x1c0] sm:$0xff]
    %v123 = vld [vmem:[%s0 + $0x1c8] sm:$0xff]
    %v124 = vld [vmem:[%s0 + $0x1d0] sm:$0xff]
    %v125 = vld [vmem:[%s0 + $0x1d8] sm:$0xff]
    %v126 = vld [vmem:[%s0 + $0x1e0] sm:$0xff]
    %v127 = vld [vmem:[%s0 + $0x1e8] sm:$0xff]
    %v128 = vld [vmem:[%s0 + $0x1f0] sm:$0xff]
    %v129 = vld [vmem:[%s0 + $0x1f8] sm:$0xff]
    %v130 = vld [vmem:[%s0 + $0x200] sm:$0xff]
    %v131 = vld [vmem:[%s0 + $0x208] sm:$0xff]
    %v132 = vld [vmem:[%s0 + $0x210] sm:$0xff]
    %v133 = vld [vmem:[%s0 + $0x218] sm:$0xff]
    %v134 = vld [vmem:[%s0 + $0x220] sm:$0xff]
    %v135 = vld [vmem:[%s0 + $0x228] sm:$0xff]
    %v136 = vld [vmem:[%s0 + $0x230] sm:$0xff]
    %v137 = vld [vmem:[%s0 + $0x238] sm:$0xff]
    %v138 = vld [vmem:[%s0 + $0x240] sm:$0xff]
    %v139 = vld [vmem:[%s0 + $0x248] sm:$0xff]
    %v140 = vld [vmem:[%s0 + $0x250] sm:$0xff]
    %v141 = vld [vmem:[%s0 + $0x258] sm:$0xff]
    %v142 = vld [vmem:[%s0 + $0x260] sm:$0xff]
    %v143 = vld [vmem:[%s0 + $0x268] sm:$0xff]
    %v144 = vld [vmem:[%s0 + $0x270] sm:$0xff]
    %v145 = vld [vmem:[%s0 + $0x278] sm:$0xff]
    %v146 = vld [vmem:[%s0 + $0x280] sm:$0xff]
    %v147 = vld [vmem:[%s0 + $0x288] sm:$0xff]
    %v148 = vld [vmem:[%s0 + $0x290] sm:$0xff]
    %v149 = vld [vmem:[%s0 + $0x298] sm:$0xff]
    %v150 = vld [vmem:[%s0 + $0x2a0] sm:$0xff]
    %v151 = vld [vmem:[%s0 + $0x2a8] sm:$0xff]
    %v152 = vld [vmem:[%s0 + $0x2b0] sm:$0xff]
    %v153 = vld [vmem:[%s0 + $0x2b8] sm:$0xff]
    %v154 = vld [vmem:[%s0 + $0x2c0] sm:$0xff]
    %v155 = vld [vmem:[%s0 + $0x2c8] sm:$0xff]
    %v156 = vld [vmem:[%s0 + $0x2d0] sm:$0xff]
    %v157 = vld [vmem:[%s0 + $0x2d8] sm:$0xff]
    %v158 = vld [vmem:[%s0 + $0x2e0] sm:$0xff]
    %v159 = vld [vmem:[%s0 + $0x2e8] sm:$0xff]
    %v160 = vld [vmem:[%s0 + $0x2f0] sm:$0xff]
    %v161 = vld [vmem:[%s0 + $0x2f8] sm:$0xff]
    %v162 = vld [vmem:[%s0 + $0x300] sm:$0xff]
    %v163 = vld [vmem:[%s0 + $0x308] sm:$0xff]
    %v164 = vld [vmem:[%s0 + $0x310] sm:$0xff]
    %v165 = vld [vmem:[%s0 + $0x318] sm:$0xff]
    %v166 = vld [vmem:[%s0 + $0x320] sm:$0xff]
    %v167 = vld [vmem:[%s0 + $0x328] sm:$0xff]
    %v168 = vld [vmem:[%s0 + $0x330] sm:$0xff]
    %v169 = vld [vmem:[%s0 + $0x338] sm:$0xff]
    %v170 = vld [vmem:[%s0 + $0x340] sm:$0xff]
    %v171 = vld [vmem:[%s0 + $0x348] sm:$0xff]
    %v172 = vld [vmem:[%s0 + $0x350] sm:$0xff]
    %v173 = vld [vmem:[%s0 + $0x358] sm:$0xff]
    %v174 = vld [vmem:[%s0 + $0x360] sm:$0xff]
    %v175 = vld [vmem:[%s0 + $0x368] sm:$0xff]
    %v176 = vld [vmem:[%s0 + $0x370] sm:$0xff]
    %v177 = vld [vmem:[%s0 + $0x378] sm:$0xff]
    %v178 = vld [vmem:[%s0 + $0x380] sm:$0xff]
    %v179 = vld [vmem:[%s0 + $0x388] sm:$0xff]
    %v180 = vld [vmem:[%s0 + $0x390] sm:$0xff]
    %v181 = vld [vmem:[%s0 + $0x398] sm:$0xff]
    %v182 = vld [vmem:[%s0 + $0x3a0] sm:$0xff]
    %v183 = vld [vmem:[%s0 + $0x3a8] sm:$0xff]
    %v184 = vld [vmem:[%s0 + $0x3b0] sm:$0xff]
    %v185 = vld [vmem:[%s0 + $0x3b8] sm:$0xff]
    %v186 = vld [vmem:[%s0 + $0x3c0] sm:$0xff]
    %v187 = vld [vmem:[%s0 + $0x3c8] sm:$0xff]
    %v188 = vld [vmem:[%s0 + $0x3d0] sm:$0xff]
    %v189 = vld [vmem:[%s0 + $0x3d8] sm:$0xff]
    %v190 = vld [vmem:[%s0 + $0x3e0] sm:$0xff]
    %v191 = vld [vmem:[%s0 + $0x3e8] sm:$0xff]
    %v192 = vld [vmem:[%s0 + $0x3f0] sm:$0xff]
    %v193 = vld [vmem:[%s0 + $0x3f8] sm:$0xff]
    %v194 = vld [vmem:[%s0 + $0x400] sm:$0xff]
    %v195 = vld [vmem:[%s0 + $0x408] sm:$0xff]
    %v196 = vld [vmem:[%s0 + $0x410] sm:$0xff]
    %v197 = vld [vmem:[%s0 + $0x418] sm:$0xff]
    %v198 = vld [vmem:[%s0 + $0x420] sm:$0xff]
    %v199 = vld [vmem:[%s0 + $0x428] sm:$0xff]
    %v200 = vld [vmem:[%s0 + $0x430] sm:$0xff]
    %v201 = vld [vmem:[%s0 + $0x438] sm:$0xff]
    %v202 = vld [vmem:[%s0 + $0x440] sm:$0xff]
    %v203 = vld [vmem:[%s0 + $0x448] sm:$0xff]
    %v204 = vld [vmem:[%s0 + $0x450] sm:$0xff]
    %v205 = vld [vmem:[%s0 + $0x458] sm:$0xff]
    %v206 = vld [vmem:[%s0 + $0x460] sm:$0xff]
    %v207 = vld [vmem:[%s0 + $0x468] sm:$0xff]
    %v208 = vld [vmem:[%s0 + $0x470] sm:$0xff]
    %v209 = vld [vmem:[%s0 + $0x478] sm:$0xff]
    %v210 = vld [vmem:[%s0 + $0x480] sm:$0xff]
    %v211 = vld [vmem:[%s0 + $0x488] sm:$0xff]
    %v212 = vld [vmem:[%s0 + $0x490] sm:$0xff]
    %v213 = vld [vmem:[%s0 + $0x498] sm:$0xff]
    %v214 = vld [vmem:[%s0 + $0x4a0] sm:$0xff]
    %v215 = vld [vmem:[%s0 + $0x4a8] sm:$0xff]
    %v216 = vld [vmem:[%s0 + $0x4b0] sm:$0xff]
    %v217 = vld [vmem:[%s0 + $0x4b8] sm:$0xff]
    %v218 = vld [vmem:[%s0 + $0x4c0] sm:$0xff]
    %v219 = vld [vmem:[%s0 + $0x4c8] sm:$0xff]
    %v220 = vld [vmem:[%s0 + $0x4d0] sm:$0xff]
    %v221 = vld [vmem:[%s0 + $0x4d8] sm:$0xff]
    %v222 = vld [vmem:[%s0 + $0x4e0] sm:$0xff]
    %v223 = vld [vmem:[%s0 + $0x4e8] sm:$0xff]
    %v224 = vld [vmem:[%s0 + $0x4f0] sm:$0xff]
    %v225 = vld [vmem:[%s0 + $0x4f8] sm:$0xff]
    %v226 = vld [vmem:[%s0 + $0x500] sm:$0xff]
    %v227 = vld [vmem:[%s0 + $0x508] sm:$0xff]
    %v228 = vld [vmem:[%s0 + $0x510] sm:$0xff]
    %v229 = vld [vmem:[%s0 + $0x518] sm:$0xff]
    %v230 = vld [vmem:[%s0 + $0x520] sm:$0xff]
    %v231 = vld [vmem:[%s0 + $0x528] sm:$0xff]
    %v232 = vld [vmem:[%s0 + $0x530] sm:$0xff]
    %v233 = vld [vmem:[%s0 + $0x538] sm:$0xff]
    %v234 = vld [vmem:[%s0 + $0x540] sm:$0xff]
    %v235 = vld [vmem:[%s0 + $0x548] sm:$0xff]
    %v236 = vld [vmem:[%s0 + $0x550] sm:$0xff]
    %v237 = vld [vmem:[%s0 + $0x558] sm:$0xff]
    %v238 = vld [vmem:[%s0 + $0x560] sm:$0xff]
    %v239 = vld [vmem:[%s0 + $0x568] sm:$0xff]
    %v240 = vld [vmem:[%s0 + $0x570] sm:$0xff]
    %v241 = vld [vmem:[%s0 + $0x578] sm:$0xff]
    %v242 = vld [vmem:[%s0 + $0x580] sm:$0xff]
    %v243 = vld [vmem:[%s0 + $0x588] sm:$0xff]
    %v244 = vld [vmem:[%s0 + $0x590] sm:$0xff]
    %v245 = vld [vmem:[%s0 + $0x598] sm:$0xff]
    %v246 = vld [vmem:[%s0 + $0x5a0] sm:$0xff]
    %v247 = vld [vmem:[%s0 + $0x5a8] sm:$0xff]
    %v248 = vld [vmem:[%s0 + $0x5b0] sm:$0xff]
    %v249 = vld [vmem:[%s0 + $0x5b8] sm:$0xff]
    %v250 = vld [vmem:[%s0 + $0x5c0] sm:$0xff]
    %v251 = vld [vmem:[%s0 + $0x5c8] sm:$0xff]
    %v252 = vld [vmem:[%s0 + $0x5d0] sm:$0xff]
    %v253 = vld [vmem:[%s0 + $0x5d8] sm:$0xff]
    %v254 = vld [vmem:[%s0 + $0x5e0] sm:$0xff]
    %v255 = vld [vmem:[%s0 + $0x5e8] sm:$0xff]
    %v256 = vld [vmem:[%s0 + $0x5f0] sm:$0xff]
    %v257 = vld [vmem:[%s0 + $0x5f8] sm:$0xff]
    %v258 = vld [vmem:[%s0 + $0x600] sm:$0xff]
    %v259 = vld [vmem:[%s0 + $0x608] sm:$0xff]
    %v260 = vld [vmem:[%s0 + $0x610] sm:$0xff]
    %v261 = vld [vmem:[%s0 + $0x618] sm:$0xff]
    %v262 = vld [vmem:[%s0 + $0x620] sm:$0xff]
    %v263 = vld [vmem:[%s0 + $0x628] sm:$0xff]
    %v264 = vld [vmem:[%s0 + $0x630] sm:$0xff]
    %v265 = vld [vmem:[%s0 + $0x638] sm:$0xff]
    %v266 = vld [vmem:[%s0 + $0x640] sm:$0xff]
    %v267 = vld [vmem:[%s0 + $0x648] sm:$0xff]
    %v268 = vld [vmem:[%s0 + $0x650] sm:$0xff]
    %v269 = vld [vmem:[%s0 + $0x658] sm:$0xff]
    %v270 = vld [vmem:[%s0 + $0x660] sm:$0xff]
    %v271 = vld [vmem:[%s0 + $0x668] sm:$0xff]
    %v272 = vld [vmem:[%s0 + $0x670] sm:$0xff]
    %v273 = vld [vmem:[%s0 + $0x678] sm:$0xff]
    %v274 = vld [vmem:[%s0 + $0x680] sm:$0xff]
    %v275 = vld [vmem:[%s0 + $0x688] sm:$0xff]
    %v276 = vld [vmem:[%s0 + $0x690] sm:$0xff]
    %v277 = vld [vmem:[%s0 + $0x698] sm:$0xff]
    %v278 = vld [vmem:[%s0 + $0x6a0] sm:$0xff]
    %v279 = vld [vmem:[%s0 + $0x6a8] sm:$0xff]
    %v280 = vld [vmem:[%s0 + $0x6b0] sm:$0xff]
    %v281 = vld [vmem:[%s0 + $0x6b8] sm:$0xff]
    %v282 = vld [vmem:[%s0 + $0x6c0] sm:$0xff]
    %v283 = vld [vmem:[%s0 + $0x6c8] sm:$0xff]
    %v284 = vld [vmem:[%s0 + $0x6d0] sm:$0xff]
    %v285 = vld [vmem:[%s0 + $0x6d8] sm:$0xff]
    %v286 = vld [vmem:[%s0 + $0x6e0] sm:$0xff]
    %v287 = vld [vmem:[%s0 + $0x6e8] sm:$0xff]
    %v288 = vld [vmem:[%s0 + $0x6f0] sm:$0xff]
    %v289 = vld [vmem:[%s0 + $0x6f8] sm:$0xff]
    %v290 = vld [vmem:[%s0 + $0x700] sm:$0xff]
    %v291 = vld [vmem:[%s0 + $0x708] sm:$0xff]
    %v292 = vld [vmem:[%s0 + $0x710] sm:$0xff]
    %v293 = vld [vmem:[%s0 + $0x718] sm:$0xff]
    %v294 = vld [vmem:[%s0 + $0x720] sm:$0xff]
    %v295 = vld [vmem:[%s0 + $0x728] sm:$0xff]
    %v296 = vld [vmem:[%s0 + $0x730] sm:$0xff]
    %v297 = vld [vmem:[%s0 + $0x738] sm:$0xff]
    %v298 = vld [vmem:[%s0 + $0x740] sm:$0xff]
    %v299 = vld [vmem:[%s0 + $0x748] sm:$0xff]
    %v300 = vld [vmem:[%s0 + $0x750] sm:$0xff]
    %v301 = vld [vmem:[%s0 + $0x758] sm:$0xff]
    %v302 = vld [vmem:[%s0 + $0x760] sm:$0xff]
    %v303 = vld [vmem:[%s0 + $0x768] sm:$0xff]
    %v304 = vld [vmem:[%s0 + $0x770] sm:$0xff]
    %v305 = vld [vmem:[%s0 + $0x778] sm:$0xff]
    %v306 = vld [vmem:[%s0 + $0x780] sm:$0xff]
    %v307 = vld [vmem:[%s0 + $0x788] sm:$0xff]
    %v308 = vld [vmem:[%s0 + $0x790] sm:$0xff]
    %v309 = vld [vmem:[%s0 + $0x798] sm:$0xff]
    %v310 = vld [vmem:[%s0 + $0x7a0] sm:$0xff]
    %v311 = vld [vmem:[%s0 + $0x7a8] sm:$0xff]
    %v312 = vld [vmem:[%s0 + $0x7b0] sm:$0xff]
    %v313 = vld [vmem:[%s0 + $0x7b8] sm:$0xff]
    %v314 = vld [vmem:[%s0 + $0x7c0] sm:$0xff]
    %v315 = vld [vmem:[%s0 + $0x7c8] sm:$0xff]
    %v316 = vld [vmem:[%s0 + $0x7d0] sm:$0xff]
    %v317 = vld [vmem:[%s0 + $0x7d8] sm:$0xff]
    %v318 = vld [vmem:[%s0 + $0x7e0] sm:$0xff]
    %v319 = vld [vmem:[%s0 + $0x7e8] sm:$0xff]
    %v320 = vld [vmem:[%s0 + $0x7f0] sm:$0xff]
    %v321 = vld [vmem:[%s0 + $0x7f8] sm:$0xff]
    %v322 = vld [vmem:[%s1] sm:$0xff]
    %v323 = vld [vmem:[%s1 + $0x8] sm:$0xff]
    %v324 = vld [vmem:[%s1 + $0x10] sm:$0xff]
    %v325 = vld [vmem:[%s1 + $0x18] sm:$0xff]
    %v326 = vld [vmem:[%s1 + $0x20] sm:$0xff]
    %v327 = vld [vmem:[%s2] sm:$0x1]
    %v329 = vlaneseq
    %v330 = vshrl.u32 %v329, 7
    %v331 = vsub.s32 0, %v330
    %v332 = vrot.slane %v327, %v331
    %vm334 = vcmask 326656
    %v336 = vsel %vm334, %v66, 0
    %v339 = vsel %vm334, %v67, 0
    %v342 = vsel %vm334, %v68, 0
    %v345 = vsel %vm334, %v69, 0
    %v348 = vsel %vm334, %v70, 0
    %v351 = vsel %vm334, %v71, 0
    %v354 = vsel %vm334, %v72, 0
    %v357 = vsel %vm334, %v73, 0
    %v360 = vsel %vm334, %v74, 0
    %v363 = vsel %vm334, %v75, 0
    %v366 = vsel %vm334, %v76, 0
    %v369 = vsel %vm334, %v77, 0
    %v372 = vsel %vm334, %v78, 0
    %v375 = vsel %vm334, %v79, 0
    %v378 = vsel %vm334, %v80, 0
    %v381 = vsel %vm334, %v81, 0
    %v384 = vsel %vm334, %v82, 0
    %v387 = vsel %vm334, %v83, 0
    %v390 = vsel %vm334, %v84, 0
    %v393 = vsel %vm334, %v85, 0
    %v396 = vsel %vm334, %v86, 0
    %v399 = vsel %vm334, %v87, 0
    %v402 = vsel %vm334, %v88, 0
    %v405 = vsel %vm334, %v89, 0
    %v408 = vsel %vm334, %v90, 0
    %v411 = vsel %vm334, %v91, 0
    %v414 = vsel %vm334, %v92, 0
    %v417 = vsel %vm334, %v93, 0
    %v420 = vsel %vm334, %v94, 0
    %v423 = vsel %vm334, %v95, 0
    %v426 = vsel %vm334, %v96, 0
    %v429 = vsel %vm334, %v97, 0
    %v432 = vsel %vm334, %v98, 0
    %v435 = vsel %vm334, %v99, 0
    %v438 = vsel %vm334, %v100, 0
    %v441 = vsel %vm334, %v101, 0
    %v444 = vsel %vm334, %v102, 0
    %v447 = vsel %vm334, %v103, 0
    %v450 = vsel %vm334, %v104, 0
    %v453 = vsel %vm334, %v105, 0
    %v456 = vsel %vm334, %v106, 0
    %v459 = vsel %vm334, %v107, 0
    %v462 = vsel %vm334, %v108, 0
    %v465 = vsel %vm334, %v109, 0
    %v468 = vsel %vm334, %v110, 0
    %v471 = vsel %vm334, %v111, 0
    %v474 = vsel %vm334, %v112, 0
    %v477 = vsel %vm334, %v113, 0
    %v480 = vsel %vm334, %v114, 0
    %v483 = vsel %vm334, %v115, 0
    %v486 = vsel %vm334, %v116, 0
    %v489 = vsel %vm334, %v117, 0
    %v492 = vsel %vm334, %v118, 0
    %v495 = vsel %vm334, %v119, 0
    %v498 = vsel %vm334, %v120, 0
    %v501 = vsel %vm334, %v121, 0
    %v504 = vsel %vm334, %v122, 0
    %v507 = vsel %vm334, %v123, 0
    %v510 = vsel %vm334, %v124, 0
    %v513 = vsel %vm334, %v125, 0
    %v516 = vsel %vm334, %v126, 0
    %v519 = vsel %vm334, %v127, 0
    %v522 = vsel %vm334, %v128, 0
    %v525 = vsel %vm334, %v129, 0
    %v528 = vsel %vm334, %v130, 0
    %v531 = vsel %vm334, %v131, 0
    %v534 = vsel %vm334, %v132, 0
    %v537 = vsel %vm334, %v133, 0
    %v540 = vsel %vm334, %v134, 0
    %v543 = vsel %vm334, %v135, 0
    %v546 = vsel %vm334, %v136, 0
    %v549 = vsel %vm334, %v137, 0
    %v552 = vsel %vm334, %v138, 0
    %v555 = vsel %vm334, %v139, 0
    %v558 = vsel %vm334, %v140, 0
    %v561 = vsel %vm334, %v141, 0
    %v564 = vsel %vm334, %v142, 0
    %v567 = vsel %vm334, %v143, 0
    %v570 = vsel %vm334, %v144, 0
    %v573 = vsel %vm334, %v145, 0
    %v576 = vsel %vm334, %v146, 0
    %v579 = vsel %vm334, %v147, 0
    %v582 = vsel %vm334, %v148, 0
    %v585 = vsel %vm334, %v149, 0
    %v588 = vsel %vm334, %v150, 0
    %v591 = vsel %vm334, %v151, 0
    %v594 = vsel %vm334, %v152, 0
    %v597 = vsel %vm334, %v153, 0
    %v600 = vsel %vm334, %v154, 0
    %v603 = vsel %vm334, %v155, 0
    %v606 = vsel %vm334, %v156, 0
    %v609 = vsel %vm334, %v157, 0
    %v612 = vsel %vm334, %v158, 0
    %v615 = vsel %vm334, %v159, 0
    %v618 = vsel %vm334, %v160, 0
    %v621 = vsel %vm334, %v161, 0
    %v624 = vsel %vm334, %v162, 0
    %v627 = vsel %vm334, %v163, 0
    %v630 = vsel %vm334, %v164, 0
    %v633 = vsel %vm334, %v165, 0
    %v636 = vsel %vm334, %v166, 0
    %v639 = vsel %vm334, %v167, 0
    %v642 = vsel %vm334, %v168, 0
    %v645 = vsel %vm334, %v169, 0
    %v648 = vsel %vm334, %v170, 0
    %v651 = vsel %vm334, %v171, 0
    %v654 = vsel %vm334, %v172, 0
    %v657 = vsel %vm334, %v173, 0
    %v660 = vsel %vm334, %v174, 0
    %v663 = vsel %vm334, %v175, 0
    %v666 = vsel %vm334, %v176, 0
    %v669 = vsel %vm334, %v177, 0
    %v672 = vsel %vm334, %v178, 0
    %v675 = vsel %vm334, %v179, 0
    %v678 = vsel %vm334, %v180, 0
    %v681 = vsel %vm334, %v181, 0
    %v684 = vsel %vm334, %v182, 0
    %v687 = vsel %vm334, %v183, 0
    %v690 = vsel %vm334, %v184, 0
    %v693 = vsel %vm334, %v185, 0
    %v696 = vsel %vm334, %v186, 0
    %v699 = vsel %vm334, %v187, 0
    %v702 = vsel %vm334, %v188, 0
    %v705 = vsel %vm334, %v189, 0
    %v708 = vsel %vm334, %v190, 0
    %v711 = vsel %vm334, %v191, 0
    %v714 = vsel %vm334, %v192, 0
    %v717 = vsel %vm334, %v193, 0
    %v720 = vsel %vm334, %v194, 0
    %v723 = vsel %vm334, %v195, 0
    %v726 = vsel %vm334, %v196, 0
    %v729 = vsel %vm334, %v197, 0
    %v732 = vsel %vm334, %v198, 0
    %v735 = vsel %vm334, %v199, 0
    %v738 = vsel %vm334, %v200, 0
    %v741 = vsel %vm334, %v201, 0
    %v744 = vsel %vm334, %v202, 0
    %v747 = vsel %vm334, %v203, 0
    %v750 = vsel %vm334, %v204, 0
    %v753 = vsel %vm334, %v205, 0
    %v756 = vsel %vm334, %v206, 0
    %v759 = vsel %vm334, %v207, 0
    %v762 = vsel %vm334, %v208, 0
    %v765 = vsel %vm334, %v209, 0
    %v768 = vsel %vm334, %v210, 0
    %v771 = vsel %vm334, %v211, 0
    %v774 = vsel %vm334, %v212, 0
    %v777 = vsel %vm334, %v213, 0
    %v780 = vsel %vm334, %v214, 0
    %v783 = vsel %vm334, %v215, 0
    %v786 = vsel %vm334, %v216, 0
    %v789 = vsel %vm334, %v217, 0
    %v792 = vsel %vm334, %v218, 0
    %v795 = vsel %vm334, %v219, 0
    %v798 = vsel %vm334, %v220, 0
    %v801 = vsel %vm334, %v221, 0
    %v804 = vsel %vm334, %v222, 0
    %v807 = vsel %vm334, %v223, 0
    %v810 = vsel %vm334, %v224, 0
    %v813 = vsel %vm334, %v225, 0
    %v816 = vsel %vm334, %v226, 0
    %v819 = vsel %vm334, %v227, 0
    %v822 = vsel %vm334, %v228, 0
    %v825 = vsel %vm334, %v229, 0
    %v828 = vsel %vm334, %v230, 0
    %v831 = vsel %vm334, %v231, 0
    %v834 = vsel %vm334, %v232, 0
    %v837 = vsel %vm334, %v233, 0
    %v840 = vsel %vm334, %v234, 0
    %v843 = vsel %vm334, %v235, 0
    %v846 = vsel %vm334, %v236, 0
    %v849 = vsel %vm334, %v237, 0
    %v852 = vsel %vm334, %v238, 0
    %v855 = vsel %vm334, %v239, 0
    %v858 = vsel %vm334, %v240, 0
    %v861 = vsel %vm334, %v241, 0
    %v864 = vsel %vm334, %v242, 0
    %v867 = vsel %vm334, %v243, 0
    %v870 = vsel %vm334, %v244, 0
    %v873 = vsel %vm334, %v245, 0
    %v876 = vsel %vm334, %v246, 0
    %v879 = vsel %vm334, %v247, 0
    %v882 = vsel %vm334, %v248, 0
    %v885 = vsel %vm334, %v249, 0
    %v888 = vsel %vm334, %v250, 0
    %v891 = vsel %vm334, %v251, 0
    %v894 = vsel %vm334, %v252, 0
    %v897 = vsel %vm334, %v253, 0
    %v900 = vsel %vm334, %v254, 0
    %v903 = vsel %vm334, %v255, 0
    %v906 = vsel %vm334, %v256, 0
    %v909 = vsel %vm334, %v257, 0
    %v912 = vsel %vm334, %v258, 0
    %v915 = vsel %vm334, %v259, 0
    %v918 = vsel %vm334, %v260, 0
    %v921 = vsel %vm334, %v261, 0
    %v924 = vsel %vm334, %v262, 0
    %v927 = vsel %vm334, %v263, 0
    %v930 = vsel %vm334, %v264, 0
    %v933 = vsel %vm334, %v265, 0
    %v936 = vsel %vm334, %v266, 0
    %v939 = vsel %vm334, %v267, 0
    %v942 = vsel %vm334, %v268, 0
    %v945 = vsel %vm334, %v269, 0
    %v948 = vsel %vm334, %v270, 0
    %v951 = vsel %vm334, %v271, 0
    %v954 = vsel %vm334, %v272, 0
    %v957 = vsel %vm334, %v273, 0
    %v960 = vsel %vm334, %v274, 0
    %v963 = vsel %vm334, %v275, 0
    %v966 = vsel %vm334, %v276, 0
    %v969 = vsel %vm334, %v277, 0
    %v972 = vsel %vm334, %v278, 0
    %v975 = vsel %vm334, %v279, 0
    %v978 = vsel %vm334, %v280, 0
    %v981 = vsel %vm334, %v281, 0
    %v984 = vsel %vm334, %v282, 0
    %v987 = vsel %vm334, %v283, 0
    %v990 = vsel %vm334, %v284, 0
    %v993 = vsel %vm334, %v285, 0
    %v996 = vsel %vm334, %v286, 0
    %v999 = vsel %vm334, %v287, 0
    %v1002 = vsel %vm334, %v288, 0
    %v1005 = vsel %vm334, %v289, 0
    %v1008 = vsel %vm334, %v290, 0
    %v1011 = vsel %vm334, %v291, 0
    %v1014 = vsel %vm334, %v292, 0
    %v1017 = vsel %vm334, %v293, 0
    %v1020 = vsel %vm334, %v294, 0
    %v1023 = vsel %vm334, %v295, 0
    %v1026 = vsel %vm334, %v296, 0
    %v1029 = vsel %vm334, %v297, 0
    %v1032 = vsel %vm334, %v298, 0
    %v1035 = vsel %vm334, %v299, 0
    %v1038 = vsel %vm334, %v300, 0
    %v1041 = vsel %vm334, %v301, 0
    %v1044 = vsel %vm334, %v302, 0
    %v1047 = vsel %vm334, %v303, 0
    %v1050 = vsel %vm334, %v304, 0
    %v1053 = vsel %vm334, %v305, 0
    %v1056 = vsel %vm334, %v306, 0
    %v1059 = vsel %vm334, %v307, 0
    %v1062 = vsel %vm334, %v308, 0
    %v1065 = vsel %vm334, %v309, 0
    %v1068 = vsel %vm334, %v310, 0
    %v1071 = vsel %vm334, %v311, 0
    %v1074 = vsel %vm334, %v312, 0
    %v1077 = vsel %vm334, %v313, 0
    %v1080 = vsel %vm334, %v314, 0
    %v1083 = vsel %vm334, %v315, 0
    %v1086 = vsel %vm334, %v316, 0
    %v1089 = vsel %vm334, %v317, 0
    %v1092 = vsel %vm334, %v318, 0
    %v1095 = vsel %vm334, %v319, 0
    %v1098 = vsel %vm334, %v320, 0
    %v1101 = vsel %vm334, %v321, 0
    %1103 = vmatprep.subr.mxu0 0.0
    %1104 = vmatpush1.msra.mxu0 %v322
    %1105 = vmatprep.subr.mxu0 0.0
    %1106 = vmatpush1.msra.mxu0 %v323
    %1107 = vmatprep.subr.mxu0 0.0
    %1108 = vmatpush1.msra.mxu0 %v324
    %1109 = vmatprep.subr.mxu0 0.0
    %1110 = vmatpush1.msra.mxu0 %v325
    %1111 = vmatprep.subr.mxu0 0.0
    %1112 = vmatpush1.msra.mxu0 %v326
    %1113 = vmatprep.subr.mxu0 0.0
    %1114 = vmatpush1.msra.mxu0 0.0
    %1115 = vmatprep.subr.mxu0 0.0
    %1116 = vmatpush1.msra.mxu0 0.0
    %1117 = vmatprep.subr.mxu0 0.0
    %1118 = vmatpush1.msra.mxu0 0.0
    %1119 = vmatprep.subr.mxu0 0.0
    %1120 = vmatpush1.msra.mxu0 0.0
    %1121 = vmatprep.subr.mxu0 0.0
    %1122 = vmatpush1.msra.mxu0 0.0
    %1123 = vmatprep.subr.mxu0 0.0
    %1124 = vmatpush1.msra.mxu0 0.0
    %1125 = vmatprep.subr.mxu0 0.0
    %1126 = vmatpush1.msra.mxu0 0.0
    %1127 = vmatprep.subr.mxu0 0.0
    %1128 = vmatpush1.msra.mxu0 0.0
    %1129 = vmatprep.subr.mxu0 0.0
    %1130 = vmatpush1.msra.mxu0 0.0
    %1131 = vmatprep.subr.mxu0 0.0
    %1132 = vmatpush1.msra.mxu0 0.0
    %1133 = vmatprep.subr.mxu0 0.0
    %1134 = vmatpush1.msra.mxu0 0.0
    %1135 = vmatprep.subr.mxu0 0.0
    %1136 = vmatpush1.msra.mxu0 0.0
    %1137 = vmatprep.subr.mxu0 0.0
    %1138 = vmatpush1.msra.mxu0 0.0
    %1139 = vmatprep.subr.mxu0 0.0
    %1140 = vmatpush1.msra.mxu0 0.0
    %1141 = vmatprep.subr.mxu0 0.0
    %1142 = vmatpush1.msra.mxu0 0.0
    %1143 = vmatprep.subr.mxu0 0.0
    %1144 = vmatpush1.msra.mxu0 0.0
    %1145 = vmatprep.subr.mxu0 0.0
    %1146 = vmatpush1.msra.mxu0 0.0
    %1147 = vmatprep.subr.mxu0 0.0
    %1148 = vmatpush1.msra.mxu0 0.0
    %1149 = vmatprep.subr.mxu0 0.0
    %1150 = vmatpush1.msra.mxu0 0.0
    %1151 = vmatprep.subr.mxu0 0.0
    %1152 = vmatpush1.msra.mxu0 0.0
    %1153 = vmatprep.subr.mxu0 0.0
    %1154 = vmatpush1.msra.mxu0 0.0
    %1155 = vmatprep.subr.mxu0 0.0
    %1156 = vmatpush1.msra.mxu0 0.0
    %1157 = vmatprep.subr.mxu0 0.0
    %1158 = vmatpush1.msra.mxu0 0.0
    %1159 = vmatprep.subr.mxu0 0.0
    %1160 = vmatpush1.msra.mxu0 0.0
    %1161 = vmatprep.subr.mxu0 0.0
    %1162 = vmatpush1.msra.mxu0 0.0
    %1163 = vmatprep.subr.mxu0 0.0
    %1164 = vmatpush1.msra.mxu0 0.0
    %1165 = vmatprep.subr.mxu0 0.0
    %1166 = vmatpush1.msra.mxu0 0.0
    %1167 = vmatprep.mubr.f32.mxu0 0.0
    %1168 = vmatmul.mubr.f32.gmra.mrb[0].mxu0 %v336
    %v1169 = vpop.f32.mrb[0].mxu0
    %v1170 = vadd.f32 %v332, %v1169
    %v1171 = vpop.f32.mrb[0].mxu0
    %1172 = vmatprep.mubr.f32.mxu0 0.0
    %1173 = vmatmul.mubr.f32.gmra.mrb[0].mxu0 %v339
    %v1174 = vpop.f32.mrb[0].mxu0
    %v1175 = vadd.f32 %v332, %v1174
    %v1176 = vpop.f32.mrb[0].mxu0
    %1177 = vmatprep.mubr.f32.mxu0 0.0
    %1178 = vmatmul.mubr.f32.gmra.mrb[0].mxu0 %v342
    %v1179 = vpop.f32.mrb[0].mxu0
    %v1180 = vadd.f32 %v332, %v1179
    %v1181 = vpop.f32.mrb[0].mxu0
    %1182 = vmatprep.mubr.f32.mxu0 0.0
    %1183 = vmatmul.mubr.f32.gmra.mrb[0].mxu0 %v345
    %v1184 = vpop.f32.mrb[0].mxu0
    %v1185 = vadd.f32 %v332, %v1184
    %v1186 = vpop.f32.mrb[0].mxu0
    %1187 = vmatprep.mubr.f32.mxu0 0.0
    %1188 = vmatmul.mubr.f32.gmra.mrb[0].mxu0 %v348
    %v1189 = vpop.f32.mrb[0].mxu0
    %v1190 = vadd.f32 %v332, %v1189
    %v1191 = vpop.f32.mrb[0].mxu0
    %1192 = vmatprep.mubr.f32.mxu0 0.0
    %1193 = vmatmul.mubr.f32.gmra.mrb[0].mxu0 %v351
    %v1194 = vpop.f32.mrb[0].mxu0
    %v1195 = vadd.f32 %v332, %v1194
    %v1196 = vpop.f32.mrb[0].mxu0
    %1197 = vmatprep.mubr.f32.mxu0 0.0
    %1198 = vmatmul.mubr.f32.gmra.mrb[0].mxu0 %v354
    %v1199 = vpop.f32.mrb[0].mxu0
    %v1200 = vadd.f32 %v332, %v1199
    %v1201 = vpop.f32.mrb[0].mxu0
    %1202 = vmatprep.mubr.f32.mxu0 0.0
    %1203 = vmatmul.mubr.f32.gmra.mrb[0].mxu0 %v357
    %v1204 = vpop.f32.mrb[0].mxu0
    %v1205 = vadd.f32 %v332, %v1204
    %v1206 = vpop.f32.mrb[0].mxu0
    %1207 = vmatprep.mubr.f32.mxu0 0.0
    %1208 = vmatmul.mubr.f32.gmra.mrb[0].mxu0 %v360
    %v1209 = vpop.f32.mrb[0].mxu0
    %v1210 = vadd.f32 %v332, %v1209
    %v1211 = vpop.f32.mrb[0].mxu0
    %1212 = vmatprep.mubr.f32.mxu0 0.0
    %1213 = vmatmul.mubr.f32.gmra.mrb[0].mxu0 %v363
    %v1214 = vpop.f32.mrb[0].mxu0
    %v1215 = vadd.f32 %v332, %v1214
    %v1216 = vpop.f32.mrb[0].mxu0
    %1217 = vmatprep.mubr.f32.mxu0 0.0
    %1218 = vmatmul.mubr.f32.gmra.mrb[0].mxu0 %v366
    %v1219 = vpop.f32.mrb[0].mxu0
    %v1220 = vadd.f32 %v332, %v1219
    %v1221 = vpop.f32.mrb[0].mxu0
    %1222 = vmatprep.mubr.f32.mxu0 0.0
    %1223 = vmatmul.mubr.f32.gmra.mrb[0].mxu0 %v369
    %v1224 = vpop.f32.mrb[0].mxu0
    %v1225 = vadd.f32 %v332, %v1224
    %v1226 = vpop.f32.mrb[0].mxu0
    %1227 = vmatprep.mubr.f32.mxu0 0.0
    %1228 = vmatmul.mubr.f32.gmra.mrb[0].mxu0 %v372
    %v1229 = vpop.f32.mrb[0].mxu0
    %v1230 = vadd.f32 %v332, %v1229
    %v1231 = vpop.f32.mrb[0].mxu0
    %1232 = vmatprep.mubr.f32.mxu0 0.0
    %1233 = vmatmul.mubr.f32.gmra.mrb[0].mxu0 %v375
    %v1234 = vpop.f32.mrb[0].mxu0
    %v1235 = vadd.f32 %v332, %v1234
    %v1236 = vpop.f32.mrb[0].mxu0
    %1237 = vmatprep.mubr.f32.mxu0 0.0
    %1238 = vmatmul.mubr.f32.gmra.mrb[0].mxu0 %v378
    %v1239 = vpop.f32.mrb[0].mxu0
    %v1240 = vadd.f32 %v332, %v1239
    %v1241 = vpop.f32.mrb[0].mxu0
    %1242 = vmatprep.mubr.f32.mxu0 0.0
    %1243 = vmatmul.mubr.f32.gmra.mrb[0].mxu0 %v381
    %v1244 = vpop.f32.mrb[0].mxu0
    %v1245 = vadd.f32 %v332, %v1244
    %v1246 = vpop.f32.mrb[0].mxu0
    %1247 = vmatprep.mubr.f32.mxu0 0.0
    %1248 = vmatmul.mubr.f32.gmra.mrb[0].mxu0 %v384
    %v1249 = vpop.f32.mrb[0].mxu0
    %v1250 = vadd.f32 %v332, %v1249
    %v1251 = vpop.f32.mrb[0].mxu0
    %1252 = vmatprep.mubr.f32.mxu0 0.0
    %1253 = vmatmul.mubr.f32.gmra.mrb[0].mxu0 %v387
    %v1254 = vpop.f32.mrb[0].mxu0
    %v1255 = vadd.f32 %v332, %v1254
    %v1256 = vpop.f32.mrb[0].mxu0
    %1257 = vmatprep.mubr.f32.mxu0 0.0
    %1258 = vmatmul.mubr.f32.gmra.mrb[0].mxu0 %v390
    %v1259 = vpop.f32.mrb[0].mxu0
    %v1260 = vadd.f32 %v332, %v1259
    %v1261 = vpop.f32.mrb[0].mxu0
    %1262 = vmatprep.mubr.f32.mxu0 0.0
    %1263 = vmatmul.mubr.f32.gmra.mrb[0].mxu0 %v393
    %v1264 = vpop.f32.mrb[0].mxu0
    %v1265 = vadd.f32 %v332, %v1264
    %v1266 = vpop.f32.mrb[0].mxu0
    %1267 = vmatprep.mubr.f32.mxu0 0.0
    %1268 = vmatmul.mubr.f32.gmra.mrb[0].mxu0 %v396
    %v1269 = vpop.f32.mrb[0].mxu0
    %v1270 = vadd.f32 %v332, %v1269
    %v1271 = vpop.f32.mrb[0].mxu0
    %1272 = vmatprep.mubr.f32.mxu0 0.0
    %1273 = vmatmul.mubr.f32.gmra.mrb[0].mxu0 %v399
    %v1274 = vpop.f32.mrb[0].mxu0
    %v1275 = vadd.f32 %v332, %v1274
    %v1276 = vpop.f32.mrb[0].mxu0
    %1277 = vmatprep.mubr.f32.mxu0 0.0
    %1278 = vmatmul.mubr.f32.gmra.mrb[0].mxu0 %v402
    %v1279 = vpop.f32.mrb[0].mxu0
    %v1280 = vadd.f32 %v332, %v1279
    %v1281 = vpop.f32.mrb[0].mxu0
    %1282 = vmatprep.mubr.f32.mxu0 0.0
    %1283 = vmatmul.mubr.f32.gmra.mrb[0].mxu0 %v405
    %v1284 = vpop.f32.mrb[0].mxu0
    %v1285 = vadd.f32 %v332, %v1284
    %v1286 = vpop.f32.mrb[0].mxu0
    %1287 = vmatprep.mubr.f32.mxu0 0.0
    %1288 = vmatmul.mubr.f32.gmra.mrb[0].mxu0 %v408
    %v1289 = vpop.f32.mrb[0].mxu0
    %v1290 = vadd.f32 %v332, %v1289
    %v1291 = vpop.f32.mrb[0].mxu0
    %1292 = vmatprep.mubr.f32.mxu0 0.0
    %1293 = vmatmul.mubr.f32.gmra.mrb[0].mxu0 %v411
    %v1294 = vpop.f32.mrb[0].mxu0
    %v1295 = vadd.f32 %v332, %v1294
    %v1296 = vpop.f32.mrb[0].mxu0
    %1297 = vmatprep.mubr.f32.mxu0 0.0
    %1298 = vmatmul.mubr.f32.gmra.mrb[0].mxu0 %v414
    %v1299 = vpop.f32.mrb[0].mxu0
    %v1300 = vadd.f32 %v332, %v1299
    %v1301 = vpop.f32.mrb[0].mxu0
    %1302 = vmatprep.mubr.f32.mxu0 0.0
    %1303 = vmatmul.mubr.f32.gmra.mrb[0].mxu0 %v417
    %v1304 = vpop.f32.mrb[0].mxu0
    %v1305 = vadd.f32 %v332, %v1304
    %v1306 = vpop.f32.mrb[0].mxu0
    %1307 = vmatprep.mubr.f32.mxu0 0.0
    %1308 = vmatmul.mubr.f32.gmra.mrb[0].mxu0 %v420
    %v1309 = vpop.f32.mrb[0].mxu0
    %v1310 = vadd.f32 %v332, %v1309
    %v1311 = vpop.f32.mrb[0].mxu0
    %1312 = vmatprep.mubr.f32.mxu0 0.0
    %1313 = vmatmul.mubr.f32.gmra.mrb[0].mxu0 %v423
    %v1314 = vpop.f32.mrb[0].mxu0
    %v1315 = vadd.f32 %v332, %v1314
    %v1316 = vpop.f32.mrb[0].mxu0
    %1317 = vmatprep.mubr.f32.mxu0 0.0
    %1318 = vmatmul.mubr.f32.gmra.mrb[0].mxu0 %v426
    %v1319 = vpop.f32.mrb[0].mxu0
    %v1320 = vadd.f32 %v332, %v1319
    %v1321 = vpop.f32.mrb[0].mxu0
    %1322 = vmatprep.mubr.f32.mxu0 0.0
    %1323 = vmatmul.mubr.f32.gmra.mrb[0].mxu0 %v429
    %v1324 = vpop.f32.mrb[0].mxu0
    %v1325 = vadd.f32 %v332, %v1324
    %v1326 = vpop.f32.mrb[0].mxu0
    %1327 = vmatprep.mubr.f32.mxu0 0.0
    %1328 = vmatmul.mubr.f32.gmra.mrb[0].mxu0 %v432
    %v1329 = vpop.f32.mrb[0].mxu0
    %v1330 = vadd.f32 %v332, %v1329
    %v1331 = vpop.f32.mrb[0].mxu0
    %1332 = vmatprep.mubr.f32.mxu0 0.0
    %1333 = vmatmul.mubr.f32.gmra.mrb[0].mxu0 %v435
    %v1334 = vpop.f32.mrb[0].mxu0
    %v1335 = vadd.f32 %v332, %v1334
    %v1336 = vpop.f32.mrb[0].mxu0
    %1337 = vmatprep.mubr.f32.mxu0 0.0
    %1338 = vmatmul.mubr.f32.gmra.mrb[0].mxu0 %v438
    %v1339 = vpop.f32.mrb[0].mxu0
    %v1340 = vadd.f32 %v332, %v1339
    %v1341 = vpop.f32.mrb[0].mxu0
    %1342 = vmatprep.mubr.f32.mxu0 0.0
    %1343 = vmatmul.mubr.f32.gmra.mrb[0].mxu0 %v441
    %v1344 = vpop.f32.mrb[0].mxu0
    %v1345 = vadd.f32 %v332, %v1344
    %v1346 = vpop.f32.mrb[0].mxu0
    %1347 = vmatprep.mubr.f32.mxu0 0.0
    %1348 = vmatmul.mubr.f32.gmra.mrb[0].mxu0 %v444
    %v1349 = vpop.f32.mrb[0].mxu0
    %v1350 = vadd.f32 %v332, %v1349
    %v1351 = vpop.f32.mrb[0].mxu0
    %1352 = vmatprep.mubr.f32.mxu0 0.0
    %1353 = vmatmul.mubr.f32.gmra.mrb[0].mxu0 %v447
    %v1354 = vpop.f32.mrb[0].mxu0
    %v1355 = vadd.f32 %v332, %v1354
    %v1356 = vpop.f32.mrb[0].mxu0
    %1357 = vmatprep.mubr.f32.mxu0 0.0
    %1358 = vmatmul.mubr.f32.gmra.mrb[0].mxu0 %v450
    %v1359 = vpop.f32.mrb[0].mxu0
    %v1360 = vadd.f32 %v332, %v1359
    %v1361 = vpop.f32.mrb[0].mxu0
    %1362 = vmatprep.mubr.f32.mxu0 0.0
    %1363 = vmatmul.mubr.f32.gmra.mrb[0].mxu0 %v453
    %v1364 = vpop.f32.mrb[0].mxu0
    %v1365 = vadd.f32 %v332, %v1364
    %v1366 = vpop.f32.mrb[0].mxu0
    %1367 = vmatprep.mubr.f32.mxu0 0.0
    %1368 = vmatmul.mubr.f32.gmra.mrb[0].mxu0 %v456
    %v1369 = vpop.f32.mrb[0].mxu0
    %v1370 = vadd.f32 %v332, %v1369
    %v1371 = vpop.f32.mrb[0].mxu0
    %1372 = vmatprep.mubr.f32.mxu0 0.0
    %1373 = vmatmul.mubr.f32.gmra.mrb[0].mxu0 %v459
    %v1374 = vpop.f32.mrb[0].mxu0
    %v1375 = vadd.f32 %v332, %v1374
    %v1376 = vpop.f32.mrb[0].mxu0
    %1377 = vmatprep.mubr.f32.mxu0 0.0
    %1378 = vmatmul.mubr.f32.gmra.mrb[0].mxu0 %v462
    %v1379 = vpop.f32.mrb[0].mxu0
    %v1380 = vadd.f32 %v332, %v1379
    %v1381 = vpop.f32.mrb[0].mxu0
    %1382 = vmatprep.mubr.f32.mxu0 0.0
    %1383 = vmatmul.mubr.f32.gmra.mrb[0].mxu0 %v465
    %v1384 = vpop.f32.mrb[0].mxu0
    %v1385 = vadd.f32 %v332, %v1384
    %v1386 = vpop.f32.mrb[0].mxu0
    %1387 = vmatprep.mubr.f32.mxu0 0.0
    %1388 = vmatmul.mubr.f32.gmra.mrb[0].mxu0 %v468
    %v1389 = vpop.f32.mrb[0].mxu0
    %v1390 = vadd.f32 %v332, %v1389
    %v1391 = vpop.f32.mrb[0].mxu0
    %1392 = vmatprep.mubr.f32.mxu0 0.0
    %1393 = vmatmul.mubr.f32.gmra.mrb[0].mxu0 %v471
    %v1394 = vpop.f32.mrb[0].mxu0
    %v1395 = vadd.f32 %v332, %v1394
    %v1396 = vpop.f32.mrb[0].mxu0
    %1397 = vmatprep.mubr.f32.mxu0 0.0
    %1398 = vmatmul.mubr.f32.gmra.mrb[0].mxu0 %v474
    %v1399 = vpop.f32.mrb[0].mxu0
    %v1400 = vadd.f32 %v332, %v1399
    %v1401 = vpop.f32.mrb[0].mxu0
    %1402 = vmatprep.mubr.f32.mxu0 0.0
    %1403 = vmatmul.mubr.f32.gmra.mrb[0].mxu0 %v477
    %v1404 = vpop.f32.mrb[0].mxu0
    %v1405 = vadd.f32 %v332, %v1404
    %v1406 = vpop.f32.mrb[0].mxu0
    %1407 = vmatprep.mubr.f32.mxu0 0.0
    %1408 = vmatmul.mubr.f32.gmra.mrb[0].mxu0 %v480
    %v1409 = vpop.f32.mrb[0].mxu0
    %v1410 = vadd.f32 %v332, %v1409
    %v1411 = vpop.f32.mrb[0].mxu0
    %1412 = vmatprep.mubr.f32.mxu0 0.0
    %1413 = vmatmul.mubr.f32.gmra.mrb[0].mxu0 %v483
    %v1414 = vpop.f32.mrb[0].mxu0
    %v1415 = vadd.f32 %v332, %v1414
    %v1416 = vpop.f32.mrb[0].mxu0
    %1417 = vmatprep.mubr.f32.mxu0 0.0
    %1418 = vmatmul.mubr.f32.gmra.mrb[0].mxu0 %v486
    %v1419 = vpop.f32.mrb[0].mxu0
    %v1420 = vadd.f32 %v332, %v1419
    %v1421 = vpop.f32.mrb[0].mxu0
    %1422 = vmatprep.mubr.f32.mxu0 0.0
    %1423 = vmatmul.mubr.f32.gmra.mrb[0].mxu0 %v489
    %v1424 = vpop.f32.mrb[0].mxu0
    %v1425 = vadd.f32 %v332, %v1424
    %v1426 = vpop.f32.mrb[0].mxu0
    %1427 = vmatprep.mubr.f32.mxu0 0.0
    %1428 = vmatmul.mubr.f32.gmra.mrb[0].mxu0 %v492
    %v1429 = vpop.f32.mrb[0].mxu0
    %v1430 = vadd.f32 %v332, %v1429
    %v1431 = vpop.f32.mrb[0].mxu0
    %1432 = vmatprep.mubr.f32.mxu0 0.0
    %1433 = vmatmul.mubr.f32.gmra.mrb[0].mxu0 %v495
    %v1434 = vpop.f32.mrb[0].mxu0
    %v1435 = vadd.f32 %v332, %v1434
    %v1436 = vpop.f32.mrb[0].mxu0
    %1437 = vmatprep.mubr.f32.mxu0 0.0
    %1438 = vmatmul.mubr.f32.gmra.mrb[0].mxu0 %v498
    %v1439 = vpop.f32.mrb[0].mxu0
    %v1440 = vadd.f32 %v332, %v1439
    %v1441 = vpop.f32.mrb[0].mxu0
    %1442 = vmatprep.mubr.f32.mxu0 0.0
    %1443 = vmatmul.mubr.f32.gmra.mrb[0].mxu0 %v501
    %v1444 = vpop.f32.mrb[0].mxu0
    %v1445 = vadd.f32 %v332, %v1444
    %v1446 = vpop.f32.mrb[0].mxu0
    %1447 = vmatprep.mubr.f32.mxu0 0.0
    %1448 = vmatmul.mubr.f32.gmra.mrb[0].mxu0 %v504
    %v1449 = vpop.f32.mrb[0].mxu0
    %v1450 = vadd.f32 %v332, %v1449
    %v1451 = vpop.f32.mrb[0].mxu0
    %1452 = vmatprep.mubr.f32.mxu0 0.0
    %1453 = vmatmul.mubr.f32.gmra.mrb[0].mxu0 %v507
    %v1454 = vpop.f32.mrb[0].mxu0
    %v1455 = vadd.f32 %v332, %v1454
    %v1456 = vpop.f32.mrb[0].mxu0
    %1457 = vmatprep.mubr.f32.mxu0 0.0
    %1458 = vmatmul.mubr.f32.gmra.mrb[0].mxu0 %v510
    %v1459 = vpop.f32.mrb[0].mxu0
    %v1460 = vadd.f32 %v332, %v1459
    %v1461 = vpop.f32.mrb[0].mxu0
    %1462 = vmatprep.mubr.f32.mxu0 0.0
    %1463 = vmatmul.mubr.f32.gmra.mrb[0].mxu0 %v513
    %v1464 = vpop.f32.mrb[0].mxu0
    %v1465 = vadd.f32 %v332, %v1464
    %v1466 = vpop.f32.mrb[0].mxu0
    %1467 = vmatprep.mubr.f32.mxu0 0.0
    %1468 = vmatmul.mubr.f32.gmra.mrb[0].mxu0 %v516
    %v1469 = vpop.f32.mrb[0].mxu0
    %v1470 = vadd.f32 %v332, %v1469
    %v1471 = vpop.f32.mrb[0].mxu0
    %1472 = vmatprep.mubr.f32.mxu0 0.0
    %1473 = vmatmul.mubr.f32.gmra.mrb[0].mxu0 %v519
    %v1474 = vpop.f32.mrb[0].mxu0
    %v1475 = vadd.f32 %v332, %v1474
    %v1476 = vpop.f32.mrb[0].mxu0
    %1477 = vmatprep.mubr.f32.mxu0 0.0
    %1478 = vmatmul.mubr.f32.gmra.mrb[0].mxu0 %v522
    %v1479 = vpop.f32.mrb[0].mxu0
    %v1480 = vadd.f32 %v332, %v1479
    %v1481 = vpop.f32.mrb[0].mxu0
    %1482 = vmatprep.mubr.f32.mxu0 0.0
    %1483 = vmatmul.mubr.f32.gmra.mrb[0].mxu0 %v525
    %v1484 = vpop.f32.mrb[0].mxu0
    %v1485 = vadd.f32 %v332, %v1484
    %v1486 = vpop.f32.mrb[0].mxu0
    %1487 = vmatprep.mubr.f32.mxu0 0.0
    %1488 = vmatmul.mubr.f32.gmra.mrb[0].mxu0 %v528
    %v1489 = vpop.f32.mrb[0].mxu0
    %v1490 = vadd.f32 %v332, %v1489
    %v1491 = vpop.f32.mrb[0].mxu0
    %1492 = vmatprep.mubr.f32.mxu0 0.0
    %1493 = vmatmul.mubr.f32.gmra.mrb[0].mxu0 %v531
    %v1494 = vpop.f32.mrb[0].mxu0
    %v1495 = vadd.f32 %v332, %v1494
    %v1496 = vpop.f32.mrb[0].mxu0
    %1497 = vmatprep.mubr.f32.mxu0 0.0
    %1498 = vmatmul.mubr.f32.gmra.mrb[0].mxu0 %v534
    %v1499 = vpop.f32.mrb[0].mxu0
    %v1500 = vadd.f32 %v332, %v1499
    %v1501 = vpop.f32.mrb[0].mxu0
    %1502 = vmatprep.mubr.f32.mxu0 0.0
    %1503 = vmatmul.mubr.f32.gmra.mrb[0].mxu0 %v537
    %v1504 = vpop.f32.mrb[0].mxu0
    %v1505 = vadd.f32 %v332, %v1504
    %v1506 = vpop.f32.mrb[0].mxu0
    %1507 = vmatprep.mubr.f32.mxu0 0.0
    %1508 = vmatmul.mubr.f32.gmra.mrb[0].mxu0 %v540
    %v1509 = vpop.f32.mrb[0].mxu0
    %v1510 = vadd.f32 %v332, %v1509
    %v1511 = vpop.f32.mrb[0].mxu0
    %1512 = vmatprep.mubr.f32.mxu0 0.0
    %1513 = vmatmul.mubr.f32.gmra.mrb[0].mxu0 %v543
    %v1514 = vpop.f32.mrb[0].mxu0
    %v1515 = vadd.f32 %v332, %v1514
    %v1516 = vpop.f32.mrb[0].mxu0
    %1517 = vmatprep.mubr.f32.mxu0 0.0
    %1518 = vmatmul.mubr.f32.gmra.mrb[0].mxu0 %v546
    %v1519 = vpop.f32.mrb[0].mxu0
    %v1520 = vadd.f32 %v332, %v1519
    %v1521 = vpop.f32.mrb[0].mxu0
    %1522 = vmatprep.mubr.f32.mxu0 0.0
    %1523 = vmatmul.mubr.f32.gmra.mrb[0].mxu0 %v549
    %v1524 = vpop.f32.mrb[0].mxu0
    %v1525 = vadd.f32 %v332, %v1524
    %v1526 = vpop.f32.mrb[0].mxu0
    %1527 = vmatprep.mubr.f32.mxu0 0.0
    %1528 = vmatmul.mubr.f32.gmra.mrb[0].mxu0 %v552
    %v1529 = vpop.f32.mrb[0].mxu0
    %v1530 = vadd.f32 %v332, %v1529
    %v1531 = vpop.f32.mrb[0].mxu0
    %1532 = vmatprep.mubr.f32.mxu0 0.0
    %1533 = vmatmul.mubr.f32.gmra.mrb[0].mxu0 %v555
    %v1534 = vpop.f32.mrb[0].mxu0
    %v1535 = vadd.f32 %v332, %v1534
    %v1536 = vpop.f32.mrb[0].mxu0
    %1537 = vmatprep.mubr.f32.mxu0 0.0
    %1538 = vmatmul.mubr.f32.gmra.mrb[0].mxu0 %v558
    %v1539 = vpop.f32.mrb[0].mxu0
    %v1540 = vadd.f32 %v332, %v1539
    %v1541 = vpop.f32.mrb[0].mxu0
    %1542 = vmatprep.mubr.f32.mxu0 0.0
    %1543 = vmatmul.mubr.f32.gmra.mrb[0].mxu0 %v561
    %v1544 = vpop.f32.mrb[0].mxu0
    %v1545 = vadd.f32 %v332, %v1544
    %v1546 = vpop.f32.mrb[0].mxu0
    %1547 = vmatprep.mubr.f32.mxu0 0.0
    %1548 = vmatmul.mubr.f32.gmra.mrb[0].mxu0 %v564
    %v1549 = vpop.f32.mrb[0].mxu0
    %v1550 = vadd.f32 %v332, %v1549
    %v1551 = vpop.f32.mrb[0].mxu0
    %1552 = vmatprep.mubr.f32.mxu0 0.0
    %1553 = vmatmul.mubr.f32.gmra.mrb[0].mxu0 %v567
    %v1554 = vpop.f32.mrb[0].mxu0
    %v1555 = vadd.f32 %v332, %v1554
    %v1556 = vpop.f32.mrb[0].mxu0
    %1557 = vmatprep.mubr.f32.mxu0 0.0
    %1558 = vmatmul.mubr.f32.gmra.mrb[0].mxu0 %v570
    %v1559 = vpop.f32.mrb[0].mxu0
    %v1560 = vadd.f32 %v332, %v1559
    %v1561 = vpop.f32.mrb[0].mxu0
    %1562 = vmatprep.mubr.f32.mxu0 0.0
    %1563 = vmatmul.mubr.f32.gmra.mrb[0].mxu0 %v573
    %v1564 = vpop.f32.mrb[0].mxu0
    %v1565 = vadd.f32 %v332, %v1564
    %v1566 = vpop.f32.mrb[0].mxu0
    %1567 = vmatprep.mubr.f32.mxu0 0.0
    %1568 = vmatmul.mubr.f32.gmra.mrb[0].mxu0 %v576
    %v1569 = vpop.f32.mrb[0].mxu0
    %v1570 = vadd.f32 %v332, %v1569
    %v1571 = vpop.f32.mrb[0].mxu0
    %1572 = vmatprep.mubr.f32.mxu0 0.0
    %1573 = vmatmul.mubr.f32.gmra.mrb[0].mxu0 %v579
    %v1574 = vpop.f32.mrb[0].mxu0
    %v1575 = vadd.f32 %v332, %v1574
    %v1576 = vpop.f32.mrb[0].mxu0
    %1577 = vmatprep.mubr.f32.mxu0 0.0
    %1578 = vmatmul.mubr.f32.gmra.mrb[0].mxu0 %v582
    %v1579 = vpop.f32.mrb[0].mxu0
    %v1580 = vadd.f32 %v332, %v1579
    %v1581 = vpop.f32.mrb[0].mxu0
    %1582 = vmatprep.mubr.f32.mxu0 0.0
    %1583 = vmatmul.mubr.f32.gmra.mrb[0].mxu0 %v585
    %v1584 = vpop.f32.mrb[0].mxu0
    %v1585 = vadd.f32 %v332, %v1584
    %v1586 = vpop.f32.mrb[0].mxu0
    %1587 = vmatprep.mubr.f32.mxu0 0.0
    %1588 = vmatmul.mubr.f32.gmra.mrb[0].mxu0 %v588
    %v1589 = vpop.f32.mrb[0].mxu0
    %v1590 = vadd.f32 %v332, %v1589
    %v1591 = vpop.f32.mrb[0].mxu0
    %1592 = vmatprep.mubr.f32.mxu0 0.0
    %1593 = vmatmul.mubr.f32.gmra.mrb[0].mxu0 %v591
    %v1594 = vpop.f32.mrb[0].mxu0
    %v1595 = vadd.f32 %v332, %v1594
    %v1596 = vpop.f32.mrb[0].mxu0
    %1597 = vmatprep.mubr.f32.mxu0 0.0
    %1598 = vmatmul.mubr.f32.gmra.mrb[0].mxu0 %v594
    %v1599 = vpop.f32.mrb[0].mxu0
    %v1600 = vadd.f32 %v332, %v1599
    %v1601 = vpop.f32.mrb[0].mxu0
    %1602 = vmatprep.mubr.f32.mxu0 0.0
    %1603 = vmatmul.mubr.f32.gmra.mrb[0].mxu0 %v597
    %v1604 = vpop.f32.mrb[0].mxu0
    %v1605 = vadd.f32 %v332, %v1604
    %v1606 = vpop.f32.mrb[0].mxu0
    %1607 = vmatprep.mubr.f32.mxu0 0.0
    %1608 = vmatmul.mubr.f32.gmra.mrb[0].mxu0 %v600
    %v1609 = vpop.f32.mrb[0].mxu0
    %v1610 = vadd.f32 %v332, %v1609
    %v1611 = vpop.f32.mrb[0].mxu0
    %1612 = vmatprep.mubr.f32.mxu0 0.0
    %1613 = vmatmul.mubr.f32.gmra.mrb[0].mxu0 %v603
    %v1614 = vpop.f32.mrb[0].mxu0
    %v1615 = vadd.f32 %v332, %v1614
    %v1616 = vpop.f32.mrb[0].mxu0
    %1617 = vmatprep.mubr.f32.mxu0 0.0
    %1618 = vmatmul.mubr.f32.gmra.mrb[0].mxu0 %v606
    %v1619 = vpop.f32.mrb[0].mxu0
    %v1620 = vadd.f32 %v332, %v1619
    %v1621 = vpop.f32.mrb[0].mxu0
    %1622 = vmatprep.mubr.f32.mxu0 0.0
    %1623 = vmatmul.mubr.f32.gmra.mrb[0].mxu0 %v609
    %v1624 = vpop.f32.mrb[0].mxu0
    %v1625 = vadd.f32 %v332, %v1624
    %v1626 = vpop.f32.mrb[0].mxu0
    %1627 = vmatprep.mubr.f32.mxu0 0.0
    %1628 = vmatmul.mubr.f32.gmra.mrb[0].mxu0 %v612
    %v1629 = vpop.f32.mrb[0].mxu0
    %v1630 = vadd.f32 %v332, %v1629
    %v1631 = vpop.f32.mrb[0].mxu0
    %1632 = vmatprep.mubr.f32.mxu0 0.0
    %1633 = vmatmul.mubr.f32.gmra.mrb[0].mxu0 %v615
    %v1634 = vpop.f32.mrb[0].mxu0
    %v1635 = vadd.f32 %v332, %v1634
    %v1636 = vpop.f32.mrb[0].mxu0
    %1637 = vmatprep.mubr.f32.mxu0 0.0
    %1638 = vmatmul.mubr.f32.gmra.mrb[0].mxu0 %v618
    %v1639 = vpop.f32.mrb[0].mxu0
    %v1640 = vadd.f32 %v332, %v1639
    %v1641 = vpop.f32.mrb[0].mxu0
    %1642 = vmatprep.mubr.f32.mxu0 0.0
    %1643 = vmatmul.mubr.f32.gmra.mrb[0].mxu0 %v621
    %v1644 = vpop.f32.mrb[0].mxu0
    %v1645 = vadd.f32 %v332, %v1644
    %v1646 = vpop.f32.mrb[0].mxu0
    %1647 = vmatprep.mubr.f32.mxu0 0.0
    %1648 = vmatmul.mubr.f32.gmra.mrb[0].mxu0 %v624
    %v1649 = vpop.f32.mrb[0].mxu0
    %v1650 = vadd.f32 %v332, %v1649
    %v1651 = vpop.f32.mrb[0].mxu0
    %1652 = vmatprep.mubr.f32.mxu0 0.0
    %1653 = vmatmul.mubr.f32.gmra.mrb[0].mxu0 %v627
    %v1654 = vpop.f32.mrb[0].mxu0
    %v1655 = vadd.f32 %v332, %v1654
    %v1656 = vpop.f32.mrb[0].mxu0
    %1657 = vmatprep.mubr.f32.mxu0 0.0
    %1658 = vmatmul.mubr.f32.gmra.mrb[0].mxu0 %v630
    %v1659 = vpop.f32.mrb[0].mxu0
    %v1660 = vadd.f32 %v332, %v1659
    %v1661 = vpop.f32.mrb[0].mxu0
    %1662 = vmatprep.mubr.f32.mxu0 0.0
    %1663 = vmatmul.mubr.f32.gmra.mrb[0].mxu0 %v633
    %v1664 = vpop.f32.mrb[0].mxu0
    %v1665 = vadd.f32 %v332, %v1664
    %v1666 = vpop.f32.mrb[0].mxu0
    %1667 = vmatprep.mubr.f32.mxu0 0.0
    %1668 = vmatmul.mubr.f32.gmra.mrb[0].mxu0 %v636
    %v1669 = vpop.f32.mrb[0].mxu0
    %v1670 = vadd.f32 %v332, %v1669
    %v1671 = vpop.f32.mrb[0].mxu0
    %1672 = vmatprep.mubr.f32.mxu0 0.0
    %1673 = vmatmul.mubr.f32.gmra.mrb[0].mxu0 %v639
    %v1674 = vpop.f32.mrb[0].mxu0
    %v1675 = vadd.f32 %v332, %v1674
    %v1676 = vpop.f32.mrb[0].mxu0
    %1677 = vmatprep.mubr.f32.mxu0 0.0
    %1678 = vmatmul.mubr.f32.gmra.mrb[0].mxu0 %v642
    %v1679 = vpop.f32.mrb[0].mxu0
    %v1680 = vadd.f32 %v332, %v1679
    %v1681 = vpop.f32.mrb[0].mxu0
    %1682 = vmatprep.mubr.f32.mxu0 0.0
    %1683 = vmatmul.mubr.f32.gmra.mrb[0].mxu0 %v645
    %v1684 = vpop.f32.mrb[0].mxu0
    %v1685 = vadd.f32 %v332, %v1684
    %v1686 = vpop.f32.mrb[0].mxu0
    %1687 = vmatprep.mubr.f32.mxu0 0.0
    %1688 = vmatmul.mubr.f32.gmra.mrb[0].mxu0 %v648
    %v1689 = vpop.f32.mrb[0].mxu0
    %v1690 = vadd.f32 %v332, %v1689
    %v1691 = vpop.f32.mrb[0].mxu0
    %1692 = vmatprep.mubr.f32.mxu0 0.0
    %1693 = vmatmul.mubr.f32.gmra.mrb[0].mxu0 %v651
    %v1694 = vpop.f32.mrb[0].mxu0
    %v1695 = vadd.f32 %v332, %v1694
    %v1696 = vpop.f32.mrb[0].mxu0
    %1697 = vmatprep.mubr.f32.mxu0 0.0
    %1698 = vmatmul.mubr.f32.gmra.mrb[0].mxu0 %v654
    %v1699 = vpop.f32.mrb[0].mxu0
    %v1700 = vadd.f32 %v332, %v1699
    %v1701 = vpop.f32.mrb[0].mxu0
    %1702 = vmatprep.mubr.f32.mxu0 0.0
    %1703 = vmatmul.mubr.f32.gmra.mrb[0].mxu0 %v657
    %v1704 = vpop.f32.mrb[0].mxu0
    %v1705 = vadd.f32 %v332, %v1704
    %v1706 = vpop.f32.mrb[0].mxu0
    %1707 = vmatprep.mubr.f32.mxu0 0.0
    %1708 = vmatmul.mubr.f32.gmra.mrb[0].mxu0 %v660
    %v1709 = vpop.f32.mrb[0].mxu0
    %v1710 = vadd.f32 %v332, %v1709
    %v1711 = vpop.f32.mrb[0].mxu0
    %1712 = vmatprep.mubr.f32.mxu0 0.0
    %1713 = vmatmul.mubr.f32.gmra.mrb[0].mxu0 %v663
    %v1714 = vpop.f32.mrb[0].mxu0
    %v1715 = vadd.f32 %v332, %v1714
    %v1716 = vpop.f32.mrb[0].mxu0
    %1717 = vmatprep.mubr.f32.mxu0 0.0
    %1718 = vmatmul.mubr.f32.gmra.mrb[0].mxu0 %v666
    %v1719 = vpop.f32.mrb[0].mxu0
    %v1720 = vadd.f32 %v332, %v1719
    %v1721 = vpop.f32.mrb[0].mxu0
    %1722 = vmatprep.mubr.f32.mxu0 0.0
    %1723 = vmatmul.mubr.f32.gmra.mrb[0].mxu0 %v669
    %v1724 = vpop.f32.mrb[0].mxu0
    %v1725 = vadd.f32 %v332, %v1724
    %v1726 = vpop.f32.mrb[0].mxu0
    %1727 = vmatprep.mubr.f32.mxu0 0.0
    %1728 = vmatmul.mubr.f32.gmra.mrb[0].mxu0 %v672
    %v1729 = vpop.f32.mrb[0].mxu0
    %v1730 = vadd.f32 %v332, %v1729
    %v1731 = vpop.f32.mrb[0].mxu0
    %1732 = vmatprep.mubr.f32.mxu0 0.0
    %1733 = vmatmul.mubr.f32.gmra.mrb[0].mxu0 %v675
    %v1734 = vpop.f32.mrb[0].mxu0
    %v1735 = vadd.f32 %v332, %v1734
    %v1736 = vpop.f32.mrb[0].mxu0
    %1737 = vmatprep.mubr.f32.mxu0 0.0
    %1738 = vmatmul.mubr.f32.gmra.mrb[0].mxu0 %v678
    %v1739 = vpop.f32.mrb[0].mxu0
    %v1740 = vadd.f32 %v332, %v1739
    %v1741 = vpop.f32.mrb[0].mxu0
    %1742 = vmatprep.mubr.f32.mxu0 0.0
    %1743 = vmatmul.mubr.f32.gmra.mrb[0].mxu0 %v681
    %v1744 = vpop.f32.mrb[0].mxu0
    %v1745 = vadd.f32 %v332, %v1744
    %v1746 = vpop.f32.mrb[0].mxu0
    %1747 = vmatprep.mubr.f32.mxu0 0.0
    %1748 = vmatmul.mubr.f32.gmra.mrb[0].mxu0 %v684
    %v1749 = vpop.f32.mrb[0].mxu0
    %v1750 = vadd.f32 %v332, %v1749
    %v1751 = vpop.f32.mrb[0].mxu0
    %1752 = vmatprep.mubr.f32.mxu0 0.0
    %1753 = vmatmul.mubr.f32.gmra.mrb[0].mxu0 %v687
    %v1754 = vpop.f32.mrb[0].mxu0
    %v1755 = vadd.f32 %v332, %v1754
    %v1756 = vpop.f32.mrb[0].mxu0
    %1757 = vmatprep.mubr.f32.mxu0 0.0
    %1758 = vmatmul.mubr.f32.gmra.mrb[0].mxu0 %v690
    %v1759 = vpop.f32.mrb[0].mxu0
    %v1760 = vadd.f32 %v332, %v1759
    %v1761 = vpop.f32.mrb[0].mxu0
    %1762 = vmatprep.mubr.f32.mxu0 0.0
    %1763 = vmatmul.mubr.f32.gmra.mrb[0].mxu0 %v693
    %v1764 = vpop.f32.mrb[0].mxu0
    %v1765 = vadd.f32 %v332, %v1764
    %v1766 = vpop.f32.mrb[0].mxu0
    %1767 = vmatprep.mubr.f32.mxu0 0.0
    %1768 = vmatmul.mubr.f32.gmra.mrb[0].mxu0 %v696
    %v1769 = vpop.f32.mrb[0].mxu0
    %v1770 = vadd.f32 %v332, %v1769
    %v1771 = vpop.f32.mrb[0].mxu0
    %1772 = vmatprep.mubr.f32.mxu0 0.0
    %1773 = vmatmul.mubr.f32.gmra.mrb[0].mxu0 %v699
    %v1774 = vpop.f32.mrb[0].mxu0
    %v1775 = vadd.f32 %v332, %v1774
    %v1776 = vpop.f32.mrb[0].mxu0
    %1777 = vmatprep.mubr.f32.mxu0 0.0
    %1778 = vmatmul.mubr.f32.gmra.mrb[0].mxu0 %v702
    %v1779 = vpop.f32.mrb[0].mxu0
    %v1780 = vadd.f32 %v332, %v1779
    %v1781 = vpop.f32.mrb[0].mxu0
    %1782 = vmatprep.mubr.f32.mxu0 0.0
    %1783 = vmatmul.mubr.f32.gmra.mrb[0].mxu0 %v705
    %v1784 = vpop.f32.mrb[0].mxu0
    %v1785 = vadd.f32 %v332, %v1784
    %v1786 = vpop.f32.mrb[0].mxu0
    %1787 = vmatprep.mubr.f32.mxu0 0.0
    %1788 = vmatmul.mubr.f32.gmra.mrb[0].mxu0 %v708
    %v1789 = vpop.f32.mrb[0].mxu0
    %v1790 = vadd.f32 %v332, %v1789
    %v1791 = vpop.f32.mrb[0].mxu0
    %1792 = vmatprep.mubr.f32.mxu0 0.0
    %1793 = vmatmul.mubr.f32.gmra.mrb[0].mxu0 %v711
    %v1794 = vpop.f32.mrb[0].mxu0
    %v1795 = vadd.f32 %v332, %v1794
    %v1796 = vpop.f32.mrb[0].mxu0
    %1797 = vmatprep.mubr.f32.mxu0 0.0
    %1798 = vmatmul.mubr.f32.gmra.mrb[0].mxu0 %v714
    %v1799 = vpop.f32.mrb[0].mxu0
    %v1800 = vadd.f32 %v332, %v1799
    %v1801 = vpop.f32.mrb[0].mxu0
    %1802 = vmatprep.mubr.f32.mxu0 0.0
    %1803 = vmatmul.mubr.f32.gmra.mrb[0].mxu0 %v717
    %v1804 = vpop.f32.mrb[0].mxu0
    %v1805 = vadd.f32 %v332, %v1804
    %v1806 = vpop.f32.mrb[0].mxu0
    %1807 = vmatprep.mubr.f32.mxu0 0.0
    %1808 = vmatmul.mubr.f32.gmra.mrb[0].mxu0 %v720
    %v1809 = vpop.f32.mrb[0].mxu0
    %v1810 = vadd.f32 %v332, %v1809
    %v1811 = vpop.f32.mrb[0].mxu0
    %1812 = vmatprep.mubr.f32.mxu0 0.0
    %1813 = vmatmul.mubr.f32.gmra.mrb[0].mxu0 %v723
    %v1814 = vpop.f32.mrb[0].mxu0
    %v1815 = vadd.f32 %v332, %v1814
    %v1816 = vpop.f32.mrb[0].mxu0
    %1817 = vmatprep.mubr.f32.mxu0 0.0
    %1818 = vmatmul.mubr.f32.gmra.mrb[0].mxu0 %v726
    %v1819 = vpop.f32.mrb[0].mxu0
    %v1820 = vadd.f32 %v332, %v1819
    %v1821 = vpop.f32.mrb[0].mxu0
    %1822 = vmatprep.mubr.f32.mxu0 0.0
    %1823 = vmatmul.mubr.f32.gmra.mrb[0].mxu0 %v729
    %v1824 = vpop.f32.mrb[0].mxu0
    %v1825 = vadd.f32 %v332, %v1824
    %v1826 = vpop.f32.mrb[0].mxu0
    %1827 = vmatprep.mubr.f32.mxu0 0.0
    %1828 = vmatmul.mubr.f32.gmra.mrb[0].mxu0 %v732
    %v1829 = vpop.f32.mrb[0].mxu0
    %v1830 = vadd.f32 %v332, %v1829
    %v1831 = vpop.f32.mrb[0].mxu0
    %1832 = vmatprep.mubr.f32.mxu0 0.0
    %1833 = vmatmul.mubr.f32.gmra.mrb[0].mxu0 %v735
    %v1834 = vpop.f32.mrb[0].mxu0
    %v1835 = vadd.f32 %v332, %v1834
    %v1836 = vpop.f32.mrb[0].mxu0
    %1837 = vmatprep.mubr.f32.mxu0 0.0
    %1838 = vmatmul.mubr.f32.gmra.mrb[0].mxu0 %v738
    %v1839 = vpop.f32.mrb[0].mxu0
    %v1840 = vadd.f32 %v332, %v1839
    %v1841 = vpop.f32.mrb[0].mxu0
    %1842 = vmatprep.mubr.f32.mxu0 0.0
    %1843 = vmatmul.mubr.f32.gmra.mrb[0].mxu0 %v741
    %v1844 = vpop.f32.mrb[0].mxu0
    %v1845 = vadd.f32 %v332, %v1844
    %v1846 = vpop.f32.mrb[0].mxu0
    %1847 = vmatprep.mubr.f32.mxu0 0.0
    %1848 = vmatmul.mubr.f32.gmra.mrb[0].mxu0 %v744
    %v1849 = vpop.f32.mrb[0].mxu0
    %v1850 = vadd.f32 %v332, %v1849
    %v1851 = vpop.f32.mrb[0].mxu0
    %1852 = vmatprep.mubr.f32.mxu0 0.0
    %1853 = vmatmul.mubr.f32.gmra.mrb[0].mxu0 %v747
    %v1854 = vpop.f32.mrb[0].mxu0
    %v1855 = vadd.f32 %v332, %v1854
    %v1856 = vpop.f32.mrb[0].mxu0
    %1857 = vmatprep.mubr.f32.mxu0 0.0
    %1858 = vmatmul.mubr.f32.gmra.mrb[0].mxu0 %v750
    %v1859 = vpop.f32.mrb[0].mxu0
    %v1860 = vadd.f32 %v332, %v1859
    %v1861 = vpop.f32.mrb[0].mxu0
    %1862 = vmatprep.mubr.f32.mxu0 0.0
    %1863 = vmatmul.mubr.f32.gmra.mrb[0].mxu0 %v753
    %v1864 = vpop.f32.mrb[0].mxu0
    %v1865 = vadd.f32 %v332, %v1864
    %v1866 = vpop.f32.mrb[0].mxu0
    %1867 = vmatprep.mubr.f32.mxu0 0.0
    %1868 = vmatmul.mubr.f32.gmra.mrb[0].mxu0 %v756
    %v1869 = vpop.f32.mrb[0].mxu0
    %v1870 = vadd.f32 %v332, %v1869
    %v1871 = vpop.f32.mrb[0].mxu0
    %1872 = vmatprep.mubr.f32.mxu0 0.0
    %1873 = vmatmul.mubr.f32.gmra.mrb[0].mxu0 %v759
    %v1874 = vpop.f32.mrb[0].mxu0
    %v1875 = vadd.f32 %v332, %v1874
    %v1876 = vpop.f32.mrb[0].mxu0
    %1877 = vmatprep.mubr.f32.mxu0 0.0
    %1878 = vmatmul.mubr.f32.gmra.mrb[0].mxu0 %v762
    %v1879 = vpop.f32.mrb[0].mxu0
    %v1880 = vadd.f32 %v332, %v1879
    %v1881 = vpop.f32.mrb[0].mxu0
    %1882 = vmatprep.mubr.f32.mxu0 0.0
    %1883 = vmatmul.mubr.f32.gmra.mrb[0].mxu0 %v765
    %v1884 = vpop.f32.mrb[0].mxu0
    %v1885 = vadd.f32 %v332, %v1884
    %v1886 = vpop.f32.mrb[0].mxu0
    %1887 = vmatprep.mubr.f32.mxu0 0.0
    %1888 = vmatmul.mubr.f32.gmra.mrb[0].mxu0 %v768
    %v1889 = vpop.f32.mrb[0].mxu0
    %v1890 = vadd.f32 %v332, %v1889
    %v1891 = vpop.f32.mrb[0].mxu0
    %1892 = vmatprep.mubr.f32.mxu0 0.0
    %1893 = vmatmul.mubr.f32.gmra.mrb[0].mxu0 %v771
    %v1894 = vpop.f32.mrb[0].mxu0
    %v1895 = vadd.f32 %v332, %v1894
    %v1896 = vpop.f32.mrb[0].mxu0
    %1897 = vmatprep.mubr.f32.mxu0 0.0
    %1898 = vmatmul.mubr.f32.gmra.mrb[0].mxu0 %v774
    %v1899 = vpop.f32.mrb[0].mxu0
    %v1900 = vadd.f32 %v332, %v1899
    %v1901 = vpop.f32.mrb[0].mxu0
    %1902 = vmatprep.mubr.f32.mxu0 0.0
    %1903 = vmatmul.mubr.f32.gmra.mrb[0].mxu0 %v777
    %v1904 = vpop.f32.mrb[0].mxu0
    %v1905 = vadd.f32 %v332, %v1904
    %v1906 = vpop.f32.mrb[0].mxu0
    %1907 = vmatprep.mubr.f32.mxu0 0.0
    %1908 = vmatmul.mubr.f32.gmra.mrb[0].mxu0 %v780
    %v1909 = vpop.f32.mrb[0].mxu0
    %v1910 = vadd.f32 %v332, %v1909
    %v1911 = vpop.f32.mrb[0].mxu0
    %1912 = vmatprep.mubr.f32.mxu0 0.0
    %1913 = vmatmul.mubr.f32.gmra.mrb[0].mxu0 %v783
    %v1914 = vpop.f32.mrb[0].mxu0
    %v1915 = vadd.f32 %v332, %v1914
    %v1916 = vpop.f32.mrb[0].mxu0
    %1917 = vmatprep.mubr.f32.mxu0 0.0
    %1918 = vmatmul.mubr.f32.gmra.mrb[0].mxu0 %v786
    %v1919 = vpop.f32.mrb[0].mxu0
    %v1920 = vadd.f32 %v332, %v1919
    %v1921 = vpop.f32.mrb[0].mxu0
    %1922 = vmatprep.mubr.f32.mxu0 0.0
    %1923 = vmatmul.mubr.f32.gmra.mrb[0].mxu0 %v789
    %v1924 = vpop.f32.mrb[0].mxu0
    %v1925 = vadd.f32 %v332, %v1924
    %v1926 = vpop.f32.mrb[0].mxu0
    %1927 = vmatprep.mubr.f32.mxu0 0.0
    %1928 = vmatmul.mubr.f32.gmra.mrb[0].mxu0 %v792
    %v1929 = vpop.f32.mrb[0].mxu0
    %v1930 = vadd.f32 %v332, %v1929
    %v1931 = vpop.f32.mrb[0].mxu0
    %1932 = vmatprep.mubr.f32.mxu0 0.0
    %1933 = vmatmul.mubr.f32.gmra.mrb[0].mxu0 %v795
    %v1934 = vpop.f32.mrb[0].mxu0
    %v1935 = vadd.f32 %v332, %v1934
    %v1936 = vpop.f32.mrb[0].mxu0
    %1937 = vmatprep.mubr.f32.mxu0 0.0
    %1938 = vmatmul.mubr.f32.gmra.mrb[0].mxu0 %v798
    %v1939 = vpop.f32.mrb[0].mxu0
    %v1940 = vadd.f32 %v332, %v1939
    %v1941 = vpop.f32.mrb[0].mxu0
    %1942 = vmatprep.mubr.f32.mxu0 0.0
    %1943 = vmatmul.mubr.f32.gmra.mrb[0].mxu0 %v801
    %v1944 = vpop.f32.mrb[0].mxu0
    %v1945 = vadd.f32 %v332, %v1944
    %v1946 = vpop.f32.mrb[0].mxu0
    %1947 = vmatprep.mubr.f32.mxu0 0.0
    %1948 = vmatmul.mubr.f32.gmra.mrb[0].mxu0 %v804
    %v1949 = vpop.f32.mrb[0].mxu0
    %v1950 = vadd.f32 %v332, %v1949
    %v1951 = vpop.f32.mrb[0].mxu0
    %1952 = vmatprep.mubr.f32.mxu0 0.0
    %1953 = vmatmul.mubr.f32.gmra.mrb[0].mxu0 %v807
    %v1954 = vpop.f32.mrb[0].mxu0
    %v1955 = vadd.f32 %v332, %v1954
    %v1956 = vpop.f32.mrb[0].mxu0
    %1957 = vmatprep.mubr.f32.mxu0 0.0
    %1958 = vmatmul.mubr.f32.gmra.mrb[0].mxu0 %v810
    %v1959 = vpop.f32.mrb[0].mxu0
    %v1960 = vadd.f32 %v332, %v1959
    %v1961 = vpop.f32.mrb[0].mxu0
    %1962 = vmatprep.mubr.f32.mxu0 0.0
    %1963 = vmatmul.mubr.f32.gmra.mrb[0].mxu0 %v813
    %v1964 = vpop.f32.mrb[0].mxu0
    %v1965 = vadd.f32 %v332, %v1964
    %v1966 = vpop.f32.mrb[0].mxu0
    %1967 = vmatprep.mubr.f32.mxu0 0.0
    %1968 = vmatmul.mubr.f32.gmra.mrb[0].mxu0 %v816
    %v1969 = vpop.f32.mrb[0].mxu0
    %v1970 = vadd.f32 %v332, %v1969
    %v1971 = vpop.f32.mrb[0].mxu0
    %1972 = vmatprep.mubr.f32.mxu0 0.0
    %1973 = vmatmul.mubr.f32.gmra.mrb[0].mxu0 %v819
    %v1974 = vpop.f32.mrb[0].mxu0
    %v1975 = vadd.f32 %v332, %v1974
    %v1976 = vpop.f32.mrb[0].mxu0
    %1977 = vmatprep.mubr.f32.mxu0 0.0
    %1978 = vmatmul.mubr.f32.gmra.mrb[0].mxu0 %v822
    %v1979 = vpop.f32.mrb[0].mxu0
    %v1980 = vadd.f32 %v332, %v1979
    %v1981 = vpop.f32.mrb[0].mxu0
    %1982 = vmatprep.mubr.f32.mxu0 0.0
    %1983 = vmatmul.mubr.f32.gmra.mrb[0].mxu0 %v825
    %v1984 = vpop.f32.mrb[0].mxu0
    %v1985 = vadd.f32 %v332, %v1984
    %v1986 = vpop.f32.mrb[0].mxu0
    %1987 = vmatprep.mubr.f32.mxu0 0.0
    %1988 = vmatmul.mubr.f32.gmra.mrb[0].mxu0 %v828
    %v1989 = vpop.f32.mrb[0].mxu0
    %v1990 = vadd.f32 %v332, %v1989
    %v1991 = vpop.f32.mrb[0].mxu0
    %1992 = vmatprep.mubr.f32.mxu0 0.0
    %1993 = vmatmul.mubr.f32.gmra.mrb[0].mxu0 %v831
    %v1994 = vpop.f32.mrb[0].mxu0
    %v1995 = vadd.f32 %v332, %v1994
    %v1996 = vpop.f32.mrb[0].mxu0
    %1997 = vmatprep.mubr.f32.mxu0 0.0
    %1998 = vmatmul.mubr.f32.gmra.mrb[0].mxu0 %v834
    %v1999 = vpop.f32.mrb[0].mxu0
    %v2000 = vadd.f32 %v332, %v1999
    %v2001 = vpop.f32.mrb[0].mxu0
    %2002 = vmatprep.mubr.f32.mxu0 0.0
    %2003 = vmatmul.mubr.f32.gmra.mrb[0].mxu0 %v837
    %v2004 = vpop.f32.mrb[0].mxu0
    %v2005 = vadd.f32 %v332, %v2004
    %v2006 = vpop.f32.mrb[0].mxu0
    %2007 = vmatprep.mubr.f32.mxu0 0.0
    %2008 = vmatmul.mubr.f32.gmra.mrb[0].mxu0 %v840
    %v2009 = vpop.f32.mrb[0].mxu0
    %v2010 = vadd.f32 %v332, %v2009
    %v2011 = vpop.f32.mrb[0].mxu0
    %2012 = vmatprep.mubr.f32.mxu0 0.0
    %2013 = vmatmul.mubr.f32.gmra.mrb[0].mxu0 %v843
    %v2014 = vpop.f32.mrb[0].mxu0
    %v2015 = vadd.f32 %v332, %v2014
    %v2016 = vpop.f32.mrb[0].mxu0
    %2017 = vmatprep.mubr.f32.mxu0 0.0
    %2018 = vmatmul.mubr.f32.gmra.mrb[0].mxu0 %v846
    %v2019 = vpop.f32.mrb[0].mxu0
    %v2020 = vadd.f32 %v332, %v2019
    %v2021 = vpop.f32.mrb[0].mxu0
    %2022 = vmatprep.mubr.f32.mxu0 0.0
    %2023 = vmatmul.mubr.f32.gmra.mrb[0].mxu0 %v849
    %v2024 = vpop.f32.mrb[0].mxu0
    %v2025 = vadd.f32 %v332, %v2024
    %v2026 = vpop.f32.mrb[0].mxu0
    %2027 = vmatprep.mubr.f32.mxu0 0.0
    %2028 = vmatmul.mubr.f32.gmra.mrb[0].mxu0 %v852
    %v2029 = vpop.f32.mrb[0].mxu0
    %v2030 = vadd.f32 %v332, %v2029
    %v2031 = vpop.f32.mrb[0].mxu0
    %2032 = vmatprep.mubr.f32.mxu0 0.0
    %2033 = vmatmul.mubr.f32.gmra.mrb[0].mxu0 %v855
    %v2034 = vpop.f32.mrb[0].mxu0
    %v2035 = vadd.f32 %v332, %v2034
    %v2036 = vpop.f32.mrb[0].mxu0
    %2037 = vmatprep.mubr.f32.mxu0 0.0
    %2038 = vmatmul.mubr.f32.gmra.mrb[0].mxu0 %v858
    %v2039 = vpop.f32.mrb[0].mxu0
    %v2040 = vadd.f32 %v332, %v2039
    %v2041 = vpop.f32.mrb[0].mxu0
    %2042 = vmatprep.mubr.f32.mxu0 0.0
    %2043 = vmatmul.mubr.f32.gmra.mrb[0].mxu0 %v861
    %v2044 = vpop.f32.mrb[0].mxu0
    %v2045 = vadd.f32 %v332, %v2044
    %v2046 = vpop.f32.mrb[0].mxu0
    %2047 = vmatprep.mubr.f32.mxu0 0.0
    %2048 = vmatmul.mubr.f32.gmra.mrb[0].mxu0 %v864
    %v2049 = vpop.f32.mrb[0].mxu0
    %v2050 = vadd.f32 %v332, %v2049
    %v2051 = vpop.f32.mrb[0].mxu0
    %2052 = vmatprep.mubr.f32.mxu0 0.0
    %2053 = vmatmul.mubr.f32.gmra.mrb[0].mxu0 %v867
    %v2054 = vpop.f32.mrb[0].mxu0
    %v2055 = vadd.f32 %v332, %v2054
    %v2056 = vpop.f32.mrb[0].mxu0
    %2057 = vmatprep.mubr.f32.mxu0 0.0
    %2058 = vmatmul.mubr.f32.gmra.mrb[0].mxu0 %v870
    %v2059 = vpop.f32.mrb[0].mxu0
    %v2060 = vadd.f32 %v332, %v2059
    %v2061 = vpop.f32.mrb[0].mxu0
    %2062 = vmatprep.mubr.f32.mxu0 0.0
    %2063 = vmatmul.mubr.f32.gmra.mrb[0].mxu0 %v873
    %v2064 = vpop.f32.mrb[0].mxu0
    %v2065 = vadd.f32 %v332, %v2064
    %v2066 = vpop.f32.mrb[0].mxu0
    %2067 = vmatprep.mubr.f32.mxu0 0.0
    %2068 = vmatmul.mubr.f32.gmra.mrb[0].mxu0 %v876
    %v2069 = vpop.f32.mrb[0].mxu0
    %v2070 = vadd.f32 %v332, %v2069
    %v2071 = vpop.f32.mrb[0].mxu0
    %2072 = vmatprep.mubr.f32.mxu0 0.0
    %2073 = vmatmul.mubr.f32.gmra.mrb[0].mxu0 %v879
    %v2074 = vpop.f32.mrb[0].mxu0
    %v2075 = vadd.f32 %v332, %v2074
    %v2076 = vpop.f32.mrb[0].mxu0
    %2077 = vmatprep.mubr.f32.mxu0 0.0
    %2078 = vmatmul.mubr.f32.gmra.mrb[0].mxu0 %v882
    %v2079 = vpop.f32.mrb[0].mxu0
    %v2080 = vadd.f32 %v332, %v2079
    %v2081 = vpop.f32.mrb[0].mxu0
    %2082 = vmatprep.mubr.f32.mxu0 0.0
    %2083 = vmatmul.mubr.f32.gmra.mrb[0].mxu0 %v885
    %v2084 = vpop.f32.mrb[0].mxu0
    %v2085 = vadd.f32 %v332, %v2084
    %v2086 = vpop.f32.mrb[0].mxu0
    %2087 = vmatprep.mubr.f32.mxu0 0.0
    %2088 = vmatmul.mubr.f32.gmra.mrb[0].mxu0 %v888
    %v2089 = vpop.f32.mrb[0].mxu0
    %v2090 = vadd.f32 %v332, %v2089
    %v2091 = vpop.f32.mrb[0].mxu0
    %2092 = vmatprep.mubr.f32.mxu0 0.0
    %2093 = vmatmul.mubr.f32.gmra.mrb[0].mxu0 %v891
    %v2094 = vpop.f32.mrb[0].mxu0
    %v2095 = vadd.f32 %v332, %v2094
    %v2096 = vpop.f32.mrb[0].mxu0
    %2097 = vmatprep.mubr.f32.mxu0 0.0
    %2098 = vmatmul.mubr.f32.gmra.mrb[0].mxu0 %v894
    %v2099 = vpop.f32.mrb[0].mxu0
    %v2100 = vadd.f32 %v332, %v2099
    %v2101 = vpop.f32.mrb[0].mxu0
    %2102 = vmatprep.mubr.f32.mxu0 0.0
    %2103 = vmatmul.mubr.f32.gmra.mrb[0].mxu0 %v897
    %v2104 = vpop.f32.mrb[0].mxu0
    %v2105 = vadd.f32 %v332, %v2104
    %v2106 = vpop.f32.mrb[0].mxu0
    %2107 = vmatprep.mubr.f32.mxu0 0.0
    %2108 = vmatmul.mubr.f32.gmra.mrb[0].mxu0 %v900
    %v2109 = vpop.f32.mrb[0].mxu0
    %v2110 = vadd.f32 %v332, %v2109
    %v2111 = vpop.f32.mrb[0].mxu0
    %2112 = vmatprep.mubr.f32.mxu0 0.0
    %2113 = vmatmul.mubr.f32.gmra.mrb[0].mxu0 %v903
    %v2114 = vpop.f32.mrb[0].mxu0
    %v2115 = vadd.f32 %v332, %v2114
    %v2116 = vpop.f32.mrb[0].mxu0
    %2117 = vmatprep.mubr.f32.mxu0 0.0
    %2118 = vmatmul.mubr.f32.gmra.mrb[0].mxu0 %v906
    %v2119 = vpop.f32.mrb[0].mxu0
    %v2120 = vadd.f32 %v332, %v2119
    %v2121 = vpop.f32.mrb[0].mxu0
    %2122 = vmatprep.mubr.f32.mxu0 0.0
    %2123 = vmatmul.mubr.f32.gmra.mrb[0].mxu0 %v909
    %v2124 = vpop.f32.mrb[0].mxu0
    %v2125 = vadd.f32 %v332, %v2124
    %v2126 = vpop.f32.mrb[0].mxu0
    %2127 = vmatprep.mubr.f32.mxu0 0.0
    %2128 = vmatmul.mubr.f32.gmra.mrb[0].mxu0 %v912
    %v2129 = vpop.f32.mrb[0].mxu0
    %v2130 = vadd.f32 %v332, %v2129
    %v2131 = vpop.f32.mrb[0].mxu0
    %2132 = vmatprep.mubr.f32.mxu0 0.0
    %2133 = vmatmul.mubr.f32.gmra.mrb[0].mxu0 %v915
    %v2134 = vpop.f32.mrb[0].mxu0
    %v2135 = vadd.f32 %v332, %v2134
    %v2136 = vpop.f32.mrb[0].mxu0
    %2137 = vmatprep.mubr.f32.mxu0 0.0
    %2138 = vmatmul.mubr.f32.gmra.mrb[0].mxu0 %v918
    %v2139 = vpop.f32.mrb[0].mxu0
    %v2140 = vadd.f32 %v332, %v2139
    %v2141 = vpop.f32.mrb[0].mxu0
    %2142 = vmatprep.mubr.f32.mxu0 0.0
    %2143 = vmatmul.mubr.f32.gmra.mrb[0].mxu0 %v921
    %v2144 = vpop.f32.mrb[0].mxu0
    %v2145 = vadd.f32 %v332, %v2144
    %v2146 = vpop.f32.mrb[0].mxu0
    %2147 = vmatprep.mubr.f32.mxu0 0.0
    %2148 = vmatmul.mubr.f32.gmra.mrb[0].mxu0 %v924
    %v2149 = vpop.f32.mrb[0].mxu0
    %v2150 = vadd.f32 %v332, %v2149
    %v2151 = vpop.f32.mrb[0].mxu0
    %2152 = vmatprep.mubr.f32.mxu0 0.0
    %2153 = vmatmul.mubr.f32.gmra.mrb[0].mxu0 %v927
    %v2154 = vpop.f32.mrb[0].mxu0
    %v2155 = vadd.f32 %v332, %v2154
    %v2156 = vpop.f32.mrb[0].mxu0
    %2157 = vmatprep.mubr.f32.mxu0 0.0
    %2158 = vmatmul.mubr.f32.gmra.mrb[0].mxu0 %v930
    %v2159 = vpop.f32.mrb[0].mxu0
    %v2160 = vadd.f32 %v332, %v2159
    %v2161 = vpop.f32.mrb[0].mxu0
    %2162 = vmatprep.mubr.f32.mxu0 0.0
    %2163 = vmatmul.mubr.f32.gmra.mrb[0].mxu0 %v933
    %v2164 = vpop.f32.mrb[0].mxu0
    %v2165 = vadd.f32 %v332, %v2164
    %v2166 = vpop.f32.mrb[0].mxu0
    %2167 = vmatprep.mubr.f32.mxu0 0.0
    %2168 = vmatmul.mubr.f32.gmra.mrb[0].mxu0 %v936
    %v2169 = vpop.f32.mrb[0].mxu0
    %v2170 = vadd.f32 %v332, %v2169
    %v2171 = vpop.f32.mrb[0].mxu0
    %2172 = vmatprep.mubr.f32.mxu0 0.0
    %2173 = vmatmul.mubr.f32.gmra.mrb[0].mxu0 %v939
    %v2174 = vpop.f32.mrb[0].mxu0
    %v2175 = vadd.f32 %v332, %v2174
    %v2176 = vpop.f32.mrb[0].mxu0
    %2177 = vmatprep.mubr.f32.mxu0 0.0
    %2178 = vmatmul.mubr.f32.gmra.mrb[0].mxu0 %v942
    %v2179 = vpop.f32.mrb[0].mxu0
    %v2180 = vadd.f32 %v332, %v2179
    %v2181 = vpop.f32.mrb[0].mxu0
    %2182 = vmatprep.mubr.f32.mxu0 0.0
    %2183 = vmatmul.mubr.f32.gmra.mrb[0].mxu0 %v945
    %v2184 = vpop.f32.mrb[0].mxu0
    %v2185 = vadd.f32 %v332, %v2184
    %v2186 = vpop.f32.mrb[0].mxu0
    %2187 = vmatprep.mubr.f32.mxu0 0.0
    %2188 = vmatmul.mubr.f32.gmra.mrb[0].mxu0 %v948
    %v2189 = vpop.f32.mrb[0].mxu0
    %v2190 = vadd.f32 %v332, %v2189
    %v2191 = vpop.f32.mrb[0].mxu0
    %2192 = vmatprep.mubr.f32.mxu0 0.0
    %2193 = vmatmul.mubr.f32.gmra.mrb[0].mxu0 %v951
    %v2194 = vpop.f32.mrb[0].mxu0
    %v2195 = vadd.f32 %v332, %v2194
    %v2196 = vpop.f32.mrb[0].mxu0
    %2197 = vmatprep.mubr.f32.mxu0 0.0
    %2198 = vmatmul.mubr.f32.gmra.mrb[0].mxu0 %v954
    %v2199 = vpop.f32.mrb[0].mxu0
    %v2200 = vadd.f32 %v332, %v2199
    %v2201 = vpop.f32.mrb[0].mxu0
    %2202 = vmatprep.mubr.f32.mxu0 0.0
    %2203 = vmatmul.mubr.f32.gmra.mrb[0].mxu0 %v957
    %v2204 = vpop.f32.mrb[0].mxu0
    %v2205 = vadd.f32 %v332, %v2204
    %v2206 = vpop.f32.mrb[0].mxu0
    %2207 = vmatprep.mubr.f32.mxu0 0.0
    %2208 = vmatmul.mubr.f32.gmra.mrb[0].mxu0 %v960
    %v2209 = vpop.f32.mrb[0].mxu0
    %v2210 = vadd.f32 %v332, %v2209
    %v2211 = vpop.f32.mrb[0].mxu0
    %2212 = vmatprep.mubr.f32.mxu0 0.0
    %2213 = vmatmul.mubr.f32.gmra.mrb[0].mxu0 %v963
    %v2214 = vpop.f32.mrb[0].mxu0
    %v2215 = vadd.f32 %v332, %v2214
    %v2216 = vpop.f32.mrb[0].mxu0
    %2217 = vmatprep.mubr.f32.mxu0 0.0
    %2218 = vmatmul.mubr.f32.gmra.mrb[0].mxu0 %v966
    %v2219 = vpop.f32.mrb[0].mxu0
    %v2220 = vadd.f32 %v332, %v2219
    %v2221 = vpop.f32.mrb[0].mxu0
    %2222 = vmatprep.mubr.f32.mxu0 0.0
    %2223 = vmatmul.mubr.f32.gmra.mrb[0].mxu0 %v969
    %v2224 = vpop.f32.mrb[0].mxu0
    %v2225 = vadd.f32 %v332, %v2224
    %v2226 = vpop.f32.mrb[0].mxu0
    %2227 = vmatprep.mubr.f32.mxu0 0.0
    %2228 = vmatmul.mubr.f32.gmra.mrb[0].mxu0 %v972
    %v2229 = vpop.f32.mrb[0].mxu0
    %v2230 = vadd.f32 %v332, %v2229
    %v2231 = vpop.f32.mrb[0].mxu0
    %2232 = vmatprep.mubr.f32.mxu0 0.0
    %2233 = vmatmul.mubr.f32.gmra.mrb[0].mxu0 %v975
    %v2234 = vpop.f32.mrb[0].mxu0
    %v2235 = vadd.f32 %v332, %v2234
    %v2236 = vpop.f32.mrb[0].mxu0
    %2237 = vmatprep.mubr.f32.mxu0 0.0
    %2238 = vmatmul.mubr.f32.gmra.mrb[0].mxu0 %v978
    %v2239 = vpop.f32.mrb[0].mxu0
    %v2240 = vadd.f32 %v332, %v2239
    %v2241 = vpop.f32.mrb[0].mxu0
    %2242 = vmatprep.mubr.f32.mxu0 0.0
    %2243 = vmatmul.mubr.f32.gmra.mrb[0].mxu0 %v981
    %v2244 = vpop.f32.mrb[0].mxu0
    %v2245 = vadd.f32 %v332, %v2244
    %v2246 = vpop.f32.mrb[0].mxu0
    %2247 = vmatprep.mubr.f32.mxu0 0.0
    %2248 = vmatmul.mubr.f32.gmra.mrb[0].mxu0 %v984
    %v2249 = vpop.f32.mrb[0].mxu0
    %v2250 = vadd.f32 %v332, %v2249
    %v2251 = vpop.f32.mrb[0].mxu0
    %2252 = vmatprep.mubr.f32.mxu0 0.0
    %2253 = vmatmul.mubr.f32.gmra.mrb[0].mxu0 %v987
    %v2254 = vpop.f32.mrb[0].mxu0
    %v2255 = vadd.f32 %v332, %v2254
    %v2256 = vpop.f32.mrb[0].mxu0
    %2257 = vmatprep.mubr.f32.mxu0 0.0
    %2258 = vmatmul.mubr.f32.gmra.mrb[0].mxu0 %v990
    %v2259 = vpop.f32.mrb[0].mxu0
    %v2260 = vadd.f32 %v332, %v2259
    %v2261 = vpop.f32.mrb[0].mxu0
    %2262 = vmatprep.mubr.f32.mxu0 0.0
    %2263 = vmatmul.mubr.f32.gmra.mrb[0].mxu0 %v993
    %v2264 = vpop.f32.mrb[0].mxu0
    %v2265 = vadd.f32 %v332, %v2264
    %v2266 = vpop.f32.mrb[0].mxu0
    %2267 = vmatprep.mubr.f32.mxu0 0.0
    %2268 = vmatmul.mubr.f32.gmra.mrb[0].mxu0 %v996
    %v2269 = vpop.f32.mrb[0].mxu0
    %v2270 = vadd.f32 %v332, %v2269
    %v2271 = vpop.f32.mrb[0].mxu0
    %2272 = vmatprep.mubr.f32.mxu0 0.0
    %2273 = vmatmul.mubr.f32.gmra.mrb[0].mxu0 %v999
    %v2274 = vpop.f32.mrb[0].mxu0
    %v2275 = vadd.f32 %v332, %v2274
    %v2276 = vpop.f32.mrb[0].mxu0
    %2277 = vmatprep.mubr.f32.mxu0 0.0
    %2278 = vmatmul.mubr.f32.gmra.mrb[0].mxu0 %v1002
    %v2279 = vpop.f32.mrb[0].mxu0
    %v2280 = vadd.f32 %v332, %v2279
    %v2281 = vpop.f32.mrb[0].mxu0
    %2282 = vmatprep.mubr.f32.mxu0 0.0
    %2283 = vmatmul.mubr.f32.gmra.mrb[0].mxu0 %v1005
    %v2284 = vpop.f32.mrb[0].mxu0
    %v2285 = vadd.f32 %v332, %v2284
    %v2286 = vpop.f32.mrb[0].mxu0
    %2287 = vmatprep.mubr.f32.mxu0 0.0
    %2288 = vmatmul.mubr.f32.gmra.mrb[0].mxu0 %v1008
    %v2289 = vpop.f32.mrb[0].mxu0
    %v2290 = vadd.f32 %v332, %v2289
    %v2291 = vpop.f32.mrb[0].mxu0
    %2292 = vmatprep.mubr.f32.mxu0 0.0
    %2293 = vmatmul.mubr.f32.gmra.mrb[0].mxu0 %v1011
    %v2294 = vpop.f32.mrb[0].mxu0
    %v2295 = vadd.f32 %v332, %v2294
    %v2296 = vpop.f32.mrb[0].mxu0
    %2297 = vmatprep.mubr.f32.mxu0 0.0
    %2298 = vmatmul.mubr.f32.gmra.mrb[0].mxu0 %v1014
    %v2299 = vpop.f32.mrb[0].mxu0
    %v2300 = vadd.f32 %v332, %v2299
    %v2301 = vpop.f32.mrb[0].mxu0
    %2302 = vmatprep.mubr.f32.mxu0 0.0
    %2303 = vmatmul.mubr.f32.gmra.mrb[0].mxu0 %v1017
    %v2304 = vpop.f32.mrb[0].mxu0
    %v2305 = vadd.f32 %v332, %v2304
    %v2306 = vpop.f32.mrb[0].mxu0
    %2307 = vmatprep.mubr.f32.mxu0 0.0
    %2308 = vmatmul.mubr.f32.gmra.mrb[0].mxu0 %v1020
    %v2309 = vpop.f32.mrb[0].mxu0
    %v2310 = vadd.f32 %v332, %v2309
    %v2311 = vpop.f32.mrb[0].mxu0
    %2312 = vmatprep.mubr.f32.mxu0 0.0
    %2313 = vmatmul.mubr.f32.gmra.mrb[0].mxu0 %v1023
    %v2314 = vpop.f32.mrb[0].mxu0
    %v2315 = vadd.f32 %v332, %v2314
    %v2316 = vpop.f32.mrb[0].mxu0
    %2317 = vmatprep.mubr.f32.mxu0 0.0
    %2318 = vmatmul.mubr.f32.gmra.mrb[0].mxu0 %v1026
    %v2319 = vpop.f32.mrb[0].mxu0
    %v2320 = vadd.f32 %v332, %v2319
    %v2321 = vpop.f32.mrb[0].mxu0
    %2322 = vmatprep.mubr.f32.mxu0 0.0
    %2323 = vmatmul.mubr.f32.gmra.mrb[0].mxu0 %v1029
    %v2324 = vpop.f32.mrb[0].mxu0
    %v2325 = vadd.f32 %v332, %v2324
    %v2326 = vpop.f32.mrb[0].mxu0
    %2327 = vmatprep.mubr.f32.mxu0 0.0
    %2328 = vmatmul.mubr.f32.gmra.mrb[0].mxu0 %v1032
    %v2329 = vpop.f32.mrb[0].mxu0
    %v2330 = vadd.f32 %v332, %v2329
    %v2331 = vpop.f32.mrb[0].mxu0
    %2332 = vmatprep.mubr.f32.mxu0 0.0
    %2333 = vmatmul.mubr.f32.gmra.mrb[0].mxu0 %v1035
    %v2334 = vpop.f32.mrb[0].mxu0
    %v2335 = vadd.f32 %v332, %v2334
    %v2336 = vpop.f32.mrb[0].mxu0
    %2337 = vmatprep.mubr.f32.mxu0 0.0
    %2338 = vmatmul.mubr.f32.gmra.mrb[0].mxu0 %v1038
    %v2339 = vpop.f32.mrb[0].mxu0
    %v2340 = vadd.f32 %v332, %v2339
    %v2341 = vpop.f32.mrb[0].mxu0
    %2342 = vmatprep.mubr.f32.mxu0 0.0
    %2343 = vmatmul.mubr.f32.gmra.mrb[0].mxu0 %v1041
    %v2344 = vpop.f32.mrb[0].mxu0
    %v2345 = vadd.f32 %v332, %v2344
    %v2346 = vpop.f32.mrb[0].mxu0
    %2347 = vmatprep.mubr.f32.mxu0 0.0
    %2348 = vmatmul.mubr.f32.gmra.mrb[0].mxu0 %v1044
    %v2349 = vpop.f32.mrb[0].mxu0
    %v2350 = vadd.f32 %v332, %v2349
    %v2351 = vpop.f32.mrb[0].mxu0
    %2352 = vmatprep.mubr.f32.mxu0 0.0
    %2353 = vmatmul.mubr.f32.gmra.mrb[0].mxu0 %v1047
    %v2354 = vpop.f32.mrb[0].mxu0
    %v2355 = vadd.f32 %v332, %v2354
    %v2356 = vpop.f32.mrb[0].mxu0
    %2357 = vmatprep.mubr.f32.mxu0 0.0
    %2358 = vmatmul.mubr.f32.gmra.mrb[0].mxu0 %v1050
    %v2359 = vpop.f32.mrb[0].mxu0
    %v2360 = vadd.f32 %v332, %v2359
    %v2361 = vpop.f32.mrb[0].mxu0
    %2362 = vmatprep.mubr.f32.mxu0 0.0
    %2363 = vmatmul.mubr.f32.gmra.mrb[0].mxu0 %v1053
    %v2364 = vpop.f32.mrb[0].mxu0
    %v2365 = vadd.f32 %v332, %v2364
    %v2366 = vpop.f32.mrb[0].mxu0
    %2367 = vmatprep.mubr.f32.mxu0 0.0
    %2368 = vmatmul.mubr.f32.gmra.mrb[0].mxu0 %v1056
    %v2369 = vpop.f32.mrb[0].mxu0
    %v2370 = vadd.f32 %v332, %v2369
    %v2371 = vpop.f32.mrb[0].mxu0
    %2372 = vmatprep.mubr.f32.mxu0 0.0
    %2373 = vmatmul.mubr.f32.gmra.mrb[0].mxu0 %v1059
    %v2374 = vpop.f32.mrb[0].mxu0
    %v2375 = vadd.f32 %v332, %v2374
    %v2376 = vpop.f32.mrb[0].mxu0
    %2377 = vmatprep.mubr.f32.mxu0 0.0
    %2378 = vmatmul.mubr.f32.gmra.mrb[0].mxu0 %v1062
    %v2379 = vpop.f32.mrb[0].mxu0
    %v2380 = vadd.f32 %v332, %v2379
    %v2381 = vpop.f32.mrb[0].mxu0
    %2382 = vmatprep.mubr.f32.mxu0 0.0
    %2383 = vmatmul.mubr.f32.gmra.mrb[0].mxu0 %v1065
    %v2384 = vpop.f32.mrb[0].mxu0
    %v2385 = vadd.f32 %v332, %v2384
    %v2386 = vpop.f32.mrb[0].mxu0
    %2387 = vmatprep.mubr.f32.mxu0 0.0
    %2388 = vmatmul.mubr.f32.gmra.mrb[0].mxu0 %v1068
    %v2389 = vpop.f32.mrb[0].mxu0
    %v2390 = vadd.f32 %v332, %v2389
    %v2391 = vpop.f32.mrb[0].mxu0
    %2392 = vmatprep.mubr.f32.mxu0 0.0
    %2393 = vmatmul.mubr.f32.gmra.mrb[0].mxu0 %v1071
    %v2394 = vpop.f32.mrb[0].mxu0
    %v2395 = vadd.f32 %v332, %v2394
    %v2396 = vpop.f32.mrb[0].mxu0
    %2397 = vmatprep.mubr.f32.mxu0 0.0
    %2398 = vmatmul.mubr.f32.gmra.mrb[0].mxu0 %v1074
    %v2399 = vpop.f32.mrb[0].mxu0
    %v2400 = vadd.f32 %v332, %v2399
    %v2401 = vpop.f32.mrb[0].mxu0
    %2402 = vmatprep.mubr.f32.mxu0 0.0
    %2403 = vmatmul.mubr.f32.gmra.mrb[0].mxu0 %v1077
    %v2404 = vpop.f32.mrb[0].mxu0
    %v2405 = vadd.f32 %v332, %v2404
    %v2406 = vpop.f32.mrb[0].mxu0
    %2407 = vmatprep.mubr.f32.mxu0 0.0
    %2408 = vmatmul.mubr.f32.gmra.mrb[0].mxu0 %v1080
    %v2409 = vpop.f32.mrb[0].mxu0
    %v2410 = vadd.f32 %v332, %v2409
    %v2411 = vpop.f32.mrb[0].mxu0
    %2412 = vmatprep.mubr.f32.mxu0 0.0
    %2413 = vmatmul.mubr.f32.gmra.mrb[0].mxu0 %v1083
    %v2414 = vpop.f32.mrb[0].mxu0
    %v2415 = vadd.f32 %v332, %v2414
    %v2416 = vpop.f32.mrb[0].mxu0
    %2417 = vmatprep.mubr.f32.mxu0 0.0
    %2418 = vmatmul.mubr.f32.gmra.mrb[0].mxu0 %v1086
    %v2419 = vpop.f32.mrb[0].mxu0
    %v2420 = vadd.f32 %v332, %v2419
    %v2421 = vpop.f32.mrb[0].mxu0
    %2422 = vmatprep.mubr.f32.mxu0 0.0
    %2423 = vmatmul.mubr.f32.gmra.mrb[0].mxu0 %v1089
    %v2424 = vpop.f32.mrb[0].mxu0
    %v2425 = vadd.f32 %v332, %v2424
    %v2426 = vpop.f32.mrb[0].mxu0
    %2427 = vmatprep.mubr.f32.mxu0 0.0
    %2428 = vmatmul.mubr.f32.gmra.mrb[0].mxu0 %v1092
    %v2429 = vpop.f32.mrb[0].mxu0
    %v2430 = vadd.f32 %v332, %v2429
    %v2431 = vpop.f32.mrb[0].mxu0
    %2432 = vmatprep.mubr.f32.mxu0 0.0
    %2433 = vmatmul.mubr.f32.gmra.mrb[0].mxu0 %v1095
    %v2434 = vpop.f32.mrb[0].mxu0
    %v2435 = vadd.f32 %v332, %v2434
    %v2436 = vpop.f32.mrb[0].mxu0
    %2437 = vmatprep.mubr.f32.mxu0 0.0
    %2438 = vmatmul.mubr.f32.gmra.mrb[0].mxu0 %v1098
    %v2439 = vpop.f32.mrb[0].mxu0
    %v2440 = vadd.f32 %v332, %v2439
    %v2441 = vpop.f32.mrb[0].mxu0
    %2442 = vmatprep.mubr.f32.mxu0 0.0
    %2443 = vmatmul.mubr.f32.gmra.mrb[0].mxu0 %v1101
    %v2444 = vpop.f32.mrb[0].mxu0
    %v2445 = vadd.f32 %v332, %v2444
    %v2446 = vpop.f32.mrb[0].mxu0
    %2447 = vdwg.mxu0
    %v2448 = vmax.f32 %v1170, 0.0
    %v2449 = vmax.f32 %v1175, 0.0
    %v2450 = vmax.f32 %v1180, 0.0
    %v2451 = vmax.f32 %v1185, 0.0
    %v2452 = vmax.f32 %v1190, 0.0
    %v2453 = vmax.f32 %v1195, 0.0
    %v2454 = vmax.f32 %v1200, 0.0
    %v2455 = vmax.f32 %v1205, 0.0
    %v2456 = vmax.f32 %v1210, 0.0
    %v2457 = vmax.f32 %v1215, 0.0
    %v2458 = vmax.f32 %v1220, 0.0
    %v2459 = vmax.f32 %v1225, 0.0
    %v2460 = vmax.f32 %v1230, 0.0
    %v2461 = vmax.f32 %v1235, 0.0
    %v2462 = vmax.f32 %v1240, 0.0
    %v2463 = vmax.f32 %v1245, 0.0
    %v2464 = vmax.f32 %v1250, 0.0
    %v2465 = vmax.f32 %v1255, 0.0
    %v2466 = vmax.f32 %v1260, 0.0
    %v2467 = vmax.f32 %v1265, 0.0
    %v2468 = vmax.f32 %v1270, 0.0
    %v2469 = vmax.f32 %v1275, 0.0
    %v2470 = vmax.f32 %v1280, 0.0
    %v2471 = vmax.f32 %v1285, 0.0
    %v2472 = vmax.f32 %v1290, 0.0
    %v2473 = vmax.f32 %v1295, 0.0
    %v2474 = vmax.f32 %v1300, 0.0
    %v2475 = vmax.f32 %v1305, 0.0
    %v2476 = vmax.f32 %v1310, 0.0
    %v2477 = vmax.f32 %v1315, 0.0
    %v2478 = vmax.f32 %v1320, 0.0
    %v2479 = vmax.f32 %v1325, 0.0
    %v2480 = vmax.f32 %v1330, 0.0
    %v2481 = vmax.f32 %v1335, 0.0
    %v2482 = vmax.f32 %v1340, 0.0
    %v2483 = vmax.f32 %v1345, 0.0
    %v2484 = vmax.f32 %v1350, 0.0
    %v2485 = vmax.f32 %v1355, 0.0
    %v2486 = vmax.f32 %v1360, 0.0
    %v2487 = vmax.f32 %v1365, 0.0
    %v2488 = vmax.f32 %v1370, 0.0
    %v2489 = vmax.f32 %v1375, 0.0
    %v2490 = vmax.f32 %v1380, 0.0
    %v2491 = vmax.f32 %v1385, 0.0
    %v2492 = vmax.f32 %v1390, 0.0
    %v2493 = vmax.f32 %v1395, 0.0
    %v2494 = vmax.f32 %v1400, 0.0
    %v2495 = vmax.f32 %v1405, 0.0
    %v2496 = vmax.f32 %v1410, 0.0
    %v2497 = vmax.f32 %v1415, 0.0
    %v2498 = vmax.f32 %v1420, 0.0
    %v2499 = vmax.f32 %v1425, 0.0
    %v2500 = vmax.f32 %v1430, 0.0
    %v2501 = vmax.f32 %v1435, 0.0
    %v2502 = vmax.f32 %v1440, 0.0
    %v2503 = vmax.f32 %v1445, 0.0
    %v2504 = vmax.f32 %v1450, 0.0
    %v2505 = vmax.f32 %v1455, 0.0
    %v2506 = vmax.f32 %v1460, 0.0
    %v2507 = vmax.f32 %v1465, 0.0
    %v2508 = vmax.f32 %v1470, 0.0
    %v2509 = vmax.f32 %v1475, 0.0
    %v2510 = vmax.f32 %v1480, 0.0
    %v2511 = vmax.f32 %v1485, 0.0
    %v2512 = vmax.f32 %v1490, 0.0
    %v2513 = vmax.f32 %v1495, 0.0
    %v2514 = vmax.f32 %v1500, 0.0
    %v2515 = vmax.f32 %v1505, 0.0
    %v2516 = vmax.f32 %v1510, 0.0
    %v2517 = vmax.f32 %v1515, 0.0
    %v2518 = vmax.f32 %v1520, 0.0
    %v2519 = vmax.f32 %v1525, 0.0
    %v2520 = vmax.f32 %v1530, 0.0
    %v2521 = vmax.f32 %v1535, 0.0
    %v2522 = vmax.f32 %v1540, 0.0
    %v2523 = vmax.f32 %v1545, 0.0
    %v2524 = vmax.f32 %v1550, 0.0
    %v2525 = vmax.f32 %v1555, 0.0
    %v2526 = vmax.f32 %v1560, 0.0
    %v2527 = vmax.f32 %v1565, 0.0
    %v2528 = vmax.f32 %v1570, 0.0
    %v2529 = vmax.f32 %v1575, 0.0
    %v2530 = vmax.f32 %v1580, 0.0
    %v2531 = vmax.f32 %v1585, 0.0
    %v2532 = vmax.f32 %v1590, 0.0
    %v2533 = vmax.f32 %v1595, 0.0
    %v2534 = vmax.f32 %v1600, 0.0
    %v2535 = vmax.f32 %v1605, 0.0
    %v2536 = vmax.f32 %v1610, 0.0
    %v2537 = vmax.f32 %v1615, 0.0
    %v2538 = vmax.f32 %v1620, 0.0
    %v2539 = vmax.f32 %v1625, 0.0
    %v2540 = vmax.f32 %v1630, 0.0
    %v2541 = vmax.f32 %v1635, 0.0
    %v2542 = vmax.f32 %v1640, 0.0
    %v2543 = vmax.f32 %v1645, 0.0
    %v2544 = vmax.f32 %v1650, 0.0
    %v2545 = vmax.f32 %v1655, 0.0
    %v2546 = vmax.f32 %v1660, 0.0
    %v2547 = vmax.f32 %v1665, 0.0
    %v2548 = vmax.f32 %v1670, 0.0
    %v2549 = vmax.f32 %v1675, 0.0
    %v2550 = vmax.f32 %v1680, 0.0
    %v2551 = vmax.f32 %v1685, 0.0
    %v2552 = vmax.f32 %v1690, 0.0
    %v2553 = vmax.f32 %v1695, 0.0
    %v2554 = vmax.f32 %v1700, 0.0
    %v2555 = vmax.f32 %v1705, 0.0
    %v2556 = vmax.f32 %v1710, 0.0
    %v2557 = vmax.f32 %v1715, 0.0
    %v2558 = vmax.f32 %v1720, 0.0
    %v2559 = vmax.f32 %v1725, 0.0
    %v2560 = vmax.f32 %v1730, 0.0
    %v2561 = vmax.f32 %v1735, 0.0
    %v2562 = vmax.f32 %v1740, 0.0
    %v2563 = vmax.f32 %v1745, 0.0
    %v2564 = vmax.f32 %v1750, 0.0
    %v2565 = vmax.f32 %v1755, 0.0
    %v2566 = vmax.f32 %v1760, 0.0
    %v2567 = vmax.f32 %v1765, 0.0
    %v2568 = vmax.f32 %v1770, 0.0
    %v2569 = vmax.f32 %v1775, 0.0
    %v2570 = vmax.f32 %v1780, 0.0
    %v2571 = vmax.f32 %v1785, 0.0
    %v2572 = vmax.f32 %v1790, 0.0
    %v2573 = vmax.f32 %v1795, 0.0
    %v2574 = vmax.f32 %v1800, 0.0
    %v2575 = vmax.f32 %v1805, 0.0
    %v2576 = vmax.f32 %v1810, 0.0
    %v2577 = vmax.f32 %v1815, 0.0
    %v2578 = vmax.f32 %v1820, 0.0
    %v2579 = vmax.f32 %v1825, 0.0
    %v2580 = vmax.f32 %v1830, 0.0
    %v2581 = vmax.f32 %v1835, 0.0
    %v2582 = vmax.f32 %v1840, 0.0
    %v2583 = vmax.f32 %v1845, 0.0
    %v2584 = vmax.f32 %v1850, 0.0
    %v2585 = vmax.f32 %v1855, 0.0
    %v2586 = vmax.f32 %v1860, 0.0
    %v2587 = vmax.f32 %v1865, 0.0
    %v2588 = vmax.f32 %v1870, 0.0
    %v2589 = vmax.f32 %v1875, 0.0
    %v2590 = vmax.f32 %v1880, 0.0
    %v2591 = vmax.f32 %v1885, 0.0
    %v2592 = vmax.f32 %v1890, 0.0
    %v2593 = vmax.f32 %v1895, 0.0
    %v2594 = vmax.f32 %v1900, 0.0
    %v2595 = vmax.f32 %v1905, 0.0
    %v2596 = vmax.f32 %v1910, 0.0
    %v2597 = vmax.f32 %v1915, 0.0
    %v2598 = vmax.f32 %v1920, 0.0
    %v2599 = vmax.f32 %v1925, 0.0
    %v2600 = vmax.f32 %v1930, 0.0
    %v2601 = vmax.f32 %v1935, 0.0
    %v2602 = vmax.f32 %v1940, 0.0
    %v2603 = vmax.f32 %v1945, 0.0
    %v2604 = vmax.f32 %v1950, 0.0
    %v2605 = vmax.f32 %v1955, 0.0
    %v2606 = vmax.f32 %v1960, 0.0
    %v2607 = vmax.f32 %v1965, 0.0
    %v2608 = vmax.f32 %v1970, 0.0
    %v2609 = vmax.f32 %v1975, 0.0
    %v2610 = vmax.f32 %v1980, 0.0
    %v2611 = vmax.f32 %v1985, 0.0
    %v2612 = vmax.f32 %v1990, 0.0
    %v2613 = vmax.f32 %v1995, 0.0
    %v2614 = vmax.f32 %v2000, 0.0
    %v2615 = vmax.f32 %v2005, 0.0
    %v2616 = vmax.f32 %v2010, 0.0
    %v2617 = vmax.f32 %v2015, 0.0
    %v2618 = vmax.f32 %v2020, 0.0
    %v2619 = vmax.f32 %v2025, 0.0
    %v2620 = vmax.f32 %v2030, 0.0
    %v2621 = vmax.f32 %v2035, 0.0
    %v2622 = vmax.f32 %v2040, 0.0
    %v2623 = vmax.f32 %v2045, 0.0
    %v2624 = vmax.f32 %v2050, 0.0
    %v2625 = vmax.f32 %v2055, 0.0
    %v2626 = vmax.f32 %v2060, 0.0
    %v2627 = vmax.f32 %v2065, 0.0
    %v2628 = vmax.f32 %v2070, 0.0
    %v2629 = vmax.f32 %v2075, 0.0
    %v2630 = vmax.f32 %v2080, 0.0
    %v2631 = vmax.f32 %v2085, 0.0
    %v2632 = vmax.f32 %v2090, 0.0
    %v2633 = vmax.f32 %v2095, 0.0
    %v2634 = vmax.f32 %v2100, 0.0
    %v2635 = vmax.f32 %v2105, 0.0
    %v2636 = vmax.f32 %v2110, 0.0
    %v2637 = vmax.f32 %v2115, 0.0
    %v2638 = vmax.f32 %v2120, 0.0
    %v2639 = vmax.f32 %v2125, 0.0
    %v2640 = vmax.f32 %v2130, 0.0
    %v2641 = vmax.f32 %v2135, 0.0
    %v2642 = vmax.f32 %v2140, 0.0
    %v2643 = vmax.f32 %v2145, 0.0
    %v2644 = vmax.f32 %v2150, 0.0
    %v2645 = vmax.f32 %v2155, 0.0
    %v2646 = vmax.f32 %v2160, 0.0
    %v2647 = vmax.f32 %v2165, 0.0
    %v2648 = vmax.f32 %v2170, 0.0
    %v2649 = vmax.f32 %v2175, 0.0
    %v2650 = vmax.f32 %v2180, 0.0
    %v2651 = vmax.f32 %v2185, 0.0
    %v2652 = vmax.f32 %v2190, 0.0
    %v2653 = vmax.f32 %v2195, 0.0
    %v2654 = vmax.f32 %v2200, 0.0
    %v2655 = vmax.f32 %v2205, 0.0
    %v2656 = vmax.f32 %v2210, 0.0
    %v2657 = vmax.f32 %v2215, 0.0
    %v2658 = vmax.f32 %v2220, 0.0
    %v2659 = vmax.f32 %v2225, 0.0
    %v2660 = vmax.f32 %v2230, 0.0
    %v2661 = vmax.f32 %v2235, 0.0
    %v2662 = vmax.f32 %v2240, 0.0
    %v2663 = vmax.f32 %v2245, 0.0
    %v2664 = vmax.f32 %v2250, 0.0
    %v2665 = vmax.f32 %v2255, 0.0
    %v2666 = vmax.f32 %v2260, 0.0
    %v2667 = vmax.f32 %v2265, 0.0
    %v2668 = vmax.f32 %v2270, 0.0
    %v2669 = vmax.f32 %v2275, 0.0
    %v2670 = vmax.f32 %v2280, 0.0
    %v2671 = vmax.f32 %v2285, 0.0
    %v2672 = vmax.f32 %v2290, 0.0
    %v2673 = vmax.f32 %v2295, 0.0
    %v2674 = vmax.f32 %v2300, 0.0
    %v2675 = vmax.f32 %v2305, 0.0
    %v2676 = vmax.f32 %v2310, 0.0
    %v2677 = vmax.f32 %v2315, 0.0
    %v2678 = vmax.f32 %v2320, 0.0
    %v2679 = vmax.f32 %v2325, 0.0
    %v2680 = vmax.f32 %v2330, 0.0
    %v2681 = vmax.f32 %v2335, 0.0
    %v2682 = vmax.f32 %v2340, 0.0
    %v2683 = vmax.f32 %v2345, 0.0
    %v2684 = vmax.f32 %v2350, 0.0
    %v2685 = vmax.f32 %v2355, 0.0
    %v2686 = vmax.f32 %v2360, 0.0
    %v2687 = vmax.f32 %v2365, 0.0
    %v2688 = vmax.f32 %v2370, 0.0
    %v2689 = vmax.f32 %v2375, 0.0
    %v2690 = vmax.f32 %v2380, 0.0
    %v2691 = vmax.f32 %v2385, 0.0
    %v2692 = vmax.f32 %v2390, 0.0
    %v2693 = vmax.f32 %v2395, 0.0
    %v2694 = vmax.f32 %v2400, 0.0
    %v2695 = vmax.f32 %v2405, 0.0
    %v2696 = vmax.f32 %v2410, 0.0
    %v2697 = vmax.f32 %v2415, 0.0
    %v2698 = vmax.f32 %v2420, 0.0
    %v2699 = vmax.f32 %v2425, 0.0
    %v2700 = vmax.f32 %v2430, 0.0
    %v2701 = vmax.f32 %v2435, 0.0
    %v2702 = vmax.f32 %v2440, 0.0
    %v2703 = vmax.f32 %v2445, 0.0
    %vm2704 = vcmask 261120
    %v2705 = vsel %vm2704, %v2448, 0.0
    %v2706 = vsel %vm2704, %v2464, 0.0
    %v2707 = vadd.f32 %v2705, %v2706
    %v2708 = vsel %vm2704, %v2480, 0.0
    %v2709 = vadd.f32 %v2707, %v2708
    %v2710 = vsel %vm2704, %v2496, 0.0
    %v2711 = vadd.f32 %v2709, %v2710
    %v2712 = vsel %vm2704, %v2512, 0.0
    %v2713 = vadd.f32 %v2711, %v2712
    %v2714 = vsel %vm2704, %v2528, 0.0
    %v2715 = vadd.f32 %v2713, %v2714
    %v2716 = vsel %vm2704, %v2544, 0.0
    %v2717 = vadd.f32 %v2715, %v2716
    %v2718 = vsel %vm2704, %v2560, 0.0
    %v2719 = vadd.f32 %v2717, %v2718
    %v2720 = vsel %vm2704, %v2576, 0.0
    %v2721 = vadd.f32 %v2719, %v2720
    %v2722 = vsel %vm2704, %v2592, 0.0
    %v2723 = vadd.f32 %v2721, %v2722
    %v2724 = vsel %vm2704, %v2608, 0.0
    %v2725 = vadd.f32 %v2723, %v2724
    %v2726 = vsel %vm2704, %v2624, 0.0
    %v2727 = vadd.f32 %v2725, %v2726
    %v2728 = vsel %vm2704, %v2640, 0.0
    %v2729 = vadd.f32 %v2727, %v2728
    %v2730 = vsel %vm2704, %v2656, 0.0
    %v2731 = vadd.f32 %v2729, %v2730
    %v2732 = vsel %vm2704, %v2672, 0.0
    %v2733 = vadd.f32 %v2731, %v2732
    %v2734 = vsel %vm2704, %v2688, 0.0
    %v2735 = vadd.f32 %v2733, %v2734
    %v2736 = vsel %vm2704, %v2449, 0.0
    %v2737 = vsel %vm2704, %v2465, 0.0
    %v2738 = vadd.f32 %v2736, %v2737
    %v2739 = vsel %vm2704, %v2481, 0.0
    %v2740 = vadd.f32 %v2738, %v2739
    %v2741 = vsel %vm2704, %v2497, 0.0
    %v2742 = vadd.f32 %v2740, %v2741
    %v2743 = vsel %vm2704, %v2513, 0.0
    %v2744 = vadd.f32 %v2742, %v2743
    %v2745 = vsel %vm2704, %v2529, 0.0
    %v2746 = vadd.f32 %v2744, %v2745
    %v2747 = vsel %vm2704, %v2545, 0.0
    %v2748 = vadd.f32 %v2746, %v2747
    %v2749 = vsel %vm2704, %v2561, 0.0
    %v2750 = vadd.f32 %v2748, %v2749
    %v2751 = vsel %vm2704, %v2577, 0.0
    %v2752 = vadd.f32 %v2750, %v2751
    %v2753 = vsel %vm2704, %v2593, 0.0
    %v2754 = vadd.f32 %v2752, %v2753
    %v2755 = vsel %vm2704, %v2609, 0.0
    %v2756 = vadd.f32 %v2754, %v2755
    %v2757 = vsel %vm2704, %v2625, 0.0
    %v2758 = vadd.f32 %v2756, %v2757
    %v2759 = vsel %vm2704, %v2641, 0.0
    %v2760 = vadd.f32 %v2758, %v2759
    %v2761 = vsel %vm2704, %v2657, 0.0
    %v2762 = vadd.f32 %v2760, %v2761
    %v2763 = vsel %vm2704, %v2673, 0.0
    %v2764 = vadd.f32 %v2762, %v2763
    %v2765 = vsel %vm2704, %v2689, 0.0
    %v2766 = vadd.f32 %v2764, %v2765
    %v2767 = vsel %vm2704, %v2450, 0.0
    %v2768 = vsel %vm2704, %v2466, 0.0
    %v2769 = vadd.f32 %v2767, %v2768
    %v2770 = vsel %vm2704, %v2482, 0.0
    %v2771 = vadd.f32 %v2769, %v2770
    %v2772 = vsel %vm2704, %v2498, 0.0
    %v2773 = vadd.f32 %v2771, %v2772
    %v2774 = vsel %vm2704, %v2514, 0.0
    %v2775 = vadd.f32 %v2773, %v2774
    %v2776 = vsel %vm2704, %v2530, 0.0
    %v2777 = vadd.f32 %v2775, %v2776
    %v2778 = vsel %vm2704, %v2546, 0.0
    %v2779 = vadd.f32 %v2777, %v2778
    %v2780 = vsel %vm2704, %v2562, 0.0
    %v2781 = vadd.f32 %v2779, %v2780
    %v2782 = vsel %vm2704, %v2578, 0.0
    %v2783 = vadd.f32 %v2781, %v2782
    %v2784 = vsel %vm2704, %v2594, 0.0
    %v2785 = vadd.f32 %v2783, %v2784
    %v2786 = vsel %vm2704, %v2610, 0.0
    %v2787 = vadd.f32 %v2785, %v2786
    %v2788 = vsel %vm2704, %v2626, 0.0
    %v2789 = vadd.f32 %v2787, %v2788
    %v2790 = vsel %vm2704, %v2642, 0.0
    %v2791 = vadd.f32 %v2789, %v2790
    %v2792 = vsel %vm2704, %v2658, 0.0
    %v2793 = vadd.f32 %v2791, %v2792
    %v2794 = vsel %vm2704, %v2674, 0.0
    %v2795 = vadd.f32 %v2793, %v2794
    %v2796 = vsel %vm2704, %v2690, 0.0
    %v2797 = vadd.f32 %v2795, %v2796
    %v2798 = vsel %vm2704, %v2451, 0.0
    %v2799 = vsel %vm2704, %v2467, 0.0
    %v2800 = vadd.f32 %v2798, %v2799
    %v2801 = vsel %vm2704, %v2483, 0.0
    %v2802 = vadd.f32 %v2800, %v2801
    %v2803 = vsel %vm2704, %v2499, 0.0
    %v2804 = vadd.f32 %v2802, %v2803
    %v2805 = vsel %vm2704, %v2515, 0.0
    %v2806 = vadd.f32 %v2804, %v2805
    %v2807 = vsel %vm2704, %v2531, 0.0
    %v2808 = vadd.f32 %v2806, %v2807
    %v2809 = vsel %vm2704, %v2547, 0.0
    %v2810 = vadd.f32 %v2808, %v2809
    %v2811 = vsel %vm2704, %v2563, 0.0
    %v2812 = vadd.f32 %v2810, %v2811
    %v2813 = vsel %vm2704, %v2579, 0.0
    %v2814 = vadd.f32 %v2812, %v2813
    %v2815 = vsel %vm2704, %v2595, 0.0
    %v2816 = vadd.f32 %v2814, %v2815
    %v2817 = vsel %vm2704, %v2611, 0.0
    %v2818 = vadd.f32 %v2816, %v2817
    %v2819 = vsel %vm2704, %v2627, 0.0
    %v2820 = vadd.f32 %v2818, %v2819
    %v2821 = vsel %vm2704, %v2643, 0.0
    %v2822 = vadd.f32 %v2820, %v2821
    %v2823 = vsel %vm2704, %v2659, 0.0
    %v2824 = vadd.f32 %v2822, %v2823
    %v2825 = vsel %vm2704, %v2675, 0.0
    %v2826 = vadd.f32 %v2824, %v2825
    %v2827 = vsel %vm2704, %v2691, 0.0
    %v2828 = vadd.f32 %v2826, %v2827
    %v2829 = vsel %vm2704, %v2452, 0.0
    %v2830 = vsel %vm2704, %v2468, 0.0
    %v2831 = vadd.f32 %v2829, %v2830
    %v2832 = vsel %vm2704, %v2484, 0.0
    %v2833 = vadd.f32 %v2831, %v2832
    %v2834 = vsel %vm2704, %v2500, 0.0
    %v2835 = vadd.f32 %v2833, %v2834
    %v2836 = vsel %vm2704, %v2516, 0.0
    %v2837 = vadd.f32 %v2835, %v2836
    %v2838 = vsel %vm2704, %v2532, 0.0
    %v2839 = vadd.f32 %v2837, %v2838
    %v2840 = vsel %vm2704, %v2548, 0.0
    %v2841 = vadd.f32 %v2839, %v2840
    %v2842 = vsel %vm2704, %v2564, 0.0
    %v2843 = vadd.f32 %v2841, %v2842
    %v2844 = vsel %vm2704, %v2580, 0.0
    %v2845 = vadd.f32 %v2843, %v2844
    %v2846 = vsel %vm2704, %v2596, 0.0
    %v2847 = vadd.f32 %v2845, %v2846
    %v2848 = vsel %vm2704, %v2612, 0.0
    %v2849 = vadd.f32 %v2847, %v2848
    %v2850 = vsel %vm2704, %v2628, 0.0
    %v2851 = vadd.f32 %v2849, %v2850
    %v2852 = vsel %vm2704, %v2644, 0.0
    %v2853 = vadd.f32 %v2851, %v2852
    %v2854 = vsel %vm2704, %v2660, 0.0
    %v2855 = vadd.f32 %v2853, %v2854
    %v2856 = vsel %vm2704, %v2676, 0.0
    %v2857 = vadd.f32 %v2855, %v2856
    %v2858 = vsel %vm2704, %v2692, 0.0
    %v2859 = vadd.f32 %v2857, %v2858
    %v2860 = vsel %vm2704, %v2453, 0.0
    %v2861 = vsel %vm2704, %v2469, 0.0
    %v2862 = vadd.f32 %v2860, %v2861
    %v2863 = vsel %vm2704, %v2485, 0.0
    %v2864 = vadd.f32 %v2862, %v2863
    %v2865 = vsel %vm2704, %v2501, 0.0
    %v2866 = vadd.f32 %v2864, %v2865
    %v2867 = vsel %vm2704, %v2517, 0.0
    %v2868 = vadd.f32 %v2866, %v2867
    %v2869 = vsel %vm2704, %v2533, 0.0
    %v2870 = vadd.f32 %v2868, %v2869
    %v2871 = vsel %vm2704, %v2549, 0.0
    %v2872 = vadd.f32 %v2870, %v2871
    %v2873 = vsel %vm2704, %v2565, 0.0
    %v2874 = vadd.f32 %v2872, %v2873
    %v2875 = vsel %vm2704, %v2581, 0.0
    %v2876 = vadd.f32 %v2874, %v2875
    %v2877 = vsel %vm2704, %v2597, 0.0
    %v2878 = vadd.f32 %v2876, %v2877
    %v2879 = vsel %vm2704, %v2613, 0.0
    %v2880 = vadd.f32 %v2878, %v2879
    %v2881 = vsel %vm2704, %v2629, 0.0
    %v2882 = vadd.f32 %v2880, %v2881
    %v2883 = vsel %vm2704, %v2645, 0.0
    %v2884 = vadd.f32 %v2882, %v2883
    %v2885 = vsel %vm2704, %v2661, 0.0
    %v2886 = vadd.f32 %v2884, %v2885
    %v2887 = vsel %vm2704, %v2677, 0.0
    %v2888 = vadd.f32 %v2886, %v2887
    %v2889 = vsel %vm2704, %v2693, 0.0
    %v2890 = vadd.f32 %v2888, %v2889
    %v2891 = vsel %vm2704, %v2454, 0.0
    %v2892 = vsel %vm2704, %v2470, 0.0
    %v2893 = vadd.f32 %v2891, %v2892
    %v2894 = vsel %vm2704, %v2486, 0.0
    %v2895 = vadd.f32 %v2893, %v2894
    %v2896 = vsel %vm2704, %v2502, 0.0
    %v2897 = vadd.f32 %v2895, %v2896
    %v2898 = vsel %vm2704, %v2518, 0.0
    %v2899 = vadd.f32 %v2897, %v2898
    %v2900 = vsel %vm2704, %v2534, 0.0
    %v2901 = vadd.f32 %v2899, %v2900
    %v2902 = vsel %vm2704, %v2550, 0.0
    %v2903 = vadd.f32 %v2901, %v2902
    %v2904 = vsel %vm2704, %v2566, 0.0
    %v2905 = vadd.f32 %v2903, %v2904
    %v2906 = vsel %vm2704, %v2582, 0.0
    %v2907 = vadd.f32 %v2905, %v2906
    %v2908 = vsel %vm2704, %v2598, 0.0
    %v2909 = vadd.f32 %v2907, %v2908
    %v2910 = vsel %vm2704, %v2614, 0.0
    %v2911 = vadd.f32 %v2909, %v2910
    %v2912 = vsel %vm2704, %v2630, 0.0
    %v2913 = vadd.f32 %v2911, %v2912
    %v2914 = vsel %vm2704, %v2646, 0.0
    %v2915 = vadd.f32 %v2913, %v2914
    %v2916 = vsel %vm2704, %v2662, 0.0
    %v2917 = vadd.f32 %v2915, %v2916
    %v2918 = vsel %vm2704, %v2678, 0.0
    %v2919 = vadd.f32 %v2917, %v2918
    %v2920 = vsel %vm2704, %v2694, 0.0
    %v2921 = vadd.f32 %v2919, %v2920
    %v2922 = vsel %vm2704, %v2455, 0.0
    %v2923 = vsel %vm2704, %v2471, 0.0
    %v2924 = vadd.f32 %v2922, %v2923
    %v2925 = vsel %vm2704, %v2487, 0.0
    %v2926 = vadd.f32 %v2924, %v2925
    %v2927 = vsel %vm2704, %v2503, 0.0
    %v2928 = vadd.f32 %v2926, %v2927
    %v2929 = vsel %vm2704, %v2519, 0.0
    %v2930 = vadd.f32 %v2928, %v2929
    %v2931 = vsel %vm2704, %v2535, 0.0
    %v2932 = vadd.f32 %v2930, %v2931
    %v2933 = vsel %vm2704, %v2551, 0.0
    %v2934 = vadd.f32 %v2932, %v2933
    %v2935 = vsel %vm2704, %v2567, 0.0
    %v2936 = vadd.f32 %v2934, %v2935
    %v2937 = vsel %vm2704, %v2583, 0.0
    %v2938 = vadd.f32 %v2936, %v2937
    %v2939 = vsel %vm2704, %v2599, 0.0
    %v2940 = vadd.f32 %v2938, %v2939
    %v2941 = vsel %vm2704, %v2615, 0.0
    %v2942 = vadd.f32 %v2940, %v2941
    %v2943 = vsel %vm2704, %v2631, 0.0
    %v2944 = vadd.f32 %v2942, %v2943
    %v2945 = vsel %vm2704, %v2647, 0.0
    %v2946 = vadd.f32 %v2944, %v2945
    %v2947 = vsel %vm2704, %v2663, 0.0
    %v2948 = vadd.f32 %v2946, %v2947
    %v2949 = vsel %vm2704, %v2679, 0.0
    %v2950 = vadd.f32 %v2948, %v2949
    %v2951 = vsel %vm2704, %v2695, 0.0
    %v2952 = vadd.f32 %v2950, %v2951
    %v2953 = vsel %vm2704, %v2456, 0.0
    %v2954 = vsel %vm2704, %v2472, 0.0
    %v2955 = vadd.f32 %v2953, %v2954
    %v2956 = vsel %vm2704, %v2488, 0.0
    %v2957 = vadd.f32 %v2955, %v2956
    %v2958 = vsel %vm2704, %v2504, 0.0
    %v2959 = vadd.f32 %v2957, %v2958
    %v2960 = vsel %vm2704, %v2520, 0.0
    %v2961 = vadd.f32 %v2959, %v2960
    %v2962 = vsel %vm2704, %v2536, 0.0
    %v2963 = vadd.f32 %v2961, %v2962
    %v2964 = vsel %vm2704, %v2552, 0.0
    %v2965 = vadd.f32 %v2963, %v2964
    %v2966 = vsel %vm2704, %v2568, 0.0
    %v2967 = vadd.f32 %v2965, %v2966
    %v2968 = vsel %vm2704, %v2584, 0.0
    %v2969 = vadd.f32 %v2967, %v2968
    %v2970 = vsel %vm2704, %v2600, 0.0
    %v2971 = vadd.f32 %v2969, %v2970
    %v2972 = vsel %vm2704, %v2616, 0.0
    %v2973 = vadd.f32 %v2971, %v2972
    %v2974 = vsel %vm2704, %v2632, 0.0
    %v2975 = vadd.f32 %v2973, %v2974
    %v2976 = vsel %vm2704, %v2648, 0.0
    %v2977 = vadd.f32 %v2975, %v2976
    %v2978 = vsel %vm2704, %v2664, 0.0
    %v2979 = vadd.f32 %v2977, %v2978
    %v2980 = vsel %vm2704, %v2680, 0.0
    %v2981 = vadd.f32 %v2979, %v2980
    %v2982 = vsel %vm2704, %v2696, 0.0
    %v2983 = vadd.f32 %v2981, %v2982
    %v2984 = vsel %vm2704, %v2457, 0.0
    %v2985 = vsel %vm2704, %v2473, 0.0
    %v2986 = vadd.f32 %v2984, %v2985
    %v2987 = vsel %vm2704, %v2489, 0.0
    %v2988 = vadd.f32 %v2986, %v2987
    %v2989 = vsel %vm2704, %v2505, 0.0
    %v2990 = vadd.f32 %v2988, %v2989
    %v2991 = vsel %vm2704, %v2521, 0.0
    %v2992 = vadd.f32 %v2990, %v2991
    %v2993 = vsel %vm2704, %v2537, 0.0
    %v2994 = vadd.f32 %v2992, %v2993
    %v2995 = vsel %vm2704, %v2553, 0.0
    %v2996 = vadd.f32 %v2994, %v2995
    %v2997 = vsel %vm2704, %v2569, 0.0
    %v2998 = vadd.f32 %v2996, %v2997
    %v2999 = vsel %vm2704, %v2585, 0.0
    %v3000 = vadd.f32 %v2998, %v2999
    %v3001 = vsel %vm2704, %v2601, 0.0
    %v3002 = vadd.f32 %v3000, %v3001
    %v3003 = vsel %vm2704, %v2617, 0.0
    %v3004 = vadd.f32 %v3002, %v3003
    %v3005 = vsel %vm2704, %v2633, 0.0
    %v3006 = vadd.f32 %v3004, %v3005
    %v3007 = vsel %vm2704, %v2649, 0.0
    %v3008 = vadd.f32 %v3006, %v3007
    %v3009 = vsel %vm2704, %v2665, 0.0
    %v3010 = vadd.f32 %v3008, %v3009
    %v3011 = vsel %vm2704, %v2681, 0.0
    %v3012 = vadd.f32 %v3010, %v3011
    %v3013 = vsel %vm2704, %v2697, 0.0
    %v3014 = vadd.f32 %v3012, %v3013
    %v3015 = vsel %vm2704, %v2458, 0.0
    %v3016 = vsel %vm2704, %v2474, 0.0
    %v3017 = vadd.f32 %v3015, %v3016
    %v3018 = vsel %vm2704, %v2490, 0.0
    %v3019 = vadd.f32 %v3017, %v3018
    %v3020 = vsel %vm2704, %v2506, 0.0
    %v3021 = vadd.f32 %v3019, %v3020
    %v3022 = vsel %vm2704, %v2522, 0.0
    %v3023 = vadd.f32 %v3021, %v3022
    %v3024 = vsel %vm2704, %v2538, 0.0
    %v3025 = vadd.f32 %v3023, %v3024
    %v3026 = vsel %vm2704, %v2554, 0.0
    %v3027 = vadd.f32 %v3025, %v3026
    %v3028 = vsel %vm2704, %v2570, 0.0
    %v3029 = vadd.f32 %v3027, %v3028
    %v3030 = vsel %vm2704, %v2586, 0.0
    %v3031 = vadd.f32 %v3029, %v3030
    %v3032 = vsel %vm2704, %v2602, 0.0
    %v3033 = vadd.f32 %v3031, %v3032
    %v3034 = vsel %vm2704, %v2618, 0.0
    %v3035 = vadd.f32 %v3033, %v3034
    %v3036 = vsel %vm2704, %v2634, 0.0
    %v3037 = vadd.f32 %v3035, %v3036
    %v3038 = vsel %vm2704, %v2650, 0.0
    %v3039 = vadd.f32 %v3037, %v3038
    %v3040 = vsel %vm2704, %v2666, 0.0
    %v3041 = vadd.f32 %v3039, %v3040
    %v3042 = vsel %vm2704, %v2682, 0.0
    %v3043 = vadd.f32 %v3041, %v3042
    %v3044 = vsel %vm2704, %v2698, 0.0
    %v3045 = vadd.f32 %v3043, %v3044
    %v3046 = vsel %vm2704, %v2459, 0.0
    %v3047 = vsel %vm2704, %v2475, 0.0
    %v3048 = vadd.f32 %v3046, %v3047
    %v3049 = vsel %vm2704, %v2491, 0.0
    %v3050 = vadd.f32 %v3048, %v3049
    %v3051 = vsel %vm2704, %v2507, 0.0
    %v3052 = vadd.f32 %v3050, %v3051
    %v3053 = vsel %vm2704, %v2523, 0.0
    %v3054 = vadd.f32 %v3052, %v3053
    %v3055 = vsel %vm2704, %v2539, 0.0
    %v3056 = vadd.f32 %v3054, %v3055
    %v3057 = vsel %vm2704, %v2555, 0.0
    %v3058 = vadd.f32 %v3056, %v3057
    %v3059 = vsel %vm2704, %v2571, 0.0
    %v3060 = vadd.f32 %v3058, %v3059
    %v3061 = vsel %vm2704, %v2587, 0.0
    %v3062 = vadd.f32 %v3060, %v3061
    %v3063 = vsel %vm2704, %v2603, 0.0
    %v3064 = vadd.f32 %v3062, %v3063
    %v3065 = vsel %vm2704, %v2619, 0.0
    %v3066 = vadd.f32 %v3064, %v3065
    %v3067 = vsel %vm2704, %v2635, 0.0
    %v3068 = vadd.f32 %v3066, %v3067
    %v3069 = vsel %vm2704, %v2651, 0.0
    %v3070 = vadd.f32 %v3068, %v3069
    %v3071 = vsel %vm2704, %v2667, 0.0
    %v3072 = vadd.f32 %v3070, %v3071
    %v3073 = vsel %vm2704, %v2683, 0.0
    %v3074 = vadd.f32 %v3072, %v3073
    %v3075 = vsel %vm2704, %v2699, 0.0
    %v3076 = vadd.f32 %v3074, %v3075
    %v3077 = vsel %vm2704, %v2460, 0.0
    %v3078 = vsel %vm2704, %v2476, 0.0
    %v3079 = vadd.f32 %v3077, %v3078
    %v3080 = vsel %vm2704, %v2492, 0.0
    %v3081 = vadd.f32 %v3079, %v3080
    %v3082 = vsel %vm2704, %v2508, 0.0
    %v3083 = vadd.f32 %v3081, %v3082
    %v3084 = vsel %vm2704, %v2524, 0.0
    %v3085 = vadd.f32 %v3083, %v3084
    %v3086 = vsel %vm2704, %v2540, 0.0
    %v3087 = vadd.f32 %v3085, %v3086
    %v3088 = vsel %vm2704, %v2556, 0.0
    %v3089 = vadd.f32 %v3087, %v3088
    %v3090 = vsel %vm2704, %v2572, 0.0
    %v3091 = vadd.f32 %v3089, %v3090
    %v3092 = vsel %vm2704, %v2588, 0.0
    %v3093 = vadd.f32 %v3091, %v3092
    %v3094 = vsel %vm2704, %v2604, 0.0
    %v3095 = vadd.f32 %v3093, %v3094
    %v3096 = vsel %vm2704, %v2620, 0.0
    %v3097 = vadd.f32 %v3095, %v3096
    %v3098 = vsel %vm2704, %v2636, 0.0
    %v3099 = vadd.f32 %v3097, %v3098
    %v3100 = vsel %vm2704, %v2652, 0.0
    %v3101 = vadd.f32 %v3099, %v3100
    %v3102 = vsel %vm2704, %v2668, 0.0
    %v3103 = vadd.f32 %v3101, %v3102
    %v3104 = vsel %vm2704, %v2684, 0.0
    %v3105 = vadd.f32 %v3103, %v3104
    %v3106 = vsel %vm2704, %v2700, 0.0
    %v3107 = vadd.f32 %v3105, %v3106
    %v3108 = vsel %vm2704, %v2461, 0.0
    %v3109 = vsel %vm2704, %v2477, 0.0
    %v3110 = vadd.f32 %v3108, %v3109
    %v3111 = vsel %vm2704, %v2493, 0.0
    %v3112 = vadd.f32 %v3110, %v3111
    %v3113 = vsel %vm2704, %v2509, 0.0
    %v3114 = vadd.f32 %v3112, %v3113
    %v3115 = vsel %vm2704, %v2525, 0.0
    %v3116 = vadd.f32 %v3114, %v3115
    %v3117 = vsel %vm2704, %v2541, 0.0
    %v3118 = vadd.f32 %v3116, %v3117
    %v3119 = vsel %vm2704, %v2557, 0.0
    %v3120 = vadd.f32 %v3118, %v3119
    %v3121 = vsel %vm2704, %v2573, 0.0
    %v3122 = vadd.f32 %v3120, %v3121
    %v3123 = vsel %vm2704, %v2589, 0.0
    %v3124 = vadd.f32 %v3122, %v3123
    %v3125 = vsel %vm2704, %v2605, 0.0
    %v3126 = vadd.f32 %v3124, %v3125
    %v3127 = vsel %vm2704, %v2621, 0.0
    %v3128 = vadd.f32 %v3126, %v3127
    %v3129 = vsel %vm2704, %v2637, 0.0
    %v3130 = vadd.f32 %v3128, %v3129
    %v3131 = vsel %vm2704, %v2653, 0.0
    %v3132 = vadd.f32 %v3130, %v3131
    %v3133 = vsel %vm2704, %v2669, 0.0
    %v3134 = vadd.f32 %v3132, %v3133
    %v3135 = vsel %vm2704, %v2685, 0.0
    %v3136 = vadd.f32 %v3134, %v3135
    %v3137 = vsel %vm2704, %v2701, 0.0
    %v3138 = vadd.f32 %v3136, %v3137
    %v3139 = vsel %vm2704, %v2462, 0.0
    %v3140 = vsel %vm2704, %v2478, 0.0
    %v3141 = vadd.f32 %v3139, %v3140
    %v3142 = vsel %vm2704, %v2494, 0.0
    %v3143 = vadd.f32 %v3141, %v3142
    %v3144 = vsel %vm2704, %v2510, 0.0
    %v3145 = vadd.f32 %v3143, %v3144
    %v3146 = vsel %vm2704, %v2526, 0.0
    %v3147 = vadd.f32 %v3145, %v3146
    %v3148 = vsel %vm2704, %v2542, 0.0
    %v3149 = vadd.f32 %v3147, %v3148
    %v3150 = vsel %vm2704, %v2558, 0.0
    %v3151 = vadd.f32 %v3149, %v3150
    %v3152 = vsel %vm2704, %v2574, 0.0
    %v3153 = vadd.f32 %v3151, %v3152
    %v3154 = vsel %vm2704, %v2590, 0.0
    %v3155 = vadd.f32 %v3153, %v3154
    %v3156 = vsel %vm2704, %v2606, 0.0
    %v3157 = vadd.f32 %v3155, %v3156
    %v3158 = vsel %vm2704, %v2622, 0.0
    %v3159 = vadd.f32 %v3157, %v3158
    %v3160 = vsel %vm2704, %v2638, 0.0
    %v3161 = vadd.f32 %v3159, %v3160
    %v3162 = vsel %vm2704, %v2654, 0.0
    %v3163 = vadd.f32 %v3161, %v3162
    %v3164 = vsel %vm2704, %v2670, 0.0
    %v3165 = vadd.f32 %v3163, %v3164
    %v3166 = vsel %vm2704, %v2686, 0.0
    %v3167 = vadd.f32 %v3165, %v3166
    %v3168 = vsel %vm2704, %v2702, 0.0
    %v3169 = vadd.f32 %v3167, %v3168
    %v3170 = vsel %vm2704, %v2463, 0.0
    %v3171 = vsel %vm2704, %v2479, 0.0
    %v3172 = vadd.f32 %v3170, %v3171
    %v3173 = vsel %vm2704, %v2495, 0.0
    %v3174 = vadd.f32 %v3172, %v3173
    %v3175 = vsel %vm2704, %v2511, 0.0
    %v3176 = vadd.f32 %v3174, %v3175
    %v3177 = vsel %vm2704, %v2527, 0.0
    %v3178 = vadd.f32 %v3176, %v3177
    %v3179 = vsel %vm2704, %v2543, 0.0
    %v3180 = vadd.f32 %v3178, %v3179
    %v3181 = vsel %vm2704, %v2559, 0.0
    %v3182 = vadd.f32 %v3180, %v3181
    %v3183 = vsel %vm2704, %v2575, 0.0
    %v3184 = vadd.f32 %v3182, %v3183
    %v3185 = vsel %vm2704, %v2591, 0.0
    %v3186 = vadd.f32 %v3184, %v3185
    %v3187 = vsel %vm2704, %v2607, 0.0
    %v3188 = vadd.f32 %v3186, %v3187
    %v3189 = vsel %vm2704, %v2623, 0.0
    %v3190 = vadd.f32 %v3188, %v3189
    %v3191 = vsel %vm2704, %v2639, 0.0
    %v3192 = vadd.f32 %v3190, %v3191
    %v3193 = vsel %vm2704, %v2655, 0.0
    %v3194 = vadd.f32 %v3192, %v3193
    %v3195 = vsel %vm2704, %v2671, 0.0
    %v3196 = vadd.f32 %v3194, %v3195
    %v3197 = vsel %vm2704, %v2687, 0.0
    %v3198 = vadd.f32 %v3196, %v3197
    %v3199 = vsel %vm2704, %v2703, 0.0
    %v3200 = vadd.f32 %v3198, %v3199
    %v3201 = vmul.f32 %v2735, 0.0625
    %v3202 = vmul.f32 %v2766, 0.0625
    %v3203 = vmul.f32 %v2797, 0.0625
    %v3204 = vmul.f32 %v2828, 0.0625
    %v3205 = vmul.f32 %v2859, 0.0625
    %v3206 = vmul.f32 %v2890, 0.0625
    %v3207 = vmul.f32 %v2921, 0.0625
    %v3208 = vmul.f32 %v2952, 0.0625
    %v3209 = vmul.f32 %v2983, 0.0625
    %v3210 = vmul.f32 %v3014, 0.0625
    %v3211 = vmul.f32 %v3045, 0.0625
    %v3212 = vmul.f32 %v3076, 0.0625
    %v3213 = vmul.f32 %v3107, 0.0625
    %v3214 = vmul.f32 %v3138, 0.0625
    %v3215 = vmul.f32 %v3169, 0.0625
    %v3216 = vmul.f32 %v3200, 0.0625
    %v3217 = vld [vmem:[%s3] sm:$0xff]
    %v3218 = vld [vmem:[%s3 + $0x8] sm:$0xff]
    %v3219 = vld [vmem:[%s3 + $0x10] sm:$0xff]
    %v3220 = vld [vmem:[%s3 + $0x18] sm:$0xff]
    %v3221 = vld [vmem:[%s4] sm:$0x1]
    %v3223 = vlaneseq
    %v3224 = vshrl.u32 %v3223, 7
    %v3225 = vsub.s32 0, %v3224
    %v3226 = vrot.slane %v3221, %v3225
    %v3229 = vsel %vm2704, %v3201, 0
    %v3232 = vsel %vm2704, %v3202, 0
    %v3235 = vsel %vm2704, %v3203, 0
    %v3238 = vsel %vm2704, %v3204, 0
    %v3241 = vsel %vm2704, %v3205, 0
    %v3244 = vsel %vm2704, %v3206, 0
    %v3247 = vsel %vm2704, %v3207, 0
    %v3250 = vsel %vm2704, %v3208, 0
    %v3253 = vsel %vm2704, %v3209, 0
    %v3256 = vsel %vm2704, %v3210, 0
    %v3259 = vsel %vm2704, %v3211, 0
    %v3262 = vsel %vm2704, %v3212, 0
    %v3265 = vsel %vm2704, %v3213, 0
    %v3268 = vsel %vm2704, %v3214, 0
    %v3271 = vsel %vm2704, %v3215, 0
    %v3274 = vsel %vm2704, %v3216, 0
    %3276 = vmatprep.subr.mxu0 0.0
    %3277 = vmatpush1.msra.mxu0 %v3217
    %3278 = vmatprep.subr.mxu0 0.0
    %3279 = vmatpush1.msra.mxu0 %v3218
    %3280 = vmatprep.subr.mxu0 0.0
    %3281 = vmatpush1.msra.mxu0 %v3219
    %3282 = vmatprep.subr.mxu0 0.0
    %3283 = vmatpush1.msra.mxu0 %v3220
    %3284 = vmatprep.subr.mxu0 0.0
    %3285 = vmatpush1.msra.mxu0 0.0
    %3286 = vmatprep.subr.mxu0 0.0
    %3287 = vmatpush1.msra.mxu0 0.0
    %3288 = vmatprep.subr.mxu0 0.0
    %3289 = vmatpush1.msra.mxu0 0.0
    %3290 = vmatprep.subr.mxu0 0.0
    %3291 = vmatpush1.msra.mxu0 0.0
    %3292 = vmatprep.subr.mxu0 0.0
    %3293 = vmatpush1.msra.mxu0 0.0
    %3294 = vmatprep.subr.mxu0 0.0
    %3295 = vmatpush1.msra.mxu0 0.0
    %3296 = vmatprep.subr.mxu0 0.0
    %3297 = vmatpush1.msra.mxu0 0.0
    %3298 = vmatprep.subr.mxu0 0.0
    %3299 = vmatpush1.msra.mxu0 0.0
    %3300 = vmatprep.subr.mxu0 0.0
    %3301 = vmatpush1.msra.mxu0 0.0
    %3302 = vmatprep.subr.mxu0 0.0
    %3303 = vmatpush1.msra.mxu0 0.0
    %3304 = vmatprep.subr.mxu0 0.0
    %3305 = vmatpush1.msra.mxu0 0.0
    %3306 = vmatprep.subr.mxu0 0.0
    %3307 = vmatpush1.msra.mxu0 0.0
    %3308 = vmatprep.subr.mxu0 0.0
    %3309 = vmatpush1.msra.mxu0 0.0
    %3310 = vmatprep.subr.mxu0 0.0
    %3311 = vmatpush1.msra.mxu0 0.0
    %3312 = vmatprep.subr.mxu0 0.0
    %3313 = vmatpush1.msra.mxu0 0.0
    %3314 = vmatprep.subr.mxu0 0.0
    %3315 = vmatpush1.msra.mxu0 0.0
    %3316 = vmatprep.subr.mxu0 0.0
    %3317 = vmatpush1.msra.mxu0 0.0
    %3318 = vmatprep.subr.mxu0 0.0
    %3319 = vmatpush1.msra.mxu0 0.0
    %3320 = vmatprep.subr.mxu0 0.0
    %3321 = vmatpush1.msra.mxu0 0.0
    %3322 = vmatprep.subr.mxu0 0.0
    %3323 = vmatpush1.msra.mxu0 0.0
    %3324 = vmatprep.subr.mxu0 0.0
    %3325 = vmatpush1.msra.mxu0 0.0
    %3326 = vmatprep.subr.mxu0 0.0
    %3327 = vmatpush1.msra.mxu0 0.0
    %3328 = vmatprep.subr.mxu0 0.0
    %3329 = vmatpush1.msra.mxu0 0.0
    %3330 = vmatprep.subr.mxu0 0.0
    %3331 = vmatpush1.msra.mxu0 0.0
    %3332 = vmatprep.subr.mxu0 0.0
    %3333 = vmatpush1.msra.mxu0 0.0
    %3334 = vmatprep.subr.mxu0 0.0
    %3335 = vmatpush1.msra.mxu0 0.0
    %3336 = vmatprep.subr.mxu0 0.0
    %3337 = vmatpush1.msra.mxu0 0.0
    %3338 = vmatprep.subr.mxu0 0.0
    %3339 = vmatpush1.msra.mxu0 0.0
    %3340 = vmatprep.mubr.f32.mxu0 0.0
    %3341 = vmatmul.mubr.f32.gmra.mrb[0].mxu0 %v3229
    %v3342 = vpop.f32.mrb[0].mxu0
    %v3343 = vadd.f32 %v3226, %v3342
    %v3344 = vpop.f32.mrb[0].mxu0
    %3345 = vmatprep.mubr.f32.mxu0 0.0
    %3346 = vmatmul.mubr.f32.gmra.mrb[0].mxu0 %v3232
    %v3347 = vpop.f32.mrb[0].mxu0
    %v3348 = vadd.f32 %v3226, %v3347
    %v3349 = vpop.f32.mrb[0].mxu0
    %3350 = vmatprep.mubr.f32.mxu0 0.0
    %3351 = vmatmul.mubr.f32.gmra.mrb[0].mxu0 %v3235
    %v3352 = vpop.f32.mrb[0].mxu0
    %v3353 = vadd.f32 %v3226, %v3352
    %v3354 = vpop.f32.mrb[0].mxu0
    %3355 = vmatprep.mubr.f32.mxu0 0.0
    %3356 = vmatmul.mubr.f32.gmra.mrb[0].mxu0 %v3238
    %v3357 = vpop.f32.mrb[0].mxu0
    %v3358 = vadd.f32 %v3226, %v3357
    %v3359 = vpop.f32.mrb[0].mxu0
    %3360 = vmatprep.mubr.f32.mxu0 0.0
    %3361 = vmatmul.mubr.f32.gmra.mrb[0].mxu0 %v3241
    %v3362 = vpop.f32.mrb[0].mxu0
    %v3363 = vadd.f32 %v3226, %v3362
    %v3364 = vpop.f32.mrb[0].mxu0
    %3365 = vmatprep.mubr.f32.mxu0 0.0
    %3366 = vmatmul.mubr.f32.gmra.mrb[0].mxu0 %v3244
    %v3367 = vpop.f32.mrb[0].mxu0
    %v3368 = vadd.f32 %v3226, %v3367
    %v3369 = vpop.f32.mrb[0].mxu0
    %3370 = vmatprep.mubr.f32.mxu0 0.0
    %3371 = vmatmul.mubr.f32.gmra.mrb[0].mxu0 %v3247
    %v3372 = vpop.f32.mrb[0].mxu0
    %v3373 = vadd.f32 %v3226, %v3372
    %v3374 = vpop.f32.mrb[0].mxu0
    %3375 = vmatprep.mubr.f32.mxu0 0.0
    %3376 = vmatmul.mubr.f32.gmra.mrb[0].mxu0 %v3250
    %v3377 = vpop.f32.mrb[0].mxu0
    %v3378 = vadd.f32 %v3226, %v3377
    %v3379 = vpop.f32.mrb[0].mxu0
    %3380 = vmatprep.mubr.f32.mxu0 0.0
    %3381 = vmatmul.mubr.f32.gmra.mrb[0].mxu0 %v3253
    %v3382 = vpop.f32.mrb[0].mxu0
    %v3383 = vadd.f32 %v3226, %v3382
    %v3384 = vpop.f32.mrb[0].mxu0
    %3385 = vmatprep.mubr.f32.mxu0 0.0
    %3386 = vmatmul.mubr.f32.gmra.mrb[0].mxu0 %v3256
    %v3387 = vpop.f32.mrb[0].mxu0
    %v3388 = vadd.f32 %v3226, %v3387
    %v3389 = vpop.f32.mrb[0].mxu0
    %3390 = vmatprep.mubr.f32.mxu0 0.0
    %3391 = vmatmul.mubr.f32.gmra.mrb[0].mxu0 %v3259
    %v3392 = vpop.f32.mrb[0].mxu0
    %v3393 = vadd.f32 %v3226, %v3392
    %v3394 = vpop.f32.mrb[0].mxu0
    %3395 = vmatprep.mubr.f32.mxu0 0.0
    %3396 = vmatmul.mubr.f32.gmra.mrb[0].mxu0 %v3262
    %v3397 = vpop.f32.mrb[0].mxu0
    %v3398 = vadd.f32 %v3226, %v3397
    %v3399 = vpop.f32.mrb[0].mxu0
    %3400 = vmatprep.mubr.f32.mxu0 0.0
    %3401 = vmatmul.mubr.f32.gmra.mrb[0].mxu0 %v3265
    %v3402 = vpop.f32.mrb[0].mxu0
    %v3403 = vadd.f32 %v3226, %v3402
    %v3404 = vpop.f32.mrb[0].mxu0
    %3405 = vmatprep.mubr.f32.mxu0 0.0
    %3406 = vmatmul.mubr.f32.gmra.mrb[0].mxu0 %v3268
    %v3407 = vpop.f32.mrb[0].mxu0
    %v3408 = vadd.f32 %v3226, %v3407
    %v3409 = vpop.f32.mrb[0].mxu0
    %3410 = vmatprep.mubr.f32.mxu0 0.0
    %3411 = vmatmul.mubr.f32.gmra.mrb[0].mxu0 %v3271
    %v3412 = vpop.f32.mrb[0].mxu0
    %v3413 = vadd.f32 %v3226, %v3412
    %v3414 = vpop.f32.mrb[0].mxu0
    %3415 = vmatprep.mubr.f32.mxu0 0.0
    %3416 = vmatmul.mubr.f32.gmra.mrb[0].mxu0 %v3274
    %v3417 = vpop.f32.mrb[0].mxu0
    %v3418 = vadd.f32 %v3226, %v3417
    %v3419 = vpop.f32.mrb[0].mxu0
    %3420 = vdwg.mxu0
    %v3421 = vld [vmem:[%s5] sm:$0xff]
    %v3422 = vld [vmem:[%s5 + $0x8] sm:$0xff]
    %v3423 = vld [vmem:[%s5 + $0x10] sm:$0xff]
    %v3424 = vld [vmem:[%s5 + $0x18] sm:$0xff]
    %v3425 = vld [vmem:[%s6] sm:$0x1]
    %v3427 = vlaneseq
    %v3428 = vshrl.u32 %v3427, 7
    %v3429 = vsub.s32 0, %v3428
    %v3430 = vrot.slane %v3425, %v3429
    %3432 = vmatprep.subr.mxu0 0.0
    %3433 = vmatpush1.msra.mxu0 %v3421
    %3434 = vmatprep.subr.mxu0 0.0
    %3435 = vmatpush1.msra.mxu0 %v3422
    %3436 = vmatprep.subr.mxu0 0.0
    %3437 = vmatpush1.msra.mxu0 %v3423
    %3438 = vmatprep.subr.mxu0 0.0
    %3439 = vmatpush1.msra.mxu0 %v3424
    %3440 = vmatprep.subr.mxu0 0.0
    %3441 = vmatpush1.msra.mxu0 0.0
    %3442 = vmatprep.subr.mxu0 0.0
    %3443 = vmatpush1.msra.mxu0 0.0
    %3444 = vmatprep.subr.mxu0 0.0
    %3445 = vmatpush1.msra.mxu0 0.0
    %3446 = vmatprep.subr.mxu0 0.0
    %3447 = vmatpush1.msra.mxu0 0.0
    %3448 = vmatprep.subr.mxu0 0.0
    %3449 = vmatpush1.msra.mxu0 0.0
    %3450 = vmatprep.subr.mxu0 0.0
    %3451 = vmatpush1.msra.mxu0 0.0
    %3452 = vmatprep.subr.mxu0 0.0
    %3453 = vmatpush1.msra.mxu0 0.0
    %3454 = vmatprep.subr.mxu0 0.0
    %3455 = vmatpush1.msra.mxu0 0.0
    %3456 = vmatprep.subr.mxu0 0.0
    %3457 = vmatpush1.msra.mxu0 0.0
    %3458 = vmatprep.subr.mxu0 0.0
    %3459 = vmatpush1.msra.mxu0 0.0
    %3460 = vmatprep.subr.mxu0 0.0
    %3461 = vmatpush1.msra.mxu0 0.0
    %3462 = vmatprep.subr.mxu0 0.0
    %3463 = vmatpush1.msra.mxu0 0.0
    %3464 = vmatprep.subr.mxu0 0.0
    %3465 = vmatpush1.msra.mxu0 0.0
    %3466 = vmatprep.subr.mxu0 0.0
    %3467 = vmatpush1.msra.mxu0 0.0
    %3468 = vmatprep.subr.mxu0 0.0
    %3469 = vmatpush1.msra.mxu0 0.0
    %3470 = vmatprep.subr.mxu0 0.0
    %3471 = vmatpush1.msra.mxu0 0.0
    %3472 = vmatprep.subr.mxu0 0.0
    %3473 = vmatpush1.msra.mxu0 0.0
    %3474 = vmatprep.subr.mxu0 0.0
    %3475 = vmatpush1.msra.mxu0 0.0
    %3476 = vmatprep.subr.mxu0 0.0
    %3477 = vmatpush1.msra.mxu0 0.0
    %3478 = vmatprep.subr.mxu0 0.0
    %3479 = vmatpush1.msra.mxu0 0.0
    %3480 = vmatprep.subr.mxu0 0.0
    %3481 = vmatpush1.msra.mxu0 0.0
    %3482 = vmatprep.subr.mxu0 0.0
    %3483 = vmatpush1.msra.mxu0 0.0
    %3484 = vmatprep.subr.mxu0 0.0
    %3485 = vmatpush1.msra.mxu0 0.0
    %3486 = vmatprep.subr.mxu0 0.0
    %3487 = vmatpush1.msra.mxu0 0.0
    %3488 = vmatprep.subr.mxu0 0.0
    %3489 = vmatpush1.msra.mxu0 0.0
    %3490 = vmatprep.subr.mxu0 0.0
    %3491 = vmatpush1.msra.mxu0 0.0
    %3492 = vmatprep.subr.mxu0 0.0
    %3493 = vmatpush1.msra.mxu0 0.0
    %3494 = vmatprep.subr.mxu0 0.0
    %3495 = vmatpush1.msra.mxu0 0.0
    %3496 = vmatprep.mubr.f32.mxu0 0.0
    %3497 = vmatmul.mubr.f32.gmra.mrb[0].mxu0 %v3229
    %v3498 = vpop.f32.mrb[0].mxu0
    %v3499 = vadd.f32 %v3430, %v3498
    %v3500 = vpop.f32.mrb[0].mxu0
    %3501 = vdwg.mxu0
    %v3502 = vadd.f32 %v3343, %v3499
    %v3503 = vxor.u32 %v3502, 2147483648
    %v3504 = vmul.f32 %v3503, 1.442695
    %v3505 = vpow.pop %v3504
    %v3506 = vadd.f32 %v3505, 1.0
    %v3507 = vrcp.pop %v3506
    %v3508 = vmul.f32 1.0, %v3507
    %3510 = vrot.lane.b32.xlu0 %v3499, 64
    %v3511 = vpop.permute.xlu0 %3510
    %v3513 = vmul.f32 %v3508, %v3511
    %3515 = vrot.lane.b32.xlu0 %v3513, 64
    %v3516 = vpop.permute.xlu0 %3515
    %v3518 = vadd.f32 %v3343, %v3516
    %v3519 = vtanh.pop %v3518
    %v3520 = vsub.f32 1.0, %v3508
    %3522 = vrot.lane.b32.xlu0 %v3519, 96
    %v3523 = vpop.permute.xlu0 %3522
    %v3525 = vmul.f32 %v3520, %v3523
    %3526 = vrot.lane.b32.xlu0 %v3201, 32
    %v3527 = vpop.permute.xlu0 %3526
    %v3529 = vmul.f32 %v3508, %v3527
    %v3530 = vadd.f32 %v3525, %v3529
    %3532 = vrot.lane.b32.xlu0 %v3530, 96
    %v3533 = vpop.permute.xlu0 %3532
    %v3534 = vsel %vm2704, %v3533, 0
    %3536 = vmatprep.subr.mxu0 0.0
    %3537 = vmatpush1.msra.mxu0 %v3421
    %3538 = vmatprep.subr.mxu0 0.0
    %3539 = vmatpush1.msra.mxu0 %v3422
    %3540 = vmatprep.subr.mxu0 0.0
    %3541 = vmatpush1.msra.mxu0 %v3423
    %3542 = vmatprep.subr.mxu0 0.0
    %3543 = vmatpush1.msra.mxu0 %v3424
    %3544 = vmatprep.subr.mxu0 0.0
    %3545 = vmatpush1.msra.mxu0 0.0
    %3546 = vmatprep.subr.mxu0 0.0
    %3547 = vmatpush1.msra.mxu0 0.0
    %3548 = vmatprep.subr.mxu0 0.0
    %3549 = vmatpush1.msra.mxu0 0.0
    %3550 = vmatprep.subr.mxu0 0.0
    %3551 = vmatpush1.msra.mxu0 0.0
    %3552 = vmatprep.subr.mxu0 0.0
    %3553 = vmatpush1.msra.mxu0 0.0
    %3554 = vmatprep.subr.mxu0 0.0
    %3555 = vmatpush1.msra.mxu0 0.0
    %3556 = vmatprep.subr.mxu0 0.0
    %3557 = vmatpush1.msra.mxu0 0.0
    %3558 = vmatprep.subr.mxu0 0.0
    %3559 = vmatpush1.msra.mxu0 0.0
    %3560 = vmatprep.subr.mxu0 0.0
    %3561 = vmatpush1.msra.mxu0 0.0
    %3562 = vmatprep.subr.mxu0 0.0
    %3563 = vmatpush1.msra.mxu0 0.0
    %3564 = vmatprep.subr.mxu0 0.0
    %3565 = vmatpush1.msra.mxu0 0.0
    %3566 = vmatprep.subr.mxu0 0.0
    %3567 = vmatpush1.msra.mxu0 0.0
    %3568 = vmatprep.subr.mxu0 0.0
    %3569 = vmatpush1.msra.mxu0 0.0
    %3570 = vmatprep.subr.mxu0 0.0
    %3571 = vmatpush1.msra.mxu0 0.0
    %3572 = vmatprep.subr.mxu0 0.0
    %3573 = vmatpush1.msra.mxu0 0.0
    %3574 = vmatprep.subr.mxu0 0.0
    %3575 = vmatpush1.msra.mxu0 0.0
    %3576 = vmatprep.subr.mxu0 0.0
    %3577 = vmatpush1.msra.mxu0 0.0
    %3578 = vmatprep.subr.mxu0 0.0
    %3579 = vmatpush1.msra.mxu0 0.0
    %3580 = vmatprep.subr.mxu0 0.0
    %3581 = vmatpush1.msra.mxu0 0.0
    %3582 = vmatprep.subr.mxu0 0.0
    %3583 = vmatpush1.msra.mxu0 0.0
    %3584 = vmatprep.subr.mxu0 0.0
    %3585 = vmatpush1.msra.mxu0 0.0
    %3586 = vmatprep.subr.mxu0 0.0
    %3587 = vmatpush1.msra.mxu0 0.0
    %3588 = vmatprep.subr.mxu0 0.0
    %3589 = vmatpush1.msra.mxu0 0.0
    %3590 = vmatprep.subr.mxu0 0.0
    %3591 = vmatpush1.msra.mxu0 0.0
    %3592 = vmatprep.subr.mxu0 0.0
    %3593 = vmatpush1.msra.mxu0 0.0
    %3594 = vmatprep.subr.mxu0 0.0
    %3595 = vmatpush1.msra.mxu0 0.0
    %3596 = vmatprep.subr.mxu0 0.0
    %3597 = vmatpush1.msra.mxu0 0.0
    %3598 = vmatprep.subr.mxu0 0.0
    %3599 = vmatpush1.msra.mxu0 0.0
    %3600 = vmatprep.mubr.f32.mxu0 0.0
    %3601 = vmatmul.mubr.f32.gmra.mrb[0].mxu0 %v3534
    %v3602 = vpop.f32.mrb[0].mxu0
    %v3603 = vadd.f32 %v3430, %v3602
    %v3604 = vpop.f32.mrb[0].mxu0
    %3605 = vdwg.mxu0
    %v3606 = vadd.f32 %v3348, %v3603
    %v3607 = vxor.u32 %v3606, 2147483648
    %v3608 = vmul.f32 %v3607, 1.442695
    %v3609 = vpow.pop %v3608
    %v3610 = vadd.f32 %v3609, 1.0
    %v3611 = vrcp.pop %v3610
    %v3612 = vmul.f32 1.0, %v3611
    %3614 = vrot.lane.b32.xlu0 %v3603, 64
    %v3615 = vpop.permute.xlu0 %3614
    %v3617 = vmul.f32 %v3612, %v3615
    %3619 = vrot.lane.b32.xlu0 %v3617, 64
    %v3620 = vpop.permute.xlu0 %3619
    %v3622 = vadd.f32 %v3348, %v3620
    %v3623 = vtanh.pop %v3622
    %v3624 = vsub.f32 1.0, %v3612
    %3626 = vrot.lane.b32.xlu0 %v3623, 96
    %v3627 = vpop.permute.xlu0 %3626
    %v3629 = vmul.f32 %v3624, %v3627
    %v3630 = vmul.f32 %v3612, %v3530
    %v3631 = vadd.f32 %v3629, %v3630
    %3633 = vrot.lane.b32.xlu0 %v3631, 96
    %v3634 = vpop.permute.xlu0 %3633
    %v3635 = vsel %vm2704, %v3634, 0
    %3637 = vmatprep.subr.mxu0 0.0
    %3638 = vmatpush1.msra.mxu0 %v3421
    %3639 = vmatprep.subr.mxu0 0.0
    %3640 = vmatpush1.msra.mxu0 %v3422
    %3641 = vmatprep.subr.mxu0 0.0
    %3642 = vmatpush1.msra.mxu0 %v3423
    %3643 = vmatprep.subr.mxu0 0.0
    %3644 = vmatpush1.msra.mxu0 %v3424
    %3645 = vmatprep.subr.mxu0 0.0
    %3646 = vmatpush1.msra.mxu0 0.0
    %3647 = vmatprep.subr.mxu0 0.0
    %3648 = vmatpush1.msra.mxu0 0.0
    %3649 = vmatprep.subr.mxu0 0.0
    %3650 = vmatpush1.msra.mxu0 0.0
    %3651 = vmatprep.subr.mxu0 0.0
    %3652 = vmatpush1.msra.mxu0 0.0
    %3653 = vmatprep.subr.mxu0 0.0
    %3654 = vmatpush1.msra.mxu0 0.0
    %3655 = vmatprep.subr.mxu0 0.0
    %3656 = vmatpush1.msra.mxu0 0.0
    %3657 = vmatprep.subr.mxu0 0.0
    %3658 = vmatpush1.msra.mxu0 0.0
    %3659 = vmatprep.subr.mxu0 0.0
    %3660 = vmatpush1.msra.mxu0 0.0
    %3661 = vmatprep.subr.mxu0 0.0
    %3662 = vmatpush1.msra.mxu0 0.0
    %3663 = vmatprep.subr.mxu0 0.0
    %3664 = vmatpush1.msra.mxu0 0.0
    %3665 = vmatprep.subr.mxu0 0.0
    %3666 = vmatpush1.msra.mxu0 0.0
    %3667 = vmatprep.subr.mxu0 0.0
    %3668 = vmatpush1.msra.mxu0 0.0
    %3669 = vmatprep.subr.mxu0 0.0
    %3670 = vmatpush1.msra.mxu0 0.0
    %3671 = vmatprep.subr.mxu0 0.0
    %3672 = vmatpush1.msra.mxu0 0.0
    %3673 = vmatprep.subr.mxu0 0.0
    %3674 = vmatpush1.msra.mxu0 0.0
    %3675 = vmatprep.subr.mxu0 0.0
    %3676 = vmatpush1.msra.mxu0 0.0
    %3677 = vmatprep.subr.mxu0 0.0
    %3678 = vmatpush1.msra.mxu0 0.0
    %3679 = vmatprep.subr.mxu0 0.0
    %3680 = vmatpush1.msra.mxu0 0.0
    %3681 = vmatprep.subr.mxu0 0.0
    %3682 = vmatpush1.msra.mxu0 0.0
    %3683 = vmatprep.subr.mxu0 0.0
    %3684 = vmatpush1.msra.mxu0 0.0
    %3685 = vmatprep.subr.mxu0 0.0
    %3686 = vmatpush1.msra.mxu0 0.0
    %3687 = vmatprep.subr.mxu0 0.0
    %3688 = vmatpush1.msra.mxu0 0.0
    %3689 = vmatprep.subr.mxu0 0.0
    %3690 = vmatpush1.msra.mxu0 0.0
    %3691 = vmatprep.subr.mxu0 0.0
    %3692 = vmatpush1.msra.mxu0 0.0
    %3693 = vmatprep.subr.mxu0 0.0
    %3694 = vmatpush1.msra.mxu0 0.0
    %3695 = vmatprep.subr.mxu0 0.0
    %3696 = vmatpush1.msra.mxu0 0.0
    %3697 = vmatprep.subr.mxu0 0.0
    %3698 = vmatpush1.msra.mxu0 0.0
    %3699 = vmatprep.subr.mxu0 0.0
    %3700 = vmatpush1.msra.mxu0 0.0
    %3701 = vmatprep.mubr.f32.mxu0 0.0
    %3702 = vmatmul.mubr.f32.gmra.mrb[0].mxu0 %v3635
    %v3703 = vpop.f32.mrb[0].mxu0
    %v3704 = vadd.f32 %v3430, %v3703
    %v3705 = vpop.f32.mrb[0].mxu0
    %3706 = vdwg.mxu0
    %v3707 = vadd.f32 %v3353, %v3704
    %v3708 = vxor.u32 %v3707, 2147483648
    %v3709 = vmul.f32 %v3708, 1.442695
    %v3710 = vpow.pop %v3709
    %v3711 = vadd.f32 %v3710, 1.0
    %v3712 = vrcp.pop %v3711
    %v3713 = vmul.f32 1.0, %v3712
    %3715 = vrot.lane.b32.xlu0 %v3704, 64
    %v3716 = vpop.permute.xlu0 %3715
    %v3718 = vmul.f32 %v3713, %v3716
    %3720 = vrot.lane.b32.xlu0 %v3718, 64
    %v3721 = vpop.permute.xlu0 %3720
    %v3723 = vadd.f32 %v3353, %v3721
    %v3724 = vtanh.pop %v3723
    %v3725 = vsub.f32 1.0, %v3713
    %3727 = vrot.lane.b32.xlu0 %v3724, 96
    %v3728 = vpop.permute.xlu0 %3727
    %v3730 = vmul.f32 %v3725, %v3728
    %v3731 = vmul.f32 %v3713, %v3631
    %v3732 = vadd.f32 %v3730, %v3731
    %3734 = vrot.lane.b32.xlu0 %v3732, 96
    %v3735 = vpop.permute.xlu0 %3734
    %v3736 = vsel %vm2704, %v3735, 0
    %3738 = vmatprep.subr.mxu0 0.0
    %3739 = vmatpush1.msra.mxu0 %v3421
    %3740 = vmatprep.subr.mxu0 0.0
    %3741 = vmatpush1.msra.mxu0 %v3422
    %3742 = vmatprep.subr.mxu0 0.0
    %3743 = vmatpush1.msra.mxu0 %v3423
    %3744 = vmatprep.subr.mxu0 0.0
    %3745 = vmatpush1.msra.mxu0 %v3424
    %3746 = vmatprep.subr.mxu0 0.0
    %3747 = vmatpush1.msra.mxu0 0.0
    %3748 = vmatprep.subr.mxu0 0.0
    %3749 = vmatpush1.msra.mxu0 0.0
    %3750 = vmatprep.subr.mxu0 0.0
    %3751 = vmatpush1.msra.mxu0 0.0
    %3752 = vmatprep.subr.mxu0 0.0
    %3753 = vmatpush1.msra.mxu0 0.0
    %3754 = vmatprep.subr.mxu0 0.0
    %3755 = vmatpush1.msra.mxu0 0.0
    %3756 = vmatprep.subr.mxu0 0.0
    %3757 = vmatpush1.msra.mxu0 0.0
    %3758 = vmatprep.subr.mxu0 0.0
    %3759 = vmatpush1.msra.mxu0 0.0
    %3760 = vmatprep.subr.mxu0 0.0
    %3761 = vmatpush1.msra.mxu0 0.0
    %3762 = vmatprep.subr.mxu0 0.0
    %3763 = vmatpush1.msra.mxu0 0.0
    %3764 = vmatprep.subr.mxu0 0.0
    %3765 = vmatpush1.msra.mxu0 0.0
    %3766 = vmatprep.subr.mxu0 0.0
    %3767 = vmatpush1.msra.mxu0 0.0
    %3768 = vmatprep.subr.mxu0 0.0
    %3769 = vmatpush1.msra.mxu0 0.0
    %3770 = vmatprep.subr.mxu0 0.0
    %3771 = vmatpush1.msra.mxu0 0.0
    %3772 = vmatprep.subr.mxu0 0.0
    %3773 = vmatpush1.msra.mxu0 0.0
    %3774 = vmatprep.subr.mxu0 0.0
    %3775 = vmatpush1.msra.mxu0 0.0
    %3776 = vmatprep.subr.mxu0 0.0
    %3777 = vmatpush1.msra.mxu0 0.0
    %3778 = vmatprep.subr.mxu0 0.0
    %3779 = vmatpush1.msra.mxu0 0.0
    %3780 = vmatprep.subr.mxu0 0.0
    %3781 = vmatpush1.msra.mxu0 0.0
    %3782 = vmatprep.subr.mxu0 0.0
    %3783 = vmatpush1.msra.mxu0 0.0
    %3784 = vmatprep.subr.mxu0 0.0
    %3785 = vmatpush1.msra.mxu0 0.0
    %3786 = vmatprep.subr.mxu0 0.0
    %3787 = vmatpush1.msra.mxu0 0.0
    %3788 = vmatprep.subr.mxu0 0.0
    %3789 = vmatpush1.msra.mxu0 0.0
    %3790 = vmatprep.subr.mxu0 0.0
    %3791 = vmatpush1.msra.mxu0 0.0
    %3792 = vmatprep.subr.mxu0 0.0
    %3793 = vmatpush1.msra.mxu0 0.0
    %3794 = vmatprep.subr.mxu0 0.0
    %3795 = vmatpush1.msra.mxu0 0.0
    %3796 = vmatprep.subr.mxu0 0.0
    %3797 = vmatpush1.msra.mxu0 0.0
    %3798 = vmatprep.subr.mxu0 0.0
    %3799 = vmatpush1.msra.mxu0 0.0
    %3800 = vmatprep.subr.mxu0 0.0
    %3801 = vmatpush1.msra.mxu0 0.0
    %3802 = vmatprep.mubr.f32.mxu0 0.0
    %3803 = vmatmul.mubr.f32.gmra.mrb[0].mxu0 %v3736
    %v3804 = vpop.f32.mrb[0].mxu0
    %v3805 = vadd.f32 %v3430, %v3804
    %v3806 = vpop.f32.mrb[0].mxu0
    %3807 = vdwg.mxu0
    %v3808 = vadd.f32 %v3358, %v3805
    %v3809 = vxor.u32 %v3808, 2147483648
    %v3810 = vmul.f32 %v3809, 1.442695
    %v3811 = vpow.pop %v3810
    %v3812 = vadd.f32 %v3811, 1.0
    %v3813 = vrcp.pop %v3812
    %v3814 = vmul.f32 1.0, %v3813
    %3816 = vrot.lane.b32.xlu0 %v3805, 64
    %v3817 = vpop.permute.xlu0 %3816
    %v3819 = vmul.f32 %v3814, %v3817
    %3821 = vrot.lane.b32.xlu0 %v3819, 64
    %v3822 = vpop.permute.xlu0 %3821
    %v3824 = vadd.f32 %v3358, %v3822
    %v3825 = vtanh.pop %v3824
    %v3826 = vsub.f32 1.0, %v3814
    %3828 = vrot.lane.b32.xlu0 %v3825, 96
    %v3829 = vpop.permute.xlu0 %3828
    %v3831 = vmul.f32 %v3826, %v3829
    %v3832 = vmul.f32 %v3814, %v3732
    %v3833 = vadd.f32 %v3831, %v3832
    %3835 = vrot.lane.b32.xlu0 %v3833, 96
    %v3836 = vpop.permute.xlu0 %3835
    %v3837 = vsel %vm2704, %v3836, 0
    %3839 = vmatprep.subr.mxu0 0.0
    %3840 = vmatpush1.msra.mxu0 %v3421
    %3841 = vmatprep.subr.mxu0 0.0
    %3842 = vmatpush1.msra.mxu0 %v3422
    %3843 = vmatprep.subr.mxu0 0.0
    %3844 = vmatpush1.msra.mxu0 %v3423
    %3845 = vmatprep.subr.mxu0 0.0
    %3846 = vmatpush1.msra.mxu0 %v3424
    %3847 = vmatprep.subr.mxu0 0.0
    %3848 = vmatpush1.msra.mxu0 0.0
    %3849 = vmatprep.subr.mxu0 0.0
    %3850 = vmatpush1.msra.mxu0 0.0
    %3851 = vmatprep.subr.mxu0 0.0
    %3852 = vmatpush1.msra.mxu0 0.0
    %3853 = vmatprep.subr.mxu0 0.0
    %3854 = vmatpush1.msra.mxu0 0.0
    %3855 = vmatprep.subr.mxu0 0.0
    %3856 = vmatpush1.msra.mxu0 0.0
    %3857 = vmatprep.subr.mxu0 0.0
    %3858 = vmatpush1.msra.mxu0 0.0
    %3859 = vmatprep.subr.mxu0 0.0
    %3860 = vmatpush1.msra.mxu0 0.0
    %3861 = vmatprep.subr.mxu0 0.0
    %3862 = vmatpush1.msra.mxu0 0.0
    %3863 = vmatprep.subr.mxu0 0.0
    %3864 = vmatpush1.msra.mxu0 0.0
    %3865 = vmatprep.subr.mxu0 0.0
    %3866 = vmatpush1.msra.mxu0 0.0
    %3867 = vmatprep.subr.mxu0 0.0
    %3868 = vmatpush1.msra.mxu0 0.0
    %3869 = vmatprep.subr.mxu0 0.0
    %3870 = vmatpush1.msra.mxu0 0.0
    %3871 = vmatprep.subr.mxu0 0.0
    %3872 = vmatpush1.msra.mxu0 0.0
    %3873 = vmatprep.subr.mxu0 0.0
    %3874 = vmatpush1.msra.mxu0 0.0
    %3875 = vmatprep.subr.mxu0 0.0
    %3876 = vmatpush1.msra.mxu0 0.0
    %3877 = vmatprep.subr.mxu0 0.0
    %3878 = vmatpush1.msra.mxu0 0.0
    %3879 = vmatprep.subr.mxu0 0.0
    %3880 = vmatpush1.msra.mxu0 0.0
    %3881 = vmatprep.subr.mxu0 0.0
    %3882 = vmatpush1.msra.mxu0 0.0
    %3883 = vmatprep.subr.mxu0 0.0
    %3884 = vmatpush1.msra.mxu0 0.0
    %3885 = vmatprep.subr.mxu0 0.0
    %3886 = vmatpush1.msra.mxu0 0.0
    %3887 = vmatprep.subr.mxu0 0.0
    %3888 = vmatpush1.msra.mxu0 0.0
    %3889 = vmatprep.subr.mxu0 0.0
    %3890 = vmatpush1.msra.mxu0 0.0
    %3891 = vmatprep.subr.mxu0 0.0
    %3892 = vmatpush1.msra.mxu0 0.0
    %3893 = vmatprep.subr.mxu0 0.0
    %3894 = vmatpush1.msra.mxu0 0.0
    %3895 = vmatprep.subr.mxu0 0.0
    %3896 = vmatpush1.msra.mxu0 0.0
    %3897 = vmatprep.subr.mxu0 0.0
    %3898 = vmatpush1.msra.mxu0 0.0
    %3899 = vmatprep.subr.mxu0 0.0
    %3900 = vmatpush1.msra.mxu0 0.0
    %3901 = vmatprep.subr.mxu0 0.0
    %3902 = vmatpush1.msra.mxu0 0.0
    %3903 = vmatprep.mubr.f32.mxu0 0.0
    %3904 = vmatmul.mubr.f32.gmra.mrb[0].mxu0 %v3837
    %v3905 = vpop.f32.mrb[0].mxu0
    %v3906 = vadd.f32 %v3430, %v3905
    %v3907 = vpop.f32.mrb[0].mxu0
    %3908 = vdwg.mxu0
    %v3909 = vadd.f32 %v3363, %v3906
    %v3910 = vxor.u32 %v3909, 2147483648
    %v3911 = vmul.f32 %v3910, 1.442695
    %v3912 = vpow.pop %v3911
    %v3913 = vadd.f32 %v3912, 1.0
    %v3914 = vrcp.pop %v3913
    %v3915 = vmul.f32 1.0, %v3914
    %3917 = vrot.lane.b32.xlu0 %v3906, 64
    %v3918 = vpop.permute.xlu0 %3917
    %v3920 = vmul.f32 %v3915, %v3918
    %3922 = vrot.lane.b32.xlu0 %v3920, 64
    %v3923 = vpop.permute.xlu0 %3922
    %v3925 = vadd.f32 %v3363, %v3923
    %v3926 = vtanh.pop %v3925
    %v3927 = vsub.f32 1.0, %v3915
    %3929 = vrot.lane.b32.xlu0 %v3926, 96
    %v3930 = vpop.permute.xlu0 %3929
    %v3932 = vmul.f32 %v3927, %v3930
    %v3933 = vmul.f32 %v3915, %v3833
    %v3934 = vadd.f32 %v3932, %v3933
    %3936 = vrot.lane.b32.xlu0 %v3934, 96
    %v3937 = vpop.permute.xlu0 %3936
    %v3938 = vsel %vm2704, %v3937, 0
    %3940 = vmatprep.subr.mxu0 0.0
    %3941 = vmatpush1.msra.mxu0 %v3421
    %3942 = vmatprep.subr.mxu0 0.0
    %3943 = vmatpush1.msra.mxu0 %v3422
    %3944 = vmatprep.subr.mxu0 0.0
    %3945 = vmatpush1.msra.mxu0 %v3423
    %3946 = vmatprep.subr.mxu0 0.0
    %3947 = vmatpush1.msra.mxu0 %v3424
    %3948 = vmatprep.subr.mxu0 0.0
    %3949 = vmatpush1.msra.mxu0 0.0
    %3950 = vmatprep.subr.mxu0 0.0
    %3951 = vmatpush1.msra.mxu0 0.0
    %3952 = vmatprep.subr.mxu0 0.0
    %3953 = vmatpush1.msra.mxu0 0.0
    %3954 = vmatprep.subr.mxu0 0.0
    %3955 = vmatpush1.msra.mxu0 0.0
    %3956 = vmatprep.subr.mxu0 0.0
    %3957 = vmatpush1.msra.mxu0 0.0
    %3958 = vmatprep.subr.mxu0 0.0
    %3959 = vmatpush1.msra.mxu0 0.0
    %3960 = vmatprep.subr.mxu0 0.0
    %3961 = vmatpush1.msra.mxu0 0.0
    %3962 = vmatprep.subr.mxu0 0.0
    %3963 = vmatpush1.msra.mxu0 0.0
    %3964 = vmatprep.subr.mxu0 0.0
    %3965 = vmatpush1.msra.mxu0 0.0
    %3966 = vmatprep.subr.mxu0 0.0
    %3967 = vmatpush1.msra.mxu0 0.0
    %3968 = vmatprep.subr.mxu0 0.0
    %3969 = vmatpush1.msra.mxu0 0.0
    %3970 = vmatprep.subr.mxu0 0.0
    %3971 = vmatpush1.msra.mxu0 0.0
    %3972 = vmatprep.subr.mxu0 0.0
    %3973 = vmatpush1.msra.mxu0 0.0
    %3974 = vmatprep.subr.mxu0 0.0
    %3975 = vmatpush1.msra.mxu0 0.0
    %3976 = vmatprep.subr.mxu0 0.0
    %3977 = vmatpush1.msra.mxu0 0.0
    %3978 = vmatprep.subr.mxu0 0.0
    %3979 = vmatpush1.msra.mxu0 0.0
    %3980 = vmatprep.subr.mxu0 0.0
    %3981 = vmatpush1.msra.mxu0 0.0
    %3982 = vmatprep.subr.mxu0 0.0
    %3983 = vmatpush1.msra.mxu0 0.0
    %3984 = vmatprep.subr.mxu0 0.0
    %3985 = vmatpush1.msra.mxu0 0.0
    %3986 = vmatprep.subr.mxu0 0.0
    %3987 = vmatpush1.msra.mxu0 0.0
    %3988 = vmatprep.subr.mxu0 0.0
    %3989 = vmatpush1.msra.mxu0 0.0
    %3990 = vmatprep.subr.mxu0 0.0
    %3991 = vmatpush1.msra.mxu0 0.0
    %3992 = vmatprep.subr.mxu0 0.0
    %3993 = vmatpush1.msra.mxu0 0.0
    %3994 = vmatprep.subr.mxu0 0.0
    %3995 = vmatpush1.msra.mxu0 0.0
    %3996 = vmatprep.subr.mxu0 0.0
    %3997 = vmatpush1.msra.mxu0 0.0
    %3998 = vmatprep.subr.mxu0 0.0
    %3999 = vmatpush1.msra.mxu0 0.0
    %4000 = vmatprep.subr.mxu0 0.0
    %4001 = vmatpush1.msra.mxu0 0.0
    %4002 = vmatprep.subr.mxu0 0.0
    %4003 = vmatpush1.msra.mxu0 0.0
    %4004 = vmatprep.mubr.f32.mxu0 0.0
    %4005 = vmatmul.mubr.f32.gmra.mrb[0].mxu0 %v3938
    %v4006 = vpop.f32.mrb[0].mxu0
    %v4007 = vadd.f32 %v3430, %v4006
    %v4008 = vpop.f32.mrb[0].mxu0
    %4009 = vdwg.mxu0
    %v4010 = vadd.f32 %v3368, %v4007
    %v4011 = vxor.u32 %v4010, 2147483648
    %v4012 = vmul.f32 %v4011, 1.442695
    %v4013 = vpow.pop %v4012
    %v4014 = vadd.f32 %v4013, 1.0
    %v4015 = vrcp.pop %v4014
    %v4016 = vmul.f32 1.0, %v4015
    %4018 = vrot.lane.b32.xlu0 %v4007, 64
    %v4019 = vpop.permute.xlu0 %4018
    %v4021 = vmul.f32 %v4016, %v4019
    %4023 = vrot.lane.b32.xlu0 %v4021, 64
    %v4024 = vpop.permute.xlu0 %4023
    %v4026 = vadd.f32 %v3368, %v4024
    %v4027 = vtanh.pop %v4026
    %v4028 = vsub.f32 1.0, %v4016
    %4030 = vrot.lane.b32.xlu0 %v4027, 96
    %v4031 = vpop.permute.xlu0 %4030
    %v4033 = vmul.f32 %v4028, %v4031
    %v4034 = vmul.f32 %v4016, %v3934
    %v4035 = vadd.f32 %v4033, %v4034
    %4037 = vrot.lane.b32.xlu0 %v4035, 96
    %v4038 = vpop.permute.xlu0 %4037
    %v4039 = vsel %vm2704, %v4038, 0
    %4041 = vmatprep.subr.mxu0 0.0
    %4042 = vmatpush1.msra.mxu0 %v3421
    %4043 = vmatprep.subr.mxu0 0.0
    %4044 = vmatpush1.msra.mxu0 %v3422
    %4045 = vmatprep.subr.mxu0 0.0
    %4046 = vmatpush1.msra.mxu0 %v3423
    %4047 = vmatprep.subr.mxu0 0.0
    %4048 = vmatpush1.msra.mxu0 %v3424
    %4049 = vmatprep.subr.mxu0 0.0
    %4050 = vmatpush1.msra.mxu0 0.0
    %4051 = vmatprep.subr.mxu0 0.0
    %4052 = vmatpush1.msra.mxu0 0.0
    %4053 = vmatprep.subr.mxu0 0.0
    %4054 = vmatpush1.msra.mxu0 0.0
    %4055 = vmatprep.subr.mxu0 0.0
    %4056 = vmatpush1.msra.mxu0 0.0
    %4057 = vmatprep.subr.mxu0 0.0
    %4058 = vmatpush1.msra.mxu0 0.0
    %4059 = vmatprep.subr.mxu0 0.0
    %4060 = vmatpush1.msra.mxu0 0.0
    %4061 = vmatprep.subr.mxu0 0.0
    %4062 = vmatpush1.msra.mxu0 0.0
    %4063 = vmatprep.subr.mxu0 0.0
    %4064 = vmatpush1.msra.mxu0 0.0
    %4065 = vmatprep.subr.mxu0 0.0
    %4066 = vmatpush1.msra.mxu0 0.0
    %4067 = vmatprep.subr.mxu0 0.0
    %4068 = vmatpush1.msra.mxu0 0.0
    %4069 = vmatprep.subr.mxu0 0.0
    %4070 = vmatpush1.msra.mxu0 0.0
    %4071 = vmatprep.subr.mxu0 0.0
    %4072 = vmatpush1.msra.mxu0 0.0
    %4073 = vmatprep.subr.mxu0 0.0
    %4074 = vmatpush1.msra.mxu0 0.0
    %4075 = vmatprep.subr.mxu0 0.0
    %4076 = vmatpush1.msra.mxu0 0.0
    %4077 = vmatprep.subr.mxu0 0.0
    %4078 = vmatpush1.msra.mxu0 0.0
    %4079 = vmatprep.subr.mxu0 0.0
    %4080 = vmatpush1.msra.mxu0 0.0
    %4081 = vmatprep.subr.mxu0 0.0
    %4082 = vmatpush1.msra.mxu0 0.0
    %4083 = vmatprep.subr.mxu0 0.0
    %4084 = vmatpush1.msra.mxu0 0.0
    %4085 = vmatprep.subr.mxu0 0.0
    %4086 = vmatpush1.msra.mxu0 0.0
    %4087 = vmatprep.subr.mxu0 0.0
    %4088 = vmatpush1.msra.mxu0 0.0
    %4089 = vmatprep.subr.mxu0 0.0
    %4090 = vmatpush1.msra.mxu0 0.0
    %4091 = vmatprep.subr.mxu0 0.0
    %4092 = vmatpush1.msra.mxu0 0.0
    %4093 = vmatprep.subr.mxu0 0.0
    %4094 = vmatpush1.msra.mxu0 0.0
    %4095 = vmatprep.subr.mxu0 0.0
    %4096 = vmatpush1.msra.mxu0 0.0
    %4097 = vmatprep.subr.mxu0 0.0
    %4098 = vmatpush1.msra.mxu0 0.0
    %4099 = vmatprep.subr.mxu0 0.0
    %4100 = vmatpush1.msra.mxu0 0.0
    %4101 = vmatprep.subr.mxu0 0.0
    %4102 = vmatpush1.msra.mxu0 0.0
    %4103 = vmatprep.subr.mxu0 0.0
    %4104 = vmatpush1.msra.mxu0 0.0
    %4105 = vmatprep.mubr.f32.mxu0 0.0
    %4106 = vmatmul.mubr.f32.gmra.mrb[0].mxu0 %v4039
    %v4107 = vpop.f32.mrb[0].mxu0
    %v4108 = vadd.f32 %v3430, %v4107
    %v4109 = vpop.f32.mrb[0].mxu0
    %4110 = vdwg.mxu0
    %v4111 = vadd.f32 %v3373, %v4108
    %v4112 = vxor.u32 %v4111, 2147483648
    %v4113 = vmul.f32 %v4112, 1.442695
    %v4114 = vpow.pop %v4113
    %v4115 = vadd.f32 %v4114, 1.0
    %v4116 = vrcp.pop %v4115
    %v4117 = vmul.f32 1.0, %v4116
    %4119 = vrot.lane.b32.xlu0 %v4108, 64
    %v4120 = vpop.permute.xlu0 %4119
    %v4122 = vmul.f32 %v4117, %v4120
    %4124 = vrot.lane.b32.xlu0 %v4122, 64
    %v4125 = vpop.permute.xlu0 %4124
    %v4127 = vadd.f32 %v3373, %v4125
    %v4128 = vtanh.pop %v4127
    %v4129 = vsub.f32 1.0, %v4117
    %4131 = vrot.lane.b32.xlu0 %v4128, 96
    %v4132 = vpop.permute.xlu0 %4131
    %v4134 = vmul.f32 %v4129, %v4132
    %v4135 = vmul.f32 %v4117, %v4035
    %v4136 = vadd.f32 %v4134, %v4135
    %4138 = vrot.lane.b32.xlu0 %v4136, 96
    %v4139 = vpop.permute.xlu0 %4138
    %v4140 = vsel %vm2704, %v4139, 0
    %4142 = vmatprep.subr.mxu0 0.0
    %4143 = vmatpush1.msra.mxu0 %v3421
    %4144 = vmatprep.subr.mxu0 0.0
    %4145 = vmatpush1.msra.mxu0 %v3422
    %4146 = vmatprep.subr.mxu0 0.0
    %4147 = vmatpush1.msra.mxu0 %v3423
    %4148 = vmatprep.subr.mxu0 0.0
    %4149 = vmatpush1.msra.mxu0 %v3424
    %4150 = vmatprep.subr.mxu0 0.0
    %4151 = vmatpush1.msra.mxu0 0.0
    %4152 = vmatprep.subr.mxu0 0.0
    %4153 = vmatpush1.msra.mxu0 0.0
    %4154 = vmatprep.subr.mxu0 0.0
    %4155 = vmatpush1.msra.mxu0 0.0
    %4156 = vmatprep.subr.mxu0 0.0
    %4157 = vmatpush1.msra.mxu0 0.0
    %4158 = vmatprep.subr.mxu0 0.0
    %4159 = vmatpush1.msra.mxu0 0.0
    %4160 = vmatprep.subr.mxu0 0.0
    %4161 = vmatpush1.msra.mxu0 0.0
    %4162 = vmatprep.subr.mxu0 0.0
    %4163 = vmatpush1.msra.mxu0 0.0
    %4164 = vmatprep.subr.mxu0 0.0
    %4165 = vmatpush1.msra.mxu0 0.0
    %4166 = vmatprep.subr.mxu0 0.0
    %4167 = vmatpush1.msra.mxu0 0.0
    %4168 = vmatprep.subr.mxu0 0.0
    %4169 = vmatpush1.msra.mxu0 0.0
    %4170 = vmatprep.subr.mxu0 0.0
    %4171 = vmatpush1.msra.mxu0 0.0
    %4172 = vmatprep.subr.mxu0 0.0
    %4173 = vmatpush1.msra.mxu0 0.0
    %4174 = vmatprep.subr.mxu0 0.0
    %4175 = vmatpush1.msra.mxu0 0.0
    %4176 = vmatprep.subr.mxu0 0.0
    %4177 = vmatpush1.msra.mxu0 0.0
    %4178 = vmatprep.subr.mxu0 0.0
    %4179 = vmatpush1.msra.mxu0 0.0
    %4180 = vmatprep.subr.mxu0 0.0
    %4181 = vmatpush1.msra.mxu0 0.0
    %4182 = vmatprep.subr.mxu0 0.0
    %4183 = vmatpush1.msra.mxu0 0.0
    %4184 = vmatprep.subr.mxu0 0.0
    %4185 = vmatpush1.msra.mxu0 0.0
    %4186 = vmatprep.subr.mxu0 0.0
    %4187 = vmatpush1.msra.mxu0 0.0
    %4188 = vmatprep.subr.mxu0 0.0
    %4189 = vmatpush1.msra.mxu0 0.0
    %4190 = vmatprep.subr.mxu0 0.0
    %4191 = vmatpush1.msra.mxu0 0.0
    %4192 = vmatprep.subr.mxu0 0.0
    %4193 = vmatpush1.msra.mxu0 0.0
    %4194 = vmatprep.subr.mxu0 0.0
    %4195 = vmatpush1.msra.mxu0 0.0
    %4196 = vmatprep.subr.mxu0 0.0
    %4197 = vmatpush1.msra.mxu0 0.0
    %4198 = vmatprep.subr.mxu0 0.0
    %4199 = vmatpush1.msra.mxu0 0.0
    %4200 = vmatprep.subr.mxu0 0.0
    %4201 = vmatpush1.msra.mxu0 0.0
    %4202 = vmatprep.subr.mxu0 0.0
    %4203 = vmatpush1.msra.mxu0 0.0
    %4204 = vmatprep.subr.mxu0 0.0
    %4205 = vmatpush1.msra.mxu0 0.0
    %4206 = vmatprep.mubr.f32.mxu0 0.0
    %4207 = vmatmul.mubr.f32.gmra.mrb[0].mxu0 %v4140
    %v4208 = vpop.f32.mrb[0].mxu0
    %v4209 = vadd.f32 %v3430, %v4208
    %v4210 = vpop.f32.mrb[0].mxu0
    %4211 = vdwg.mxu0
    %v4212 = vadd.f32 %v3378, %v4209
    %v4213 = vxor.u32 %v4212, 2147483648
    %v4214 = vmul.f32 %v4213, 1.442695
    %v4215 = vpow.pop %v4214
    %v4216 = vadd.f32 %v4215, 1.0
    %v4217 = vrcp.pop %v4216
    %v4218 = vmul.f32 1.0, %v4217
    %4220 = vrot.lane.b32.xlu0 %v4209, 64
    %v4221 = vpop.permute.xlu0 %4220
    %v4223 = vmul.f32 %v4218, %v4221
    %4225 = vrot.lane.b32.xlu0 %v4223, 64
    %v4226 = vpop.permute.xlu0 %4225
    %v4228 = vadd.f32 %v3378, %v4226
    %v4229 = vtanh.pop %v4228
    %v4230 = vsub.f32 1.0, %v4218
    %4232 = vrot.lane.b32.xlu0 %v4229, 96
    %v4233 = vpop.permute.xlu0 %4232
    %v4235 = vmul.f32 %v4230, %v4233
    %v4236 = vmul.f32 %v4218, %v4136
    %v4237 = vadd.f32 %v4235, %v4236
    %4239 = vrot.lane.b32.xlu0 %v4237, 96
    %v4240 = vpop.permute.xlu0 %4239
    %v4241 = vsel %vm2704, %v4240, 0
    %4243 = vmatprep.subr.mxu0 0.0
    %4244 = vmatpush1.msra.mxu0 %v3421
    %4245 = vmatprep.subr.mxu0 0.0
    %4246 = vmatpush1.msra.mxu0 %v3422
    %4247 = vmatprep.subr.mxu0 0.0
    %4248 = vmatpush1.msra.mxu0 %v3423
    %4249 = vmatprep.subr.mxu0 0.0
    %4250 = vmatpush1.msra.mxu0 %v3424
    %4251 = vmatprep.subr.mxu0 0.0
    %4252 = vmatpush1.msra.mxu0 0.0
    %4253 = vmatprep.subr.mxu0 0.0
    %4254 = vmatpush1.msra.mxu0 0.0
    %4255 = vmatprep.subr.mxu0 0.0
    %4256 = vmatpush1.msra.mxu0 0.0
    %4257 = vmatprep.subr.mxu0 0.0
    %4258 = vmatpush1.msra.mxu0 0.0
    %4259 = vmatprep.subr.mxu0 0.0
    %4260 = vmatpush1.msra.mxu0 0.0
    %4261 = vmatprep.subr.mxu0 0.0
    %4262 = vmatpush1.msra.mxu0 0.0
    %4263 = vmatprep.subr.mxu0 0.0
    %4264 = vmatpush1.msra.mxu0 0.0
    %4265 = vmatprep.subr.mxu0 0.0
    %4266 = vmatpush1.msra.mxu0 0.0
    %4267 = vmatprep.subr.mxu0 0.0
    %4268 = vmatpush1.msra.mxu0 0.0
    %4269 = vmatprep.subr.mxu0 0.0
    %4270 = vmatpush1.msra.mxu0 0.0
    %4271 = vmatprep.subr.mxu0 0.0
    %4272 = vmatpush1.msra.mxu0 0.0
    %4273 = vmatprep.subr.mxu0 0.0
    %4274 = vmatpush1.msra.mxu0 0.0
    %4275 = vmatprep.subr.mxu0 0.0
    %4276 = vmatpush1.msra.mxu0 0.0
    %4277 = vmatprep.subr.mxu0 0.0
    %4278 = vmatpush1.msra.mxu0 0.0
    %4279 = vmatprep.subr.mxu0 0.0
    %4280 = vmatpush1.msra.mxu0 0.0
    %4281 = vmatprep.subr.mxu0 0.0
    %4282 = vmatpush1.msra.mxu0 0.0
    %4283 = vmatprep.subr.mxu0 0.0
    %4284 = vmatpush1.msra.mxu0 0.0
    %4285 = vmatprep.subr.mxu0 0.0
    %4286 = vmatpush1.msra.mxu0 0.0
    %4287 = vmatprep.subr.mxu0 0.0
    %4288 = vmatpush1.msra.mxu0 0.0
    %4289 = vmatprep.subr.mxu0 0.0
    %4290 = vmatpush1.msra.mxu0 0.0
    %4291 = vmatprep.subr.mxu0 0.0
    %4292 = vmatpush1.msra.mxu0 0.0
    %4293 = vmatprep.subr.mxu0 0.0
    %4294 = vmatpush1.msra.mxu0 0.0
    %4295 = vmatprep.subr.mxu0 0.0
    %4296 = vmatpush1.msra.mxu0 0.0
    %4297 = vmatprep.subr.mxu0 0.0
    %4298 = vmatpush1.msra.mxu0 0.0
    %4299 = vmatprep.subr.mxu0 0.0
    %4300 = vmatpush1.msra.mxu0 0.0
    %4301 = vmatprep.subr.mxu0 0.0
    %4302 = vmatpush1.msra.mxu0 0.0
    %4303 = vmatprep.subr.mxu0 0.0
    %4304 = vmatpush1.msra.mxu0 0.0
    %4305 = vmatprep.subr.mxu0 0.0
    %4306 = vmatpush1.msra.mxu0 0.0
    %4307 = vmatprep.mubr.f32.mxu0 0.0
    %4308 = vmatmul.mubr.f32.gmra.mrb[0].mxu0 %v4241
    %v4309 = vpop.f32.mrb[0].mxu0
    %v4310 = vadd.f32 %v3430, %v4309
    %v4311 = vpop.f32.mrb[0].mxu0
    %4312 = vdwg.mxu0
    %v4313 = vadd.f32 %v3383, %v4310
    %v4314 = vxor.u32 %v4313, 2147483648
    %v4315 = vmul.f32 %v4314, 1.442695
    %v4316 = vpow.pop %v4315
    %v4317 = vadd.f32 %v4316, 1.0
    %v4318 = vrcp.pop %v4317
    %v4319 = vmul.f32 1.0, %v4318
    %4321 = vrot.lane.b32.xlu0 %v4310, 64
    %v4322 = vpop.permute.xlu0 %4321
    %v4324 = vmul.f32 %v4319, %v4322
    %4326 = vrot.lane.b32.xlu0 %v4324, 64
    %v4327 = vpop.permute.xlu0 %4326
    %v4329 = vadd.f32 %v3383, %v4327
    %v4330 = vtanh.pop %v4329
    %v4331 = vsub.f32 1.0, %v4319
    %4333 = vrot.lane.b32.xlu0 %v4330, 96
    %v4334 = vpop.permute.xlu0 %4333
    %v4336 = vmul.f32 %v4331, %v4334
    %v4337 = vmul.f32 %v4319, %v4237
    %v4338 = vadd.f32 %v4336, %v4337
    %4340 = vrot.lane.b32.xlu0 %v4338, 96
    %v4341 = vpop.permute.xlu0 %4340
    %v4342 = vsel %vm2704, %v4341, 0
    %4344 = vmatprep.subr.mxu0 0.0
    %4345 = vmatpush1.msra.mxu0 %v3421
    %4346 = vmatprep.subr.mxu0 0.0
    %4347 = vmatpush1.msra.mxu0 %v3422
    %4348 = vmatprep.subr.mxu0 0.0
    %4349 = vmatpush1.msra.mxu0 %v3423
    %4350 = vmatprep.subr.mxu0 0.0
    %4351 = vmatpush1.msra.mxu0 %v3424
    %4352 = vmatprep.subr.mxu0 0.0
    %4353 = vmatpush1.msra.mxu0 0.0
    %4354 = vmatprep.subr.mxu0 0.0
    %4355 = vmatpush1.msra.mxu0 0.0
    %4356 = vmatprep.subr.mxu0 0.0
    %4357 = vmatpush1.msra.mxu0 0.0
    %4358 = vmatprep.subr.mxu0 0.0
    %4359 = vmatpush1.msra.mxu0 0.0
    %4360 = vmatprep.subr.mxu0 0.0
    %4361 = vmatpush1.msra.mxu0 0.0
    %4362 = vmatprep.subr.mxu0 0.0
    %4363 = vmatpush1.msra.mxu0 0.0
    %4364 = vmatprep.subr.mxu0 0.0
    %4365 = vmatpush1.msra.mxu0 0.0
    %4366 = vmatprep.subr.mxu0 0.0
    %4367 = vmatpush1.msra.mxu0 0.0
    %4368 = vmatprep.subr.mxu0 0.0
    %4369 = vmatpush1.msra.mxu0 0.0
    %4370 = vmatprep.subr.mxu0 0.0
    %4371 = vmatpush1.msra.mxu0 0.0
    %4372 = vmatprep.subr.mxu0 0.0
    %4373 = vmatpush1.msra.mxu0 0.0
    %4374 = vmatprep.subr.mxu0 0.0
    %4375 = vmatpush1.msra.mxu0 0.0
    %4376 = vmatprep.subr.mxu0 0.0
    %4377 = vmatpush1.msra.mxu0 0.0
    %4378 = vmatprep.subr.mxu0 0.0
    %4379 = vmatpush1.msra.mxu0 0.0
    %4380 = vmatprep.subr.mxu0 0.0
    %4381 = vmatpush1.msra.mxu0 0.0
    %4382 = vmatprep.subr.mxu0 0.0
    %4383 = vmatpush1.msra.mxu0 0.0
    %4384 = vmatprep.subr.mxu0 0.0
    %4385 = vmatpush1.msra.mxu0 0.0
    %4386 = vmatprep.subr.mxu0 0.0
    %4387 = vmatpush1.msra.mxu0 0.0
    %4388 = vmatprep.subr.mxu0 0.0
    %4389 = vmatpush1.msra.mxu0 0.0
    %4390 = vmatprep.subr.mxu0 0.0
    %4391 = vmatpush1.msra.mxu0 0.0
    %4392 = vmatprep.subr.mxu0 0.0
    %4393 = vmatpush1.msra.mxu0 0.0
    %4394 = vmatprep.subr.mxu0 0.0
    %4395 = vmatpush1.msra.mxu0 0.0
    %4396 = vmatprep.subr.mxu0 0.0
    %4397 = vmatpush1.msra.mxu0 0.0
    %4398 = vmatprep.subr.mxu0 0.0
    %4399 = vmatpush1.msra.mxu0 0.0
    %4400 = vmatprep.subr.mxu0 0.0
    %4401 = vmatpush1.msra.mxu0 0.0
    %4402 = vmatprep.subr.mxu0 0.0
    %4403 = vmatpush1.msra.mxu0 0.0
    %4404 = vmatprep.subr.mxu0 0.0
    %4405 = vmatpush1.msra.mxu0 0.0
    %4406 = vmatprep.subr.mxu0 0.0
    %4407 = vmatpush1.msra.mxu0 0.0
    %4408 = vmatprep.mubr.f32.mxu0 0.0
    %4409 = vmatmul.mubr.f32.gmra.mrb[0].mxu0 %v4342
    %v4410 = vpop.f32.mrb[0].mxu0
    %v4411 = vadd.f32 %v3430, %v4410
    %v4412 = vpop.f32.mrb[0].mxu0
    %4413 = vdwg.mxu0
    %v4414 = vadd.f32 %v3388, %v4411
    %v4415 = vxor.u32 %v4414, 2147483648
    %v4416 = vmul.f32 %v4415, 1.442695
    %v4417 = vpow.pop %v4416
    %v4418 = vadd.f32 %v4417, 1.0
    %v4419 = vrcp.pop %v4418
    %v4420 = vmul.f32 1.0, %v4419
    %4422 = vrot.lane.b32.xlu0 %v4411, 64
    %v4423 = vpop.permute.xlu0 %4422
    %v4425 = vmul.f32 %v4420, %v4423
    %4427 = vrot.lane.b32.xlu0 %v4425, 64
    %v4428 = vpop.permute.xlu0 %4427
    %v4430 = vadd.f32 %v3388, %v4428
    %v4431 = vtanh.pop %v4430
    %v4432 = vsub.f32 1.0, %v4420
    %4434 = vrot.lane.b32.xlu0 %v4431, 96
    %v4435 = vpop.permute.xlu0 %4434
    %v4437 = vmul.f32 %v4432, %v4435
    %v4438 = vmul.f32 %v4420, %v4338
    %v4439 = vadd.f32 %v4437, %v4438
    %4441 = vrot.lane.b32.xlu0 %v4439, 96
    %v4442 = vpop.permute.xlu0 %4441
    %v4443 = vsel %vm2704, %v4442, 0
    %4445 = vmatprep.subr.mxu0 0.0
    %4446 = vmatpush1.msra.mxu0 %v3421
    %4447 = vmatprep.subr.mxu0 0.0
    %4448 = vmatpush1.msra.mxu0 %v3422
    %4449 = vmatprep.subr.mxu0 0.0
    %4450 = vmatpush1.msra.mxu0 %v3423
    %4451 = vmatprep.subr.mxu0 0.0
    %4452 = vmatpush1.msra.mxu0 %v3424
    %4453 = vmatprep.subr.mxu0 0.0
    %4454 = vmatpush1.msra.mxu0 0.0
    %4455 = vmatprep.subr.mxu0 0.0
    %4456 = vmatpush1.msra.mxu0 0.0
    %4457 = vmatprep.subr.mxu0 0.0
    %4458 = vmatpush1.msra.mxu0 0.0
    %4459 = vmatprep.subr.mxu0 0.0
    %4460 = vmatpush1.msra.mxu0 0.0
    %4461 = vmatprep.subr.mxu0 0.0
    %4462 = vmatpush1.msra.mxu0 0.0
    %4463 = vmatprep.subr.mxu0 0.0
    %4464 = vmatpush1.msra.mxu0 0.0
    %4465 = vmatprep.subr.mxu0 0.0
    %4466 = vmatpush1.msra.mxu0 0.0
    %4467 = vmatprep.subr.mxu0 0.0
    %4468 = vmatpush1.msra.mxu0 0.0
    %4469 = vmatprep.subr.mxu0 0.0
    %4470 = vmatpush1.msra.mxu0 0.0
    %4471 = vmatprep.subr.mxu0 0.0
    %4472 = vmatpush1.msra.mxu0 0.0
    %4473 = vmatprep.subr.mxu0 0.0
    %4474 = vmatpush1.msra.mxu0 0.0
    %4475 = vmatprep.subr.mxu0 0.0
    %4476 = vmatpush1.msra.mxu0 0.0
    %4477 = vmatprep.subr.mxu0 0.0
    %4478 = vmatpush1.msra.mxu0 0.0
    %4479 = vmatprep.subr.mxu0 0.0
    %4480 = vmatpush1.msra.mxu0 0.0
    %4481 = vmatprep.subr.mxu0 0.0
    %4482 = vmatpush1.msra.mxu0 0.0
    %4483 = vmatprep.subr.mxu0 0.0
    %4484 = vmatpush1.msra.mxu0 0.0
    %4485 = vmatprep.subr.mxu0 0.0
    %4486 = vmatpush1.msra.mxu0 0.0
    %4487 = vmatprep.subr.mxu0 0.0
    %4488 = vmatpush1.msra.mxu0 0.0
    %4489 = vmatprep.subr.mxu0 0.0
    %4490 = vmatpush1.msra.mxu0 0.0
    %4491 = vmatprep.subr.mxu0 0.0
    %4492 = vmatpush1.msra.mxu0 0.0
    %4493 = vmatprep.subr.mxu0 0.0
    %4494 = vmatpush1.msra.mxu0 0.0
    %4495 = vmatprep.subr.mxu0 0.0
    %4496 = vmatpush1.msra.mxu0 0.0
    %4497 = vmatprep.subr.mxu0 0.0
    %4498 = vmatpush1.msra.mxu0 0.0
    %4499 = vmatprep.subr.mxu0 0.0
    %4500 = vmatpush1.msra.mxu0 0.0
    %4501 = vmatprep.subr.mxu0 0.0
    %4502 = vmatpush1.msra.mxu0 0.0
    %4503 = vmatprep.subr.mxu0 0.0
    %4504 = vmatpush1.msra.mxu0 0.0
    %4505 = vmatprep.subr.mxu0 0.0
    %4506 = vmatpush1.msra.mxu0 0.0
    %4507 = vmatprep.subr.mxu0 0.0
    %4508 = vmatpush1.msra.mxu0 0.0
    %4509 = vmatprep.mubr.f32.mxu0 0.0
    %4510 = vmatmul.mubr.f32.gmra.mrb[0].mxu0 %v4443
    %v4511 = vpop.f32.mrb[0].mxu0
    %v4512 = vadd.f32 %v3430, %v4511
    %v4513 = vpop.f32.mrb[0].mxu0
    %4514 = vdwg.mxu0
    %v4515 = vadd.f32 %v3393, %v4512
    %v4516 = vxor.u32 %v4515, 2147483648
    %v4517 = vmul.f32 %v4516, 1.442695
    %v4518 = vpow.pop %v4517
    %v4519 = vadd.f32 %v4518, 1.0
    %v4520 = vrcp.pop %v4519
    %v4521 = vmul.f32 1.0, %v4520
    %4523 = vrot.lane.b32.xlu0 %v4512, 64
    %v4524 = vpop.permute.xlu0 %4523
    %v4526 = vmul.f32 %v4521, %v4524
    %4528 = vrot.lane.b32.xlu0 %v4526, 64
    %v4529 = vpop.permute.xlu0 %4528
    %v4531 = vadd.f32 %v3393, %v4529
    %v4532 = vtanh.pop %v4531
    %v4533 = vsub.f32 1.0, %v4521
    %4535 = vrot.lane.b32.xlu0 %v4532, 96
    %v4536 = vpop.permute.xlu0 %4535
    %v4538 = vmul.f32 %v4533, %v4536
    %v4539 = vmul.f32 %v4521, %v4439
    %v4540 = vadd.f32 %v4538, %v4539
    %4542 = vrot.lane.b32.xlu0 %v4540, 96
    %v4543 = vpop.permute.xlu0 %4542
    %v4544 = vsel %vm2704, %v4543, 0
    %4546 = vmatprep.subr.mxu0 0.0
    %4547 = vmatpush1.msra.mxu0 %v3421
    %4548 = vmatprep.subr.mxu0 0.0
    %4549 = vmatpush1.msra.mxu0 %v3422
    %4550 = vmatprep.subr.mxu0 0.0
    %4551 = vmatpush1.msra.mxu0 %v3423
    %4552 = vmatprep.subr.mxu0 0.0
    %4553 = vmatpush1.msra.mxu0 %v3424
    %4554 = vmatprep.subr.mxu0 0.0
    %4555 = vmatpush1.msra.mxu0 0.0
    %4556 = vmatprep.subr.mxu0 0.0
    %4557 = vmatpush1.msra.mxu0 0.0
    %4558 = vmatprep.subr.mxu0 0.0
    %4559 = vmatpush1.msra.mxu0 0.0
    %4560 = vmatprep.subr.mxu0 0.0
    %4561 = vmatpush1.msra.mxu0 0.0
    %4562 = vmatprep.subr.mxu0 0.0
    %4563 = vmatpush1.msra.mxu0 0.0
    %4564 = vmatprep.subr.mxu0 0.0
    %4565 = vmatpush1.msra.mxu0 0.0
    %4566 = vmatprep.subr.mxu0 0.0
    %4567 = vmatpush1.msra.mxu0 0.0
    %4568 = vmatprep.subr.mxu0 0.0
    %4569 = vmatpush1.msra.mxu0 0.0
    %4570 = vmatprep.subr.mxu0 0.0
    %4571 = vmatpush1.msra.mxu0 0.0
    %4572 = vmatprep.subr.mxu0 0.0
    %4573 = vmatpush1.msra.mxu0 0.0
    %4574 = vmatprep.subr.mxu0 0.0
    %4575 = vmatpush1.msra.mxu0 0.0
    %4576 = vmatprep.subr.mxu0 0.0
    %4577 = vmatpush1.msra.mxu0 0.0
    %4578 = vmatprep.subr.mxu0 0.0
    %4579 = vmatpush1.msra.mxu0 0.0
    %4580 = vmatprep.subr.mxu0 0.0
    %4581 = vmatpush1.msra.mxu0 0.0
    %4582 = vmatprep.subr.mxu0 0.0
    %4583 = vmatpush1.msra.mxu0 0.0
    %4584 = vmatprep.subr.mxu0 0.0
    %4585 = vmatpush1.msra.mxu0 0.0
    %4586 = vmatprep.subr.mxu0 0.0
    %4587 = vmatpush1.msra.mxu0 0.0
    %4588 = vmatprep.subr.mxu0 0.0
    %4589 = vmatpush1.msra.mxu0 0.0
    %4590 = vmatprep.subr.mxu0 0.0
    %4591 = vmatpush1.msra.mxu0 0.0
    %4592 = vmatprep.subr.mxu0 0.0
    %4593 = vmatpush1.msra.mxu0 0.0
    %4594 = vmatprep.subr.mxu0 0.0
    %4595 = vmatpush1.msra.mxu0 0.0
    %4596 = vmatprep.subr.mxu0 0.0
    %4597 = vmatpush1.msra.mxu0 0.0
    %4598 = vmatprep.subr.mxu0 0.0
    %4599 = vmatpush1.msra.mxu0 0.0
    %4600 = vmatprep.subr.mxu0 0.0
    %4601 = vmatpush1.msra.mxu0 0.0
    %4602 = vmatprep.subr.mxu0 0.0
    %4603 = vmatpush1.msra.mxu0 0.0
    %4604 = vmatprep.subr.mxu0 0.0
    %4605 = vmatpush1.msra.mxu0 0.0
    %4606 = vmatprep.subr.mxu0 0.0
    %4607 = vmatpush1.msra.mxu0 0.0
    %4608 = vmatprep.subr.mxu0 0.0
    %4609 = vmatpush1.msra.mxu0 0.0
    %4610 = vmatprep.mubr.f32.mxu0 0.0
    %4611 = vmatmul.mubr.f32.gmra.mrb[0].mxu0 %v4544
    %v4612 = vpop.f32.mrb[0].mxu0
    %v4613 = vadd.f32 %v3430, %v4612
    %v4614 = vpop.f32.mrb[0].mxu0
    %4615 = vdwg.mxu0
    %v4616 = vadd.f32 %v3398, %v4613
    %v4617 = vxor.u32 %v4616, 2147483648
    %v4618 = vmul.f32 %v4617, 1.442695
    %v4619 = vpow.pop %v4618
    %v4620 = vadd.f32 %v4619, 1.0
    %v4621 = vrcp.pop %v4620
    %v4622 = vmul.f32 1.0, %v4621
    %4624 = vrot.lane.b32.xlu0 %v4613, 64
    %v4625 = vpop.permute.xlu0 %4624
    %v4627 = vmul.f32 %v4622, %v4625
    %4629 = vrot.lane.b32.xlu0 %v4627, 64
    %v4630 = vpop.permute.xlu0 %4629
    %v4632 = vadd.f32 %v3398, %v4630
    %v4633 = vtanh.pop %v4632
    %v4634 = vsub.f32 1.0, %v4622
    %4636 = vrot.lane.b32.xlu0 %v4633, 96
    %v4637 = vpop.permute.xlu0 %4636
    %v4639 = vmul.f32 %v4634, %v4637
    %v4640 = vmul.f32 %v4622, %v4540
    %v4641 = vadd.f32 %v4639, %v4640
    %4643 = vrot.lane.b32.xlu0 %v4641, 96
    %v4644 = vpop.permute.xlu0 %4643
    %v4645 = vsel %vm2704, %v4644, 0
    %4647 = vmatprep.subr.mxu0 0.0
    %4648 = vmatpush1.msra.mxu0 %v3421
    %4649 = vmatprep.subr.mxu0 0.0
    %4650 = vmatpush1.msra.mxu0 %v3422
    %4651 = vmatprep.subr.mxu0 0.0
    %4652 = vmatpush1.msra.mxu0 %v3423
    %4653 = vmatprep.subr.mxu0 0.0
    %4654 = vmatpush1.msra.mxu0 %v3424
    %4655 = vmatprep.subr.mxu0 0.0
    %4656 = vmatpush1.msra.mxu0 0.0
    %4657 = vmatprep.subr.mxu0 0.0
    %4658 = vmatpush1.msra.mxu0 0.0
    %4659 = vmatprep.subr.mxu0 0.0
    %4660 = vmatpush1.msra.mxu0 0.0
    %4661 = vmatprep.subr.mxu0 0.0
    %4662 = vmatpush1.msra.mxu0 0.0
    %4663 = vmatprep.subr.mxu0 0.0
    %4664 = vmatpush1.msra.mxu0 0.0
    %4665 = vmatprep.subr.mxu0 0.0
    %4666 = vmatpush1.msra.mxu0 0.0
    %4667 = vmatprep.subr.mxu0 0.0
    %4668 = vmatpush1.msra.mxu0 0.0
    %4669 = vmatprep.subr.mxu0 0.0
    %4670 = vmatpush1.msra.mxu0 0.0
    %4671 = vmatprep.subr.mxu0 0.0
    %4672 = vmatpush1.msra.mxu0 0.0
    %4673 = vmatprep.subr.mxu0 0.0
    %4674 = vmatpush1.msra.mxu0 0.0
    %4675 = vmatprep.subr.mxu0 0.0
    %4676 = vmatpush1.msra.mxu0 0.0
    %4677 = vmatprep.subr.mxu0 0.0
    %4678 = vmatpush1.msra.mxu0 0.0
    %4679 = vmatprep.subr.mxu0 0.0
    %4680 = vmatpush1.msra.mxu0 0.0
    %4681 = vmatprep.subr.mxu0 0.0
    %4682 = vmatpush1.msra.mxu0 0.0
    %4683 = vmatprep.subr.mxu0 0.0
    %4684 = vmatpush1.msra.mxu0 0.0
    %4685 = vmatprep.subr.mxu0 0.0
    %4686 = vmatpush1.msra.mxu0 0.0
    %4687 = vmatprep.subr.mxu0 0.0
    %4688 = vmatpush1.msra.mxu0 0.0
    %4689 = vmatprep.subr.mxu0 0.0
    %4690 = vmatpush1.msra.mxu0 0.0
    %4691 = vmatprep.subr.mxu0 0.0
    %4692 = vmatpush1.msra.mxu0 0.0
    %4693 = vmatprep.subr.mxu0 0.0
    %4694 = vmatpush1.msra.mxu0 0.0
    %4695 = vmatprep.subr.mxu0 0.0
    %4696 = vmatpush1.msra.mxu0 0.0
    %4697 = vmatprep.subr.mxu0 0.0
    %4698 = vmatpush1.msra.mxu0 0.0
    %4699 = vmatprep.subr.mxu0 0.0
    %4700 = vmatpush1.msra.mxu0 0.0
    %4701 = vmatprep.subr.mxu0 0.0
    %4702 = vmatpush1.msra.mxu0 0.0
    %4703 = vmatprep.subr.mxu0 0.0
    %4704 = vmatpush1.msra.mxu0 0.0
    %4705 = vmatprep.subr.mxu0 0.0
    %4706 = vmatpush1.msra.mxu0 0.0
    %4707 = vmatprep.subr.mxu0 0.0
    %4708 = vmatpush1.msra.mxu0 0.0
    %4709 = vmatprep.subr.mxu0 0.0
    %4710 = vmatpush1.msra.mxu0 0.0
    %4711 = vmatprep.mubr.f32.mxu0 0.0
    %4712 = vmatmul.mubr.f32.gmra.mrb[0].mxu0 %v4645
    %v4713 = vpop.f32.mrb[0].mxu0
    %v4714 = vadd.f32 %v3430, %v4713
    %v4715 = vpop.f32.mrb[0].mxu0
    %4716 = vdwg.mxu0
    %v4717 = vadd.f32 %v3403, %v4714
    %v4718 = vxor.u32 %v4717, 2147483648
    %v4719 = vmul.f32 %v4718, 1.442695
    %v4720 = vpow.pop %v4719
    %v4721 = vadd.f32 %v4720, 1.0
    %v4722 = vrcp.pop %v4721
    %v4723 = vmul.f32 1.0, %v4722
    %4725 = vrot.lane.b32.xlu0 %v4714, 64
    %v4726 = vpop.permute.xlu0 %4725
    %v4728 = vmul.f32 %v4723, %v4726
    %4730 = vrot.lane.b32.xlu0 %v4728, 64
    %v4731 = vpop.permute.xlu0 %4730
    %v4733 = vadd.f32 %v3403, %v4731
    %v4734 = vtanh.pop %v4733
    %v4735 = vsub.f32 1.0, %v4723
    %4737 = vrot.lane.b32.xlu0 %v4734, 96
    %v4738 = vpop.permute.xlu0 %4737
    %v4740 = vmul.f32 %v4735, %v4738
    %v4741 = vmul.f32 %v4723, %v4641
    %v4742 = vadd.f32 %v4740, %v4741
    %4744 = vrot.lane.b32.xlu0 %v4742, 96
    %v4745 = vpop.permute.xlu0 %4744
    %v4746 = vsel %vm2704, %v4745, 0
    %4748 = vmatprep.subr.mxu0 0.0
    %4749 = vmatpush1.msra.mxu0 %v3421
    %4750 = vmatprep.subr.mxu0 0.0
    %4751 = vmatpush1.msra.mxu0 %v3422
    %4752 = vmatprep.subr.mxu0 0.0
    %4753 = vmatpush1.msra.mxu0 %v3423
    %4754 = vmatprep.subr.mxu0 0.0
    %4755 = vmatpush1.msra.mxu0 %v3424
    %4756 = vmatprep.subr.mxu0 0.0
    %4757 = vmatpush1.msra.mxu0 0.0
    %4758 = vmatprep.subr.mxu0 0.0
    %4759 = vmatpush1.msra.mxu0 0.0
    %4760 = vmatprep.subr.mxu0 0.0
    %4761 = vmatpush1.msra.mxu0 0.0
    %4762 = vmatprep.subr.mxu0 0.0
    %4763 = vmatpush1.msra.mxu0 0.0
    %4764 = vmatprep.subr.mxu0 0.0
    %4765 = vmatpush1.msra.mxu0 0.0
    %4766 = vmatprep.subr.mxu0 0.0
    %4767 = vmatpush1.msra.mxu0 0.0
    %4768 = vmatprep.subr.mxu0 0.0
    %4769 = vmatpush1.msra.mxu0 0.0
    %4770 = vmatprep.subr.mxu0 0.0
    %4771 = vmatpush1.msra.mxu0 0.0
    %4772 = vmatprep.subr.mxu0 0.0
    %4773 = vmatpush1.msra.mxu0 0.0
    %4774 = vmatprep.subr.mxu0 0.0
    %4775 = vmatpush1.msra.mxu0 0.0
    %4776 = vmatprep.subr.mxu0 0.0
    %4777 = vmatpush1.msra.mxu0 0.0
    %4778 = vmatprep.subr.mxu0 0.0
    %4779 = vmatpush1.msra.mxu0 0.0
    %4780 = vmatprep.subr.mxu0 0.0
    %4781 = vmatpush1.msra.mxu0 0.0
    %4782 = vmatprep.subr.mxu0 0.0
    %4783 = vmatpush1.msra.mxu0 0.0
    %4784 = vmatprep.subr.mxu0 0.0
    %4785 = vmatpush1.msra.mxu0 0.0
    %4786 = vmatprep.subr.mxu0 0.0
    %4787 = vmatpush1.msra.mxu0 0.0
    %4788 = vmatprep.subr.mxu0 0.0
    %4789 = vmatpush1.msra.mxu0 0.0
    %4790 = vmatprep.subr.mxu0 0.0
    %4791 = vmatpush1.msra.mxu0 0.0
    %4792 = vmatprep.subr.mxu0 0.0
    %4793 = vmatpush1.msra.mxu0 0.0
    %4794 = vmatprep.subr.mxu0 0.0
    %4795 = vmatpush1.msra.mxu0 0.0
    %4796 = vmatprep.subr.mxu0 0.0
    %4797 = vmatpush1.msra.mxu0 0.0
    %4798 = vmatprep.subr.mxu0 0.0
    %4799 = vmatpush1.msra.mxu0 0.0
    %4800 = vmatprep.subr.mxu0 0.0
    %4801 = vmatpush1.msra.mxu0 0.0
    %4802 = vmatprep.subr.mxu0 0.0
    %4803 = vmatpush1.msra.mxu0 0.0
    %4804 = vmatprep.subr.mxu0 0.0
    %4805 = vmatpush1.msra.mxu0 0.0
    %4806 = vmatprep.subr.mxu0 0.0
    %4807 = vmatpush1.msra.mxu0 0.0
    %4808 = vmatprep.subr.mxu0 0.0
    %4809 = vmatpush1.msra.mxu0 0.0
    %4810 = vmatprep.subr.mxu0 0.0
    %4811 = vmatpush1.msra.mxu0 0.0
    %4812 = vmatprep.mubr.f32.mxu0 0.0
    %4813 = vmatmul.mubr.f32.gmra.mrb[0].mxu0 %v4746
    %v4814 = vpop.f32.mrb[0].mxu0
    %v4815 = vadd.f32 %v3430, %v4814
    %v4816 = vpop.f32.mrb[0].mxu0
    %4817 = vdwg.mxu0
    %v4818 = vadd.f32 %v3408, %v4815
    %v4819 = vxor.u32 %v4818, 2147483648
    %v4820 = vmul.f32 %v4819, 1.442695
    %v4821 = vpow.pop %v4820
    %v4822 = vadd.f32 %v4821, 1.0
    %v4823 = vrcp.pop %v4822
    %v4824 = vmul.f32 1.0, %v4823
    %4826 = vrot.lane.b32.xlu0 %v4815, 64
    %v4827 = vpop.permute.xlu0 %4826
    %v4829 = vmul.f32 %v4824, %v4827
    %4831 = vrot.lane.b32.xlu0 %v4829, 64
    %v4832 = vpop.permute.xlu0 %4831
    %v4834 = vadd.f32 %v3408, %v4832
    %v4835 = vtanh.pop %v4834
    %v4836 = vsub.f32 1.0, %v4824
    %4838 = vrot.lane.b32.xlu0 %v4835, 96
    %v4839 = vpop.permute.xlu0 %4838
    %v4841 = vmul.f32 %v4836, %v4839
    %v4842 = vmul.f32 %v4824, %v4742
    %v4843 = vadd.f32 %v4841, %v4842
    %4845 = vrot.lane.b32.xlu0 %v4843, 96
    %v4846 = vpop.permute.xlu0 %4845
    %v4847 = vsel %vm2704, %v4846, 0
    %4849 = vmatprep.subr.mxu0 0.0
    %4850 = vmatpush1.msra.mxu0 %v3421
    %4851 = vmatprep.subr.mxu0 0.0
    %4852 = vmatpush1.msra.mxu0 %v3422
    %4853 = vmatprep.subr.mxu0 0.0
    %4854 = vmatpush1.msra.mxu0 %v3423
    %4855 = vmatprep.subr.mxu0 0.0
    %4856 = vmatpush1.msra.mxu0 %v3424
    %4857 = vmatprep.subr.mxu0 0.0
    %4858 = vmatpush1.msra.mxu0 0.0
    %4859 = vmatprep.subr.mxu0 0.0
    %4860 = vmatpush1.msra.mxu0 0.0
    %4861 = vmatprep.subr.mxu0 0.0
    %4862 = vmatpush1.msra.mxu0 0.0
    %4863 = vmatprep.subr.mxu0 0.0
    %4864 = vmatpush1.msra.mxu0 0.0
    %4865 = vmatprep.subr.mxu0 0.0
    %4866 = vmatpush1.msra.mxu0 0.0
    %4867 = vmatprep.subr.mxu0 0.0
    %4868 = vmatpush1.msra.mxu0 0.0
    %4869 = vmatprep.subr.mxu0 0.0
    %4870 = vmatpush1.msra.mxu0 0.0
    %4871 = vmatprep.subr.mxu0 0.0
    %4872 = vmatpush1.msra.mxu0 0.0
    %4873 = vmatprep.subr.mxu0 0.0
    %4874 = vmatpush1.msra.mxu0 0.0
    %4875 = vmatprep.subr.mxu0 0.0
    %4876 = vmatpush1.msra.mxu0 0.0
    %4877 = vmatprep.subr.mxu0 0.0
    %4878 = vmatpush1.msra.mxu0 0.0
    %4879 = vmatprep.subr.mxu0 0.0
    %4880 = vmatpush1.msra.mxu0 0.0
    %4881 = vmatprep.subr.mxu0 0.0
    %4882 = vmatpush1.msra.mxu0 0.0
    %4883 = vmatprep.subr.mxu0 0.0
    %4884 = vmatpush1.msra.mxu0 0.0
    %4885 = vmatprep.subr.mxu0 0.0
    %4886 = vmatpush1.msra.mxu0 0.0
    %4887 = vmatprep.subr.mxu0 0.0
    %4888 = vmatpush1.msra.mxu0 0.0
    %4889 = vmatprep.subr.mxu0 0.0
    %4890 = vmatpush1.msra.mxu0 0.0
    %4891 = vmatprep.subr.mxu0 0.0
    %4892 = vmatpush1.msra.mxu0 0.0
    %4893 = vmatprep.subr.mxu0 0.0
    %4894 = vmatpush1.msra.mxu0 0.0
    %4895 = vmatprep.subr.mxu0 0.0
    %4896 = vmatpush1.msra.mxu0 0.0
    %4897 = vmatprep.subr.mxu0 0.0
    %4898 = vmatpush1.msra.mxu0 0.0
    %4899 = vmatprep.subr.mxu0 0.0
    %4900 = vmatpush1.msra.mxu0 0.0
    %4901 = vmatprep.subr.mxu0 0.0
    %4902 = vmatpush1.msra.mxu0 0.0
    %4903 = vmatprep.subr.mxu0 0.0
    %4904 = vmatpush1.msra.mxu0 0.0
    %4905 = vmatprep.subr.mxu0 0.0
    %4906 = vmatpush1.msra.mxu0 0.0
    %4907 = vmatprep.subr.mxu0 0.0
    %4908 = vmatpush1.msra.mxu0 0.0
    %4909 = vmatprep.subr.mxu0 0.0
    %4910 = vmatpush1.msra.mxu0 0.0
    %4911 = vmatprep.subr.mxu0 0.0
    %4912 = vmatpush1.msra.mxu0 0.0
    %4913 = vmatprep.mubr.f32.mxu0 0.0
    %4914 = vmatmul.mubr.f32.gmra.mrb[0].mxu0 %v4847
    %v4915 = vpop.f32.mrb[0].mxu0
    %v4916 = vadd.f32 %v3430, %v4915
    %v4917 = vpop.f32.mrb[0].mxu0
    %4918 = vdwg.mxu0
    %v4919 = vadd.f32 %v3413, %v4916
    %v4920 = vxor.u32 %v4919, 2147483648
    %v4921 = vmul.f32 %v4920, 1.442695
    %v4922 = vpow.pop %v4921
    %v4923 = vadd.f32 %v4922, 1.0
    %v4924 = vrcp.pop %v4923
    %v4925 = vmul.f32 1.0, %v4924
    %4927 = vrot.lane.b32.xlu0 %v4916, 64
    %v4928 = vpop.permute.xlu0 %4927
    %v4930 = vmul.f32 %v4925, %v4928
    %4932 = vrot.lane.b32.xlu0 %v4930, 64
    %v4933 = vpop.permute.xlu0 %4932
    %v4935 = vadd.f32 %v3413, %v4933
    %v4936 = vtanh.pop %v4935
    %v4937 = vsub.f32 1.0, %v4925
    %4939 = vrot.lane.b32.xlu0 %v4936, 96
    %v4940 = vpop.permute.xlu0 %4939
    %v4942 = vmul.f32 %v4937, %v4940
    %v4943 = vmul.f32 %v4925, %v4843
    %v4944 = vadd.f32 %v4942, %v4943
    %4946 = vrot.lane.b32.xlu0 %v4944, 96
    %v4947 = vpop.permute.xlu0 %4946
    %v4948 = vsel %vm2704, %v4947, 0
    %4950 = vmatprep.subr.mxu0 0.0
    %4951 = vmatpush1.msra.mxu0 %v3421
    %4952 = vmatprep.subr.mxu0 0.0
    %4953 = vmatpush1.msra.mxu0 %v3422
    %4954 = vmatprep.subr.mxu0 0.0
    %4955 = vmatpush1.msra.mxu0 %v3423
    %4956 = vmatprep.subr.mxu0 0.0
    %4957 = vmatpush1.msra.mxu0 %v3424
    %4958 = vmatprep.subr.mxu0 0.0
    %4959 = vmatpush1.msra.mxu0 0.0
    %4960 = vmatprep.subr.mxu0 0.0
    %4961 = vmatpush1.msra.mxu0 0.0
    %4962 = vmatprep.subr.mxu0 0.0
    %4963 = vmatpush1.msra.mxu0 0.0
    %4964 = vmatprep.subr.mxu0 0.0
    %4965 = vmatpush1.msra.mxu0 0.0
    %4966 = vmatprep.subr.mxu0 0.0
    %4967 = vmatpush1.msra.mxu0 0.0
    %4968 = vmatprep.subr.mxu0 0.0
    %4969 = vmatpush1.msra.mxu0 0.0
    %4970 = vmatprep.subr.mxu0 0.0
    %4971 = vmatpush1.msra.mxu0 0.0
    %4972 = vmatprep.subr.mxu0 0.0
    %4973 = vmatpush1.msra.mxu0 0.0
    %4974 = vmatprep.subr.mxu0 0.0
    %4975 = vmatpush1.msra.mxu0 0.0
    %4976 = vmatprep.subr.mxu0 0.0
    %4977 = vmatpush1.msra.mxu0 0.0
    %4978 = vmatprep.subr.mxu0 0.0
    %4979 = vmatpush1.msra.mxu0 0.0
    %4980 = vmatprep.subr.mxu0 0.0
    %4981 = vmatpush1.msra.mxu0 0.0
    %4982 = vmatprep.subr.mxu0 0.0
    %4983 = vmatpush1.msra.mxu0 0.0
    %4984 = vmatprep.subr.mxu0 0.0
    %4985 = vmatpush1.msra.mxu0 0.0
    %4986 = vmatprep.subr.mxu0 0.0
    %4987 = vmatpush1.msra.mxu0 0.0
    %4988 = vmatprep.subr.mxu0 0.0
    %4989 = vmatpush1.msra.mxu0 0.0
    %4990 = vmatprep.subr.mxu0 0.0
    %4991 = vmatpush1.msra.mxu0 0.0
    %4992 = vmatprep.subr.mxu0 0.0
    %4993 = vmatpush1.msra.mxu0 0.0
    %4994 = vmatprep.subr.mxu0 0.0
    %4995 = vmatpush1.msra.mxu0 0.0
    %4996 = vmatprep.subr.mxu0 0.0
    %4997 = vmatpush1.msra.mxu0 0.0
    %4998 = vmatprep.subr.mxu0 0.0
    %4999 = vmatpush1.msra.mxu0 0.0
    %5000 = vmatprep.subr.mxu0 0.0
    %5001 = vmatpush1.msra.mxu0 0.0
    %5002 = vmatprep.subr.mxu0 0.0
    %5003 = vmatpush1.msra.mxu0 0.0
    %5004 = vmatprep.subr.mxu0 0.0
    %5005 = vmatpush1.msra.mxu0 0.0
    %5006 = vmatprep.subr.mxu0 0.0
    %5007 = vmatpush1.msra.mxu0 0.0
    %5008 = vmatprep.subr.mxu0 0.0
    %5009 = vmatpush1.msra.mxu0 0.0
    %5010 = vmatprep.subr.mxu0 0.0
    %5011 = vmatpush1.msra.mxu0 0.0
    %5012 = vmatprep.subr.mxu0 0.0
    %5013 = vmatpush1.msra.mxu0 0.0
    %5014 = vmatprep.mubr.f32.mxu0 0.0
    %5015 = vmatmul.mubr.f32.gmra.mrb[0].mxu0 %v4948
    %v5016 = vpop.f32.mrb[0].mxu0
    %v5017 = vadd.f32 %v3430, %v5016
    %v5018 = vpop.f32.mrb[0].mxu0
    %5019 = vdwg.mxu0
    %v5020 = vadd.f32 %v3418, %v5017
    %v5021 = vxor.u32 %v5020, 2147483648
    %v5022 = vmul.f32 %v5021, 1.442695
    %v5023 = vpow.pop %v5022
    %v5024 = vadd.f32 %v5023, 1.0
    %v5025 = vrcp.pop %v5024
    %v5026 = vmul.f32 1.0, %v5025
    %5028 = vrot.lane.b32.xlu0 %v5017, 64
    %v5029 = vpop.permute.xlu0 %5028
    %v5031 = vmul.f32 %v5026, %v5029
    %5033 = vrot.lane.b32.xlu0 %v5031, 64
    %v5034 = vpop.permute.xlu0 %5033
    %v5036 = vadd.f32 %v3418, %v5034
    %v5037 = vtanh.pop %v5036
    %v5038 = vsub.f32 1.0, %v5026
    %5040 = vrot.lane.b32.xlu0 %v5037, 96
    %v5041 = vpop.permute.xlu0 %5040
    %v5043 = vmul.f32 %v5038, %v5041
    %v5044 = vmul.f32 %v5026, %v4944
    %v5045 = vadd.f32 %v5043, %v5044
    %5046 = vst [vmem:[%s16] sm:$0xff] 0.0
    %v5047 = vld [vmem:[%s9] sm:$0xff]
    %v5048 = vld [vmem:[%s9 + $0x8] sm:$0xff]
    %v5049 = vld [vmem:[%s9 + $0x10] sm:$0xff]
    %v5050 = vld [vmem:[%s9 + $0x18] sm:$0xff]
    %v5051 = vld [vmem:[%s10] sm:$0xff]
    %v5052 = vld [vmem:[%s10 + $0x8] sm:$0xff]
    %v5053 = vld [vmem:[%s10 + $0x10] sm:$0xff]
    %v5054 = vld [vmem:[%s10 + $0x18] sm:$0xff]
    %v5055 = vld [vmem:[%s11] sm:$0x1]
    %v5056 = vld [vmem:[%s12] sm:$0x1]
    %v5057 = vld [vmem:[%s13] sm:$0xff]
    %v5058 = vld [vmem:[%s13 + $0x8] sm:$0xff]
    %v5059 = vld [vmem:[%s13 + $0x10] sm:$0xff]
    %v5060 = vld [vmem:[%s13 + $0x18] sm:$0xff]
    %v5061 = vld [vmem:[%s14] sm:$0x1]
    %v5062 = vld [vmem:[%s8] sm:$0xff]
    %v5063 = vld [vmem:[%s8 + $0x8] sm:$0xff]
    %v5064 = vld [vmem:[%s8 + $0x10] sm:$0xff]
    %v5065 = vld [vmem:[%s8 + $0x18] sm:$0xff]
    %v5066 = vld [vmem:[%s8 + $0x20] sm:$0xff]
    %v5067 = vld [vmem:[%s8 + $0x28] sm:$0xff]
    %v5068 = vld [vmem:[%s8 + $0x30] sm:$0xff]
    %v5069 = vld [vmem:[%s8 + $0x38] sm:$0xff]
    %v5070 = vld [vmem:[%s8 + $0x40] sm:$0xff]
    %v5071 = vld [vmem:[%s8 + $0x48] sm:$0xff]
    %v5072 = vld [vmem:[%s8 + $0x50] sm:$0xff]
    %v5073 = vld [vmem:[%s8 + $0x58] sm:$0xff]
    %v5074 = vld [vmem:[%s8 + $0x60] sm:$0xff]
    %v5075 = vld [vmem:[%s8 + $0x68] sm:$0xff]
    %v5076 = vld [vmem:[%s8 + $0x70] sm:$0xff]
    %v5077 = vld [vmem:[%s8 + $0x78] sm:$0xff]
    %v5078 = vlaneseq
    %v5079 = vand.u32 %v5078, 127
    %v5080 = vcvt.s32.f32 %v5079
    %v5081 = vld [vmem:[%s7] sm:$0xff]
    %v5083 = vlaneseq
    %v5084 = vshrl.u32 %v5083, 7
    %v5085 = vsub.s32 0, %v5084
    %v5086 = vrot.slane %v5055, %v5085
    %v5089 = vsel %vm2704, %v5081, 0
    %5091 = vmatprep.subr.mxu0 0.0
    %5092 = vmatpush1.msra.mxu0 %v5047
    %5093 = vmatprep.subr.mxu0 0.0
    %5094 = vmatpush1.msra.mxu0 %v5048
    %5095 = vmatprep.subr.mxu0 0.0
    %5096 = vmatpush1.msra.mxu0 %v5049
    %5097 = vmatprep.subr.mxu0 0.0
    %5098 = vmatpush1.msra.mxu0 %v5050
    %5099 = vmatprep.subr.mxu0 0.0
    %5100 = vmatpush1.msra.mxu0 0.0
    %5101 = vmatprep.subr.mxu0 0.0
    %5102 = vmatpush1.msra.mxu0 0.0
    %5103 = vmatprep.subr.mxu0 0.0
    %5104 = vmatpush1.msra.mxu0 0.0
    %5105 = vmatprep.subr.mxu0 0.0
    %5106 = vmatpush1.msra.mxu0 0.0
    %5107 = vmatprep.subr.mxu0 0.0
    %5108 = vmatpush1.msra.mxu0 0.0
    %5109 = vmatprep.subr.mxu0 0.0
    %5110 = vmatpush1.msra.mxu0 0.0
    %5111 = vmatprep.subr.mxu0 0.0
    %5112 = vmatpush1.msra.mxu0 0.0
    %5113 = vmatprep.subr.mxu0 0.0
    %5114 = vmatpush1.msra.mxu0 0.0
    %5115 = vmatprep.subr.mxu0 0.0
    %5116 = vmatpush1.msra.mxu0 0.0
    %5117 = vmatprep.subr.mxu0 0.0
    %5118 = vmatpush1.msra.mxu0 0.0
    %5119 = vmatprep.subr.mxu0 0.0
    %5120 = vmatpush1.msra.mxu0 0.0
    %5121 = vmatprep.subr.mxu0 0.0
    %5122 = vmatpush1.msra.mxu0 0.0
    %5123 = vmatprep.subr.mxu0 0.0
    %5124 = vmatpush1.msra.mxu0 0.0
    %5125 = vmatprep.subr.mxu0 0.0
    %5126 = vmatpush1.msra.mxu0 0.0
    %5127 = vmatprep.subr.mxu0 0.0
    %5128 = vmatpush1.msra.mxu0 0.0
    %5129 = vmatprep.subr.mxu0 0.0
    %5130 = vmatpush1.msra.mxu0 0.0
    %5131 = vmatprep.subr.mxu0 0.0
    %5132 = vmatpush1.msra.mxu0 0.0
    %5133 = vmatprep.subr.mxu0 0.0
    %5134 = vmatpush1.msra.mxu0 0.0
    %5135 = vmatprep.subr.mxu0 0.0
    %5136 = vmatpush1.msra.mxu0 0.0
    %5137 = vmatprep.subr.mxu0 0.0
    %5138 = vmatpush1.msra.mxu0 0.0
    %5139 = vmatprep.subr.mxu0 0.0
    %5140 = vmatpush1.msra.mxu0 0.0
    %5141 = vmatprep.subr.mxu0 0.0
    %5142 = vmatpush1.msra.mxu0 0.0
    %5143 = vmatprep.subr.mxu0 0.0
    %5144 = vmatpush1.msra.mxu0 0.0
    %5145 = vmatprep.subr.mxu0 0.0
    %5146 = vmatpush1.msra.mxu0 0.0
    %5147 = vmatprep.subr.mxu0 0.0
    %5148 = vmatpush1.msra.mxu0 0.0
    %5149 = vmatprep.subr.mxu0 0.0
    %5150 = vmatpush1.msra.mxu0 0.0
    %5151 = vmatprep.subr.mxu0 0.0
    %5152 = vmatpush1.msra.mxu0 0.0
    %5153 = vmatprep.subr.mxu0 0.0
    %5154 = vmatpush1.msra.mxu0 0.0
    %5155 = vmatprep.mubr.f32.mxu0 0.0
    %5156 = vmatmul.mubr.f32.gmra.mrb[0].mxu0 %v5089
    %v5157 = vpop.f32.mrb[0].mxu0
    %v5158 = vadd.f32 %v5086, %v5157
    %v5159 = vpop.f32.mrb[0].mxu0
    %5160 = vdwg.mxu0
    %v5162 = vlaneseq
    %v5163 = vshrl.u32 %v5162, 7
    %v5164 = vsub.s32 0, %v5163
    %v5165 = vrot.slane %v5056, %v5164
    %5168 = vrot.lane.b32.xlu0 %v5045, 96
    %v5169 = vpop.permute.xlu0 %5168
    %v5170 = vsel %vm2704, %v5169, 0
    %5172 = vmatprep.subr.mxu0 0.0
    %5173 = vmatpush1.msra.mxu0 %v5051
    %5174 = vmatprep.subr.mxu0 0.0
    %5175 = vmatpush1.msra.mxu0 %v5052
    %5176 = vmatprep.subr.mxu0 0.0
    %5177 = vmatpush1.msra.mxu0 %v5053
    %5178 = vmatprep.subr.mxu0 0.0
    %5179 = vmatpush1.msra.mxu0 %v5054
    %5180 = vmatprep.subr.mxu0 0.0
    %5181 = vmatpush1.msra.mxu0 0.0
    %5182 = vmatprep.subr.mxu0 0.0
    %5183 = vmatpush1.msra.mxu0 0.0
    %5184 = vmatprep.subr.mxu0 0.0
    %5185 = vmatpush1.msra.mxu0 0.0
    %5186 = vmatprep.subr.mxu0 0.0
    %5187 = vmatpush1.msra.mxu0 0.0
    %5188 = vmatprep.subr.mxu0 0.0
    %5189 = vmatpush1.msra.mxu0 0.0
    %5190 = vmatprep.subr.mxu0 0.0
    %5191 = vmatpush1.msra.mxu0 0.0
    %5192 = vmatprep.subr.mxu0 0.0
    %5193 = vmatpush1.msra.mxu0 0.0
    %5194 = vmatprep.subr.mxu0 0.0
    %5195 = vmatpush1.msra.mxu0 0.0
    %5196 = vmatprep.subr.mxu0 0.0
    %5197 = vmatpush1.msra.mxu0 0.0
    %5198 = vmatprep.subr.mxu0 0.0
    %5199 = vmatpush1.msra.mxu0 0.0
    %5200 = vmatprep.subr.mxu0 0.0
    %5201 = vmatpush1.msra.mxu0 0.0
    %5202 = vmatprep.subr.mxu0 0.0
    %5203 = vmatpush1.msra.mxu0 0.0
    %5204 = vmatprep.subr.mxu0 0.0
    %5205 = vmatpush1.msra.mxu0 0.0
    %5206 = vmatprep.subr.mxu0 0.0
    %5207 = vmatpush1.msra.mxu0 0.0
    %5208 = vmatprep.subr.mxu0 0.0
    %5209 = vmatpush1.msra.mxu0 0.0
    %5210 = vmatprep.subr.mxu0 0.0
    %5211 = vmatpush1.msra.mxu0 0.0
    %5212 = vmatprep.subr.mxu0 0.0
    %5213 = vmatpush1.msra.mxu0 0.0
    %5214 = vmatprep.subr.mxu0 0.0
    %5215 = vmatpush1.msra.mxu0 0.0
    %5216 = vmatprep.subr.mxu0 0.0
    %5217 = vmatpush1.msra.mxu0 0.0
    %5218 = vmatprep.subr.mxu0 0.0
    %5219 = vmatpush1.msra.mxu0 0.0
    %5220 = vmatprep.subr.mxu0 0.0
    %5221 = vmatpush1.msra.mxu0 0.0
    %5222 = vmatprep.subr.mxu0 0.0
    %5223 = vmatpush1.msra.mxu0 0.0
    %5224 = vmatprep.subr.mxu0 0.0
    %5225 = vmatpush1.msra.mxu0 0.0
    %5226 = vmatprep.subr.mxu0 0.0
    %5227 = vmatpush1.msra.mxu0 0.0
    %5228 = vmatprep.subr.mxu0 0.0
    %5229 = vmatpush1.msra.mxu0 0.0
    %5230 = vmatprep.subr.mxu0 0.0
    %5231 = vmatpush1.msra.mxu0 0.0
    %5232 = vmatprep.subr.mxu0 0.0
    %5233 = vmatpush1.msra.mxu0 0.0
    %5234 = vmatprep.subr.mxu0 0.0
    %5235 = vmatpush1.msra.mxu0 0.0
    %5236 = vmatprep.mubr.f32.mxu0 0.0
    %5237 = vmatmul.mubr.f32.gmra.mrb[0].mxu0 %v5170
    %v5238 = vpop.f32.mrb[0].mxu0
    %v5239 = vadd.f32 %v5165, %v5238
    %v5240 = vpop.f32.mrb[0].mxu0
    %5241 = vdwg.mxu0
    %v5242 = vadd.f32 %v5158, %v5239
    %v5243 = vxor.u32 %v5242, 2147483648
    %v5244 = vmul.f32 %v5243, 1.442695
    %v5245 = vpow.pop %v5244
    %v5246 = vadd.f32 %v5245, 1.0
    %v5247 = vrcp.pop %v5246
    %v5248 = vmul.f32 1.0, %v5247
    %5250 = vrot.lane.b32.xlu0 %v5239, 64
    %v5251 = vpop.permute.xlu0 %5250
    %v5253 = vmul.f32 %v5248, %v5251
    %5255 = vrot.lane.b32.xlu0 %v5253, 64
    %v5256 = vpop.permute.xlu0 %5255
    %v5258 = vadd.f32 %v5158, %v5256
    %v5259 = vtanh.pop %v5258
    %v5260 = vsub.f32 1.0, %v5248
    %5262 = vrot.lane.b32.xlu0 %v5259, 96
    %v5263 = vpop.permute.xlu0 %5262
    %v5265 = vmul.f32 %v5260, %v5263
    %v5266 = vmul.f32 %v5248, %v5045
    %v5267 = vadd.f32 %v5265, %v5266
    %v5269 = vlaneseq
    %v5270 = vshrl.u32 %v5269, 7
    %v5271 = vsub.s32 0, %v5270
    %v5272 = vrot.slane %v5061, %v5271
    %5275 = vrot.lane.b32.xlu0 %v5267, 96
    %v5276 = vpop.permute.xlu0 %5275
    %v5277 = vsel %vm2704, %v5276, 0
    %5279 = vmatprep.subr.mxu0 0.0
    %5280 = vmatpush1.msra.mxu0 %v5057
    %5281 = vmatprep.subr.mxu0 0.0
    %5282 = vmatpush1.msra.mxu0 %v5058
    %5283 = vmatprep.subr.mxu0 0.0
    %5284 = vmatpush1.msra.mxu0 %v5059
    %5285 = vmatprep.subr.mxu0 0.0
    %5286 = vmatpush1.msra.mxu0 %v5060
    %5287 = vmatprep.subr.mxu0 0.0
    %5288 = vmatpush1.msra.mxu0 0.0
    %5289 = vmatprep.subr.mxu0 0.0
    %5290 = vmatpush1.msra.mxu0 0.0
    %5291 = vmatprep.subr.mxu0 0.0
    %5292 = vmatpush1.msra.mxu0 0.0
    %5293 = vmatprep.subr.mxu0 0.0
    %5294 = vmatpush1.msra.mxu0 0.0
    %5295 = vmatprep.subr.mxu0 0.0
    %5296 = vmatpush1.msra.mxu0 0.0
    %5297 = vmatprep.subr.mxu0 0.0
    %5298 = vmatpush1.msra.mxu0 0.0
    %5299 = vmatprep.subr.mxu0 0.0
    %5300 = vmatpush1.msra.mxu0 0.0
    %5301 = vmatprep.subr.mxu0 0.0
    %5302 = vmatpush1.msra.mxu0 0.0
    %5303 = vmatprep.subr.mxu0 0.0
    %5304 = vmatpush1.msra.mxu0 0.0
    %5305 = vmatprep.subr.mxu0 0.0
    %5306 = vmatpush1.msra.mxu0 0.0
    %5307 = vmatprep.subr.mxu0 0.0
    %5308 = vmatpush1.msra.mxu0 0.0
    %5309 = vmatprep.subr.mxu0 0.0
    %5310 = vmatpush1.msra.mxu0 0.0
    %5311 = vmatprep.subr.mxu0 0.0
    %5312 = vmatpush1.msra.mxu0 0.0
    %5313 = vmatprep.subr.mxu0 0.0
    %5314 = vmatpush1.msra.mxu0 0.0
    %5315 = vmatprep.subr.mxu0 0.0
    %5316 = vmatpush1.msra.mxu0 0.0
    %5317 = vmatprep.subr.mxu0 0.0
    %5318 = vmatpush1.msra.mxu0 0.0
    %5319 = vmatprep.subr.mxu0 0.0
    %5320 = vmatpush1.msra.mxu0 0.0
    %5321 = vmatprep.subr.mxu0 0.0
    %5322 = vmatpush1.msra.mxu0 0.0
    %5323 = vmatprep.subr.mxu0 0.0
    %5324 = vmatpush1.msra.mxu0 0.0
    %5325 = vmatprep.subr.mxu0 0.0
    %5326 = vmatpush1.msra.mxu0 0.0
    %5327 = vmatprep.subr.mxu0 0.0
    %5328 = vmatpush1.msra.mxu0 0.0
    %5329 = vmatprep.subr.mxu0 0.0
    %5330 = vmatpush1.msra.mxu0 0.0
    %5331 = vmatprep.subr.mxu0 0.0
    %5332 = vmatpush1.msra.mxu0 0.0
    %5333 = vmatprep.subr.mxu0 0.0
    %5334 = vmatpush1.msra.mxu0 0.0
    %5335 = vmatprep.subr.mxu0 0.0
    %5336 = vmatpush1.msra.mxu0 0.0
    %5337 = vmatprep.subr.mxu0 0.0
    %5338 = vmatpush1.msra.mxu0 0.0
    %5339 = vmatprep.subr.mxu0 0.0
    %5340 = vmatpush1.msra.mxu0 0.0
    %5341 = vmatprep.subr.mxu0 0.0
    %5342 = vmatpush1.msra.mxu0 0.0
    %5343 = vmatprep.mubr.f32.mxu0 0.0
    %5344 = vmatmul.mubr.f32.gmra.mrb[0].mxu0 %v5277
    %v5345 = vpop.f32.mrb[0].mxu0
    %v5346 = vadd.f32 %v5272, %v5345
    %v5347 = vpop.f32.mrb[0].mxu0
    %5348 = vdwg.mxu0
    %s5349 = scalar_lea.vmem %s16, 8
    %5350 = vst [vmem:[%s5349] sm:$0xff] %v5346
    %5351 = vmax.xlane.f32.xlu0 %v5346
    %v5352 = vpop.xlane.xlu0 %5351
    %vm5353 = vcmp.eq.f32.partialorder %v5346, %v5352
    %v5354 = vsel %vm5353, %v5080, 128.0
    %5355 = vmin.xlane.f32.xlu0 %v5354
    %v5356 = vpop.xlane.xlu0 %5355
    %vm5357 = vcmp.eq.f32.partialorder %v5080, %v5356
    %v5358 = vsel %vm5357, 1, 0
    %v5359 = vcvt.s32.f32 %v5358
    %5360 = vmatprep.subr.mxu0 0.0
    %5361 = vmatpush1.msra.mxu0 %v5062
    %5362 = vmatprep.subr.mxu0 0.0
    %5363 = vmatpush1.msra.mxu0 %v5063
    %5364 = vmatprep.subr.mxu0 0.0
    %5365 = vmatpush1.msra.mxu0 %v5064
    %5366 = vmatprep.subr.mxu0 0.0
    %5367 = vmatpush1.msra.mxu0 %v5065
    %5368 = vmatprep.subr.mxu0 0.0
    %5369 = vmatpush1.msra.mxu0 %v5066
    %5370 = vmatprep.subr.mxu0 0.0
    %5371 = vmatpush1.msra.mxu0 %v5067
    %5372 = vmatprep.subr.mxu0 0.0
    %5373 = vmatpush1.msra.mxu0 %v5068
    %5374 = vmatprep.subr.mxu0 0.0
    %5375 = vmatpush1.msra.mxu0 %v5069
    %5376 = vmatprep.subr.mxu0 0.0
    %5377 = vmatpush1.msra.mxu0 %v5070
    %5378 = vmatprep.subr.mxu0 0.0
    %5379 = vmatpush1.msra.mxu0 %v5071
    %5380 = vmatprep.subr.mxu0 0.0
    %5381 = vmatpush1.msra.mxu0 %v5072
    %5382 = vmatprep.subr.mxu0 0.0
    %5383 = vmatpush1.msra.mxu0 %v5073
    %5384 = vmatprep.subr.mxu0 0.0
    %5385 = vmatpush1.msra.mxu0 %v5074
    %5386 = vmatprep.subr.mxu0 0.0
    %5387 = vmatpush1.msra.mxu0 %v5075
    %5388 = vmatprep.subr.mxu0 0.0
    %5389 = vmatpush1.msra.mxu0 %v5076
    %5390 = vmatprep.subr.mxu0 0.0
    %5391 = vmatpush1.msra.mxu0 %v5077
    %5392 = vmatprep.subr.mxu0 0.0
    %5393 = vmatpush1.msra.mxu0 0.0
    %5394 = vmatprep.subr.mxu0 0.0
    %5395 = vmatpush1.msra.mxu0 0.0
    %5396 = vmatprep.subr.mxu0 0.0
    %5397 = vmatpush1.msra.mxu0 0.0
    %5398 = vmatprep.subr.mxu0 0.0
    %5399 = vmatpush1.msra.mxu0 0.0
    %5400 = vmatprep.subr.mxu0 0.0
    %5401 = vmatpush1.msra.mxu0 0.0
    %5402 = vmatprep.subr.mxu0 0.0
    %5403 = vmatpush1.msra.mxu0 0.0
    %5404 = vmatprep.subr.mxu0 0.0
    %5405 = vmatpush1.msra.mxu0 0.0
    %5406 = vmatprep.subr.mxu0 0.0
    %5407 = vmatpush1.msra.mxu0 0.0
    %5408 = vmatprep.subr.mxu0 0.0
    %5409 = vmatpush1.msra.mxu0 0.0
    %5410 = vmatprep.subr.mxu0 0.0
    %5411 = vmatpush1.msra.mxu0 0.0
    %5412 = vmatprep.subr.mxu0 0.0
    %5413 = vmatpush1.msra.mxu0 0.0
    %5414 = vmatprep.subr.mxu0 0.0
    %5415 = vmatpush1.msra.mxu0 0.0
    %5416 = vmatprep.subr.mxu0 0.0
    %5417 = vmatpush1.msra.mxu0 0.0
    %5418 = vmatprep.subr.mxu0 0.0
    %5419 = vmatpush1.msra.mxu0 0.0
    %5420 = vmatprep.subr.mxu0 0.0
    %5421 = vmatpush1.msra.mxu0 0.0
    %5422 = vmatprep.subr.mxu0 0.0
    %5423 = vmatpush1.msra.mxu0 0.0
    %5424 = vmatprep.mubr.f32.mxu0 0.0
    %5425 = vmatmul.mubr.f32.gmra.mrb[0].mxu0 %v5359
    %v5426 = vpop.f32.mrb[0].mxu0
    %v5427 = vadd.f32 0.0, %v5426
    %v5428 = vpop.f32.mrb[0].mxu0
    %5429 = vdwg.mxu0
    %s5430 = sld [smem:[#allocation2 + $0x1]]
    %p5431 = scmp.gt.s32.totalorder %s5430, 0
    %s5432 = scalar_select %p5431, 1, 0
    %s5433 = scvt.s32.f32 %s5432
    %s5434 = scalar_lea.vmem %s7, 8
    %v5435 = vld [vmem:[%s5434] sm:$0xff]
    %v5436 = vstv %s5433
    %v5437 = vmul.f32 %v5436, %v5435
    %s5438 = ssub.f32 1.0, %s5433
    %v5439 = vstv %s5438
    %v5440 = vmul.f32 %v5439, %v5427
    %v5441 = vadd.f32 %v5437, %v5440
    %v5443 = vsel %vm2704, %v5441, 0
    %5445 = vmatprep.subr.mxu0 0.0
    %5446 = vmatpush1.msra.mxu0 %v5047
    %5447 = vmatprep.subr.mxu0 0.0
    %5448 = vmatpush1.msra.mxu0 %v5048
    %5449 = vmatprep.subr.mxu0 0.0
    %5450 = vmatpush1.msra.mxu0 %v5049
    %5451 = vmatprep.subr.mxu0 0.0
    %5452 = vmatpush1.msra.mxu0 %v5050
    %5453 = vmatprep.subr.mxu0 0.0
    %5454 = vmatpush1.msra.mxu0 0.0
    %5455 = vmatprep.subr.mxu0 0.0
    %5456 = vmatpush1.msra.mxu0 0.0
    %5457 = vmatprep.subr.mxu0 0.0
    %5458 = vmatpush1.msra.mxu0 0.0
    %5459 = vmatprep.subr.mxu0 0.0
    %5460 = vmatpush1.msra.mxu0 0.0
    %5461 = vmatprep.subr.mxu0 0.0
    %5462 = vmatpush1.msra.mxu0 0.0
    %5463 = vmatprep.subr.mxu0 0.0
    %5464 = vmatpush1.msra.mxu0 0.0
    %5465 = vmatprep.subr.mxu0 0.0
    %5466 = vmatpush1.msra.mxu0 0.0
    %5467 = vmatprep.subr.mxu0 0.0
    %5468 = vmatpush1.msra.mxu0 0.0
    %5469 = vmatprep.subr.mxu0 0.0
    %5470 = vmatpush1.msra.mxu0 0.0
    %5471 = vmatprep.subr.mxu0 0.0
    %5472 = vmatpush1.msra.mxu0 0.0
    %5473 = vmatprep.subr.mxu0 0.0
    %5474 = vmatpush1.msra.mxu0 0.0
    %5475 = vmatprep.subr.mxu0 0.0
    %5476 = vmatpush1.msra.mxu0 0.0
    %5477 = vmatprep.subr.mxu0 0.0
    %5478 = vmatpush1.msra.mxu0 0.0
    %5479 = vmatprep.subr.mxu0 0.0
    %5480 = vmatpush1.msra.mxu0 0.0
    %5481 = vmatprep.subr.mxu0 0.0
    %5482 = vmatpush1.msra.mxu0 0.0
    %5483 = vmatprep.subr.mxu0 0.0
    %5484 = vmatpush1.msra.mxu0 0.0
    %5485 = vmatprep.subr.mxu0 0.0
    %5486 = vmatpush1.msra.mxu0 0.0
    %5487 = vmatprep.subr.mxu0 0.0
    %5488 = vmatpush1.msra.mxu0 0.0
    %5489 = vmatprep.subr.mxu0 0.0
    %5490 = vmatpush1.msra.mxu0 0.0
    %5491 = vmatprep.subr.mxu0 0.0
    %5492 = vmatpush1.msra.mxu0 0.0
    %5493 = vmatprep.subr.mxu0 0.0
    %5494 = vmatpush1.msra.mxu0 0.0
    %5495 = vmatprep.subr.mxu0 0.0
    %5496 = vmatpush1.msra.mxu0 0.0
    %5497 = vmatprep.subr.mxu0 0.0
    %5498 = vmatpush1.msra.mxu0 0.0
    %5499 = vmatprep.subr.mxu0 0.0
    %5500 = vmatpush1.msra.mxu0 0.0
    %5501 = vmatprep.subr.mxu0 0.0
    %5502 = vmatpush1.msra.mxu0 0.0
    %5503 = vmatprep.subr.mxu0 0.0
    %5504 = vmatpush1.msra.mxu0 0.0
    %5505 = vmatprep.subr.mxu0 0.0
    %5506 = vmatpush1.msra.mxu0 0.0
    %5507 = vmatprep.subr.mxu0 0.0
    %5508 = vmatpush1.msra.mxu0 0.0
    %5509 = vmatprep.mubr.f32.mxu0 0.0
    %5510 = vmatmul.mubr.f32.gmra.mrb[0].mxu0 %v5443
    %v5511 = vpop.f32.mrb[0].mxu0
    %v5512 = vadd.f32 %v5086, %v5511
    %v5513 = vpop.f32.mrb[0].mxu0
    %5514 = vdwg.mxu0
    %5515 = vmatprep.subr.mxu0 0.0
    %5516 = vmatpush1.msra.mxu0 %v5051
    %5517 = vmatprep.subr.mxu0 0.0
    %5518 = vmatpush1.msra.mxu0 %v5052
    %5519 = vmatprep.subr.mxu0 0.0
    %5520 = vmatpush1.msra.mxu0 %v5053
    %5521 = vmatprep.subr.mxu0 0.0
    %5522 = vmatpush1.msra.mxu0 %v5054
    %5523 = vmatprep.subr.mxu0 0.0
    %5524 = vmatpush1.msra.mxu0 0.0
    %5525 = vmatprep.subr.mxu0 0.0
    %5526 = vmatpush1.msra.mxu0 0.0
    %5527 = vmatprep.subr.mxu0 0.0
    %5528 = vmatpush1.msra.mxu0 0.0
    %5529 = vmatprep.subr.mxu0 0.0
    %5530 = vmatpush1.msra.mxu0 0.0
    %5531 = vmatprep.subr.mxu0 0.0
    %5532 = vmatpush1.msra.mxu0 0.0
    %5533 = vmatprep.subr.mxu0 0.0
    %5534 = vmatpush1.msra.mxu0 0.0
    %5535 = vmatprep.subr.mxu0 0.0
    %5536 = vmatpush1.msra.mxu0 0.0
    %5537 = vmatprep.subr.mxu0 0.0
    %5538 = vmatpush1.msra.mxu0 0.0
    %5539 = vmatprep.subr.mxu0 0.0
    %5540 = vmatpush1.msra.mxu0 0.0
    %5541 = vmatprep.subr.mxu0 0.0
    %5542 = vmatpush1.msra.mxu0 0.0
    %5543 = vmatprep.subr.mxu0 0.0
    %5544 = vmatpush1.msra.mxu0 0.0
    %5545 = vmatprep.subr.mxu0 0.0
    %5546 = vmatpush1.msra.mxu0 0.0
    %5547 = vmatprep.subr.mxu0 0.0
    %5548 = vmatpush1.msra.mxu0 0.0
    %5549 = vmatprep.subr.mxu0 0.0
    %5550 = vmatpush1.msra.mxu0 0.0
    %5551 = vmatprep.subr.mxu0 0.0
    %5552 = vmatpush1.msra.mxu0 0.0
    %5553 = vmatprep.subr.mxu0 0.0
    %5554 = vmatpush1.msra.mxu0 0.0
    %5555 = vmatprep.subr.mxu0 0.0
    %5556 = vmatpush1.msra.mxu0 0.0
    %5557 = vmatprep.subr.mxu0 0.0
    %5558 = vmatpush1.msra.mxu0 0.0
    %5559 = vmatprep.subr.mxu0 0.0
    %5560 = vmatpush1.msra.mxu0 0.0
    %5561 = vmatprep.subr.mxu0 0.0
    %5562 = vmatpush1.msra.mxu0 0.0
    %5563 = vmatprep.subr.mxu0 0.0
    %5564 = vmatpush1.msra.mxu0 0.0
    %5565 = vmatprep.subr.mxu0 0.0
    %5566 = vmatpush1.msra.mxu0 0.0
    %5567 = vmatprep.subr.mxu0 0.0
    %5568 = vmatpush1.msra.mxu0 0.0
    %5569 = vmatprep.subr.mxu0 0.0
    %5570 = vmatpush1.msra.mxu0 0.0
    %5571 = vmatprep.subr.mxu0 0.0
    %5572 = vmatpush1.msra.mxu0 0.0
    %5573 = vmatprep.subr.mxu0 0.0
    %5574 = vmatpush1.msra.mxu0 0.0
    %5575 = vmatprep.subr.mxu0 0.0
    %5576 = vmatpush1.msra.mxu0 0.0
    %5577 = vmatprep.subr.mxu0 0.0
    %5578 = vmatpush1.msra.mxu0 0.0
    %5579 = vmatprep.mubr.f32.mxu0 0.0
    %5580 = vmatmul.mubr.f32.gmra.mrb[0].mxu0 %v5277
    %v5581 = vpop.f32.mrb[0].mxu0
    %v5582 = vadd.f32 %v5165, %v5581
    %v5583 = vpop.f32.mrb[0].mxu0
    %5584 = vdwg.mxu0
    %v5585 = vadd.f32 %v5512, %v5582
    %v5586 = vxor.u32 %v5585, 2147483648
    %v5587 = vmul.f32 %v5586, 1.442695
    %v5588 = vpow.pop %v5587
    %v5589 = vadd.f32 %v5588, 1.0
    %v5590 = vrcp.pop %v5589
    %v5591 = vmul.f32 1.0, %v5590
    %5593 = vrot.lane.b32.xlu0 %v5582, 64
    %v5594 = vpop.permute.xlu0 %5593
    %v5596 = vmul.f32 %v5591, %v5594
    %5598 = vrot.lane.b32.xlu0 %v5596, 64
    %v5599 = vpop.permute.xlu0 %5598
    %v5601 = vadd.f32 %v5512, %v5599
    %v5602 = vtanh.pop %v5601
    %v5603 = vsub.f32 1.0, %v5591
    %5605 = vrot.lane.b32.xlu0 %v5602, 96
    %v5606 = vpop.permute.xlu0 %5605
    %v5608 = vmul.f32 %v5603, %v5606
    %v5609 = vmul.f32 %v5591, %v5267
    %v5610 = vadd.f32 %v5608, %v5609
    %5612 = vrot.lane.b32.xlu0 %v5610, 96
    %v5613 = vpop.permute.xlu0 %5612
    %v5614 = vsel %vm2704, %v5613, 0
    %5616 = vmatprep.subr.mxu0 0.0
    %5617 = vmatpush1.msra.mxu0 %v5057
    %5618 = vmatprep.subr.mxu0 0.0
    %5619 = vmatpush1.msra.mxu0 %v5058
    %5620 = vmatprep.subr.mxu0 0.0
    %5621 = vmatpush1.msra.mxu0 %v5059
    %5622 = vmatprep.subr.mxu0 0.0
    %5623 = vmatpush1.msra.mxu0 %v5060
    %5624 = vmatprep.subr.mxu0 0.0
    %5625 = vmatpush1.msra.mxu0 0.0
    %5626 = vmatprep.subr.mxu0 0.0
    %5627 = vmatpush1.msra.mxu0 0.0
    %5628 = vmatprep.subr.mxu0 0.0
    %5629 = vmatpush1.msra.mxu0 0.0
    %5630 = vmatprep.subr.mxu0 0.0
    %5631 = vmatpush1.msra.mxu0 0.0
    %5632 = vmatprep.subr.mxu0 0.0
    %5633 = vmatpush1.msra.mxu0 0.0
    %5634 = vmatprep.subr.mxu0 0.0
    %5635 = vmatpush1.msra.mxu0 0.0
    %5636 = vmatprep.subr.mxu0 0.0
    %5637 = vmatpush1.msra.mxu0 0.0
    %5638 = vmatprep.subr.mxu0 0.0
    %5639 = vmatpush1.msra.mxu0 0.0
    %5640 = vmatprep.subr.mxu0 0.0
    %5641 = vmatpush1.msra.mxu0 0.0
    %5642 = vmatprep.subr.mxu0 0.0
    %5643 = vmatpush1.msra.mxu0 0.0
    %5644 = vmatprep.subr.mxu0 0.0
    %5645 = vmatpush1.msra.mxu0 0.0
    %5646 = vmatprep.subr.mxu0 0.0
    %5647 = vmatpush1.msra.mxu0 0.0
    %5648 = vmatprep.subr.mxu0 0.0
    %5649 = vmatpush1.msra.mxu0 0.0
    %5650 = vmatprep.subr.mxu0 0.0
    %5651 = vmatpush1.msra.mxu0 0.0
    %5652 = vmatprep.subr.mxu0 0.0
    %5653 = vmatpush1.msra.mxu0 0.0
    %5654 = vmatprep.subr.mxu0 0.0
    %5655 = vmatpush1.msra.mxu0 0.0
    %5656 = vmatprep.subr.mxu0 0.0
    %5657 = vmatpush1.msra.mxu0 0.0
    %5658 = vmatprep.subr.mxu0 0.0
    %5659 = vmatpush1.msra.mxu0 0.0
    %5660 = vmatprep.subr.mxu0 0.0
    %5661 = vmatpush1.msra.mxu0 0.0
    %5662 = vmatprep.subr.mxu0 0.0
    %5663 = vmatpush1.msra.mxu0 0.0
    %5664 = vmatprep.subr.mxu0 0.0
    %5665 = vmatpush1.msra.mxu0 0.0
    %5666 = vmatprep.subr.mxu0 0.0
    %5667 = vmatpush1.msra.mxu0 0.0
    %5668 = vmatprep.subr.mxu0 0.0
    %5669 = vmatpush1.msra.mxu0 0.0
    %5670 = vmatprep.subr.mxu0 0.0
    %5671 = vmatpush1.msra.mxu0 0.0
    %5672 = vmatprep.subr.mxu0 0.0
    %5673 = vmatpush1.msra.mxu0 0.0
    %5674 = vmatprep.subr.mxu0 0.0
    %5675 = vmatpush1.msra.mxu0 0.0
    %5676 = vmatprep.subr.mxu0 0.0
    %5677 = vmatpush1.msra.mxu0 0.0
    %5678 = vmatprep.subr.mxu0 0.0
    %5679 = vmatpush1.msra.mxu0 0.0
    %5680 = vmatprep.mubr.f32.mxu0 0.0
    %5681 = vmatmul.mubr.f32.gmra.mrb[0].mxu0 %v5614
    %v5682 = vpop.f32.mrb[0].mxu0
    %v5683 = vadd.f32 %v5272, %v5682
    %v5684 = vpop.f32.mrb[0].mxu0
    %5685 = vdwg.mxu0
    %s5686 = scalar_lea.vmem %s16, 16
    %5687 = vst [vmem:[%s5686] sm:$0xff] %v5683
    %5688 = vmax.xlane.f32.xlu0 %v5683
    %v5689 = vpop.xlane.xlu0 %5688
    %vm5690 = vcmp.eq.f32.partialorder %v5683, %v5689
    %v5691 = vsel %vm5690, %v5080, 128.0
    %5692 = vmin.xlane.f32.xlu0 %v5691
    %v5693 = vpop.xlane.xlu0 %5692
    %vm5694 = vcmp.eq.f32.partialorder %v5080, %v5693
    %v5695 = vsel %vm5694, 1, 0
    %v5696 = vcvt.s32.f32 %v5695
    %5697 = vmatprep.subr.mxu0 0.0
    %5698 = vmatpush1.msra.mxu0 %v5062
    %5699 = vmatprep.subr.mxu0 0.0
    %5700 = vmatpush1.msra.mxu0 %v5063
    %5701 = vmatprep.subr.mxu0 0.0
    %5702 = vmatpush1.msra.mxu0 %v5064
    %5703 = vmatprep.subr.mxu0 0.0
    %5704 = vmatpush1.msra.mxu0 %v5065
    %5705 = vmatprep.subr.mxu0 0.0
    %5706 = vmatpush1.msra.mxu0 %v5066
    %5707 = vmatprep.subr.mxu0 0.0
    %5708 = vmatpush1.msra.mxu0 %v5067
    %5709 = vmatprep.subr.mxu0 0.0
    %5710 = vmatpush1.msra.mxu0 %v5068
    %5711 = vmatprep.subr.mxu0 0.0
    %5712 = vmatpush1.msra.mxu0 %v5069
    %5713 = vmatprep.subr.mxu0 0.0
    %5714 = vmatpush1.msra.mxu0 %v5070
    %5715 = vmatprep.subr.mxu0 0.0
    %5716 = vmatpush1.msra.mxu0 %v5071
    %5717 = vmatprep.subr.mxu0 0.0
    %5718 = vmatpush1.msra.mxu0 %v5072
    %5719 = vmatprep.subr.mxu0 0.0
    %5720 = vmatpush1.msra.mxu0 %v5073
    %5721 = vmatprep.subr.mxu0 0.0
    %5722 = vmatpush1.msra.mxu0 %v5074
    %5723 = vmatprep.subr.mxu0 0.0
    %5724 = vmatpush1.msra.mxu0 %v5075
    %5725 = vmatprep.subr.mxu0 0.0
    %5726 = vmatpush1.msra.mxu0 %v5076
    %5727 = vmatprep.subr.mxu0 0.0
    %5728 = vmatpush1.msra.mxu0 %v5077
    %5729 = vmatprep.subr.mxu0 0.0
    %5730 = vmatpush1.msra.mxu0 0.0
    %5731 = vmatprep.subr.mxu0 0.0
    %5732 = vmatpush1.msra.mxu0 0.0
    %5733 = vmatprep.subr.mxu0 0.0
    %5734 = vmatpush1.msra.mxu0 0.0
    %5735 = vmatprep.subr.mxu0 0.0
    %5736 = vmatpush1.msra.mxu0 0.0
    %5737 = vmatprep.subr.mxu0 0.0
    %5738 = vmatpush1.msra.mxu0 0.0
    %5739 = vmatprep.subr.mxu0 0.0
    %5740 = vmatpush1.msra.mxu0 0.0
    %5741 = vmatprep.subr.mxu0 0.0
    %5742 = vmatpush1.msra.mxu0 0.0
    %5743 = vmatprep.subr.mxu0 0.0
    %5744 = vmatpush1.msra.mxu0 0.0
    %5745 = vmatprep.subr.mxu0 0.0
    %5746 = vmatpush1.msra.mxu0 0.0
    %5747 = vmatprep.subr.mxu0 0.0
    %5748 = vmatpush1.msra.mxu0 0.0
    %5749 = vmatprep.subr.mxu0 0.0
    %5750 = vmatpush1.msra.mxu0 0.0
    %5751 = vmatprep.subr.mxu0 0.0
    %5752 = vmatpush1.msra.mxu0 0.0
    %5753 = vmatprep.subr.mxu0 0.0
    %5754 = vmatpush1.msra.mxu0 0.0
    %5755 = vmatprep.subr.mxu0 0.0
    %5756 = vmatpush1.msra.mxu0 0.0
    %5757 = vmatprep.subr.mxu0 0.0
    %5758 = vmatpush1.msra.mxu0 0.0
    %5759 = vmatprep.subr.mxu0 0.0
    %5760 = vmatpush1.msra.mxu0 0.0
    %5761 = vmatprep.mubr.f32.mxu0 0.0
    %5762 = vmatmul.mubr.f32.gmra.mrb[0].mxu0 %v5696
    %v5763 = vpop.f32.mrb[0].mxu0
    %v5764 = vadd.f32 0.0, %v5763
    %v5765 = vpop.f32.mrb[0].mxu0
    %5766 = vdwg.mxu0
    %s5767 = sld [smem:[#allocation2 + $0x2]]
    %p5768 = scmp.gt.s32.totalorder %s5767, 0
    %s5769 = scalar_select %p5768, 1, 0
    %s5770 = scvt.s32.f32 %s5769
    %s5771 = scalar_lea.vmem %s7, 16
    %v5772 = vld [vmem:[%s5771] sm:$0xff]
    %v5773 = vstv %s5770
    %v5774 = vmul.f32 %v5773, %v5772
    %s5775 = ssub.f32 1.0, %s5770
    %v5776 = vstv %s5775
    %v5777 = vmul.f32 %v5776, %v5764
    %v5778 = vadd.f32 %v5774, %v5777
    %v5780 = vsel %vm2704, %v5778, 0
    %5782 = vmatprep.subr.mxu0 0.0
    %5783 = vmatpush1.msra.mxu0 %v5047
    %5784 = vmatprep.subr.mxu0 0.0
    %5785 = vmatpush1.msra.mxu0 %v5048
    %5786 = vmatprep.subr.mxu0 0.0
    %5787 = vmatpush1.msra.mxu0 %v5049
    %5788 = vmatprep.subr.mxu0 0.0
    %5789 = vmatpush1.msra.mxu0 %v5050
    %5790 = vmatprep.subr.mxu0 0.0
    %5791 = vmatpush1.msra.mxu0 0.0
    %5792 = vmatprep.subr.mxu0 0.0
    %5793 = vmatpush1.msra.mxu0 0.0
    %5794 = vmatprep.subr.mxu0 0.0
    %5795 = vmatpush1.msra.mxu0 0.0
    %5796 = vmatprep.subr.mxu0 0.0
    %5797 = vmatpush1.msra.mxu0 0.0
    %5798 = vmatprep.subr.mxu0 0.0
    %5799 = vmatpush1.msra.mxu0 0.0
    %5800 = vmatprep.subr.mxu0 0.0
    %5801 = vmatpush1.msra.mxu0 0.0
    %5802 = vmatprep.subr.mxu0 0.0
    %5803 = vmatpush1.msra.mxu0 0.0
    %5804 = vmatprep.subr.mxu0 0.0
    %5805 = vmatpush1.msra.mxu0 0.0
    %5806 = vmatprep.subr.mxu0 0.0
    %5807 = vmatpush1.msra.mxu0 0.0
    %5808 = vmatprep.subr.mxu0 0.0
    %5809 = vmatpush1.msra.mxu0 0.0
    %5810 = vmatprep.subr.mxu0 0.0
    %5811 = vmatpush1.msra.mxu0 0.0
    %5812 = vmatprep.subr.mxu0 0.0
    %5813 = vmatpush1.msra.mxu0 0.0
    %5814 = vmatprep.subr.mxu0 0.0
    %5815 = vmatpush1.msra.mxu0 0.0
    %5816 = vmatprep.subr.mxu0 0.0
    %5817 = vmatpush1.msra.mxu0 0.0
    %5818 = vmatprep.subr.mxu0 0.0
    %5819 = vmatpush1.msra.mxu0 0.0
    %5820 = vmatprep.subr.mxu0 0.0
    %5821 = vmatpush1.msra.mxu0 0.0
    %5822 = vmatprep.subr.mxu0 0.0
    %5823 = vmatpush1.msra.mxu0 0.0
    %5824 = vmatprep.subr.mxu0 0.0
    %5825 = vmatpush1.msra.mxu0 0.0
    %5826 = vmatprep.subr.mxu0 0.0
    %5827 = vmatpush1.msra.mxu0 0.0
    %5828 = vmatprep.subr.mxu0 0.0
    %5829 = vmatpush1.msra.mxu0 0.0
    %5830 = vmatprep.subr.mxu0 0.0
    %5831 = vmatpush1.msra.mxu0 0.0
    %5832 = vmatprep.subr.mxu0 0.0
    %5833 = vmatpush1.msra.mxu0 0.0
    %5834 = vmatprep.subr.mxu0 0.0
    %5835 = vmatpush1.msra.mxu0 0.0
    %5836 = vmatprep.subr.mxu0 0.0
    %5837 = vmatpush1.msra.mxu0 0.0
    %5838 = vmatprep.subr.mxu0 0.0
    %5839 = vmatpush1.msra.mxu0 0.0
    %5840 = vmatprep.subr.mxu0 0.0
    %5841 = vmatpush1.msra.mxu0 0.0
    %5842 = vmatprep.subr.mxu0 0.0
    %5843 = vmatpush1.msra.mxu0 0.0
    %5844 = vmatprep.subr.mxu0 0.0
    %5845 = vmatpush1.msra.mxu0 0.0
    %5846 = vmatprep.mubr.f32.mxu0 0.0
    %5847 = vmatmul.mubr.f32.gmra.mrb[0].mxu0 %v5780
    %v5848 = vpop.f32.mrb[0].mxu0
    %v5849 = vadd.f32 %v5086, %v5848
    %v5850 = vpop.f32.mrb[0].mxu0
    %5851 = vdwg.mxu0
    %5852 = vmatprep.subr.mxu0 0.0
    %5853 = vmatpush1.msra.mxu0 %v5051
    %5854 = vmatprep.subr.mxu0 0.0
    %5855 = vmatpush1.msra.mxu0 %v5052
    %5856 = vmatprep.subr.mxu0 0.0
    %5857 = vmatpush1.msra.mxu0 %v5053
    %5858 = vmatprep.subr.mxu0 0.0
    %5859 = vmatpush1.msra.mxu0 %v5054
    %5860 = vmatprep.subr.mxu0 0.0
    %5861 = vmatpush1.msra.mxu0 0.0
    %5862 = vmatprep.subr.mxu0 0.0
    %5863 = vmatpush1.msra.mxu0 0.0
    %5864 = vmatprep.subr.mxu0 0.0
    %5865 = vmatpush1.msra.mxu0 0.0
    %5866 = vmatprep.subr.mxu0 0.0
    %5867 = vmatpush1.msra.mxu0 0.0
    %5868 = vmatprep.subr.mxu0 0.0
    %5869 = vmatpush1.msra.mxu0 0.0
    %5870 = vmatprep.subr.mxu0 0.0
    %5871 = vmatpush1.msra.mxu0 0.0
    %5872 = vmatprep.subr.mxu0 0.0
    %5873 = vmatpush1.msra.mxu0 0.0
    %5874 = vmatprep.subr.mxu0 0.0
    %5875 = vmatpush1.msra.mxu0 0.0
    %5876 = vmatprep.subr.mxu0 0.0
    %5877 = vmatpush1.msra.mxu0 0.0
    %5878 = vmatprep.subr.mxu0 0.0
    %5879 = vmatpush1.msra.mxu0 0.0
    %5880 = vmatprep.subr.mxu0 0.0
    %5881 = vmatpush1.msra.mxu0 0.0
    %5882 = vmatprep.subr.mxu0 0.0
    %5883 = vmatpush1.msra.mxu0 0.0
    %5884 = vmatprep.subr.mxu0 0.0
    %5885 = vmatpush1.msra.mxu0 0.0
    %5886 = vmatprep.subr.mxu0 0.0
    %5887 = vmatpush1.msra.mxu0 0.0
    %5888 = vmatprep.subr.mxu0 0.0
    %5889 = vmatpush1.msra.mxu0 0.0
    %5890 = vmatprep.subr.mxu0 0.0
    %5891 = vmatpush1.msra.mxu0 0.0
    %5892 = vmatprep.subr.mxu0 0.0
    %5893 = vmatpush1.msra.mxu0 0.0
    %5894 = vmatprep.subr.mxu0 0.0
    %5895 = vmatpush1.msra.mxu0 0.0
    %5896 = vmatprep.subr.mxu0 0.0
    %5897 = vmatpush1.msra.mxu0 0.0
    %5898 = vmatprep.subr.mxu0 0.0
    %5899 = vmatpush1.msra.mxu0 0.0
    %5900 = vmatprep.subr.mxu0 0.0
    %5901 = vmatpush1.msra.mxu0 0.0
    %5902 = vmatprep.subr.mxu0 0.0
    %5903 = vmatpush1.msra.mxu0 0.0
    %5904 = vmatprep.subr.mxu0 0.0
    %5905 = vmatpush1.msra.mxu0 0.0
    %5906 = vmatprep.subr.mxu0 0.0
    %5907 = vmatpush1.msra.mxu0 0.0
    %5908 = vmatprep.subr.mxu0 0.0
    %5909 = vmatpush1.msra.mxu0 0.0
    %5910 = vmatprep.subr.mxu0 0.0
    %5911 = vmatpush1.msra.mxu0 0.0
    %5912 = vmatprep.subr.mxu0 0.0
    %5913 = vmatpush1.msra.mxu0 0.0
    %5914 = vmatprep.subr.mxu0 0.0
    %5915 = vmatpush1.msra.mxu0 0.0
    %5916 = vmatprep.mubr.f32.mxu0 0.0
    %5917 = vmatmul.mubr.f32.gmra.mrb[0].mxu0 %v5614
    %v5918 = vpop.f32.mrb[0].mxu0
    %v5919 = vadd.f32 %v5165, %v5918
    %v5920 = vpop.f32.mrb[0].mxu0
    %5921 = vdwg.mxu0
    %v5922 = vadd.f32 %v5849, %v5919
    %v5923 = vxor.u32 %v5922, 2147483648
    %v5924 = vmul.f32 %v5923, 1.442695
    %v5925 = vpow.pop %v5924
    %v5926 = vadd.f32 %v5925, 1.0
    %v5927 = vrcp.pop %v5926
    %v5928 = vmul.f32 1.0, %v5927
    %5930 = vrot.lane.b32.xlu0 %v5919, 64
    %v5931 = vpop.permute.xlu0 %5930
    %v5933 = vmul.f32 %v5928, %v5931
    %5935 = vrot.lane.b32.xlu0 %v5933, 64
    %v5936 = vpop.permute.xlu0 %5935
    %v5938 = vadd.f32 %v5849, %v5936
    %v5939 = vtanh.pop %v5938
    %v5940 = vsub.f32 1.0, %v5928
    %5942 = vrot.lane.b32.xlu0 %v5939, 96
    %v5943 = vpop.permute.xlu0 %5942
    %v5945 = vmul.f32 %v5940, %v5943
    %v5946 = vmul.f32 %v5928, %v5610
    %v5947 = vadd.f32 %v5945, %v5946
    %5949 = vrot.lane.b32.xlu0 %v5947, 96
    %v5950 = vpop.permute.xlu0 %5949
    %v5951 = vsel %vm2704, %v5950, 0
    %5953 = vmatprep.subr.mxu0 0.0
    %5954 = vmatpush1.msra.mxu0 %v5057
    %5955 = vmatprep.subr.mxu0 0.0
    %5956 = vmatpush1.msra.mxu0 %v5058
    %5957 = vmatprep.subr.mxu0 0.0
    %5958 = vmatpush1.msra.mxu0 %v5059
    %5959 = vmatprep.subr.mxu0 0.0
    %5960 = vmatpush1.msra.mxu0 %v5060
    %5961 = vmatprep.subr.mxu0 0.0
    %5962 = vmatpush1.msra.mxu0 0.0
    %5963 = vmatprep.subr.mxu0 0.0
    %5964 = vmatpush1.msra.mxu0 0.0
    %5965 = vmatprep.subr.mxu0 0.0
    %5966 = vmatpush1.msra.mxu0 0.0
    %5967 = vmatprep.subr.mxu0 0.0
    %5968 = vmatpush1.msra.mxu0 0.0
    %5969 = vmatprep.subr.mxu0 0.0
    %5970 = vmatpush1.msra.mxu0 0.0
    %5971 = vmatprep.subr.mxu0 0.0
    %5972 = vmatpush1.msra.mxu0 0.0
    %5973 = vmatprep.subr.mxu0 0.0
    %5974 = vmatpush1.msra.mxu0 0.0
    %5975 = vmatprep.subr.mxu0 0.0
    %5976 = vmatpush1.msra.mxu0 0.0
    %5977 = vmatprep.subr.mxu0 0.0
    %5978 = vmatpush1.msra.mxu0 0.0
    %5979 = vmatprep.subr.mxu0 0.0
    %5980 = vmatpush1.msra.mxu0 0.0
    %5981 = vmatprep.subr.mxu0 0.0
    %5982 = vmatpush1.msra.mxu0 0.0
    %5983 = vmatprep.subr.mxu0 0.0
    %5984 = vmatpush1.msra.mxu0 0.0
    %5985 = vmatprep.subr.mxu0 0.0
    %5986 = vmatpush1.msra.mxu0 0.0
    %5987 = vmatprep.subr.mxu0 0.0
    %5988 = vmatpush1.msra.mxu0 0.0
    %5989 = vmatprep.subr.mxu0 0.0
    %5990 = vmatpush1.msra.mxu0 0.0
    %5991 = vmatprep.subr.mxu0 0.0
    %5992 = vmatpush1.msra.mxu0 0.0
    %5993 = vmatprep.subr.mxu0 0.0
    %5994 = vmatpush1.msra.mxu0 0.0
    %5995 = vmatprep.subr.mxu0 0.0
    %5996 = vmatpush1.msra.mxu0 0.0
    %5997 = vmatprep.subr.mxu0 0.0
    %5998 = vmatpush1.msra.mxu0 0.0
    %5999 = vmatprep.subr.mxu0 0.0
    %6000 = vmatpush1.msra.mxu0 0.0
    %6001 = vmatprep.subr.mxu0 0.0
    %6002 = vmatpush1.msra.mxu0 0.0
    %6003 = vmatprep.subr.mxu0 0.0
    %6004 = vmatpush1.msra.mxu0 0.0
    %6005 = vmatprep.subr.mxu0 0.0
    %6006 = vmatpush1.msra.mxu0 0.0
    %6007 = vmatprep.subr.mxu0 0.0
    %6008 = vmatpush1.msra.mxu0 0.0
    %6009 = vmatprep.subr.mxu0 0.0
    %6010 = vmatpush1.msra.mxu0 0.0
    %6011 = vmatprep.subr.mxu0 0.0
    %6012 = vmatpush1.msra.mxu0 0.0
    %6013 = vmatprep.subr.mxu0 0.0
    %6014 = vmatpush1.msra.mxu0 0.0
    %6015 = vmatprep.subr.mxu0 0.0
    %6016 = vmatpush1.msra.mxu0 0.0
    %6017 = vmatprep.mubr.f32.mxu0 0.0
    %6018 = vmatmul.mubr.f32.gmra.mrb[0].mxu0 %v5951
    %v6019 = vpop.f32.mrb[0].mxu0
    %v6020 = vadd.f32 %v5272, %v6019
    %v6021 = vpop.f32.mrb[0].mxu0
    %6022 = vdwg.mxu0
    %s6023 = scalar_lea.vmem %s16, 24
    %6024 = vst [vmem:[%s6023] sm:$0xff] %v6020
    %6025 = vmax.xlane.f32.xlu0 %v6020
    %v6026 = vpop.xlane.xlu0 %6025
    %vm6027 = vcmp.eq.f32.partialorder %v6020, %v6026
    %v6028 = vsel %vm6027, %v5080, 128.0
    %6029 = vmin.xlane.f32.xlu0 %v6028
    %v6030 = vpop.xlane.xlu0 %6029
    %vm6031 = vcmp.eq.f32.partialorder %v5080, %v6030
    %v6032 = vsel %vm6031, 1, 0
    %v6033 = vcvt.s32.f32 %v6032
    %6034 = vmatprep.subr.mxu0 0.0
    %6035 = vmatpush1.msra.mxu0 %v5062
    %6036 = vmatprep.subr.mxu0 0.0
    %6037 = vmatpush1.msra.mxu0 %v5063
    %6038 = vmatprep.subr.mxu0 0.0
    %6039 = vmatpush1.msra.mxu0 %v5064
    %6040 = vmatprep.subr.mxu0 0.0
    %6041 = vmatpush1.msra.mxu0 %v5065
    %6042 = vmatprep.subr.mxu0 0.0
    %6043 = vmatpush1.msra.mxu0 %v5066
    %6044 = vmatprep.subr.mxu0 0.0
    %6045 = vmatpush1.msra.mxu0 %v5067
    %6046 = vmatprep.subr.mxu0 0.0
    %6047 = vmatpush1.msra.mxu0 %v5068
    %6048 = vmatprep.subr.mxu0 0.0
    %6049 = vmatpush1.msra.mxu0 %v5069
    %6050 = vmatprep.subr.mxu0 0.0
    %6051 = vmatpush1.msra.mxu0 %v5070
    %6052 = vmatprep.subr.mxu0 0.0
    %6053 = vmatpush1.msra.mxu0 %v5071
    %6054 = vmatprep.subr.mxu0 0.0
    %6055 = vmatpush1.msra.mxu0 %v5072
    %6056 = vmatprep.subr.mxu0 0.0
    %6057 = vmatpush1.msra.mxu0 %v5073
    %6058 = vmatprep.subr.mxu0 0.0
    %6059 = vmatpush1.msra.mxu0 %v5074
    %6060 = vmatprep.subr.mxu0 0.0
    %6061 = vmatpush1.msra.mxu0 %v5075
    %6062 = vmatprep.subr.mxu0 0.0
    %6063 = vmatpush1.msra.mxu0 %v5076
    %6064 = vmatprep.subr.mxu0 0.0
    %6065 = vmatpush1.msra.mxu0 %v5077
    %6066 = vmatprep.subr.mxu0 0.0
    %6067 = vmatpush1.msra.mxu0 0.0
    %6068 = vmatprep.subr.mxu0 0.0
    %6069 = vmatpush1.msra.mxu0 0.0
    %6070 = vmatprep.subr.mxu0 0.0
    %6071 = vmatpush1.msra.mxu0 0.0
    %6072 = vmatprep.subr.mxu0 0.0
    %6073 = vmatpush1.msra.mxu0 0.0
    %6074 = vmatprep.subr.mxu0 0.0
    %6075 = vmatpush1.msra.mxu0 0.0
    %6076 = vmatprep.subr.mxu0 0.0
    %6077 = vmatpush1.msra.mxu0 0.0
    %6078 = vmatprep.subr.mxu0 0.0
    %6079 = vmatpush1.msra.mxu0 0.0
    %6080 = vmatprep.subr.mxu0 0.0
    %6081 = vmatpush1.msra.mxu0 0.0
    %6082 = vmatprep.subr.mxu0 0.0
    %6083 = vmatpush1.msra.mxu0 0.0
    %6084 = vmatprep.subr.mxu0 0.0
    %6085 = vmatpush1.msra.mxu0 0.0
    %6086 = vmatprep.subr.mxu0 0.0
    %6087 = vmatpush1.msra.mxu0 0.0
    %6088 = vmatprep.subr.mxu0 0.0
    %6089 = vmatpush1.msra.mxu0 0.0
    %6090 = vmatprep.subr.mxu0 0.0
    %6091 = vmatpush1.msra.mxu0 0.0
    %6092 = vmatprep.subr.mxu0 0.0
    %6093 = vmatpush1.msra.mxu0 0.0
    %6094 = vmatprep.subr.mxu0 0.0
    %6095 = vmatpush1.msra.mxu0 0.0
    %6096 = vmatprep.subr.mxu0 0.0
    %6097 = vmatpush1.msra.mxu0 0.0
    %6098 = vmatprep.mubr.f32.mxu0 0.0
    %6099 = vmatmul.mubr.f32.gmra.mrb[0].mxu0 %v6033
    %v6100 = vpop.f32.mrb[0].mxu0
    %v6101 = vadd.f32 0.0, %v6100
    %v6102 = vpop.f32.mrb[0].mxu0
    %6103 = vdwg.mxu0
    %s6104 = sld [smem:[#allocation2 + $0x3]]
    %p6105 = scmp.gt.s32.totalorder %s6104, 0
    %s6106 = scalar_select %p6105, 1, 0
    %s6107 = scvt.s32.f32 %s6106
    %s6108 = scalar_lea.vmem %s7, 24
    %v6109 = vld [vmem:[%s6108] sm:$0xff]
    %v6110 = vstv %s6107
    %v6111 = vmul.f32 %v6110, %v6109
    %s6112 = ssub.f32 1.0, %s6107
    %v6113 = vstv %s6112
    %v6114 = vmul.f32 %v6113, %v6101
    %v6115 = vadd.f32 %v6111, %v6114
    %v6117 = vsel %vm2704, %v6115, 0
    %6119 = vmatprep.subr.mxu0 0.0
    %6120 = vmatpush1.msra.mxu0 %v5047
    %6121 = vmatprep.subr.mxu0 0.0
    %6122 = vmatpush1.msra.mxu0 %v5048
    %6123 = vmatprep.subr.mxu0 0.0
    %6124 = vmatpush1.msra.mxu0 %v5049
    %6125 = vmatprep.subr.mxu0 0.0
    %6126 = vmatpush1.msra.mxu0 %v5050
    %6127 = vmatprep.subr.mxu0 0.0
    %6128 = vmatpush1.msra.mxu0 0.0
    %6129 = vmatprep.subr.mxu0 0.0
    %6130 = vmatpush1.msra.mxu0 0.0
    %6131 = vmatprep.subr.mxu0 0.0
    %6132 = vmatpush1.msra.mxu0 0.0
    %6133 = vmatprep.subr.mxu0 0.0
    %6134 = vmatpush1.msra.mxu0 0.0
    %6135 = vmatprep.subr.mxu0 0.0
    %6136 = vmatpush1.msra.mxu0 0.0
    %6137 = vmatprep.subr.mxu0 0.0
    %6138 = vmatpush1.msra.mxu0 0.0
    %6139 = vmatprep.subr.mxu0 0.0
    %6140 = vmatpush1.msra.mxu0 0.0
    %6141 = vmatprep.subr.mxu0 0.0
    %6142 = vmatpush1.msra.mxu0 0.0
    %6143 = vmatprep.subr.mxu0 0.0
    %6144 = vmatpush1.msra.mxu0 0.0
    %6145 = vmatprep.subr.mxu0 0.0
    %6146 = vmatpush1.msra.mxu0 0.0
    %6147 = vmatprep.subr.mxu0 0.0
    %6148 = vmatpush1.msra.mxu0 0.0
    %6149 = vmatprep.subr.mxu0 0.0
    %6150 = vmatpush1.msra.mxu0 0.0
    %6151 = vmatprep.subr.mxu0 0.0
    %6152 = vmatpush1.msra.mxu0 0.0
    %6153 = vmatprep.subr.mxu0 0.0
    %6154 = vmatpush1.msra.mxu0 0.0
    %6155 = vmatprep.subr.mxu0 0.0
    %6156 = vmatpush1.msra.mxu0 0.0
    %6157 = vmatprep.subr.mxu0 0.0
    %6158 = vmatpush1.msra.mxu0 0.0
    %6159 = vmatprep.subr.mxu0 0.0
    %6160 = vmatpush1.msra.mxu0 0.0
    %6161 = vmatprep.subr.mxu0 0.0
    %6162 = vmatpush1.msra.mxu0 0.0
    %6163 = vmatprep.subr.mxu0 0.0
    %6164 = vmatpush1.msra.mxu0 0.0
    %6165 = vmatprep.subr.mxu0 0.0
    %6166 = vmatpush1.msra.mxu0 0.0
    %6167 = vmatprep.subr.mxu0 0.0
    %6168 = vmatpush1.msra.mxu0 0.0
    %6169 = vmatprep.subr.mxu0 0.0
    %6170 = vmatpush1.msra.mxu0 0.0
    %6171 = vmatprep.subr.mxu0 0.0
    %6172 = vmatpush1.msra.mxu0 0.0
    %6173 = vmatprep.subr.mxu0 0.0
    %6174 = vmatpush1.msra.mxu0 0.0
    %6175 = vmatprep.subr.mxu0 0.0
    %6176 = vmatpush1.msra.mxu0 0.0
    %6177 = vmatprep.subr.mxu0 0.0
    %6178 = vmatpush1.msra.mxu0 0.0
    %6179 = vmatprep.subr.mxu0 0.0
    %6180 = vmatpush1.msra.mxu0 0.0
    %6181 = vmatprep.subr.mxu0 0.0
    %6182 = vmatpush1.msra.mxu0 0.0
    %6183 = vmatprep.mubr.f32.mxu0 0.0
    %6184 = vmatmul.mubr.f32.gmra.mrb[0].mxu0 %v6117
    %v6185 = vpop.f32.mrb[0].mxu0
    %v6186 = vadd.f32 %v5086, %v6185
    %v6187 = vpop.f32.mrb[0].mxu0
    %6188 = vdwg.mxu0
    %6189 = vmatprep.subr.mxu0 0.0
    %6190 = vmatpush1.msra.mxu0 %v5051
    %6191 = vmatprep.subr.mxu0 0.0
    %6192 = vmatpush1.msra.mxu0 %v5052
    %6193 = vmatprep.subr.mxu0 0.0
    %6194 = vmatpush1.msra.mxu0 %v5053
    %6195 = vmatprep.subr.mxu0 0.0
    %6196 = vmatpush1.msra.mxu0 %v5054
    %6197 = vmatprep.subr.mxu0 0.0
    %6198 = vmatpush1.msra.mxu0 0.0
    %6199 = vmatprep.subr.mxu0 0.0
    %6200 = vmatpush1.msra.mxu0 0.0
    %6201 = vmatprep.subr.mxu0 0.0
    %6202 = vmatpush1.msra.mxu0 0.0
    %6203 = vmatprep.subr.mxu0 0.0
    %6204 = vmatpush1.msra.mxu0 0.0
    %6205 = vmatprep.subr.mxu0 0.0
    %6206 = vmatpush1.msra.mxu0 0.0
    %6207 = vmatprep.subr.mxu0 0.0
    %6208 = vmatpush1.msra.mxu0 0.0
    %6209 = vmatprep.subr.mxu0 0.0
    %6210 = vmatpush1.msra.mxu0 0.0
    %6211 = vmatprep.subr.mxu0 0.0
    %6212 = vmatpush1.msra.mxu0 0.0
    %6213 = vmatprep.subr.mxu0 0.0
    %6214 = vmatpush1.msra.mxu0 0.0
    %6215 = vmatprep.subr.mxu0 0.0
    %6216 = vmatpush1.msra.mxu0 0.0
    %6217 = vmatprep.subr.mxu0 0.0
    %6218 = vmatpush1.msra.mxu0 0.0
    %6219 = vmatprep.subr.mxu0 0.0
    %6220 = vmatpush1.msra.mxu0 0.0
    %6221 = vmatprep.subr.mxu0 0.0
    %6222 = vmatpush1.msra.mxu0 0.0
    %6223 = vmatprep.subr.mxu0 0.0
    %6224 = vmatpush1.msra.mxu0 0.0
    %6225 = vmatprep.subr.mxu0 0.0
    %6226 = vmatpush1.msra.mxu0 0.0
    %6227 = vmatprep.subr.mxu0 0.0
    %6228 = vmatpush1.msra.mxu0 0.0
    %6229 = vmatprep.subr.mxu0 0.0
    %6230 = vmatpush1.msra.mxu0 0.0
    %6231 = vmatprep.subr.mxu0 0.0
    %6232 = vmatpush1.msra.mxu0 0.0
    %6233 = vmatprep.subr.mxu0 0.0
    %6234 = vmatpush1.msra.mxu0 0.0
    %6235 = vmatprep.subr.mxu0 0.0
    %6236 = vmatpush1.msra.mxu0 0.0
    %6237 = vmatprep.subr.mxu0 0.0
    %6238 = vmatpush1.msra.mxu0 0.0
    %6239 = vmatprep.subr.mxu0 0.0
    %6240 = vmatpush1.msra.mxu0 0.0
    %6241 = vmatprep.subr.mxu0 0.0
    %6242 = vmatpush1.msra.mxu0 0.0
    %6243 = vmatprep.subr.mxu0 0.0
    %6244 = vmatpush1.msra.mxu0 0.0
    %6245 = vmatprep.subr.mxu0 0.0
    %6246 = vmatpush1.msra.mxu0 0.0
    %6247 = vmatprep.subr.mxu0 0.0
    %6248 = vmatpush1.msra.mxu0 0.0
    %6249 = vmatprep.subr.mxu0 0.0
    %6250 = vmatpush1.msra.mxu0 0.0
    %6251 = vmatprep.subr.mxu0 0.0
    %6252 = vmatpush1.msra.mxu0 0.0
    %6253 = vmatprep.mubr.f32.mxu0 0.0
    %6254 = vmatmul.mubr.f32.gmra.mrb[0].mxu0 %v5951
    %v6255 = vpop.f32.mrb[0].mxu0
    %v6256 = vadd.f32 %v5165, %v6255
    %v6257 = vpop.f32.mrb[0].mxu0
    %6258 = vdwg.mxu0
    %v6259 = vadd.f32 %v6186, %v6256
    %v6260 = vxor.u32 %v6259, 2147483648
    %v6261 = vmul.f32 %v6260, 1.442695
    %v6262 = vpow.pop %v6261
    %v6263 = vadd.f32 %v6262, 1.0
    %v6264 = vrcp.pop %v6263
    %v6265 = vmul.f32 1.0, %v6264
    %6267 = vrot.lane.b32.xlu0 %v6256, 64
    %v6268 = vpop.permute.xlu0 %6267
    %v6270 = vmul.f32 %v6265, %v6268
    %6272 = vrot.lane.b32.xlu0 %v6270, 64
    %v6273 = vpop.permute.xlu0 %6272
    %v6275 = vadd.f32 %v6186, %v6273
    %v6276 = vtanh.pop %v6275
    %v6277 = vsub.f32 1.0, %v6265
    %6279 = vrot.lane.b32.xlu0 %v6276, 96
    %v6280 = vpop.permute.xlu0 %6279
    %v6282 = vmul.f32 %v6277, %v6280
    %v6283 = vmul.f32 %v6265, %v5947
    %v6284 = vadd.f32 %v6282, %v6283
    %6286 = vrot.lane.b32.xlu0 %v6284, 96
    %v6287 = vpop.permute.xlu0 %6286
    %v6288 = vsel %vm2704, %v6287, 0
    %6290 = vmatprep.subr.mxu0 0.0
    %6291 = vmatpush1.msra.mxu0 %v5057
    %6292 = vmatprep.subr.mxu0 0.0
    %6293 = vmatpush1.msra.mxu0 %v5058
    %6294 = vmatprep.subr.mxu0 0.0
    %6295 = vmatpush1.msra.mxu0 %v5059
    %6296 = vmatprep.subr.mxu0 0.0
    %6297 = vmatpush1.msra.mxu0 %v5060
    %6298 = vmatprep.subr.mxu0 0.0
    %6299 = vmatpush1.msra.mxu0 0.0
    %6300 = vmatprep.subr.mxu0 0.0
    %6301 = vmatpush1.msra.mxu0 0.0
    %6302 = vmatprep.subr.mxu0 0.0
    %6303 = vmatpush1.msra.mxu0 0.0
    %6304 = vmatprep.subr.mxu0 0.0
    %6305 = vmatpush1.msra.mxu0 0.0
    %6306 = vmatprep.subr.mxu0 0.0
    %6307 = vmatpush1.msra.mxu0 0.0
    %6308 = vmatprep.subr.mxu0 0.0
    %6309 = vmatpush1.msra.mxu0 0.0
    %6310 = vmatprep.subr.mxu0 0.0
    %6311 = vmatpush1.msra.mxu0 0.0
    %6312 = vmatprep.subr.mxu0 0.0
    %6313 = vmatpush1.msra.mxu0 0.0
    %6314 = vmatprep.subr.mxu0 0.0
    %6315 = vmatpush1.msra.mxu0 0.0
    %6316 = vmatprep.subr.mxu0 0.0
    %6317 = vmatpush1.msra.mxu0 0.0
    %6318 = vmatprep.subr.mxu0 0.0
    %6319 = vmatpush1.msra.mxu0 0.0
    %6320 = vmatprep.subr.mxu0 0.0
    %6321 = vmatpush1.msra.mxu0 0.0
    %6322 = vmatprep.subr.mxu0 0.0
    %6323 = vmatpush1.msra.mxu0 0.0
    %6324 = vmatprep.subr.mxu0 0.0
    %6325 = vmatpush1.msra.mxu0 0.0
    %6326 = vmatprep.subr.mxu0 0.0
    %6327 = vmatpush1.msra.mxu0 0.0
    %6328 = vmatprep.subr.mxu0 0.0
    %6329 = vmatpush1.msra.mxu0 0.0
    %6330 = vmatprep.subr.mxu0 0.0
    %6331 = vmatpush1.msra.mxu0 0.0
    %6332 = vmatprep.subr.mxu0 0.0
    %6333 = vmatpush1.msra.mxu0 0.0
    %6334 = vmatprep.subr.mxu0 0.0
    %6335 = vmatpush1.msra.mxu0 0.0
    %6336 = vmatprep.subr.mxu0 0.0
    %6337 = vmatpush1.msra.mxu0 0.0
    %6338 = vmatprep.subr.mxu0 0.0
    %6339 = vmatpush1.msra.mxu0 0.0
    %6340 = vmatprep.subr.mxu0 0.0
    %6341 = vmatpush1.msra.mxu0 0.0
    %6342 = vmatprep.subr.mxu0 0.0
    %6343 = vmatpush1.msra.mxu0 0.0
    %6344 = vmatprep.subr.mxu0 0.0
    %6345 = vmatpush1.msra.mxu0 0.0
    %6346 = vmatprep.subr.mxu0 0.0
    %6347 = vmatpush1.msra.mxu0 0.0
    %6348 = vmatprep.subr.mxu0 0.0
    %6349 = vmatpush1.msra.mxu0 0.0
    %6350 = vmatprep.subr.mxu0 0.0
    %6351 = vmatpush1.msra.mxu0 0.0
    %6352 = vmatprep.subr.mxu0 0.0
    %6353 = vmatpush1.msra.mxu0 0.0
    %6354 = vmatprep.mubr.f32.mxu0 0.0
    %6355 = vmatmul.mubr.f32.gmra.mrb[0].mxu0 %v6288
    %v6356 = vpop.f32.mrb[0].mxu0
    %v6357 = vadd.f32 %v5272, %v6356
    %v6358 = vpop.f32.mrb[0].mxu0
    %6359 = vdwg.mxu0
    %s6360 = scalar_lea.vmem %s16, 32
    %6361 = vst [vmem:[%s6360] sm:$0xff] %v6357
    %6362 = vmax.xlane.f32.xlu0 %v6357
    %v6363 = vpop.xlane.xlu0 %6362
    %vm6364 = vcmp.eq.f32.partialorder %v6357, %v6363
    %v6365 = vsel %vm6364, %v5080, 128.0
    %6366 = vmin.xlane.f32.xlu0 %v6365
    %v6367 = vpop.xlane.xlu0 %6366
    %vm6368 = vcmp.eq.f32.partialorder %v5080, %v6367
    %v6369 = vsel %vm6368, 1, 0
    %v6370 = vcvt.s32.f32 %v6369
    %6371 = vmatprep.subr.mxu0 0.0
    %6372 = vmatpush1.msra.mxu0 %v5062
    %6373 = vmatprep.subr.mxu0 0.0
    %6374 = vmatpush1.msra.mxu0 %v5063
    %6375 = vmatprep.subr.mxu0 0.0
    %6376 = vmatpush1.msra.mxu0 %v5064
    %6377 = vmatprep.subr.mxu0 0.0
    %6378 = vmatpush1.msra.mxu0 %v5065
    %6379 = vmatprep.subr.mxu0 0.0
    %6380 = vmatpush1.msra.mxu0 %v5066
    %6381 = vmatprep.subr.mxu0 0.0
    %6382 = vmatpush1.msra.mxu0 %v5067
    %6383 = vmatprep.subr.mxu0 0.0
    %6384 = vmatpush1.msra.mxu0 %v5068
    %6385 = vmatprep.subr.mxu0 0.0
    %6386 = vmatpush1.msra.mxu0 %v5069
    %6387 = vmatprep.subr.mxu0 0.0
    %6388 = vmatpush1.msra.mxu0 %v5070
    %6389 = vmatprep.subr.mxu0 0.0
    %6390 = vmatpush1.msra.mxu0 %v5071
    %6391 = vmatprep.subr.mxu0 0.0
    %6392 = vmatpush1.msra.mxu0 %v5072
    %6393 = vmatprep.subr.mxu0 0.0
    %6394 = vmatpush1.msra.mxu0 %v5073
    %6395 = vmatprep.subr.mxu0 0.0
    %6396 = vmatpush1.msra.mxu0 %v5074
    %6397 = vmatprep.subr.mxu0 0.0
    %6398 = vmatpush1.msra.mxu0 %v5075
    %6399 = vmatprep.subr.mxu0 0.0
    %6400 = vmatpush1.msra.mxu0 %v5076
    %6401 = vmatprep.subr.mxu0 0.0
    %6402 = vmatpush1.msra.mxu0 %v5077
    %6403 = vmatprep.subr.mxu0 0.0
    %6404 = vmatpush1.msra.mxu0 0.0
    %6405 = vmatprep.subr.mxu0 0.0
    %6406 = vmatpush1.msra.mxu0 0.0
    %6407 = vmatprep.subr.mxu0 0.0
    %6408 = vmatpush1.msra.mxu0 0.0
    %6409 = vmatprep.subr.mxu0 0.0
    %6410 = vmatpush1.msra.mxu0 0.0
    %6411 = vmatprep.subr.mxu0 0.0
    %6412 = vmatpush1.msra.mxu0 0.0
    %6413 = vmatprep.subr.mxu0 0.0
    %6414 = vmatpush1.msra.mxu0 0.0
    %6415 = vmatprep.subr.mxu0 0.0
    %6416 = vmatpush1.msra.mxu0 0.0
    %6417 = vmatprep.subr.mxu0 0.0
    %6418 = vmatpush1.msra.mxu0 0.0
    %6419 = vmatprep.subr.mxu0 0.0
    %6420 = vmatpush1.msra.mxu0 0.0
    %6421 = vmatprep.subr.mxu0 0.0
    %6422 = vmatpush1.msra.mxu0 0.0
    %6423 = vmatprep.subr.mxu0 0.0
    %6424 = vmatpush1.msra.mxu0 0.0
    %6425 = vmatprep.subr.mxu0 0.0
    %6426 = vmatpush1.msra.mxu0 0.0
    %6427 = vmatprep.subr.mxu0 0.0
    %6428 = vmatpush1.msra.mxu0 0.0
    %6429 = vmatprep.subr.mxu0 0.0
    %6430 = vmatpush1.msra.mxu0 0.0
    %6431 = vmatprep.subr.mxu0 0.0
    %6432 = vmatpush1.msra.mxu0 0.0
    %6433 = vmatprep.subr.mxu0 0.0
    %6434 = vmatpush1.msra.mxu0 0.0
    %6435 = vmatprep.mubr.f32.mxu0 0.0
    %6436 = vmatmul.mubr.f32.gmra.mrb[0].mxu0 %v6370
    %v6437 = vpop.f32.mrb[0].mxu0
    %v6438 = vadd.f32 0.0, %v6437
    %v6439 = vpop.f32.mrb[0].mxu0
    %6440 = vdwg.mxu0
    %s6441 = sld [smem:[#allocation2 + $0x4]]
    %p6442 = scmp.gt.s32.totalorder %s6441, 0
    %s6443 = scalar_select %p6442, 1, 0
    %s6444 = scvt.s32.f32 %s6443
    %s6445 = scalar_lea.vmem %s7, 32
    %v6446 = vld [vmem:[%s6445] sm:$0xff]
    %v6447 = vstv %s6444
    %v6448 = vmul.f32 %v6447, %v6446
    %s6449 = ssub.f32 1.0, %s6444
    %v6450 = vstv %s6449
    %v6451 = vmul.f32 %v6450, %v6438
    %v6452 = vadd.f32 %v6448, %v6451
    %v6454 = vsel %vm2704, %v6452, 0
    %6456 = vmatprep.subr.mxu0 0.0
    %6457 = vmatpush1.msra.mxu0 %v5047
    %6458 = vmatprep.subr.mxu0 0.0
    %6459 = vmatpush1.msra.mxu0 %v5048
    %6460 = vmatprep.subr.mxu0 0.0
    %6461 = vmatpush1.msra.mxu0 %v5049
    %6462 = vmatprep.subr.mxu0 0.0
    %6463 = vmatpush1.msra.mxu0 %v5050
    %6464 = vmatprep.subr.mxu0 0.0
    %6465 = vmatpush1.msra.mxu0 0.0
    %6466 = vmatprep.subr.mxu0 0.0
    %6467 = vmatpush1.msra.mxu0 0.0
    %6468 = vmatprep.subr.mxu0 0.0
    %6469 = vmatpush1.msra.mxu0 0.0
    %6470 = vmatprep.subr.mxu0 0.0
    %6471 = vmatpush1.msra.mxu0 0.0
    %6472 = vmatprep.subr.mxu0 0.0
    %6473 = vmatpush1.msra.mxu0 0.0
    %6474 = vmatprep.subr.mxu0 0.0
    %6475 = vmatpush1.msra.mxu0 0.0
    %6476 = vmatprep.subr.mxu0 0.0
    %6477 = vmatpush1.msra.mxu0 0.0
    %6478 = vmatprep.subr.mxu0 0.0
    %6479 = vmatpush1.msra.mxu0 0.0
    %6480 = vmatprep.subr.mxu0 0.0
    %6481 = vmatpush1.msra.mxu0 0.0
    %6482 = vmatprep.subr.mxu0 0.0
    %6483 = vmatpush1.msra.mxu0 0.0
    %6484 = vmatprep.subr.mxu0 0.0
    %6485 = vmatpush1.msra.mxu0 0.0
    %6486 = vmatprep.subr.mxu0 0.0
    %6487 = vmatpush1.msra.mxu0 0.0
    %6488 = vmatprep.subr.mxu0 0.0
    %6489 = vmatpush1.msra.mxu0 0.0
    %6490 = vmatprep.subr.mxu0 0.0
    %6491 = vmatpush1.msra.mxu0 0.0
    %6492 = vmatprep.subr.mxu0 0.0
    %6493 = vmatpush1.msra.mxu0 0.0
    %6494 = vmatprep.subr.mxu0 0.0
    %6495 = vmatpush1.msra.mxu0 0.0
    %6496 = vmatprep.subr.mxu0 0.0
    %6497 = vmatpush1.msra.mxu0 0.0
    %6498 = vmatprep.subr.mxu0 0.0
    %6499 = vmatpush1.msra.mxu0 0.0
    %6500 = vmatprep.subr.mxu0 0.0
    %6501 = vmatpush1.msra.mxu0 0.0
    %6502 = vmatprep.subr.mxu0 0.0
    %6503 = vmatpush1.msra.mxu0 0.0
    %6504 = vmatprep.subr.mxu0 0.0
    %6505 = vmatpush1.msra.mxu0 0.0
    %6506 = vmatprep.subr.mxu0 0.0
    %6507 = vmatpush1.msra.mxu0 0.0
    %6508 = vmatprep.subr.mxu0 0.0
    %6509 = vmatpush1.msra.mxu0 0.0
    %6510 = vmatprep.subr.mxu0 0.0
    %6511 = vmatpush1.msra.mxu0 0.0
    %6512 = vmatprep.subr.mxu0 0.0
    %6513 = vmatpush1.msra.mxu0 0.0
    %6514 = vmatprep.subr.mxu0 0.0
    %6515 = vmatpush1.msra.mxu0 0.0
    %6516 = vmatprep.subr.mxu0 0.0
    %6517 = vmatpush1.msra.mxu0 0.0
    %6518 = vmatprep.subr.mxu0 0.0
    %6519 = vmatpush1.msra.mxu0 0.0
    %6520 = vmatprep.mubr.f32.mxu0 0.0
    %6521 = vmatmul.mubr.f32.gmra.mrb[0].mxu0 %v6454
    %v6522 = vpop.f32.mrb[0].mxu0
    %v6523 = vadd.f32 %v5086, %v6522
    %v6524 = vpop.f32.mrb[0].mxu0
    %6525 = vdwg.mxu0
    %6526 = vmatprep.subr.mxu0 0.0
    %6527 = vmatpush1.msra.mxu0 %v5051
    %6528 = vmatprep.subr.mxu0 0.0
    %6529 = vmatpush1.msra.mxu0 %v5052
    %6530 = vmatprep.subr.mxu0 0.0
    %6531 = vmatpush1.msra.mxu0 %v5053
    %6532 = vmatprep.subr.mxu0 0.0
    %6533 = vmatpush1.msra.mxu0 %v5054
    %6534 = vmatprep.subr.mxu0 0.0
    %6535 = vmatpush1.msra.mxu0 0.0
    %6536 = vmatprep.subr.mxu0 0.0
    %6537 = vmatpush1.msra.mxu0 0.0
    %6538 = vmatprep.subr.mxu0 0.0
    %6539 = vmatpush1.msra.mxu0 0.0
    %6540 = vmatprep.subr.mxu0 0.0
    %6541 = vmatpush1.msra.mxu0 0.0
    %6542 = vmatprep.subr.mxu0 0.0
    %6543 = vmatpush1.msra.mxu0 0.0
    %6544 = vmatprep.subr.mxu0 0.0
    %6545 = vmatpush1.msra.mxu0 0.0
    %6546 = vmatprep.subr.mxu0 0.0
    %6547 = vmatpush1.msra.mxu0 0.0
    %6548 = vmatprep.subr.mxu0 0.0
    %6549 = vmatpush1.msra.mxu0 0.0
    %6550 = vmatprep.subr.mxu0 0.0
    %6551 = vmatpush1.msra.mxu0 0.0
    %6552 = vmatprep.subr.mxu0 0.0
    %6553 = vmatpush1.msra.mxu0 0.0
    %6554 = vmatprep.subr.mxu0 0.0
    %6555 = vmatpush1.msra.mxu0 0.0
    %6556 = vmatprep.subr.mxu0 0.0
    %6557 = vmatpush1.msra.mxu0 0.0
    %6558 = vmatprep.subr.mxu0 0.0
    %6559 = vmatpush1.msra.mxu0 0.0
    %6560 = vmatprep.subr.mxu0 0.0
    %6561 = vmatpush1.msra.mxu0 0.0
    %6562 = vmatprep.subr.mxu0 0.0
    %6563 = vmatpush1.msra.mxu0 0.0
    %6564 = vmatprep.subr.mxu0 0.0
    %6565 = vmatpush1.msra.mxu0 0.0
    %6566 = vmatprep.subr.mxu0 0.0
    %6567 = vmatpush1.msra.mxu0 0.0
    %6568 = vmatprep.subr.mxu0 0.0
    %6569 = vmatpush1.msra.mxu0 0.0
    %6570 = vmatprep.subr.mxu0 0.0
    %6571 = vmatpush1.msra.mxu0 0.0
    %6572 = vmatprep.subr.mxu0 0.0
    %6573 = vmatpush1.msra.mxu0 0.0
    %6574 = vmatprep.subr.mxu0 0.0
    %6575 = vmatpush1.msra.mxu0 0.0
    %6576 = vmatprep.subr.mxu0 0.0
    %6577 = vmatpush1.msra.mxu0 0.0
    %6578 = vmatprep.subr.mxu0 0.0
    %6579 = vmatpush1.msra.mxu0 0.0
    %6580 = vmatprep.subr.mxu0 0.0
    %6581 = vmatpush1.msra.mxu0 0.0
    %6582 = vmatprep.subr.mxu0 0.0
    %6583 = vmatpush1.msra.mxu0 0.0
    %6584 = vmatprep.subr.mxu0 0.0
    %6585 = vmatpush1.msra.mxu0 0.0
    %6586 = vmatprep.subr.mxu0 0.0
    %6587 = vmatpush1.msra.mxu0 0.0
    %6588 = vmatprep.subr.mxu0 0.0
    %6589 = vmatpush1.msra.mxu0 0.0
    %6590 = vmatprep.mubr.f32.mxu0 0.0
    %6591 = vmatmul.mubr.f32.gmra.mrb[0].mxu0 %v6288
    %v6592 = vpop.f32.mrb[0].mxu0
    %v6593 = vadd.f32 %v5165, %v6592
    %v6594 = vpop.f32.mrb[0].mxu0
    %6595 = vdwg.mxu0
    %v6596 = vadd.f32 %v6523, %v6593
    %v6597 = vxor.u32 %v6596, 2147483648
    %v6598 = vmul.f32 %v6597, 1.442695
    %v6599 = vpow.pop %v6598
    %v6600 = vadd.f32 %v6599, 1.0
    %v6601 = vrcp.pop %v6600
    %v6602 = vmul.f32 1.0, %v6601
    %6604 = vrot.lane.b32.xlu0 %v6593, 64
    %v6605 = vpop.permute.xlu0 %6604
    %v6607 = vmul.f32 %v6602, %v6605
    %6609 = vrot.lane.b32.xlu0 %v6607, 64
    %v6610 = vpop.permute.xlu0 %6609
    %v6612 = vadd.f32 %v6523, %v6610
    %v6613 = vtanh.pop %v6612
    %v6614 = vsub.f32 1.0, %v6602
    %6616 = vrot.lane.b32.xlu0 %v6613, 96
    %v6617 = vpop.permute.xlu0 %6616
    %v6619 = vmul.f32 %v6614, %v6617
    %v6620 = vmul.f32 %v6602, %v6284
    %v6621 = vadd.f32 %v6619, %v6620
    %6623 = vrot.lane.b32.xlu0 %v6621, 96
    %v6624 = vpop.permute.xlu0 %6623
    %v6625 = vsel %vm2704, %v6624, 0
    %6627 = vmatprep.subr.mxu0 0.0
    %6628 = vmatpush1.msra.mxu0 %v5057
    %6629 = vmatprep.subr.mxu0 0.0
    %6630 = vmatpush1.msra.mxu0 %v5058
    %6631 = vmatprep.subr.mxu0 0.0
    %6632 = vmatpush1.msra.mxu0 %v5059
    %6633 = vmatprep.subr.mxu0 0.0
    %6634 = vmatpush1.msra.mxu0 %v5060
    %6635 = vmatprep.subr.mxu0 0.0
    %6636 = vmatpush1.msra.mxu0 0.0
    %6637 = vmatprep.subr.mxu0 0.0
    %6638 = vmatpush1.msra.mxu0 0.0
    %6639 = vmatprep.subr.mxu0 0.0
    %6640 = vmatpush1.msra.mxu0 0.0
    %6641 = vmatprep.subr.mxu0 0.0
    %6642 = vmatpush1.msra.mxu0 0.0
    %6643 = vmatprep.subr.mxu0 0.0
    %6644 = vmatpush1.msra.mxu0 0.0
    %6645 = vmatprep.subr.mxu0 0.0
    %6646 = vmatpush1.msra.mxu0 0.0
    %6647 = vmatprep.subr.mxu0 0.0
    %6648 = vmatpush1.msra.mxu0 0.0
    %6649 = vmatprep.subr.mxu0 0.0
    %6650 = vmatpush1.msra.mxu0 0.0
    %6651 = vmatprep.subr.mxu0 0.0
    %6652 = vmatpush1.msra.mxu0 0.0
    %6653 = vmatprep.subr.mxu0 0.0
    %6654 = vmatpush1.msra.mxu0 0.0
    %6655 = vmatprep.subr.mxu0 0.0
    %6656 = vmatpush1.msra.mxu0 0.0
    %6657 = vmatprep.subr.mxu0 0.0
    %6658 = vmatpush1.msra.mxu0 0.0
    %6659 = vmatprep.subr.mxu0 0.0
    %6660 = vmatpush1.msra.mxu0 0.0
    %6661 = vmatprep.subr.mxu0 0.0
    %6662 = vmatpush1.msra.mxu0 0.0
    %6663 = vmatprep.subr.mxu0 0.0
    %6664 = vmatpush1.msra.mxu0 0.0
    %6665 = vmatprep.subr.mxu0 0.0
    %6666 = vmatpush1.msra.mxu0 0.0
    %6667 = vmatprep.subr.mxu0 0.0
    %6668 = vmatpush1.msra.mxu0 0.0
    %6669 = vmatprep.subr.mxu0 0.0
    %6670 = vmatpush1.msra.mxu0 0.0
    %6671 = vmatprep.subr.mxu0 0.0
    %6672 = vmatpush1.msra.mxu0 0.0
    %6673 = vmatprep.subr.mxu0 0.0
    %6674 = vmatpush1.msra.mxu0 0.0
    %6675 = vmatprep.subr.mxu0 0.0
    %6676 = vmatpush1.msra.mxu0 0.0
    %6677 = vmatprep.subr.mxu0 0.0
    %6678 = vmatpush1.msra.mxu0 0.0
    %6679 = vmatprep.subr.mxu0 0.0
    %6680 = vmatpush1.msra.mxu0 0.0
    %6681 = vmatprep.subr.mxu0 0.0
    %6682 = vmatpush1.msra.mxu0 0.0
    %6683 = vmatprep.subr.mxu0 0.0
    %6684 = vmatpush1.msra.mxu0 0.0
    %6685 = vmatprep.subr.mxu0 0.0
    %6686 = vmatpush1.msra.mxu0 0.0
    %6687 = vmatprep.subr.mxu0 0.0
    %6688 = vmatpush1.msra.mxu0 0.0
    %6689 = vmatprep.subr.mxu0 0.0
    %6690 = vmatpush1.msra.mxu0 0.0
    %6691 = vmatprep.mubr.f32.mxu0 0.0
    %6692 = vmatmul.mubr.f32.gmra.mrb[0].mxu0 %v6625
    %v6693 = vpop.f32.mrb[0].mxu0
    %v6694 = vadd.f32 %v5272, %v6693
    %v6695 = vpop.f32.mrb[0].mxu0
    %6696 = vdwg.mxu0
    %s6697 = scalar_lea.vmem %s16, 40
    %6698 = vst [vmem:[%s6697] sm:$0xff] %v6694
    %6699 = vmax.xlane.f32.xlu0 %v6694
    %v6700 = vpop.xlane.xlu0 %6699
    %vm6701 = vcmp.eq.f32.partialorder %v6694, %v6700
    %v6702 = vsel %vm6701, %v5080, 128.0
    %6703 = vmin.xlane.f32.xlu0 %v6702
    %v6704 = vpop.xlane.xlu0 %6703
    %vm6705 = vcmp.eq.f32.partialorder %v5080, %v6704
    %v6706 = vsel %vm6705, 1, 0
    %v6707 = vcvt.s32.f32 %v6706
    %6708 = vmatprep.subr.mxu0 0.0
    %6709 = vmatpush1.msra.mxu0 %v5062
    %6710 = vmatprep.subr.mxu0 0.0
    %6711 = vmatpush1.msra.mxu0 %v5063
    %6712 = vmatprep.subr.mxu0 0.0
    %6713 = vmatpush1.msra.mxu0 %v5064
    %6714 = vmatprep.subr.mxu0 0.0
    %6715 = vmatpush1.msra.mxu0 %v5065
    %6716 = vmatprep.subr.mxu0 0.0
    %6717 = vmatpush1.msra.mxu0 %v5066
    %6718 = vmatprep.subr.mxu0 0.0
    %6719 = vmatpush1.msra.mxu0 %v5067
    %6720 = vmatprep.subr.mxu0 0.0
    %6721 = vmatpush1.msra.mxu0 %v5068
    %6722 = vmatprep.subr.mxu0 0.0
    %6723 = vmatpush1.msra.mxu0 %v5069
    %6724 = vmatprep.subr.mxu0 0.0
    %6725 = vmatpush1.msra.mxu0 %v5070
    %6726 = vmatprep.subr.mxu0 0.0
    %6727 = vmatpush1.msra.mxu0 %v5071
    %6728 = vmatprep.subr.mxu0 0.0
    %6729 = vmatpush1.msra.mxu0 %v5072
    %6730 = vmatprep.subr.mxu0 0.0
    %6731 = vmatpush1.msra.mxu0 %v5073
    %6732 = vmatprep.subr.mxu0 0.0
    %6733 = vmatpush1.msra.mxu0 %v5074
    %6734 = vmatprep.subr.mxu0 0.0
    %6735 = vmatpush1.msra.mxu0 %v5075
    %6736 = vmatprep.subr.mxu0 0.0
    %6737 = vmatpush1.msra.mxu0 %v5076
    %6738 = vmatprep.subr.mxu0 0.0
    %6739 = vmatpush1.msra.mxu0 %v5077
    %6740 = vmatprep.subr.mxu0 0.0
    %6741 = vmatpush1.msra.mxu0 0.0
    %6742 = vmatprep.subr.mxu0 0.0
    %6743 = vmatpush1.msra.mxu0 0.0
    %6744 = vmatprep.subr.mxu0 0.0
    %6745 = vmatpush1.msra.mxu0 0.0
    %6746 = vmatprep.subr.mxu0 0.0
    %6747 = vmatpush1.msra.mxu0 0.0
    %6748 = vmatprep.subr.mxu0 0.0
    %6749 = vmatpush1.msra.mxu0 0.0
    %6750 = vmatprep.subr.mxu0 0.0
    %6751 = vmatpush1.msra.mxu0 0.0
    %6752 = vmatprep.subr.mxu0 0.0
    %6753 = vmatpush1.msra.mxu0 0.0
    %6754 = vmatprep.subr.mxu0 0.0
    %6755 = vmatpush1.msra.mxu0 0.0
    %6756 = vmatprep.subr.mxu0 0.0
    %6757 = vmatpush1.msra.mxu0 0.0
    %6758 = vmatprep.subr.mxu0 0.0
    %6759 = vmatpush1.msra.mxu0 0.0
    %6760 = vmatprep.subr.mxu0 0.0
    %6761 = vmatpush1.msra.mxu0 0.0
    %6762 = vmatprep.subr.mxu0 0.0
    %6763 = vmatpush1.msra.mxu0 0.0
    %6764 = vmatprep.subr.mxu0 0.0
    %6765 = vmatpush1.msra.mxu0 0.0
    %6766 = vmatprep.subr.mxu0 0.0
    %6767 = vmatpush1.msra.mxu0 0.0
    %6768 = vmatprep.subr.mxu0 0.0
    %6769 = vmatpush1.msra.mxu0 0.0
    %6770 = vmatprep.subr.mxu0 0.0
    %6771 = vmatpush1.msra.mxu0 0.0
    %6772 = vmatprep.mubr.f32.mxu0 0.0
    %6773 = vmatmul.mubr.f32.gmra.mrb[0].mxu0 %v6707
    %v6774 = vpop.f32.mrb[0].mxu0
    %v6775 = vadd.f32 0.0, %v6774
    %v6776 = vpop.f32.mrb[0].mxu0
    %6777 = vdwg.mxu0
    %s6778 = sld [smem:[#allocation2 + $0x5]]
    %p6779 = scmp.gt.s32.totalorder %s6778, 0
    %s6780 = scalar_select %p6779, 1, 0
    %s6781 = scvt.s32.f32 %s6780
    %s6782 = scalar_lea.vmem %s7, 40
    %v6783 = vld [vmem:[%s6782] sm:$0xff]
    %v6784 = vstv %s6781
    %v6785 = vmul.f32 %v6784, %v6783
    %s6786 = ssub.f32 1.0, %s6781
    %v6787 = vstv %s6786
    %v6788 = vmul.f32 %v6787, %v6775
    %v6789 = vadd.f32 %v6785, %v6788
    %v6791 = vsel %vm2704, %v6789, 0
    %6793 = vmatprep.subr.mxu0 0.0
    %6794 = vmatpush1.msra.mxu0 %v5047
    %6795 = vmatprep.subr.mxu0 0.0
    %6796 = vmatpush1.msra.mxu0 %v5048
    %6797 = vmatprep.subr.mxu0 0.0
    %6798 = vmatpush1.msra.mxu0 %v5049
    %6799 = vmatprep.subr.mxu0 0.0
    %6800 = vmatpush1.msra.mxu0 %v5050
    %6801 = vmatprep.subr.mxu0 0.0
    %6802 = vmatpush1.msra.mxu0 0.0
    %6803 = vmatprep.subr.mxu0 0.0
    %6804 = vmatpush1.msra.mxu0 0.0
    %6805 = vmatprep.subr.mxu0 0.0
    %6806 = vmatpush1.msra.mxu0 0.0
    %6807 = vmatprep.subr.mxu0 0.0
    %6808 = vmatpush1.msra.mxu0 0.0
    %6809 = vmatprep.subr.mxu0 0.0
    %6810 = vmatpush1.msra.mxu0 0.0
    %6811 = vmatprep.subr.mxu0 0.0
    %6812 = vmatpush1.msra.mxu0 0.0
    %6813 = vmatprep.subr.mxu0 0.0
    %6814 = vmatpush1.msra.mxu0 0.0
    %6815 = vmatprep.subr.mxu0 0.0
    %6816 = vmatpush1.msra.mxu0 0.0
    %6817 = vmatprep.subr.mxu0 0.0
    %6818 = vmatpush1.msra.mxu0 0.0
    %6819 = vmatprep.subr.mxu0 0.0
    %6820 = vmatpush1.msra.mxu0 0.0
    %6821 = vmatprep.subr.mxu0 0.0
    %6822 = vmatpush1.msra.mxu0 0.0
    %6823 = vmatprep.subr.mxu0 0.0
    %6824 = vmatpush1.msra.mxu0 0.0
    %6825 = vmatprep.subr.mxu0 0.0
    %6826 = vmatpush1.msra.mxu0 0.0
    %6827 = vmatprep.subr.mxu0 0.0
    %6828 = vmatpush1.msra.mxu0 0.0
    %6829 = vmatprep.subr.mxu0 0.0
    %6830 = vmatpush1.msra.mxu0 0.0
    %6831 = vmatprep.subr.mxu0 0.0
    %6832 = vmatpush1.msra.mxu0 0.0
    %6833 = vmatprep.subr.mxu0 0.0
    %6834 = vmatpush1.msra.mxu0 0.0
    %6835 = vmatprep.subr.mxu0 0.0
    %6836 = vmatpush1.msra.mxu0 0.0
    %6837 = vmatprep.subr.mxu0 0.0
    %6838 = vmatpush1.msra.mxu0 0.0
    %6839 = vmatprep.subr.mxu0 0.0
    %6840 = vmatpush1.msra.mxu0 0.0
    %6841 = vmatprep.subr.mxu0 0.0
    %6842 = vmatpush1.msra.mxu0 0.0
    %6843 = vmatprep.subr.mxu0 0.0
    %6844 = vmatpush1.msra.mxu0 0.0
    %6845 = vmatprep.subr.mxu0 0.0
    %6846 = vmatpush1.msra.mxu0 0.0
    %6847 = vmatprep.subr.mxu0 0.0
    %6848 = vmatpush1.msra.mxu0 0.0
    %6849 = vmatprep.subr.mxu0 0.0
    %6850 = vmatpush1.msra.mxu0 0.0
    %6851 = vmatprep.subr.mxu0 0.0
    %6852 = vmatpush1.msra.mxu0 0.0
    %6853 = vmatprep.subr.mxu0 0.0
    %6854 = vmatpush1.msra.mxu0 0.0
    %6855 = vmatprep.subr.mxu0 0.0
    %6856 = vmatpush1.msra.mxu0 0.0
    %6857 = vmatprep.mubr.f32.mxu0 0.0
    %6858 = vmatmul.mubr.f32.gmra.mrb[0].mxu0 %v6791
    %v6859 = vpop.f32.mrb[0].mxu0
    %v6860 = vadd.f32 %v5086, %v6859
    %v6861 = vpop.f32.mrb[0].mxu0
    %6862 = vdwg.mxu0
    %6863 = vmatprep.subr.mxu0 0.0
    %6864 = vmatpush1.msra.mxu0 %v5051
    %6865 = vmatprep.subr.mxu0 0.0
    %6866 = vmatpush1.msra.mxu0 %v5052
    %6867 = vmatprep.subr.mxu0 0.0
    %6868 = vmatpush1.msra.mxu0 %v5053
    %6869 = vmatprep.subr.mxu0 0.0
    %6870 = vmatpush1.msra.mxu0 %v5054
    %6871 = vmatprep.subr.mxu0 0.0
    %6872 = vmatpush1.msra.mxu0 0.0
    %6873 = vmatprep.subr.mxu0 0.0
    %6874 = vmatpush1.msra.mxu0 0.0
    %6875 = vmatprep.subr.mxu0 0.0
    %6876 = vmatpush1.msra.mxu0 0.0
    %6877 = vmatprep.subr.mxu0 0.0
    %6878 = vmatpush1.msra.mxu0 0.0
    %6879 = vmatprep.subr.mxu0 0.0
    %6880 = vmatpush1.msra.mxu0 0.0
    %6881 = vmatprep.subr.mxu0 0.0
    %6882 = vmatpush1.msra.mxu0 0.0
    %6883 = vmatprep.subr.mxu0 0.0
    %6884 = vmatpush1.msra.mxu0 0.0
    %6885 = vmatprep.subr.mxu0 0.0
    %6886 = vmatpush1.msra.mxu0 0.0
    %6887 = vmatprep.subr.mxu0 0.0
    %6888 = vmatpush1.msra.mxu0 0.0
    %6889 = vmatprep.subr.mxu0 0.0
    %6890 = vmatpush1.msra.mxu0 0.0
    %6891 = vmatprep.subr.mxu0 0.0
    %6892 = vmatpush1.msra.mxu0 0.0
    %6893 = vmatprep.subr.mxu0 0.0
    %6894 = vmatpush1.msra.mxu0 0.0
    %6895 = vmatprep.subr.mxu0 0.0
    %6896 = vmatpush1.msra.mxu0 0.0
    %6897 = vmatprep.subr.mxu0 0.0
    %6898 = vmatpush1.msra.mxu0 0.0
    %6899 = vmatprep.subr.mxu0 0.0
    %6900 = vmatpush1.msra.mxu0 0.0
    %6901 = vmatprep.subr.mxu0 0.0
    %6902 = vmatpush1.msra.mxu0 0.0
    %6903 = vmatprep.subr.mxu0 0.0
    %6904 = vmatpush1.msra.mxu0 0.0
    %6905 = vmatprep.subr.mxu0 0.0
    %6906 = vmatpush1.msra.mxu0 0.0
    %6907 = vmatprep.subr.mxu0 0.0
    %6908 = vmatpush1.msra.mxu0 0.0
    %6909 = vmatprep.subr.mxu0 0.0
    %6910 = vmatpush1.msra.mxu0 0.0
    %6911 = vmatprep.subr.mxu0 0.0
    %6912 = vmatpush1.msra.mxu0 0.0
    %6913 = vmatprep.subr.mxu0 0.0
    %6914 = vmatpush1.msra.mxu0 0.0
    %6915 = vmatprep.subr.mxu0 0.0
    %6916 = vmatpush1.msra.mxu0 0.0
    %6917 = vmatprep.subr.mxu0 0.0
    %6918 = vmatpush1.msra.mxu0 0.0
    %6919 = vmatprep.subr.mxu0 0.0
    %6920 = vmatpush1.msra.mxu0 0.0
    %6921 = vmatprep.subr.mxu0 0.0
    %6922 = vmatpush1.msra.mxu0 0.0
    %6923 = vmatprep.subr.mxu0 0.0
    %6924 = vmatpush1.msra.mxu0 0.0
    %6925 = vmatprep.subr.mxu0 0.0
    %6926 = vmatpush1.msra.mxu0 0.0
    %6927 = vmatprep.mubr.f32.mxu0 0.0
    %6928 = vmatmul.mubr.f32.gmra.mrb[0].mxu0 %v6625
    %v6929 = vpop.f32.mrb[0].mxu0
    %v6930 = vadd.f32 %v5165, %v6929
    %v6931 = vpop.f32.mrb[0].mxu0
    %6932 = vdwg.mxu0
    %v6933 = vadd.f32 %v6860, %v6930
    %v6934 = vxor.u32 %v6933, 2147483648
    %v6935 = vmul.f32 %v6934, 1.442695
    %v6936 = vpow.pop %v6935
    %v6937 = vadd.f32 %v6936, 1.0
    %v6938 = vrcp.pop %v6937
    %v6939 = vmul.f32 1.0, %v6938
    %6941 = vrot.lane.b32.xlu0 %v6930, 64
    %v6942 = vpop.permute.xlu0 %6941
    %v6944 = vmul.f32 %v6939, %v6942
    %6946 = vrot.lane.b32.xlu0 %v6944, 64
    %v6947 = vpop.permute.xlu0 %6946
    %v6949 = vadd.f32 %v6860, %v6947
    %v6950 = vtanh.pop %v6949
    %v6951 = vsub.f32 1.0, %v6939
    %6953 = vrot.lane.b32.xlu0 %v6950, 96
    %v6954 = vpop.permute.xlu0 %6953
    %v6956 = vmul.f32 %v6951, %v6954
    %v6957 = vmul.f32 %v6939, %v6621
    %v6958 = vadd.f32 %v6956, %v6957
    %6960 = vrot.lane.b32.xlu0 %v6958, 96
    %v6961 = vpop.permute.xlu0 %6960
    %v6962 = vsel %vm2704, %v6961, 0
    %6964 = vmatprep.subr.mxu0 0.0
    %6965 = vmatpush1.msra.mxu0 %v5057
    %6966 = vmatprep.subr.mxu0 0.0
    %6967 = vmatpush1.msra.mxu0 %v5058
    %6968 = vmatprep.subr.mxu0 0.0
    %6969 = vmatpush1.msra.mxu0 %v5059
    %6970 = vmatprep.subr.mxu0 0.0
    %6971 = vmatpush1.msra.mxu0 %v5060
    %6972 = vmatprep.subr.mxu0 0.0
    %6973 = vmatpush1.msra.mxu0 0.0
    %6974 = vmatprep.subr.mxu0 0.0
    %6975 = vmatpush1.msra.mxu0 0.0
    %6976 = vmatprep.subr.mxu0 0.0
    %6977 = vmatpush1.msra.mxu0 0.0
    %6978 = vmatprep.subr.mxu0 0.0
    %6979 = vmatpush1.msra.mxu0 0.0
    %6980 = vmatprep.subr.mxu0 0.0
    %6981 = vmatpush1.msra.mxu0 0.0
    %6982 = vmatprep.subr.mxu0 0.0
    %6983 = vmatpush1.msra.mxu0 0.0
    %6984 = vmatprep.subr.mxu0 0.0
    %6985 = vmatpush1.msra.mxu0 0.0
    %6986 = vmatprep.subr.mxu0 0.0
    %6987 = vmatpush1.msra.mxu0 0.0
    %6988 = vmatprep.subr.mxu0 0.0
    %6989 = vmatpush1.msra.mxu0 0.0
    %6990 = vmatprep.subr.mxu0 0.0
    %6991 = vmatpush1.msra.mxu0 0.0
    %6992 = vmatprep.subr.mxu0 0.0
    %6993 = vmatpush1.msra.mxu0 0.0
    %6994 = vmatprep.subr.mxu0 0.0
    %6995 = vmatpush1.msra.mxu0 0.0
    %6996 = vmatprep.subr.mxu0 0.0
    %6997 = vmatpush1.msra.mxu0 0.0
    %6998 = vmatprep.subr.mxu0 0.0
    %6999 = vmatpush1.msra.mxu0 0.0
    %7000 = vmatprep.subr.mxu0 0.0
    %7001 = vmatpush1.msra.mxu0 0.0
    %7002 = vmatprep.subr.mxu0 0.0
    %7003 = vmatpush1.msra.mxu0 0.0
    %7004 = vmatprep.subr.mxu0 0.0
    %7005 = vmatpush1.msra.mxu0 0.0
    %7006 = vmatprep.subr.mxu0 0.0
    %7007 = vmatpush1.msra.mxu0 0.0
    %7008 = vmatprep.subr.mxu0 0.0
    %7009 = vmatpush1.msra.mxu0 0.0
    %7010 = vmatprep.subr.mxu0 0.0
    %7011 = vmatpush1.msra.mxu0 0.0
    %7012 = vmatprep.subr.mxu0 0.0
    %7013 = vmatpush1.msra.mxu0 0.0
    %7014 = vmatprep.subr.mxu0 0.0
    %7015 = vmatpush1.msra.mxu0 0.0
    %7016 = vmatprep.subr.mxu0 0.0
    %7017 = vmatpush1.msra.mxu0 0.0
    %7018 = vmatprep.subr.mxu0 0.0
    %7019 = vmatpush1.msra.mxu0 0.0
    %7020 = vmatprep.subr.mxu0 0.0
    %7021 = vmatpush1.msra.mxu0 0.0
    %7022 = vmatprep.subr.mxu0 0.0
    %7023 = vmatpush1.msra.mxu0 0.0
    %7024 = vmatprep.subr.mxu0 0.0
    %7025 = vmatpush1.msra.mxu0 0.0
    %7026 = vmatprep.subr.mxu0 0.0
    %7027 = vmatpush1.msra.mxu0 0.0
    %7028 = vmatprep.mubr.f32.mxu0 0.0
    %7029 = vmatmul.mubr.f32.gmra.mrb[0].mxu0 %v6962
    %v7030 = vpop.f32.mrb[0].mxu0
    %v7031 = vadd.f32 %v5272, %v7030
    %v7032 = vpop.f32.mrb[0].mxu0
    %7033 = vdwg.mxu0
    %s7034 = scalar_lea.vmem %s16, 48
    %7035 = vst [vmem:[%s7034] sm:$0xff] %v7031
    %7036 = vmax.xlane.f32.xlu0 %v7031
    %v7037 = vpop.xlane.xlu0 %7036
    %vm7038 = vcmp.eq.f32.partialorder %v7031, %v7037
    %v7039 = vsel %vm7038, %v5080, 128.0
    %7040 = vmin.xlane.f32.xlu0 %v7039
    %v7041 = vpop.xlane.xlu0 %7040
    %vm7042 = vcmp.eq.f32.partialorder %v5080, %v7041
    %v7043 = vsel %vm7042, 1, 0
    %v7044 = vcvt.s32.f32 %v7043
    %7045 = vmatprep.subr.mxu0 0.0
    %7046 = vmatpush1.msra.mxu0 %v5062
    %7047 = vmatprep.subr.mxu0 0.0
    %7048 = vmatpush1.msra.mxu0 %v5063
    %7049 = vmatprep.subr.mxu0 0.0
    %7050 = vmatpush1.msra.mxu0 %v5064
    %7051 = vmatprep.subr.mxu0 0.0
    %7052 = vmatpush1.msra.mxu0 %v5065
    %7053 = vmatprep.subr.mxu0 0.0
    %7054 = vmatpush1.msra.mxu0 %v5066
    %7055 = vmatprep.subr.mxu0 0.0
    %7056 = vmatpush1.msra.mxu0 %v5067
    %7057 = vmatprep.subr.mxu0 0.0
    %7058 = vmatpush1.msra.mxu0 %v5068
    %7059 = vmatprep.subr.mxu0 0.0
    %7060 = vmatpush1.msra.mxu0 %v5069
    %7061 = vmatprep.subr.mxu0 0.0
    %7062 = vmatpush1.msra.mxu0 %v5070
    %7063 = vmatprep.subr.mxu0 0.0
    %7064 = vmatpush1.msra.mxu0 %v5071
    %7065 = vmatprep.subr.mxu0 0.0
    %7066 = vmatpush1.msra.mxu0 %v5072
    %7067 = vmatprep.subr.mxu0 0.0
    %7068 = vmatpush1.msra.mxu0 %v5073
    %7069 = vmatprep.subr.mxu0 0.0
    %7070 = vmatpush1.msra.mxu0 %v5074
    %7071 = vmatprep.subr.mxu0 0.0
    %7072 = vmatpush1.msra.mxu0 %v5075
    %7073 = vmatprep.subr.mxu0 0.0
    %7074 = vmatpush1.msra.mxu0 %v5076
    %7075 = vmatprep.subr.mxu0 0.0
    %7076 = vmatpush1.msra.mxu0 %v5077
    %7077 = vmatprep.subr.mxu0 0.0
    %7078 = vmatpush1.msra.mxu0 0.0
    %7079 = vmatprep.subr.mxu0 0.0
    %7080 = vmatpush1.msra.mxu0 0.0
    %7081 = vmatprep.subr.mxu0 0.0
    %7082 = vmatpush1.msra.mxu0 0.0
    %7083 = vmatprep.subr.mxu0 0.0
    %7084 = vmatpush1.msra.mxu0 0.0
    %7085 = vmatprep.subr.mxu0 0.0
    %7086 = vmatpush1.msra.mxu0 0.0
    %7087 = vmatprep.subr.mxu0 0.0
    %7088 = vmatpush1.msra.mxu0 0.0
    %7089 = vmatprep.subr.mxu0 0.0
    %7090 = vmatpush1.msra.mxu0 0.0
    %7091 = vmatprep.subr.mxu0 0.0
    %7092 = vmatpush1.msra.mxu0 0.0
    %7093 = vmatprep.subr.mxu0 0.0
    %7094 = vmatpush1.msra.mxu0 0.0
    %7095 = vmatprep.subr.mxu0 0.0
    %7096 = vmatpush1.msra.mxu0 0.0
    %7097 = vmatprep.subr.mxu0 0.0
    %7098 = vmatpush1.msra.mxu0 0.0
    %7099 = vmatprep.subr.mxu0 0.0
    %7100 = vmatpush1.msra.mxu0 0.0
    %7101 = vmatprep.subr.mxu0 0.0
    %7102 = vmatpush1.msra.mxu0 0.0
    %7103 = vmatprep.subr.mxu0 0.0
    %7104 = vmatpush1.msra.mxu0 0.0
    %7105 = vmatprep.subr.mxu0 0.0
    %7106 = vmatpush1.msra.mxu0 0.0
    %7107 = vmatprep.subr.mxu0 0.0
    %7108 = vmatpush1.msra.mxu0 0.0
    %7109 = vmatprep.mubr.f32.mxu0 0.0
    %7110 = vmatmul.mubr.f32.gmra.mrb[0].mxu0 %v7044
    %v7111 = vpop.f32.mrb[0].mxu0
    %v7112 = vadd.f32 0.0, %v7111
    %v7113 = vpop.f32.mrb[0].mxu0
    %7114 = vdwg.mxu0
    %s7115 = sld [smem:[#allocation2 + $0x6]]
    %p7116 = scmp.gt.s32.totalorder %s7115, 0
    %s7117 = scalar_select %p7116, 1, 0
    %s7118 = scvt.s32.f32 %s7117
    %s7119 = scalar_lea.vmem %s7, 48
    %v7120 = vld [vmem:[%s7119] sm:$0xff]
    %v7121 = vstv %s7118
    %v7122 = vmul.f32 %v7121, %v7120
    %s7123 = ssub.f32 1.0, %s7118
    %v7124 = vstv %s7123
    %v7125 = vmul.f32 %v7124, %v7112
    %v7126 = vadd.f32 %v7122, %v7125
    %v7128 = vsel %vm2704, %v7126, 0
    %7130 = vmatprep.subr.mxu0 0.0
    %7131 = vmatpush1.msra.mxu0 %v5047
    %7132 = vmatprep.subr.mxu0 0.0
    %7133 = vmatpush1.msra.mxu0 %v5048
    %7134 = vmatprep.subr.mxu0 0.0
    %7135 = vmatpush1.msra.mxu0 %v5049
    %7136 = vmatprep.subr.mxu0 0.0
    %7137 = vmatpush1.msra.mxu0 %v5050
    %7138 = vmatprep.subr.mxu0 0.0
    %7139 = vmatpush1.msra.mxu0 0.0
    %7140 = vmatprep.subr.mxu0 0.0
    %7141 = vmatpush1.msra.mxu0 0.0
    %7142 = vmatprep.subr.mxu0 0.0
    %7143 = vmatpush1.msra.mxu0 0.0
    %7144 = vmatprep.subr.mxu0 0.0
    %7145 = vmatpush1.msra.mxu0 0.0
    %7146 = vmatprep.subr.mxu0 0.0
    %7147 = vmatpush1.msra.mxu0 0.0
    %7148 = vmatprep.subr.mxu0 0.0
    %7149 = vmatpush1.msra.mxu0 0.0
    %7150 = vmatprep.subr.mxu0 0.0
    %7151 = vmatpush1.msra.mxu0 0.0
    %7152 = vmatprep.subr.mxu0 0.0
    %7153 = vmatpush1.msra.mxu0 0.0
    %7154 = vmatprep.subr.mxu0 0.0
    %7155 = vmatpush1.msra.mxu0 0.0
    %7156 = vmatprep.subr.mxu0 0.0
    %7157 = vmatpush1.msra.mxu0 0.0
    %7158 = vmatprep.subr.mxu0 0.0
    %7159 = vmatpush1.msra.mxu0 0.0
    %7160 = vmatprep.subr.mxu0 0.0
    %7161 = vmatpush1.msra.mxu0 0.0
    %7162 = vmatprep.subr.mxu0 0.0
    %7163 = vmatpush1.msra.mxu0 0.0
    %7164 = vmatprep.subr.mxu0 0.0
    %7165 = vmatpush1.msra.mxu0 0.0
    %7166 = vmatprep.subr.mxu0 0.0
    %7167 = vmatpush1.msra.mxu0 0.0
    %7168 = vmatprep.subr.mxu0 0.0
    %7169 = vmatpush1.msra.mxu0 0.0
    %7170 = vmatprep.subr.mxu0 0.0
    %7171 = vmatpush1.msra.mxu0 0.0
    %7172 = vmatprep.subr.mxu0 0.0
    %7173 = vmatpush1.msra.mxu0 0.0
    %7174 = vmatprep.subr.mxu0 0.0
    %7175 = vmatpush1.msra.mxu0 0.0
    %7176 = vmatprep.subr.mxu0 0.0
    %7177 = vmatpush1.msra.mxu0 0.0
    %7178 = vmatprep.subr.mxu0 0.0
    %7179 = vmatpush1.msra.mxu0 0.0
    %7180 = vmatprep.subr.mxu0 0.0
    %7181 = vmatpush1.msra.mxu0 0.0
    %7182 = vmatprep.subr.mxu0 0.0
    %7183 = vmatpush1.msra.mxu0 0.0
    %7184 = vmatprep.subr.mxu0 0.0
    %7185 = vmatpush1.msra.mxu0 0.0
    %7186 = vmatprep.subr.mxu0 0.0
    %7187 = vmatpush1.msra.mxu0 0.0
    %7188 = vmatprep.subr.mxu0 0.0
    %7189 = vmatpush1.msra.mxu0 0.0
    %7190 = vmatprep.subr.mxu0 0.0
    %7191 = vmatpush1.msra.mxu0 0.0
    %7192 = vmatprep.subr.mxu0 0.0
    %7193 = vmatpush1.msra.mxu0 0.0
    %7194 = vmatprep.mubr.f32.mxu0 0.0
    %7195 = vmatmul.mubr.f32.gmra.mrb[0].mxu0 %v7128
    %v7196 = vpop.f32.mrb[0].mxu0
    %v7197 = vadd.f32 %v5086, %v7196
    %v7198 = vpop.f32.mrb[0].mxu0
    %7199 = vdwg.mxu0
    %7200 = vmatprep.subr.mxu0 0.0
    %7201 = vmatpush1.msra.mxu0 %v5051
    %7202 = vmatprep.subr.mxu0 0.0
    %7203 = vmatpush1.msra.mxu0 %v5052
    %7204 = vmatprep.subr.mxu0 0.0
    %7205 = vmatpush1.msra.mxu0 %v5053
    %7206 = vmatprep.subr.mxu0 0.0
    %7207 = vmatpush1.msra.mxu0 %v5054
    %7208 = vmatprep.subr.mxu0 0.0
    %7209 = vmatpush1.msra.mxu0 0.0
    %7210 = vmatprep.subr.mxu0 0.0
    %7211 = vmatpush1.msra.mxu0 0.0
    %7212 = vmatprep.subr.mxu0 0.0
    %7213 = vmatpush1.msra.mxu0 0.0
    %7214 = vmatprep.subr.mxu0 0.0
    %7215 = vmatpush1.msra.mxu0 0.0
    %7216 = vmatprep.subr.mxu0 0.0
    %7217 = vmatpush1.msra.mxu0 0.0
    %7218 = vmatprep.subr.mxu0 0.0
    %7219 = vmatpush1.msra.mxu0 0.0
    %7220 = vmatprep.subr.mxu0 0.0
    %7221 = vmatpush1.msra.mxu0 0.0
    %7222 = vmatprep.subr.mxu0 0.0
    %7223 = vmatpush1.msra.mxu0 0.0
    %7224 = vmatprep.subr.mxu0 0.0
    %7225 = vmatpush1.msra.mxu0 0.0
    %7226 = vmatprep.subr.mxu0 0.0
    %7227 = vmatpush1.msra.mxu0 0.0
    %7228 = vmatprep.subr.mxu0 0.0
    %7229 = vmatpush1.msra.mxu0 0.0
    %7230 = vmatprep.subr.mxu0 0.0
    %7231 = vmatpush1.msra.mxu0 0.0
    %7232 = vmatprep.subr.mxu0 0.0
    %7233 = vmatpush1.msra.mxu0 0.0
    %7234 = vmatprep.subr.mxu0 0.0
    %7235 = vmatpush1.msra.mxu0 0.0
    %7236 = vmatprep.subr.mxu0 0.0
    %7237 = vmatpush1.msra.mxu0 0.0
    %7238 = vmatprep.subr.mxu0 0.0
    %7239 = vmatpush1.msra.mxu0 0.0
    %7240 = vmatprep.subr.mxu0 0.0
    %7241 = vmatpush1.msra.mxu0 0.0
    %7242 = vmatprep.subr.mxu0 0.0
    %7243 = vmatpush1.msra.mxu0 0.0
    %7244 = vmatprep.subr.mxu0 0.0
    %7245 = vmatpush1.msra.mxu0 0.0
    %7246 = vmatprep.subr.mxu0 0.0
    %7247 = vmatpush1.msra.mxu0 0.0
    %7248 = vmatprep.subr.mxu0 0.0
    %7249 = vmatpush1.msra.mxu0 0.0
    %7250 = vmatprep.subr.mxu0 0.0
    %7251 = vmatpush1.msra.mxu0 0.0
    %7252 = vmatprep.subr.mxu0 0.0
    %7253 = vmatpush1.msra.mxu0 0.0
    %7254 = vmatprep.subr.mxu0 0.0
    %7255 = vmatpush1.msra.mxu0 0.0
    %7256 = vmatprep.subr.mxu0 0.0
    %7257 = vmatpush1.msra.mxu0 0.0
    %7258 = vmatprep.subr.mxu0 0.0
    %7259 = vmatpush1.msra.mxu0 0.0
    %7260 = vmatprep.subr.mxu0 0.0
    %7261 = vmatpush1.msra.mxu0 0.0
    %7262 = vmatprep.subr.mxu0 0.0
    %7263 = vmatpush1.msra.mxu0 0.0
    %7264 = vmatprep.mubr.f32.mxu0 0.0
    %7265 = vmatmul.mubr.f32.gmra.mrb[0].mxu0 %v6962
    %v7266 = vpop.f32.mrb[0].mxu0
    %v7267 = vadd.f32 %v5165, %v7266
    %v7268 = vpop.f32.mrb[0].mxu0
    %7269 = vdwg.mxu0
    %v7270 = vadd.f32 %v7197, %v7267
    %v7271 = vxor.u32 %v7270, 2147483648
    %v7272 = vmul.f32 %v7271, 1.442695
    %v7273 = vpow.pop %v7272
    %v7274 = vadd.f32 %v7273, 1.0
    %v7275 = vrcp.pop %v7274
    %v7276 = vmul.f32 1.0, %v7275
    %7278 = vrot.lane.b32.xlu0 %v7267, 64
    %v7279 = vpop.permute.xlu0 %7278
    %v7281 = vmul.f32 %v7276, %v7279
    %7283 = vrot.lane.b32.xlu0 %v7281, 64
    %v7284 = vpop.permute.xlu0 %7283
    %v7286 = vadd.f32 %v7197, %v7284
    %v7287 = vtanh.pop %v7286
    %v7288 = vsub.f32 1.0, %v7276
    %7290 = vrot.lane.b32.xlu0 %v7287, 96
    %v7291 = vpop.permute.xlu0 %7290
    %v7293 = vmul.f32 %v7288, %v7291
    %v7294 = vmul.f32 %v7276, %v6958
    %v7295 = vadd.f32 %v7293, %v7294
    %7297 = vrot.lane.b32.xlu0 %v7295, 96
    %v7298 = vpop.permute.xlu0 %7297
    %v7299 = vsel %vm2704, %v7298, 0
    %7301 = vmatprep.subr.mxu0 0.0
    %7302 = vmatpush1.msra.mxu0 %v5057
    %7303 = vmatprep.subr.mxu0 0.0
    %7304 = vmatpush1.msra.mxu0 %v5058
    %7305 = vmatprep.subr.mxu0 0.0
    %7306 = vmatpush1.msra.mxu0 %v5059
    %7307 = vmatprep.subr.mxu0 0.0
    %7308 = vmatpush1.msra.mxu0 %v5060
    %7309 = vmatprep.subr.mxu0 0.0
    %7310 = vmatpush1.msra.mxu0 0.0
    %7311 = vmatprep.subr.mxu0 0.0
    %7312 = vmatpush1.msra.mxu0 0.0
    %7313 = vmatprep.subr.mxu0 0.0
    %7314 = vmatpush1.msra.mxu0 0.0
    %7315 = vmatprep.subr.mxu0 0.0
    %7316 = vmatpush1.msra.mxu0 0.0
    %7317 = vmatprep.subr.mxu0 0.0
    %7318 = vmatpush1.msra.mxu0 0.0
    %7319 = vmatprep.subr.mxu0 0.0
    %7320 = vmatpush1.msra.mxu0 0.0
    %7321 = vmatprep.subr.mxu0 0.0
    %7322 = vmatpush1.msra.mxu0 0.0
    %7323 = vmatprep.subr.mxu0 0.0
    %7324 = vmatpush1.msra.mxu0 0.0
    %7325 = vmatprep.subr.mxu0 0.0
    %7326 = vmatpush1.msra.mxu0 0.0
    %7327 = vmatprep.subr.mxu0 0.0
    %7328 = vmatpush1.msra.mxu0 0.0
    %7329 = vmatprep.subr.mxu0 0.0
    %7330 = vmatpush1.msra.mxu0 0.0
    %7331 = vmatprep.subr.mxu0 0.0
    %7332 = vmatpush1.msra.mxu0 0.0
    %7333 = vmatprep.subr.mxu0 0.0
    %7334 = vmatpush1.msra.mxu0 0.0
    %7335 = vmatprep.subr.mxu0 0.0
    %7336 = vmatpush1.msra.mxu0 0.0
    %7337 = vmatprep.subr.mxu0 0.0
    %7338 = vmatpush1.msra.mxu0 0.0
    %7339 = vmatprep.subr.mxu0 0.0
    %7340 = vmatpush1.msra.mxu0 0.0
    %7341 = vmatprep.subr.mxu0 0.0
    %7342 = vmatpush1.msra.mxu0 0.0
    %7343 = vmatprep.subr.mxu0 0.0
    %7344 = vmatpush1.msra.mxu0 0.0
    %7345 = vmatprep.subr.mxu0 0.0
    %7346 = vmatpush1.msra.mxu0 0.0
    %7347 = vmatprep.subr.mxu0 0.0
    %7348 = vmatpush1.msra.mxu0 0.0
    %7349 = vmatprep.subr.mxu0 0.0
    %7350 = vmatpush1.msra.mxu0 0.0
    %7351 = vmatprep.subr.mxu0 0.0
    %7352 = vmatpush1.msra.mxu0 0.0
    %7353 = vmatprep.subr.mxu0 0.0
    %7354 = vmatpush1.msra.mxu0 0.0
    %7355 = vmatprep.subr.mxu0 0.0
    %7356 = vmatpush1.msra.mxu0 0.0
    %7357 = vmatprep.subr.mxu0 0.0
    %7358 = vmatpush1.msra.mxu0 0.0
    %7359 = vmatprep.subr.mxu0 0.0
    %7360 = vmatpush1.msra.mxu0 0.0
    %7361 = vmatprep.subr.mxu0 0.0
    %7362 = vmatpush1.msra.mxu0 0.0
    %7363 = vmatprep.subr.mxu0 0.0
    %7364 = vmatpush1.msra.mxu0 0.0
    %7365 = vmatprep.mubr.f32.mxu0 0.0
    %7366 = vmatmul.mubr.f32.gmra.mrb[0].mxu0 %v7299
    %v7367 = vpop.f32.mrb[0].mxu0
    %v7368 = vadd.f32 %v5272, %v7367
    %v7369 = vpop.f32.mrb[0].mxu0
    %7370 = vdwg.mxu0
    %s7371 = scalar_lea.vmem %s16, 56
    %7372 = vst [vmem:[%s7371] sm:$0xff] %v7368
    // Predicated region
    $region70: #{_img2seq_forward.1} parent=1 // pred_check
      _
    $region71: #{_img2seq_forward.1} parent=1 // pred_check_branch
      %7374 = sbr.rel (0) target = $region73
    $region72: #{_img2seq_forward.1} parent=1 // pred_region
      _
    $region73: #{_img2seq_forward.1} parent=1 // pred_fallthru
      _
    // Predicated region
    $region74: #{_img2seq_forward.1} parent=1 // pred_check
      _
    $region75: #{_img2seq_forward.1} parent=1 // pred_check_branch
      %7376 = sbr.rel (0) target = $region77
    $region76: #{_img2seq_forward.1} parent=1 // pred_region
      _
    $region77: #{_img2seq_forward.1} parent=1 // pred_fallthru
      _
    %7377 = vsyncpa [#allocation3], 1

</llo_original>
